<compile_context>
chip_gen: v5e
topology: v5e:2x2
jax: 0.10.0
libtpu: 0.0.40
codegen_flags: <defaults>
</compile_context>

<pallas_src>
import functools

import jax
import jax.numpy as jnp
import numpy as np
from jax.experimental import pallas as pl
from jax.experimental.pallas import tpu as pltpu


def _round_up(n, m):
    return -(-n // m) * m


# ----------------------------------------------------------------------------
# Kernel A: afterconv1 (1x1 conv == channel matmul) + ReLU + L2 normalize(dim=C)
# ----------------------------------------------------------------------------
def conv1x1_relu_norm_kernel(x_ref, w_ref, o_ref, *, scale):
    # x_ref: (tn, K) bf16 positions x in-channels ; w_ref: (K, C) bf16 ; o_ref: (tn, C) bf16
    y = jnp.dot(x_ref[...], w_ref[...], preferred_element_type=jnp.float32)  # MXU, f32 acc
    y = jnp.maximum(y, 0.0)                                                  # ReLU (f32)
    # F.normalize: y / max(||y||, eps)  ==  y * rsqrt(max(sum(y^2), eps^2)); rsqrt -> EUP slot
    inv = jax.lax.rsqrt(jnp.maximum(jnp.sum(y * y, axis=-1, keepdims=True), 1e-24))
    # epilogue stays f32 (cheapest on v5e); one bf16 cast at the store.
    o_ref[...] = (y * (inv * scale)).astype(o_ref.dtype)


def conv1x1_relu_norm(x, w, *, scale=1.0, tn_max=512):
    # x: (N, K) float ; w: (K, C).  Returns (N, C) bf16 rows = L2-normalized(relu(x@w)) * scale.
    N, K = x.shape
    Kw, C = w.shape
    assert K == Kw
    tn = min(tn_max, _round_up(N, 16))        # big row tiles; 16-row align for bf16 sublanes
    Np = _round_up(N, tn)
    if Np != N:
        x = jnp.pad(x, ((0, Np - N), (0, 0)))  # zero rows -> zero outputs (eps-guarded norm)
    out = pl.pallas_call(
        functools.partial(conv1x1_relu_norm_kernel, scale=float(scale)),
        out_shape=jax.ShapeDtypeStruct((Np, C), jnp.bfloat16),
        grid=(Np // tn,),
        in_specs=[
            pl.BlockSpec((tn, K), lambda i: (i, 0)),
            pl.BlockSpec((K, C), lambda i: (0, 0)),   # weight block resident across grid
        ],
        out_specs=pl.BlockSpec((tn, C), lambda i: (i, 0)),
        compiler_params=pltpu.CompilerParams(dimension_semantics=("parallel",)),
    )(x.astype(jnp.bfloat16), w.astype(jnp.bfloat16))
    return out[:N] if Np != N else out


# ----------------------------------------------------------------------------
# Kernel B: correlation matmul (T batched) + per-frame softmax over video pos.
# ----------------------------------------------------------------------------
def corr_softmax_kernel(f2_ref, f1t_ref, o_ref, *, T, P2):
    # f2_ref : (T*P2, C) bf16   video features, positions ordered (t, w, h)
    # f1t_ref: (C, P1p) bf16    image features channels-first; sqrt(512) pre-folded
    # o_ref  : (T, P2, P1p) f32 softmax over P2 (video positions) per (t, image pos)
    corr = jnp.dot(f2_ref[...], f1t_ref[...], preferred_element_type=jnp.float32)
    for t in range(T):                       # static unroll, T is small
        c = corr[t * P2:(t + 1) * P2, :]     # sublane-aligned static slice
        m = jnp.max(c, axis=0, keepdims=True)
        e = jnp.exp(c - m)
        s = jnp.sum(e, axis=0, keepdims=True)
        o_ref[t] = (e * pl.reciprocal(s, approx=True)).astype(o_ref.dtype)


def corr_softmax(feat2_vid, feat1_img_t, *, T, P2):
    # feat2_vid: (bs, T*P2, C) ; feat1_img_t: (bs, C, P1) -> (bs, T, P2, P1) f32
    bs, TP2, C = feat2_vid.shape
    _, C2, P1 = feat1_img_t.shape
    assert TP2 == T * P2 and C2 == C
    P1p = _round_up(P1, 128)                 # lane-dense output (unmasked full-width stores)
    if P1p != P1:
        # zero-padded image columns -> uniform softmax values, sliced off below
        feat1_img_t = jnp.pad(feat1_img_t, ((0, 0), (0, 0), (0, P1p - P1)))
    out = pl.pallas_call(
        functools.partial(corr_softmax_kernel, T=T, P2=P2),
        out_shape=jax.ShapeDtypeStruct((bs, T, P2, P1p), jnp.float32),
        grid=(bs,),
        in_specs=[
            pl.BlockSpec((None, TP2, C), lambda b: (b, 0, 0)),
            pl.BlockSpec((None, C, P1p), lambda b: (b, 0, 0)),
        ],
        out_specs=pl.BlockSpec((None, T, P2, P1p), lambda b: (b, 0, 0, 0)),
        compiler_params=pltpu.CompilerParams(dimension_semantics=("parallel",)),
    )(feat2_vid.astype(jnp.bfloat16), feat1_img_t.astype(jnp.bfloat16))
    return out[..., :P1] if P1p != P1 else out


# ----------------------------------------------------------------------------
# Encoder stub (replaces the external InflatedResNet) — plain-JAX glue.
# ----------------------------------------------------------------------------
def encoder_stub(x_nchw, w_enc):
    # x: (N, Cin, Hin, Win) -> (N, H, W, 1024) with 4x spatial downsample.
    N, Cin, Hin, Win = x_nchw.shape
    x = x_nchw.reshape(N, Cin, Hin // 4, 4, Win // 4, 4).mean(axis=(3, 5))
    x = jnp.einsum("nchw,cd->nhwd", x, w_enc)
    return jnp.maximum(x, 0.0)


# ----------------------------------------------------------------------------
# Full forward (CycleTime.forward semantics)
# ----------------------------------------------------------------------------
def cycle_time_forward(ximg1, img2, params):
    bs, T, Cin, Hin, Win = ximg1.shape
    div_num = 512
    corr_scale = float(div_num) ** 0.5       # torch.div(corrfeat, 512 ** (-0.5))

    # encoderVideo on videoclip1 and img2 (stubbed, see TODO above)
    feat_vid = encoder_stub(ximg1.reshape(bs * T, Cin, Hin, Win), params["w_enc"])
    feat_img = encoder_stub(img2.reshape(bs, Cin, Hin, Win), params["w_enc"])
    H, W, Denc = feat_vid.shape[1], feat_vid.shape[2], feat_vid.shape[3]

    # afterconv1 + relu + F.normalize(dim=channels) — Pallas kernel A (bf16 out).
    # sqrt(512) correlation scale folded into the (smaller) image features.
    vid = conv1x1_relu_norm(feat_vid.reshape(bs * T * H * W, Denc), params["w_after"],
                            scale=1.0)
    img = conv1x1_relu_norm(feat_img.reshape(bs * H * W, Denc), params["w_after"],
                            scale=corr_scale)
    C = vid.shape[-1]

    # r50_feat2_vec: transpose(3,4) then flatten -> positions ordered (t, w, h)
    vid = vid.reshape(bs, T, H, W, C).transpose(0, 1, 3, 2, 4).reshape(bs, T * W * H, C)
    # patch_feat1_vec: (bs, C, H*W) — pre-transposed once in XLA so kernel B
    # needs no per-step in-kernel transpose.
    img_t = img.reshape(bs, H * W, C).transpose(0, 2, 1)

    # compute_corr_softmax — Pallas kernel B (T batched per grid step)
    corr = corr_softmax(vid, img_t, T=T, P2=W * H)   # (bs, T, W*H, H*W) f32

    spatial_out1 = H  # img_feat2.size(3); assumes H == W as in the torch code
    return corr.reshape(bs * T, spatial_out1 * spatial_out1, spatial_out1, spatial_out1)


# ----------------------------------------------------------------------------
# Pure-JAX references (for correctness checks of the Pallas path)
#   match_kernel_dtypes=True  -> mimics the kernel's bf16 matmul operands and
#                                folded scale (tight check of kernel mechanics)
#   match_kernel_dtypes=False -> full-f32 math (loose numerical sanity check)
# ----------------------------------------------------------------------------
def cycle_time_reference(ximg1, img2, params, *, match_kernel_dtypes=True):
    bs, T, Cin, Hin, Win = ximg1.shape
    corr_scale = 512.0 ** 0.5
    feat_vid = encoder_stub(ximg1.reshape(bs * T, Cin, Hin, Win), params["w_enc"])
    feat_img = encoder_stub(img2.reshape(bs, Cin, Hin, Win), params["w_enc"])
    H, W, Denc = feat_vid.shape[1], feat_vid.shape[2], feat_vid.shape[3]

    w = params["w_after"]
    if match_kernel_dtypes:
        w = w.astype(jnp.bfloat16)

    def after(x, scale):
        if match_kernel_dtypes:
            x = x.astype(jnp.bfloat16)
        y = jnp.maximum(jnp.dot(x, w, preferred_element_type=jnp.float32), 0.0)
        inv = jax.lax.rsqrt(jnp.maximum(jnp.sum(y * y, axis=-1, keepdims=True), 1e-24))
        out = y * (inv * scale)
        return out.astype(jnp.bfloat16) if match_kernel_dtypes else out

    vid = after(feat_vid.reshape(bs * T * H * W, Denc), 1.0)
    img = after(feat_img.reshape(bs * H * W, Denc),
                corr_scale if match_kernel_dtypes else 1.0)
    C = vid.shape[-1]
    vid = vid.reshape(bs, T, H, W, C).transpose(0, 1, 3, 2, 4).reshape(bs, T, W * H, C)
    img = img.reshape(bs, H * W, C)
    corr = jnp.einsum("btpc,bqc->btpq", vid, img,
                      preferred_element_type=jnp.float32).astype(jnp.float32)
    if not match_kernel_dtypes:
        corr = corr * corr_scale
    corr = jax.nn.softmax(corr, axis=2)
    so1 = H
    return corr.reshape(bs * T, so1 * so1, so1, so1)


if __name__ == "__main__":
    key = jax.random.PRNGKey(0)
    k_x, k_i, k_e, k_a = jax.random.split(key, 4)

    bs, T, Cin, Hin, Win = 2, 2, 3, 32, 32          # small shapes
    Denc, Cmid = 1024, 512                          # encoder-out / afterconv1-out dims

    ximg1 = jax.random.normal(k_x, (bs, T, Cin, Hin, Win), jnp.float32)
    img2 = jax.random.normal(k_i, (bs, 1, Cin, Hin, Win), jnp.float32)

    params = {
        # encoder stub projection (deterministic)
        "w_enc": jax.random.normal(k_e, (Cin, Denc), jnp.float32) * 0.1,
        # afterconv1: Conv3d(1024, 512, k=1, bias=False), kaiming_normal fan_out
        "w_after": jax.random.normal(k_a, (Denc, Cmid), jnp.float32)
        * float(np.sqrt(2.0 / Cmid)),
    }

    out = jax.jit(cycle_time_forward)(ximg1, img2, params)
    out = jax.block_until_ready(out)

    Hf = Hin // 4
    assert out.shape == (bs * T, Hf * Hf, Hf, Hf), out.shape

    # Tight check vs a reference that mirrors the kernel's bf16 operands /
    # folded scale (verifies tiling, layout, softmax axis).
    ref_matched = cycle_time_reference(ximg1, img2, params, match_kernel_dtypes=True)
    assert np.allclose(np.asarray(out), np.asarray(ref_matched), atol=2e-3, rtol=5e-2)

    # Loose sanity check vs the pure-f32 reference (bf16 matmul inputs and the
    # approx EUP reciprocal shift the softmax slightly — tolerance widened).
    ref_f32 = cycle_time_reference(ximg1, img2, params, match_kernel_dtypes=False)
    assert np.allclose(np.asarray(out), np.asarray(ref_f32), atol=5e-2, rtol=2.5e-1)

    print("KERNEL_OK")
</pallas_src>

<mosaic_0001>
module attributes {stable_mosaic.version = 11 : i64} {
  func.func @conv1x1_relu_norm_kernel(%arg0: i32, %arg1: memref<256x1024xbf16, #tpu.memory_space<vmem>>, %arg2: memref<1024x512xbf16, #tpu.memory_space<vmem>>, %arg3: memref<256x512xbf16, #tpu.memory_space<vmem>>) attributes {dimension_semantics = [#tpu.dimension_semantics<parallel>], iteration_bounds = array<i64: 1>, scalar_prefetch = 0 : i64, scratch_operands = 0 : i64, tpu.core_type = #tpu.core_type<tc>, window_params = [{transform_indices = @transform_0, window_bounds = array<i64: 256, 1024>}, {pipeline_mode = #tpu.pipeline_mode<synchronous>, transform_indices = @transform_1, window_bounds = array<i64: 1024, 512>}, {transform_indices = @transform_2, window_bounds = array<i64: 256, 512>}]} {
    %c0 = arith.constant 0 : index
    %c0_0 = arith.constant 0 : index
    %0 = vector.load %arg1[%c0, %c0_0] : memref<256x1024xbf16, #tpu.memory_space<vmem>>, vector<256x1024xbf16>
    %c0_1 = arith.constant 0 : index
    %c0_2 = arith.constant 0 : index
    %1 = vector.load %arg2[%c0_1, %c0_2] : memref<1024x512xbf16, #tpu.memory_space<vmem>>, vector<1024x512xbf16>
    %cst = arith.constant dense<0.000000e+00> : vector<256x512xf32>
    %2 = tpu.matmul %0, %1, %cst {dimension_numbers = #tpu.dot_dimension_numbers<[1], [0], [0], [1], [0, 0, 1, 1], [], []>} : vector<256x1024xbf16>, vector<1024x512xbf16>, vector<256x512xf32> -> vector<256x512xf32>
    %cst_3 = arith.constant 0.000000e+00 : f32
    %3 = vector.broadcast %cst_3 : f32 to vector<256x512xf32>
    %4 = arith.maximumf %2, %3 : vector<256x512xf32>
    %5 = arith.mulf %4, %4 : vector<256x512xf32>
    %cst_4 = arith.constant dense<0.000000e+00> : vector<256xf32>
    %6 = vector.multi_reduction <add>, %5, %cst_4 [1] : vector<256x512xf32> to vector<256xf32>
    %7 = vector.shape_cast %6 : vector<256xf32> to vector<256x1xf32>
    %cst_5 = arith.constant 1.000000e-24 : f32
    %8 = vector.broadcast %cst_5 : f32 to vector<256x1xf32>
    %9 = arith.maximumf %7, %8 : vector<256x1xf32>
    %10 = math.rsqrt %9 : vector<256x1xf32>
    %cst_6 = arith.constant 1.000000e+00 : f32
    %11 = vector.broadcast %cst_6 : f32 to vector<256x1xf32>
    %12 = arith.mulf %10, %11 : vector<256x1xf32>
    %13 = vector.broadcast %12 : vector<256x1xf32> to vector<256x512xf32>
    %14 = arith.mulf %4, %13 : vector<256x512xf32>
    %15 = arith.truncf %14 : vector<256x512xf32> to vector<256x512xbf16>
    %c0_7 = arith.constant 0 : index
    %c0_8 = arith.constant 0 : index
    %16 = vector.load %arg3[%c0_7, %c0_8] : memref<256x512xbf16, #tpu.memory_space<vmem>>, vector<256x512xbf16>
    tpu.vector_store %arg3[%c0_7, %c0_8], %15 {strides = array<i32>} : memref<256x512xbf16, #tpu.memory_space<vmem>>, vector<256x512xbf16>,
    return
  }
  func.func @transform_0(%arg0: i32) -> (i32, i32) {
    %c0_i32 = arith.constant 0 : i32
    %c0_i32_0 = arith.constant 0 : i32
    return %arg0, %c0_i32 : i32, i32
  }
  func.func @transform_1(%arg0: i32) -> (i32, i32) {
    %c0_i32 = arith.constant 0 : i32
    %c0_i32_0 = arith.constant 0 : i32
    %c0_i32_1 = arith.constant 0 : i32
    return %c0_i32, %c0_i32_0 : i32, i32
  }
  func.func @transform_2(%arg0: i32) -> (i32, i32) {
    %c0_i32 = arith.constant 0 : i32
    %c0_i32_0 = arith.constant 0 : i32
    return %arg0, %c0_i32 : i32, i32
  }
}

module attributes {stable_mosaic.version = 11 : i64} {
  func.func @conv1x1_relu_norm_kernel(%arg0: i32, %arg1: memref<128x1024xbf16, #tpu.memory_space<vmem>>, %arg2: memref<1024x512xbf16, #tpu.memory_space<vmem>>, %arg3: memref<128x512xbf16, #tpu.memory_space<vmem>>) attributes {dimension_semantics = [#tpu.dimension_semantics<parallel>], iteration_bounds = array<i64: 1>, scalar_prefetch = 0 : i64, scratch_operands = 0 : i64, tpu.core_type = #tpu.core_type<tc>, window_params = [{transform_indices = @transform_0, window_bounds = array<i64: 128, 1024>}, {pipeline_mode = #tpu.pipeline_mode<synchronous>, transform_indices = @transform_1, window_bounds = array<i64: 1024, 512>}, {transform_indices = @transform_2, window_bounds = array<i64: 128, 512>}]} {
    %c0 = arith.constant 0 : index
    %c0_0 = arith.constant 0 : index
    %0 = vector.load %arg1[%c0, %c0_0] : memref<128x1024xbf16, #tpu.memory_space<vmem>>, vector<128x1024xbf16>
    %c0_1 = arith.constant 0 : index
    %c0_2 = arith.constant 0 : index
    %1 = vector.load %arg2[%c0_1, %c0_2] : memref<1024x512xbf16, #tpu.memory_space<vmem>>, vector<1024x512xbf16>
    %cst = arith.constant dense<0.000000e+00> : vector<128x512xf32>
    %2 = tpu.matmul %0, %1, %cst {dimension_numbers = #tpu.dot_dimension_numbers<[1], [0], [0], [1], [0, 0, 1, 1], [], []>} : vector<128x1024xbf16>, vector<1024x512xbf16>, vector<128x512xf32> -> vector<128x512xf32>
    %cst_3 = arith.constant 0.000000e+00 : f32
    %3 = vector.broadcast %cst_3 : f32 to vector<128x512xf32>
    %4 = arith.maximumf %2, %3 : vector<128x512xf32>
    %5 = arith.mulf %4, %4 : vector<128x512xf32>
    %cst_4 = arith.constant dense<0.000000e+00> : vector<128xf32>
    %6 = vector.multi_reduction <add>, %5, %cst_4 [1] : vector<128x512xf32> to vector<128xf32>
    %7 = vector.shape_cast %6 : vector<128xf32> to vector<128x1xf32>
    %cst_5 = arith.constant 1.000000e-24 : f32
    %8 = vector.broadcast %cst_5 : f32 to vector<128x1xf32>
    %9 = arith.maximumf %7, %8 : vector<128x1xf32>
    %10 = math.rsqrt %9 : vector<128x1xf32>
    %cst_6 = arith.constant 22.6274166 : f32
    %11 = vector.broadcast %cst_6 : f32 to vector<128x1xf32>
    %12 = arith.mulf %10, %11 : vector<128x1xf32>
    %13 = vector.broadcast %12 : vector<128x1xf32> to vector<128x512xf32>
    %14 = arith.mulf %4, %13 : vector<128x512xf32>
    %15 = arith.truncf %14 : vector<128x512xf32> to vector<128x512xbf16>
    %c0_7 = arith.constant 0 : index
    %c0_8 = arith.constant 0 : index
    %16 = vector.load %arg3[%c0_7, %c0_8] : memref<128x512xbf16, #tpu.memory_space<vmem>>, vector<128x512xbf16>
    tpu.vector_store %arg3[%c0_7, %c0_8], %15 {strides = array<i32>} : memref<128x512xbf16, #tpu.memory_space<vmem>>, vector<128x512xbf16>,
    return
  }
  func.func @transform_0(%arg0: i32) -> (i32, i32) {
    %c0_i32 = arith.constant 0 : i32
    %c0_i32_0 = arith.constant 0 : i32
    return %arg0, %c0_i32 : i32, i32
  }
  func.func @transform_1(%arg0: i32) -> (i32, i32) {
    %c0_i32 = arith.constant 0 : i32
    %c0_i32_0 = arith.constant 0 : i32
    %c0_i32_1 = arith.constant 0 : i32
    return %c0_i32, %c0_i32_0 : i32, i32
  }
  func.func @transform_2(%arg0: i32) -> (i32, i32) {
    %c0_i32 = arith.constant 0 : i32
    %c0_i32_0 = arith.constant 0 : i32
    return %arg0, %c0_i32 : i32, i32
  }
}

module attributes {stable_mosaic.version = 11 : i64} {
  func.func @corr_softmax_kernel(%arg0: i32, %arg1: memref<1x128x512xbf16, #tpu.memory_space<vmem>>, %arg2: memref<1x512x128xbf16, #tpu.memory_space<vmem>>, %arg3: memref<1x2x64x128xf32, #tpu.memory_space<vmem>>) attributes {dimension_semantics = [#tpu.dimension_semantics<parallel>], iteration_bounds = array<i64: 2>, scalar_prefetch = 0 : i64, scratch_operands = 0 : i64, tpu.core_type = #tpu.core_type<tc>, window_params = [{transform_indices = @transform_0, window_bounds = array<i64: 1, 128, 512>}, {transform_indices = @transform_1, window_bounds = array<i64: 1, 512, 128>}, {transform_indices = @transform_2, window_bounds = array<i64: 1, 2, 64, 128>}]} {
    %c0 = arith.constant 0 : index
    %c0_0 = arith.constant 0 : index
    %c0_1 = arith.constant 0 : index
    %0 = vector.load %arg1[%c0, %c0_0, %c0_1] : memref<1x128x512xbf16, #tpu.memory_space<vmem>>, vector<1x128x512xbf16>
    %1 = vector.shape_cast %0 : vector<1x128x512xbf16> to vector<128x512xbf16>
    %c0_2 = arith.constant 0 : index
    %c0_3 = arith.constant 0 : index
    %c0_4 = arith.constant 0 : index
    %2 = vector.load %arg2[%c0_2, %c0_3, %c0_4] : memref<1x512x128xbf16, #tpu.memory_space<vmem>>, vector<1x512x128xbf16>
    %3 = vector.shape_cast %2 : vector<1x512x128xbf16> to vector<512x128xbf16>
    %cst = arith.constant dense<0.000000e+00> : vector<128x128xf32>
    %4 = tpu.matmul %1, %3, %cst {dimension_numbers = #tpu.dot_dimension_numbers<[1], [0], [0], [1], [0, 0, 1, 1], [], []>} : vector<128x512xbf16>, vector<512x128xbf16>, vector<128x128xf32> -> vector<128x128xf32>
    %5 = vector.extract_strided_slice %4 {offsets = [0, 0], sizes = [64, 128], strides = [1, 1]} : vector<128x128xf32> to vector<64x128xf32>
    %cst_5 = arith.constant dense<0xFF800000> : vector<128xf32>
    %6 = vector.multi_reduction <maximumf>, %5, %cst_5 [0] : vector<64x128xf32> to vector<128xf32>
    %7 = vector.shape_cast %6 : vector<128xf32> to vector<1x128xf32>
    %8 = vector.broadcast %7 : vector<1x128xf32> to vector<64x128xf32>
    %9 = arith.subf %5, %8 : vector<64x128xf32>
    %10 = math.exp %9 : vector<64x128xf32>
    %cst_6 = arith.constant dense<0.000000e+00> : vector<128xf32>
    %11 = vector.multi_reduction <add>, %10, %cst_6 [0] : vector<64x128xf32> to vector<128xf32>
    %12 = vector.shape_cast %11 : vector<128xf32> to vector<1x128xf32>
    %13 = tpu.reciprocal %12 {approx = true} : vector<1x128xf32> -> vector<1x128xf32>
    %14 = vector.broadcast %13 : vector<1x128xf32> to vector<64x128xf32>
    %15 = arith.mulf %10, %14 : vector<64x128xf32>
    %c0_7 = arith.constant 0 : index
    %c0_8 = arith.constant 0 : index
    %c0_9 = arith.constant 0 : index
    %c0_10 = arith.constant 0 : index
    %16 = vector.load %arg3[%c0_7, %c0_8, %c0_9, %c0_10] : memref<1x2x64x128xf32, #tpu.memory_space<vmem>>, vector<1x1x64x128xf32>
    %17 = vector.shape_cast %16 : vector<1x1x64x128xf32> to vector<64x128xf32>
    %18 = vector.shape_cast %15 : vector<64x128xf32> to vector<1x1x64x128xf32>
    tpu.vector_store %arg3[%c0_7, %c0_8, %c0_9, %c0_10], %18 {strides = array<i32>} : memref<1x2x64x128xf32, #tpu.memory_space<vmem>>, vector<1x1x64x128xf32>,
    %19 = vector.extract_strided_slice %4 {offsets = [64, 0], sizes = [64, 128], strides = [1, 1]} : vector<128x128xf32> to vector<64x128xf32>
    %cst_11 = arith.constant dense<0xFF800000> : vector<128xf32>
    %20 = vector.multi_reduction <maximumf>, %19, %cst_11 [0] : vector<64x128xf32> to vector<128xf32>
    %21 = vector.shape_cast %20 : vector<128xf32> to vector<1x128xf32>
    %22 = vector.broadcast %21 : vector<1x128xf32> to vector<64x128xf32>
    %23 = arith.subf %19, %22 : vector<64x128xf32>
    %24 = math.exp %23 : vector<64x128xf32>
    %cst_12 = arith.constant dense<0.000000e+00> : vector<128xf32>
    %25 = vector.multi_reduction <add>, %24, %cst_12 [0] : vector<64x128xf32> to vector<128xf32>
    %26 = vector.shape_cast %25 : vector<128xf32> to vector<1x128xf32>
    %27 = tpu.reciprocal %26 {approx = true} : vector<1x128xf32> -> vector<1x128xf32>
    %28 = vector.broadcast %27 : vector<1x128xf32> to vector<64x128xf32>
    %29 = arith.mulf %24, %28 : vector<64x128xf32>
    %c0_13 = arith.constant 0 : index
    %c1 = arith.constant 1 : index
    %c0_14 = arith.constant 0 : index
    %c0_15 = arith.constant 0 : index
    %30 = vector.load %arg3[%c0_13, %c1, %c0_14, %c0_15] : memref<1x2x64x128xf32, #tpu.memory_space<vmem>>, vector<1x1x64x128xf32>
    %31 = vector.shape_cast %30 : vector<1x1x64x128xf32> to vector<64x128xf32>
    %32 = vector.shape_cast %29 : vector<64x128xf32> to vector<1x1x64x128xf32>
    tpu.vector_store %arg3[%c0_13, %c1, %c0_14, %c0_15], %32 {strides = array<i32>} : memref<1x2x64x128xf32, #tpu.memory_space<vmem>>, vector<1x1x64x128xf32>,
    return
  }
  func.func @transform_0(%arg0: i32) -> (i32, i32, i32) {
    %c0_i32 = arith.constant 0 : i32
    %c0_i32_0 = arith.constant 0 : i32
    %c0_i32_1 = arith.constant 0 : i32
    return %arg0, %c0_i32, %c0_i32_0 : i32, i32, i32
  }
  func.func @transform_1(%arg0: i32) -> (i32, i32, i32) {
    %c0_i32 = arith.constant 0 : i32
    %c0_i32_0 = arith.constant 0 : i32
    %c0_i32_1 = arith.constant 0 : i32
    return %arg0, %c0_i32, %c0_i32_0 : i32, i32, i32
  }
  func.func @transform_2(%arg0: i32) -> (i32, i32, i32, i32) {
    %c0_i32 = arith.constant 0 : i32
    %c0_i32_0 = arith.constant 0 : i32
    %c0_i32_1 = arith.constant 0 : i32
    %c0_i32_2 = arith.constant 0 : i32
    return %arg0, %c0_i32, %c0_i32_0, %c0_i32_1 : i32, i32, i32, i32
  }
}

</mosaic_0001>

<llo_original>
// kernel: cycle_time_forward.3
$region0: #{cycle_time_forward.3}
  #allocation0 [shape = 'u32[]', space=smem, size = 0x4, offset = 0x4, fixed_abs, tag = 'smem constant byte address 0x4 - core index']
  #allocation1 [shape = 'u32[72,128]{1,0:T(1,128)}', space=vmem, size = 0x9000, scoped, tag = 'internal scratch']
  %s0 = inlined_call_operand.vmem [shape: bf16[256,1024], index: 0, kind: input, shape index: {}]
  %s1 = inlined_call_operand.vmem [shape: bf16[1024,512], index: 1, kind: input, shape index: {}]
  %s2 = inlined_call_operand.vmem [shape: bf16[256,512], index: 2, kind: output, shape index: {}]
  %s3 = sld [smem:[#allocation0]]
  $region18: #{cycle_time_forward.3} parent=0
    _
  %s5 = ssub.s32 1, %s3
  %s6 = scalar_select 0, %s5, %s3
  // Predicated region
  $region2: #{cycle_time_forward.3} parent=0 // pred_check
    _
  $region3: #{cycle_time_forward.3} parent=0 // pred_check_branch
    %8 = sbr.rel (0) target = $region5
  $region4: #{cycle_time_forward.3} parent=0 // pred_region
    _
  $region5: #{cycle_time_forward.3} parent=0 // pred_fallthru
    _
  // Predicated region
  $region6: #{cycle_time_forward.3} parent=0 // pred_check
    _
  $region7: #{cycle_time_forward.3} parent=0 // pred_check_branch
    %10 = sbr.rel (0) target = $region9
  $region8: #{cycle_time_forward.3} parent=0 // pred_region
    _
  $region9: #{cycle_time_forward.3} parent=0 // pred_fallthru
    _
  %v11 = vld [vmem:[%s0] sm:$0xff]
  %v12 = vld [vmem:[%s0 + $0x8] sm:$0xff]
  %v13 = vld [vmem:[%s0 + $0x10] sm:$0xff]
  %v14 = vld [vmem:[%s0 + $0x18] sm:$0xff]
  %v15 = vld [vmem:[%s0 + $0x20] sm:$0xff]
  %v16 = vld [vmem:[%s0 + $0x28] sm:$0xff]
  %v17 = vld [vmem:[%s0 + $0x30] sm:$0xff]
  %v18 = vld [vmem:[%s0 + $0x38] sm:$0xff]
  %v19 = vld [vmem:[%s0 + $0x40] sm:$0xff]
  %v20 = vld [vmem:[%s0 + $0x48] sm:$0xff]
  %v21 = vld [vmem:[%s0 + $0x50] sm:$0xff]
  %v22 = vld [vmem:[%s0 + $0x58] sm:$0xff]
  %v23 = vld [vmem:[%s0 + $0x60] sm:$0xff]
  %v24 = vld [vmem:[%s0 + $0x68] sm:$0xff]
  %v25 = vld [vmem:[%s0 + $0x70] sm:$0xff]
  %v26 = vld [vmem:[%s0 + $0x78] sm:$0xff]
  %v27 = vld [vmem:[%s0 + $0x80] sm:$0xff]
  %v28 = vld [vmem:[%s0 + $0x88] sm:$0xff]
  %v29 = vld [vmem:[%s0 + $0x90] sm:$0xff]
  %v30 = vld [vmem:[%s0 + $0x98] sm:$0xff]
  %v31 = vld [vmem:[%s0 + $0xa0] sm:$0xff]
  %v32 = vld [vmem:[%s0 + $0xa8] sm:$0xff]
  %v33 = vld [vmem:[%s0 + $0xb0] sm:$0xff]
  %v34 = vld [vmem:[%s0 + $0xb8] sm:$0xff]
  %v35 = vld [vmem:[%s0 + $0xc0] sm:$0xff]
  %v36 = vld [vmem:[%s0 + $0xc8] sm:$0xff]
  %v37 = vld [vmem:[%s0 + $0xd0] sm:$0xff]
  %v38 = vld [vmem:[%s0 + $0xd8] sm:$0xff]
  %v39 = vld [vmem:[%s0 + $0xe0] sm:$0xff]
  %v40 = vld [vmem:[%s0 + $0xe8] sm:$0xff]
  %v41 = vld [vmem:[%s0 + $0xf0] sm:$0xff]
  %v42 = vld [vmem:[%s0 + $0xf8] sm:$0xff]
  %v43 = vld [vmem:[%s0 + $0x100] sm:$0xff]
  %v44 = vld [vmem:[%s0 + $0x108] sm:$0xff]
  %v45 = vld [vmem:[%s0 + $0x110] sm:$0xff]
  %v46 = vld [vmem:[%s0 + $0x118] sm:$0xff]
  %v47 = vld [vmem:[%s0 + $0x120] sm:$0xff]
  %v48 = vld [vmem:[%s0 + $0x128] sm:$0xff]
  %v49 = vld [vmem:[%s0 + $0x130] sm:$0xff]
  %v50 = vld [vmem:[%s0 + $0x138] sm:$0xff]
  %v51 = vld [vmem:[%s0 + $0x140] sm:$0xff]
  %v52 = vld [vmem:[%s0 + $0x148] sm:$0xff]
  %v53 = vld [vmem:[%s0 + $0x150] sm:$0xff]
  %v54 = vld [vmem:[%s0 + $0x158] sm:$0xff]
  %v55 = vld [vmem:[%s0 + $0x160] sm:$0xff]
  %v56 = vld [vmem:[%s0 + $0x168] sm:$0xff]
  %v57 = vld [vmem:[%s0 + $0x170] sm:$0xff]
  %v58 = vld [vmem:[%s0 + $0x178] sm:$0xff]
  %v59 = vld [vmem:[%s0 + $0x180] sm:$0xff]
  %v60 = vld [vmem:[%s0 + $0x188] sm:$0xff]
  %v61 = vld [vmem:[%s0 + $0x190] sm:$0xff]
  %v62 = vld [vmem:[%s0 + $0x198] sm:$0xff]
  %v63 = vld [vmem:[%s0 + $0x1a0] sm:$0xff]
  %v64 = vld [vmem:[%s0 + $0x1a8] sm:$0xff]
  %v65 = vld [vmem:[%s0 + $0x1b0] sm:$0xff]
  %v66 = vld [vmem:[%s0 + $0x1b8] sm:$0xff]
  %v67 = vld [vmem:[%s0 + $0x1c0] sm:$0xff]
  %v68 = vld [vmem:[%s0 + $0x1c8] sm:$0xff]
  %v69 = vld [vmem:[%s0 + $0x1d0] sm:$0xff]
  %v70 = vld [vmem:[%s0 + $0x1d8] sm:$0xff]
  %v71 = vld [vmem:[%s0 + $0x1e0] sm:$0xff]
  %v72 = vld [vmem:[%s0 + $0x1e8] sm:$0xff]
  %v73 = vld [vmem:[%s0 + $0x1f0] sm:$0xff]
  %v74 = vld [vmem:[%s0 + $0x1f8] sm:$0xff]
  %v75 = vld [vmem:[%s0 + $0x200] sm:$0xff]
  %v76 = vld [vmem:[%s0 + $0x208] sm:$0xff]
  %v77 = vld [vmem:[%s0 + $0x210] sm:$0xff]
  %v78 = vld [vmem:[%s0 + $0x218] sm:$0xff]
  %v79 = vld [vmem:[%s0 + $0x220] sm:$0xff]
  %v80 = vld [vmem:[%s0 + $0x228] sm:$0xff]
  %v81 = vld [vmem:[%s0 + $0x230] sm:$0xff]
  %v82 = vld [vmem:[%s0 + $0x238] sm:$0xff]
  %v83 = vld [vmem:[%s0 + $0x240] sm:$0xff]
  %v84 = vld [vmem:[%s0 + $0x248] sm:$0xff]
  %v85 = vld [vmem:[%s0 + $0x250] sm:$0xff]
  %v86 = vld [vmem:[%s0 + $0x258] sm:$0xff]
  %v87 = vld [vmem:[%s0 + $0x260] sm:$0xff]
  %v88 = vld [vmem:[%s0 + $0x268] sm:$0xff]
  %v89 = vld [vmem:[%s0 + $0x270] sm:$0xff]
  %v90 = vld [vmem:[%s0 + $0x278] sm:$0xff]
  %v91 = vld [vmem:[%s0 + $0x280] sm:$0xff]
  %v92 = vld [vmem:[%s0 + $0x288] sm:$0xff]
  %v93 = vld [vmem:[%s0 + $0x290] sm:$0xff]
  %v94 = vld [vmem:[%s0 + $0x298] sm:$0xff]
  %v95 = vld [vmem:[%s0 + $0x2a0] sm:$0xff]
  %v96 = vld [vmem:[%s0 + $0x2a8] sm:$0xff]
  %v97 = vld [vmem:[%s0 + $0x2b0] sm:$0xff]
  %v98 = vld [vmem:[%s0 + $0x2b8] sm:$0xff]
  %v99 = vld [vmem:[%s0 + $0x2c0] sm:$0xff]
  %v100 = vld [vmem:[%s0 + $0x2c8] sm:$0xff]
  %v101 = vld [vmem:[%s0 + $0x2d0] sm:$0xff]
  %v102 = vld [vmem:[%s0 + $0x2d8] sm:$0xff]
  %v103 = vld [vmem:[%s0 + $0x2e0] sm:$0xff]
  %v104 = vld [vmem:[%s0 + $0x2e8] sm:$0xff]
  %v105 = vld [vmem:[%s0 + $0x2f0] sm:$0xff]
  %v106 = vld [vmem:[%s0 + $0x2f8] sm:$0xff]
  %v107 = vld [vmem:[%s0 + $0x300] sm:$0xff]
  %v108 = vld [vmem:[%s0 + $0x308] sm:$0xff]
  %v109 = vld [vmem:[%s0 + $0x310] sm:$0xff]
  %v110 = vld [vmem:[%s0 + $0x318] sm:$0xff]
  %v111 = vld [vmem:[%s0 + $0x320] sm:$0xff]
  %v112 = vld [vmem:[%s0 + $0x328] sm:$0xff]
  %v113 = vld [vmem:[%s0 + $0x330] sm:$0xff]
  %v114 = vld [vmem:[%s0 + $0x338] sm:$0xff]
  %v115 = vld [vmem:[%s0 + $0x340] sm:$0xff]
  %v116 = vld [vmem:[%s0 + $0x348] sm:$0xff]
  %v117 = vld [vmem:[%s0 + $0x350] sm:$0xff]
  %v118 = vld [vmem:[%s0 + $0x358] sm:$0xff]
  %v119 = vld [vmem:[%s0 + $0x360] sm:$0xff]
  %v120 = vld [vmem:[%s0 + $0x368] sm:$0xff]
  %v121 = vld [vmem:[%s0 + $0x370] sm:$0xff]
  %v122 = vld [vmem:[%s0 + $0x378] sm:$0xff]
  %v123 = vld [vmem:[%s0 + $0x380] sm:$0xff]
  %v124 = vld [vmem:[%s0 + $0x388] sm:$0xff]
  %v125 = vld [vmem:[%s0 + $0x390] sm:$0xff]
  %v126 = vld [vmem:[%s0 + $0x398] sm:$0xff]
  %v127 = vld [vmem:[%s0 + $0x3a0] sm:$0xff]
  %v128 = vld [vmem:[%s0 + $0x3a8] sm:$0xff]
  %v129 = vld [vmem:[%s0 + $0x3b0] sm:$0xff]
  %v130 = vld [vmem:[%s0 + $0x3b8] sm:$0xff]
  %v131 = vld [vmem:[%s0 + $0x3c0] sm:$0xff]
  %v132 = vld [vmem:[%s0 + $0x3c8] sm:$0xff]
  %v133 = vld [vmem:[%s0 + $0x3d0] sm:$0xff]
  %v134 = vld [vmem:[%s0 + $0x3d8] sm:$0xff]
  %v135 = vld [vmem:[%s0 + $0x3e0] sm:$0xff]
  %v136 = vld [vmem:[%s0 + $0x3e8] sm:$0xff]
  %v137 = vld [vmem:[%s0 + $0x3f0] sm:$0xff]
  %v138 = vld [vmem:[%s0 + $0x3f8] sm:$0xff]
  %v139 = vld [vmem:[%s1] sm:$0xff]
  %v140 = vld [vmem:[%s1 + $0x8] sm:$0xff]
  %v141 = vld [vmem:[%s1 + $0x10] sm:$0xff]
  %v142 = vld [vmem:[%s1 + $0x18] sm:$0xff]
  %v143 = vld [vmem:[%s1 + $0x20] sm:$0xff]
  %v144 = vld [vmem:[%s1 + $0x28] sm:$0xff]
  %v145 = vld [vmem:[%s1 + $0x30] sm:$0xff]
  %v146 = vld [vmem:[%s1 + $0x38] sm:$0xff]
  %v147 = vld [vmem:[%s1 + $0x40] sm:$0xff]
  %v148 = vld [vmem:[%s1 + $0x48] sm:$0xff]
  %v149 = vld [vmem:[%s1 + $0x50] sm:$0xff]
  %v150 = vld [vmem:[%s1 + $0x58] sm:$0xff]
  %v151 = vld [vmem:[%s1 + $0x60] sm:$0xff]
  %v152 = vld [vmem:[%s1 + $0x68] sm:$0xff]
  %v153 = vld [vmem:[%s1 + $0x70] sm:$0xff]
  %v154 = vld [vmem:[%s1 + $0x78] sm:$0xff]
  %v155 = vld [vmem:[%s1 + $0x80] sm:$0xff]
  %v156 = vld [vmem:[%s1 + $0x88] sm:$0xff]
  %v157 = vld [vmem:[%s1 + $0x90] sm:$0xff]
  %v158 = vld [vmem:[%s1 + $0x98] sm:$0xff]
  %v159 = vld [vmem:[%s1 + $0xa0] sm:$0xff]
  %v160 = vld [vmem:[%s1 + $0xa8] sm:$0xff]
  %v161 = vld [vmem:[%s1 + $0xb0] sm:$0xff]
  %v162 = vld [vmem:[%s1 + $0xb8] sm:$0xff]
  %v163 = vld [vmem:[%s1 + $0xc0] sm:$0xff]
  %v164 = vld [vmem:[%s1 + $0xc8] sm:$0xff]
  %v165 = vld [vmem:[%s1 + $0xd0] sm:$0xff]
  %v166 = vld [vmem:[%s1 + $0xd8] sm:$0xff]
  %v167 = vld [vmem:[%s1 + $0xe0] sm:$0xff]
  %v168 = vld [vmem:[%s1 + $0xe8] sm:$0xff]
  %v169 = vld [vmem:[%s1 + $0xf0] sm:$0xff]
  %v170 = vld [vmem:[%s1 + $0xf8] sm:$0xff]
  %v171 = vld [vmem:[%s1 + $0x100] sm:$0xff]
  %v172 = vld [vmem:[%s1 + $0x108] sm:$0xff]
  %v173 = vld [vmem:[%s1 + $0x110] sm:$0xff]
  %v174 = vld [vmem:[%s1 + $0x118] sm:$0xff]
  %v175 = vld [vmem:[%s1 + $0x120] sm:$0xff]
  %v176 = vld [vmem:[%s1 + $0x128] sm:$0xff]
  %v177 = vld [vmem:[%s1 + $0x130] sm:$0xff]
  %v178 = vld [vmem:[%s1 + $0x138] sm:$0xff]
  %v179 = vld [vmem:[%s1 + $0x140] sm:$0xff]
  %v180 = vld [vmem:[%s1 + $0x148] sm:$0xff]
  %v181 = vld [vmem:[%s1 + $0x150] sm:$0xff]
  %v182 = vld [vmem:[%s1 + $0x158] sm:$0xff]
  %v183 = vld [vmem:[%s1 + $0x160] sm:$0xff]
  %v184 = vld [vmem:[%s1 + $0x168] sm:$0xff]
  %v185 = vld [vmem:[%s1 + $0x170] sm:$0xff]
  %v186 = vld [vmem:[%s1 + $0x178] sm:$0xff]
  %v187 = vld [vmem:[%s1 + $0x180] sm:$0xff]
  %v188 = vld [vmem:[%s1 + $0x188] sm:$0xff]
  %v189 = vld [vmem:[%s1 + $0x190] sm:$0xff]
  %v190 = vld [vmem:[%s1 + $0x198] sm:$0xff]
  %v191 = vld [vmem:[%s1 + $0x1a0] sm:$0xff]
  %v192 = vld [vmem:[%s1 + $0x1a8] sm:$0xff]
  %v193 = vld [vmem:[%s1 + $0x1b0] sm:$0xff]
  %v194 = vld [vmem:[%s1 + $0x1b8] sm:$0xff]
  %v195 = vld [vmem:[%s1 + $0x1c0] sm:$0xff]
  %v196 = vld [vmem:[%s1 + $0x1c8] sm:$0xff]
  %v197 = vld [vmem:[%s1 + $0x1d0] sm:$0xff]
  %v198 = vld [vmem:[%s1 + $0x1d8] sm:$0xff]
  %v199 = vld [vmem:[%s1 + $0x1e0] sm:$0xff]
  %v200 = vld [vmem:[%s1 + $0x1e8] sm:$0xff]
  %v201 = vld [vmem:[%s1 + $0x1f0] sm:$0xff]
  %v202 = vld [vmem:[%s1 + $0x1f8] sm:$0xff]
  %v203 = vld [vmem:[%s1 + $0x200] sm:$0xff]
  %v204 = vld [vmem:[%s1 + $0x208] sm:$0xff]
  %v205 = vld [vmem:[%s1 + $0x210] sm:$0xff]
  %v206 = vld [vmem:[%s1 + $0x218] sm:$0xff]
  %v207 = vld [vmem:[%s1 + $0x220] sm:$0xff]
  %v208 = vld [vmem:[%s1 + $0x228] sm:$0xff]
  %v209 = vld [vmem:[%s1 + $0x230] sm:$0xff]
  %v210 = vld [vmem:[%s1 + $0x238] sm:$0xff]
  %v211 = vld [vmem:[%s1 + $0x240] sm:$0xff]
  %v212 = vld [vmem:[%s1 + $0x248] sm:$0xff]
  %v213 = vld [vmem:[%s1 + $0x250] sm:$0xff]
  %v214 = vld [vmem:[%s1 + $0x258] sm:$0xff]
  %v215 = vld [vmem:[%s1 + $0x260] sm:$0xff]
  %v216 = vld [vmem:[%s1 + $0x268] sm:$0xff]
  %v217 = vld [vmem:[%s1 + $0x270] sm:$0xff]
  %v218 = vld [vmem:[%s1 + $0x278] sm:$0xff]
  %v219 = vld [vmem:[%s1 + $0x280] sm:$0xff]
  %v220 = vld [vmem:[%s1 + $0x288] sm:$0xff]
  %v221 = vld [vmem:[%s1 + $0x290] sm:$0xff]
  %v222 = vld [vmem:[%s1 + $0x298] sm:$0xff]
  %v223 = vld [vmem:[%s1 + $0x2a0] sm:$0xff]
  %v224 = vld [vmem:[%s1 + $0x2a8] sm:$0xff]
  %v225 = vld [vmem:[%s1 + $0x2b0] sm:$0xff]
  %v226 = vld [vmem:[%s1 + $0x2b8] sm:$0xff]
  %v227 = vld [vmem:[%s1 + $0x2c0] sm:$0xff]
  %v228 = vld [vmem:[%s1 + $0x2c8] sm:$0xff]
  %v229 = vld [vmem:[%s1 + $0x2d0] sm:$0xff]
  %v230 = vld [vmem:[%s1 + $0x2d8] sm:$0xff]
  %v231 = vld [vmem:[%s1 + $0x2e0] sm:$0xff]
  %v232 = vld [vmem:[%s1 + $0x2e8] sm:$0xff]
  %v233 = vld [vmem:[%s1 + $0x2f0] sm:$0xff]
  %v234 = vld [vmem:[%s1 + $0x2f8] sm:$0xff]
  %v235 = vld [vmem:[%s1 + $0x300] sm:$0xff]
  %v236 = vld [vmem:[%s1 + $0x308] sm:$0xff]
  %v237 = vld [vmem:[%s1 + $0x310] sm:$0xff]
  %v238 = vld [vmem:[%s1 + $0x318] sm:$0xff]
  %v239 = vld [vmem:[%s1 + $0x320] sm:$0xff]
  %v240 = vld [vmem:[%s1 + $0x328] sm:$0xff]
  %v241 = vld [vmem:[%s1 + $0x330] sm:$0xff]
  %v242 = vld [vmem:[%s1 + $0x338] sm:$0xff]
  %v243 = vld [vmem:[%s1 + $0x340] sm:$0xff]
  %v244 = vld [vmem:[%s1 + $0x348] sm:$0xff]
  %v245 = vld [vmem:[%s1 + $0x350] sm:$0xff]
  %v246 = vld [vmem:[%s1 + $0x358] sm:$0xff]
  %v247 = vld [vmem:[%s1 + $0x360] sm:$0xff]
  %v248 = vld [vmem:[%s1 + $0x368] sm:$0xff]
  %v249 = vld [vmem:[%s1 + $0x370] sm:$0xff]
  %v250 = vld [vmem:[%s1 + $0x378] sm:$0xff]
  %v251 = vld [vmem:[%s1 + $0x380] sm:$0xff]
  %v252 = vld [vmem:[%s1 + $0x388] sm:$0xff]
  %v253 = vld [vmem:[%s1 + $0x390] sm:$0xff]
  %v254 = vld [vmem:[%s1 + $0x398] sm:$0xff]
  %v255 = vld [vmem:[%s1 + $0x3a0] sm:$0xff]
  %v256 = vld [vmem:[%s1 + $0x3a8] sm:$0xff]
  %v257 = vld [vmem:[%s1 + $0x3b0] sm:$0xff]
  %v258 = vld [vmem:[%s1 + $0x3b8] sm:$0xff]
  %v259 = vld [vmem:[%s1 + $0x3c0] sm:$0xff]
  %v260 = vld [vmem:[%s1 + $0x3c8] sm:$0xff]
  %v261 = vld [vmem:[%s1 + $0x3d0] sm:$0xff]
  %v262 = vld [vmem:[%s1 + $0x3d8] sm:$0xff]
  %v263 = vld [vmem:[%s1 + $0x3e0] sm:$0xff]
  %v264 = vld [vmem:[%s1 + $0x3e8] sm:$0xff]
  %v265 = vld [vmem:[%s1 + $0x3f0] sm:$0xff]
  %v266 = vld [vmem:[%s1 + $0x3f8] sm:$0xff]
  %v267 = vld [vmem:[%s1 + $0x400] sm:$0xff]
  %v268 = vld [vmem:[%s1 + $0x408] sm:$0xff]
  %v269 = vld [vmem:[%s1 + $0x410] sm:$0xff]
  %v270 = vld [vmem:[%s1 + $0x418] sm:$0xff]
  %v271 = vld [vmem:[%s1 + $0x420] sm:$0xff]
  %v272 = vld [vmem:[%s1 + $0x428] sm:$0xff]
  %v273 = vld [vmem:[%s1 + $0x430] sm:$0xff]
  %v274 = vld [vmem:[%s1 + $0x438] sm:$0xff]
  %v275 = vld [vmem:[%s1 + $0x440] sm:$0xff]
  %v276 = vld [vmem:[%s1 + $0x448] sm:$0xff]
  %v277 = vld [vmem:[%s1 + $0x450] sm:$0xff]
  %v278 = vld [vmem:[%s1 + $0x458] sm:$0xff]
  %v279 = vld [vmem:[%s1 + $0x460] sm:$0xff]
  %v280 = vld [vmem:[%s1 + $0x468] sm:$0xff]
  %v281 = vld [vmem:[%s1 + $0x470] sm:$0xff]
  %v282 = vld [vmem:[%s1 + $0x478] sm:$0xff]
  %v283 = vld [vmem:[%s1 + $0x480] sm:$0xff]
  %v284 = vld [vmem:[%s1 + $0x488] sm:$0xff]
  %v285 = vld [vmem:[%s1 + $0x490] sm:$0xff]
  %v286 = vld [vmem:[%s1 + $0x498] sm:$0xff]
  %v287 = vld [vmem:[%s1 + $0x4a0] sm:$0xff]
  %v288 = vld [vmem:[%s1 + $0x4a8] sm:$0xff]
  %v289 = vld [vmem:[%s1 + $0x4b0] sm:$0xff]
  %v290 = vld [vmem:[%s1 + $0x4b8] sm:$0xff]
  %v291 = vld [vmem:[%s1 + $0x4c0] sm:$0xff]
  %v292 = vld [vmem:[%s1 + $0x4c8] sm:$0xff]
  %v293 = vld [vmem:[%s1 + $0x4d0] sm:$0xff]
  %v294 = vld [vmem:[%s1 + $0x4d8] sm:$0xff]
  %v295 = vld [vmem:[%s1 + $0x4e0] sm:$0xff]
  %v296 = vld [vmem:[%s1 + $0x4e8] sm:$0xff]
  %v297 = vld [vmem:[%s1 + $0x4f0] sm:$0xff]
  %v298 = vld [vmem:[%s1 + $0x4f8] sm:$0xff]
  %v299 = vld [vmem:[%s1 + $0x500] sm:$0xff]
  %v300 = vld [vmem:[%s1 + $0x508] sm:$0xff]
  %v301 = vld [vmem:[%s1 + $0x510] sm:$0xff]
  %v302 = vld [vmem:[%s1 + $0x518] sm:$0xff]
  %v303 = vld [vmem:[%s1 + $0x520] sm:$0xff]
  %v304 = vld [vmem:[%s1 + $0x528] sm:$0xff]
  %v305 = vld [vmem:[%s1 + $0x530] sm:$0xff]
  %v306 = vld [vmem:[%s1 + $0x538] sm:$0xff]
  %v307 = vld [vmem:[%s1 + $0x540] sm:$0xff]
  %v308 = vld [vmem:[%s1 + $0x548] sm:$0xff]
  %v309 = vld [vmem:[%s1 + $0x550] sm:$0xff]
  %v310 = vld [vmem:[%s1 + $0x558] sm:$0xff]
  %v311 = vld [vmem:[%s1 + $0x560] sm:$0xff]
  %v312 = vld [vmem:[%s1 + $0x568] sm:$0xff]
  %v313 = vld [vmem:[%s1 + $0x570] sm:$0xff]
  %v314 = vld [vmem:[%s1 + $0x578] sm:$0xff]
  %v315 = vld [vmem:[%s1 + $0x580] sm:$0xff]
  %v316 = vld [vmem:[%s1 + $0x588] sm:$0xff]
  %v317 = vld [vmem:[%s1 + $0x590] sm:$0xff]
  %v318 = vld [vmem:[%s1 + $0x598] sm:$0xff]
  %v319 = vld [vmem:[%s1 + $0x5a0] sm:$0xff]
  %v320 = vld [vmem:[%s1 + $0x5a8] sm:$0xff]
  %v321 = vld [vmem:[%s1 + $0x5b0] sm:$0xff]
  %v322 = vld [vmem:[%s1 + $0x5b8] sm:$0xff]
  %v323 = vld [vmem:[%s1 + $0x5c0] sm:$0xff]
  %v324 = vld [vmem:[%s1 + $0x5c8] sm:$0xff]
  %v325 = vld [vmem:[%s1 + $0x5d0] sm:$0xff]
  %v326 = vld [vmem:[%s1 + $0x5d8] sm:$0xff]
  %v327 = vld [vmem:[%s1 + $0x5e0] sm:$0xff]
  %v328 = vld [vmem:[%s1 + $0x5e8] sm:$0xff]
  %v329 = vld [vmem:[%s1 + $0x5f0] sm:$0xff]
  %v330 = vld [vmem:[%s1 + $0x5f8] sm:$0xff]
  %v331 = vld [vmem:[%s1 + $0x600] sm:$0xff]
  %v332 = vld [vmem:[%s1 + $0x608] sm:$0xff]
  %v333 = vld [vmem:[%s1 + $0x610] sm:$0xff]
  %v334 = vld [vmem:[%s1 + $0x618] sm:$0xff]
  %v335 = vld [vmem:[%s1 + $0x620] sm:$0xff]
  %v336 = vld [vmem:[%s1 + $0x628] sm:$0xff]
  %v337 = vld [vmem:[%s1 + $0x630] sm:$0xff]
  %v338 = vld [vmem:[%s1 + $0x638] sm:$0xff]
  %v339 = vld [vmem:[%s1 + $0x640] sm:$0xff]
  %v340 = vld [vmem:[%s1 + $0x648] sm:$0xff]
  %v341 = vld [vmem:[%s1 + $0x650] sm:$0xff]
  %v342 = vld [vmem:[%s1 + $0x658] sm:$0xff]
  %v343 = vld [vmem:[%s1 + $0x660] sm:$0xff]
  %v344 = vld [vmem:[%s1 + $0x668] sm:$0xff]
  %v345 = vld [vmem:[%s1 + $0x670] sm:$0xff]
  %v346 = vld [vmem:[%s1 + $0x678] sm:$0xff]
  %v347 = vld [vmem:[%s1 + $0x680] sm:$0xff]
  %v348 = vld [vmem:[%s1 + $0x688] sm:$0xff]
  %v349 = vld [vmem:[%s1 + $0x690] sm:$0xff]
  %v350 = vld [vmem:[%s1 + $0x698] sm:$0xff]
  %v351 = vld [vmem:[%s1 + $0x6a0] sm:$0xff]
  %v352 = vld [vmem:[%s1 + $0x6a8] sm:$0xff]
  %v353 = vld [vmem:[%s1 + $0x6b0] sm:$0xff]
  %v354 = vld [vmem:[%s1 + $0x6b8] sm:$0xff]
  %v355 = vld [vmem:[%s1 + $0x6c0] sm:$0xff]
  %v356 = vld [vmem:[%s1 + $0x6c8] sm:$0xff]
  %v357 = vld [vmem:[%s1 + $0x6d0] sm:$0xff]
  %v358 = vld [vmem:[%s1 + $0x6d8] sm:$0xff]
  %v359 = vld [vmem:[%s1 + $0x6e0] sm:$0xff]
  %v360 = vld [vmem:[%s1 + $0x6e8] sm:$0xff]
  %v361 = vld [vmem:[%s1 + $0x6f0] sm:$0xff]
  %v362 = vld [vmem:[%s1 + $0x6f8] sm:$0xff]
  %v363 = vld [vmem:[%s1 + $0x700] sm:$0xff]
  %v364 = vld [vmem:[%s1 + $0x708] sm:$0xff]
  %v365 = vld [vmem:[%s1 + $0x710] sm:$0xff]
  %v366 = vld [vmem:[%s1 + $0x718] sm:$0xff]
  %v367 = vld [vmem:[%s1 + $0x720] sm:$0xff]
  %v368 = vld [vmem:[%s1 + $0x728] sm:$0xff]
  %v369 = vld [vmem:[%s1 + $0x730] sm:$0xff]
  %v370 = vld [vmem:[%s1 + $0x738] sm:$0xff]
  %v371 = vld [vmem:[%s1 + $0x740] sm:$0xff]
  %v372 = vld [vmem:[%s1 + $0x748] sm:$0xff]
  %v373 = vld [vmem:[%s1 + $0x750] sm:$0xff]
  %v374 = vld [vmem:[%s1 + $0x758] sm:$0xff]
  %v375 = vld [vmem:[%s1 + $0x760] sm:$0xff]
  %v376 = vld [vmem:[%s1 + $0x768] sm:$0xff]
  %v377 = vld [vmem:[%s1 + $0x770] sm:$0xff]
  %v378 = vld [vmem:[%s1 + $0x778] sm:$0xff]
  %v379 = vld [vmem:[%s1 + $0x780] sm:$0xff]
  %v380 = vld [vmem:[%s1 + $0x788] sm:$0xff]
  %v381 = vld [vmem:[%s1 + $0x790] sm:$0xff]
  %v382 = vld [vmem:[%s1 + $0x798] sm:$0xff]
  %v383 = vld [vmem:[%s1 + $0x7a0] sm:$0xff]
  %v384 = vld [vmem:[%s1 + $0x7a8] sm:$0xff]
  %v385 = vld [vmem:[%s1 + $0x7b0] sm:$0xff]
  %v386 = vld [vmem:[%s1 + $0x7b8] sm:$0xff]
  %v387 = vld [vmem:[%s1 + $0x7c0] sm:$0xff]
  %v388 = vld [vmem:[%s1 + $0x7c8] sm:$0xff]
  %v389 = vld [vmem:[%s1 + $0x7d0] sm:$0xff]
  %v390 = vld [vmem:[%s1 + $0x7d8] sm:$0xff]
  %v391 = vld [vmem:[%s1 + $0x7e0] sm:$0xff]
  %v392 = vld [vmem:[%s1 + $0x7e8] sm:$0xff]
  %v393 = vld [vmem:[%s1 + $0x7f0] sm:$0xff]
  %v394 = vld [vmem:[%s1 + $0x7f8] sm:$0xff]
  %v523 = vunpack.c.l.b16 %v11
  %v524 = vunpack.c.h.b16 %v11
  %v525 = vunpack.c.l.b16 %v12
  %v526 = vunpack.c.h.b16 %v12
  %v527 = vunpack.c.l.b16 %v13
  %v528 = vunpack.c.h.b16 %v13
  %v529 = vunpack.c.l.b16 %v14
  %v530 = vunpack.c.h.b16 %v14
  %v531 = vunpack.c.l.b16 %v15
  %v532 = vunpack.c.h.b16 %v15
  %v533 = vunpack.c.l.b16 %v16
  %v534 = vunpack.c.h.b16 %v16
  %v535 = vunpack.c.l.b16 %v17
  %v536 = vunpack.c.h.b16 %v17
  %v537 = vunpack.c.l.b16 %v18
  %v538 = vunpack.c.h.b16 %v18
  %v539 = vunpack.c.l.b16 %v19
  %v540 = vunpack.c.h.b16 %v19
  %v541 = vunpack.c.l.b16 %v20
  %v542 = vunpack.c.h.b16 %v20
  %v543 = vunpack.c.l.b16 %v21
  %v544 = vunpack.c.h.b16 %v21
  %v545 = vunpack.c.l.b16 %v22
  %v546 = vunpack.c.h.b16 %v22
  %v547 = vunpack.c.l.b16 %v23
  %v548 = vunpack.c.h.b16 %v23
  %v549 = vunpack.c.l.b16 %v24
  %v550 = vunpack.c.h.b16 %v24
  %v551 = vunpack.c.l.b16 %v25
  %v552 = vunpack.c.h.b16 %v25
  %v553 = vunpack.c.l.b16 %v26
  %v554 = vunpack.c.h.b16 %v26
  %v555 = vunpack.c.l.b16 %v27
  %v556 = vunpack.c.h.b16 %v27
  %v557 = vunpack.c.l.b16 %v28
  %v558 = vunpack.c.h.b16 %v28
  %v559 = vunpack.c.l.b16 %v29
  %v560 = vunpack.c.h.b16 %v29
  %v561 = vunpack.c.l.b16 %v30
  %v562 = vunpack.c.h.b16 %v30
  %v563 = vunpack.c.l.b16 %v31
  %v564 = vunpack.c.h.b16 %v31
  %v565 = vunpack.c.l.b16 %v32
  %v566 = vunpack.c.h.b16 %v32
  %v567 = vunpack.c.l.b16 %v33
  %v568 = vunpack.c.h.b16 %v33
  %v569 = vunpack.c.l.b16 %v34
  %v570 = vunpack.c.h.b16 %v34
  %v571 = vunpack.c.l.b16 %v35
  %v572 = vunpack.c.h.b16 %v35
  %v573 = vunpack.c.l.b16 %v36
  %v574 = vunpack.c.h.b16 %v36
  %v575 = vunpack.c.l.b16 %v37
  %v576 = vunpack.c.h.b16 %v37
  %v577 = vunpack.c.l.b16 %v38
  %v578 = vunpack.c.h.b16 %v38
  %v579 = vunpack.c.l.b16 %v39
  %v580 = vunpack.c.h.b16 %v39
  %v581 = vunpack.c.l.b16 %v40
  %v582 = vunpack.c.h.b16 %v40
  %v583 = vunpack.c.l.b16 %v41
  %v584 = vunpack.c.h.b16 %v41
  %v585 = vunpack.c.l.b16 %v42
  %v586 = vunpack.c.h.b16 %v42
  %v587 = vunpack.c.l.b16 %v43
  %v588 = vunpack.c.h.b16 %v43
  %v589 = vunpack.c.l.b16 %v44
  %v590 = vunpack.c.h.b16 %v44
  %v591 = vunpack.c.l.b16 %v45
  %v592 = vunpack.c.h.b16 %v45
  %v593 = vunpack.c.l.b16 %v46
  %v594 = vunpack.c.h.b16 %v46
  %v595 = vunpack.c.l.b16 %v47
  %v596 = vunpack.c.h.b16 %v47
  %v597 = vunpack.c.l.b16 %v48
  %v598 = vunpack.c.h.b16 %v48
  %v599 = vunpack.c.l.b16 %v49
  %v600 = vunpack.c.h.b16 %v49
  %v601 = vunpack.c.l.b16 %v50
  %v602 = vunpack.c.h.b16 %v50
  %v603 = vunpack.c.l.b16 %v51
  %v604 = vunpack.c.h.b16 %v51
  %v605 = vunpack.c.l.b16 %v52
  %v606 = vunpack.c.h.b16 %v52
  %v607 = vunpack.c.l.b16 %v53
  %v608 = vunpack.c.h.b16 %v53
  %v609 = vunpack.c.l.b16 %v54
  %v610 = vunpack.c.h.b16 %v54
  %v611 = vunpack.c.l.b16 %v55
  %v612 = vunpack.c.h.b16 %v55
  %v613 = vunpack.c.l.b16 %v56
  %v614 = vunpack.c.h.b16 %v56
  %v615 = vunpack.c.l.b16 %v57
  %v616 = vunpack.c.h.b16 %v57
  %v617 = vunpack.c.l.b16 %v58
  %v618 = vunpack.c.h.b16 %v58
  %v619 = vunpack.c.l.b16 %v59
  %v620 = vunpack.c.h.b16 %v59
  %v621 = vunpack.c.l.b16 %v60
  %v622 = vunpack.c.h.b16 %v60
  %v623 = vunpack.c.l.b16 %v61
  %v624 = vunpack.c.h.b16 %v61
  %v625 = vunpack.c.l.b16 %v62
  %v626 = vunpack.c.h.b16 %v62
  %v627 = vunpack.c.l.b16 %v63
  %v628 = vunpack.c.h.b16 %v63
  %v629 = vunpack.c.l.b16 %v64
  %v630 = vunpack.c.h.b16 %v64
  %v631 = vunpack.c.l.b16 %v65
  %v632 = vunpack.c.h.b16 %v65
  %v633 = vunpack.c.l.b16 %v66
  %v634 = vunpack.c.h.b16 %v66
  %v635 = vunpack.c.l.b16 %v67
  %v636 = vunpack.c.h.b16 %v67
  %v637 = vunpack.c.l.b16 %v68
  %v638 = vunpack.c.h.b16 %v68
  %v639 = vunpack.c.l.b16 %v69
  %v640 = vunpack.c.h.b16 %v69
  %v641 = vunpack.c.l.b16 %v70
  %v642 = vunpack.c.h.b16 %v70
  %v643 = vunpack.c.l.b16 %v71
  %v644 = vunpack.c.h.b16 %v71
  %v645 = vunpack.c.l.b16 %v72
  %v646 = vunpack.c.h.b16 %v72
  %v647 = vunpack.c.l.b16 %v73
  %v648 = vunpack.c.h.b16 %v73
  %v649 = vunpack.c.l.b16 %v74
  %v650 = vunpack.c.h.b16 %v74
  %v651 = vunpack.c.l.b16 %v75
  %v652 = vunpack.c.h.b16 %v75
  %v653 = vunpack.c.l.b16 %v76
  %v654 = vunpack.c.h.b16 %v76
  %v655 = vunpack.c.l.b16 %v77
  %v656 = vunpack.c.h.b16 %v77
  %v657 = vunpack.c.l.b16 %v78
  %v658 = vunpack.c.h.b16 %v78
  %v659 = vunpack.c.l.b16 %v79
  %v660 = vunpack.c.h.b16 %v79
  %v661 = vunpack.c.l.b16 %v80
  %v662 = vunpack.c.h.b16 %v80
  %v663 = vunpack.c.l.b16 %v81
  %v664 = vunpack.c.h.b16 %v81
  %v665 = vunpack.c.l.b16 %v82
  %v666 = vunpack.c.h.b16 %v82
  %v667 = vunpack.c.l.b16 %v83
  %v668 = vunpack.c.h.b16 %v83
  %v669 = vunpack.c.l.b16 %v84
  %v670 = vunpack.c.h.b16 %v84
  %v671 = vunpack.c.l.b16 %v85
  %v672 = vunpack.c.h.b16 %v85
  %v673 = vunpack.c.l.b16 %v86
  %v674 = vunpack.c.h.b16 %v86
  %v675 = vunpack.c.l.b16 %v87
  %v676 = vunpack.c.h.b16 %v87
  %v677 = vunpack.c.l.b16 %v88
  %v678 = vunpack.c.h.b16 %v88
  %v679 = vunpack.c.l.b16 %v89
  %v680 = vunpack.c.h.b16 %v89
  %v681 = vunpack.c.l.b16 %v90
  %v682 = vunpack.c.h.b16 %v90
  %v683 = vunpack.c.l.b16 %v91
  %v684 = vunpack.c.h.b16 %v91
  %v685 = vunpack.c.l.b16 %v92
  %v686 = vunpack.c.h.b16 %v92
  %v687 = vunpack.c.l.b16 %v93
  %v688 = vunpack.c.h.b16 %v93
  %v689 = vunpack.c.l.b16 %v94
  %v690 = vunpack.c.h.b16 %v94
  %v691 = vunpack.c.l.b16 %v95
  %v692 = vunpack.c.h.b16 %v95
  %v693 = vunpack.c.l.b16 %v96
  %v694 = vunpack.c.h.b16 %v96
  %v695 = vunpack.c.l.b16 %v97
  %v696 = vunpack.c.h.b16 %v97
  %v697 = vunpack.c.l.b16 %v98
  %v698 = vunpack.c.h.b16 %v98
  %v699 = vunpack.c.l.b16 %v99
  %v700 = vunpack.c.h.b16 %v99
  %v701 = vunpack.c.l.b16 %v100
  %v702 = vunpack.c.h.b16 %v100
  %v703 = vunpack.c.l.b16 %v101
  %v704 = vunpack.c.h.b16 %v101
  %v705 = vunpack.c.l.b16 %v102
  %v706 = vunpack.c.h.b16 %v102
  %v707 = vunpack.c.l.b16 %v103
  %v708 = vunpack.c.h.b16 %v103
  %v709 = vunpack.c.l.b16 %v104
  %v710 = vunpack.c.h.b16 %v104
  %v711 = vunpack.c.l.b16 %v105
  %v712 = vunpack.c.h.b16 %v105
  %v713 = vunpack.c.l.b16 %v106
  %v714 = vunpack.c.h.b16 %v106
  %v715 = vunpack.c.l.b16 %v107
  %v716 = vunpack.c.h.b16 %v107
  %v717 = vunpack.c.l.b16 %v108
  %v718 = vunpack.c.h.b16 %v108
  %v719 = vunpack.c.l.b16 %v109
  %v720 = vunpack.c.h.b16 %v109
  %v721 = vunpack.c.l.b16 %v110
  %v722 = vunpack.c.h.b16 %v110
  %v723 = vunpack.c.l.b16 %v111
  %v724 = vunpack.c.h.b16 %v111
  %v725 = vunpack.c.l.b16 %v112
  %v726 = vunpack.c.h.b16 %v112
  %v727 = vunpack.c.l.b16 %v113
  %v728 = vunpack.c.h.b16 %v113
  %v729 = vunpack.c.l.b16 %v114
  %v730 = vunpack.c.h.b16 %v114
  %v731 = vunpack.c.l.b16 %v115
  %v732 = vunpack.c.h.b16 %v115
  %v733 = vunpack.c.l.b16 %v116
  %v734 = vunpack.c.h.b16 %v116
  %v735 = vunpack.c.l.b16 %v117
  %v736 = vunpack.c.h.b16 %v117
  %v737 = vunpack.c.l.b16 %v118
  %v738 = vunpack.c.h.b16 %v118
  %v739 = vunpack.c.l.b16 %v119
  %v740 = vunpack.c.h.b16 %v119
  %v741 = vunpack.c.l.b16 %v120
  %v742 = vunpack.c.h.b16 %v120
  %v743 = vunpack.c.l.b16 %v121
  %v744 = vunpack.c.h.b16 %v121
  %v745 = vunpack.c.l.b16 %v122
  %v746 = vunpack.c.h.b16 %v122
  %v747 = vunpack.c.l.b16 %v123
  %v748 = vunpack.c.h.b16 %v123
  %v749 = vunpack.c.l.b16 %v124
  %v750 = vunpack.c.h.b16 %v124
  %v751 = vunpack.c.l.b16 %v125
  %v752 = vunpack.c.h.b16 %v125
  %v753 = vunpack.c.l.b16 %v126
  %v754 = vunpack.c.h.b16 %v126
  %v755 = vunpack.c.l.b16 %v127
  %v756 = vunpack.c.h.b16 %v127
  %v757 = vunpack.c.l.b16 %v128
  %v758 = vunpack.c.h.b16 %v128
  %v759 = vunpack.c.l.b16 %v129
  %v760 = vunpack.c.h.b16 %v129
  %v761 = vunpack.c.l.b16 %v130
  %v762 = vunpack.c.h.b16 %v130
  %v763 = vunpack.c.l.b16 %v131
  %v764 = vunpack.c.h.b16 %v131
  %v765 = vunpack.c.l.b16 %v132
  %v766 = vunpack.c.h.b16 %v132
  %v767 = vunpack.c.l.b16 %v133
  %v768 = vunpack.c.h.b16 %v133
  %v769 = vunpack.c.l.b16 %v134
  %v770 = vunpack.c.h.b16 %v134
  %v771 = vunpack.c.l.b16 %v135
  %v772 = vunpack.c.h.b16 %v135
  %v773 = vunpack.c.l.b16 %v136
  %v774 = vunpack.c.h.b16 %v136
  %v775 = vunpack.c.l.b16 %v137
  %v776 = vunpack.c.h.b16 %v137
  %v777 = vunpack.c.l.b16 %v138
  %v778 = vunpack.c.h.b16 %v138
  %v779 = vpack.c.b16 %v531, %v523
  %v780 = vpack.c.b16 %v532, %v524
  %v781 = vpack.c.b16 %v533, %v525
  %v782 = vpack.c.b16 %v534, %v526
  %v783 = vpack.c.b16 %v535, %v527
  %v784 = vpack.c.b16 %v536, %v528
  %v785 = vpack.c.b16 %v537, %v529
  %v786 = vpack.c.b16 %v538, %v530
  %v787 = vpack.c.b16 %v547, %v539
  %v788 = vpack.c.b16 %v548, %v540
  %v789 = vpack.c.b16 %v549, %v541
  %v790 = vpack.c.b16 %v550, %v542
  %v791 = vpack.c.b16 %v551, %v543
  %v792 = vpack.c.b16 %v552, %v544
  %v793 = vpack.c.b16 %v553, %v545
  %v794 = vpack.c.b16 %v554, %v546
  %v795 = vpack.c.b16 %v563, %v555
  %v796 = vpack.c.b16 %v564, %v556
  %v797 = vpack.c.b16 %v565, %v557
  %v798 = vpack.c.b16 %v566, %v558
  %v799 = vpack.c.b16 %v567, %v559
  %v800 = vpack.c.b16 %v568, %v560
  %v801 = vpack.c.b16 %v569, %v561
  %v802 = vpack.c.b16 %v570, %v562
  %v803 = vpack.c.b16 %v579, %v571
  %v804 = vpack.c.b16 %v580, %v572
  %v805 = vpack.c.b16 %v581, %v573
  %v806 = vpack.c.b16 %v582, %v574
  %v807 = vpack.c.b16 %v583, %v575
  %v808 = vpack.c.b16 %v584, %v576
  %v809 = vpack.c.b16 %v585, %v577
  %v810 = vpack.c.b16 %v586, %v578
  %v811 = vpack.c.b16 %v595, %v587
  %v812 = vpack.c.b16 %v596, %v588
  %v813 = vpack.c.b16 %v597, %v589
  %v814 = vpack.c.b16 %v598, %v590
  %v815 = vpack.c.b16 %v599, %v591
  %v816 = vpack.c.b16 %v600, %v592
  %v817 = vpack.c.b16 %v601, %v593
  %v818 = vpack.c.b16 %v602, %v594
  %v819 = vpack.c.b16 %v611, %v603
  %v820 = vpack.c.b16 %v612, %v604
  %v821 = vpack.c.b16 %v613, %v605
  %v822 = vpack.c.b16 %v614, %v606
  %v823 = vpack.c.b16 %v615, %v607
  %v824 = vpack.c.b16 %v616, %v608
  %v825 = vpack.c.b16 %v617, %v609
  %v826 = vpack.c.b16 %v618, %v610
  %v827 = vpack.c.b16 %v627, %v619
  %v828 = vpack.c.b16 %v628, %v620
  %v829 = vpack.c.b16 %v629, %v621
  %v830 = vpack.c.b16 %v630, %v622
  %v831 = vpack.c.b16 %v631, %v623
  %v832 = vpack.c.b16 %v632, %v624
  %v833 = vpack.c.b16 %v633, %v625
  %v834 = vpack.c.b16 %v634, %v626
  %v835 = vpack.c.b16 %v643, %v635
  %v836 = vpack.c.b16 %v644, %v636
  %v837 = vpack.c.b16 %v645, %v637
  %v838 = vpack.c.b16 %v646, %v638
  %v839 = vpack.c.b16 %v647, %v639
  %v840 = vpack.c.b16 %v648, %v640
  %v841 = vpack.c.b16 %v649, %v641
  %v842 = vpack.c.b16 %v650, %v642
  %v843 = vpack.c.b16 %v659, %v651
  %v844 = vpack.c.b16 %v660, %v652
  %v845 = vpack.c.b16 %v661, %v653
  %v846 = vpack.c.b16 %v662, %v654
  %v847 = vpack.c.b16 %v663, %v655
  %v848 = vpack.c.b16 %v664, %v656
  %v849 = vpack.c.b16 %v665, %v657
  %v850 = vpack.c.b16 %v666, %v658
  %v851 = vpack.c.b16 %v675, %v667
  %v852 = vpack.c.b16 %v676, %v668
  %v853 = vpack.c.b16 %v677, %v669
  %v854 = vpack.c.b16 %v678, %v670
  %v855 = vpack.c.b16 %v679, %v671
  %v856 = vpack.c.b16 %v680, %v672
  %v857 = vpack.c.b16 %v681, %v673
  %v858 = vpack.c.b16 %v682, %v674
  %v859 = vpack.c.b16 %v691, %v683
  %v860 = vpack.c.b16 %v692, %v684
  %v861 = vpack.c.b16 %v693, %v685
  %v862 = vpack.c.b16 %v694, %v686
  %v863 = vpack.c.b16 %v695, %v687
  %v864 = vpack.c.b16 %v696, %v688
  %v865 = vpack.c.b16 %v697, %v689
  %v866 = vpack.c.b16 %v698, %v690
  %v867 = vpack.c.b16 %v707, %v699
  %v868 = vpack.c.b16 %v708, %v700
  %v869 = vpack.c.b16 %v709, %v701
  %v870 = vpack.c.b16 %v710, %v702
  %v871 = vpack.c.b16 %v711, %v703
  %v872 = vpack.c.b16 %v712, %v704
  %v873 = vpack.c.b16 %v713, %v705
  %v874 = vpack.c.b16 %v714, %v706
  %v875 = vpack.c.b16 %v723, %v715
  %v876 = vpack.c.b16 %v724, %v716
  %v877 = vpack.c.b16 %v725, %v717
  %v878 = vpack.c.b16 %v726, %v718
  %v879 = vpack.c.b16 %v727, %v719
  %v880 = vpack.c.b16 %v728, %v720
  %v881 = vpack.c.b16 %v729, %v721
  %v882 = vpack.c.b16 %v730, %v722
  %v883 = vpack.c.b16 %v739, %v731
  %v884 = vpack.c.b16 %v740, %v732
  %v885 = vpack.c.b16 %v741, %v733
  %v886 = vpack.c.b16 %v742, %v734
  %v887 = vpack.c.b16 %v743, %v735
  %v888 = vpack.c.b16 %v744, %v736
  %v889 = vpack.c.b16 %v745, %v737
  %v890 = vpack.c.b16 %v746, %v738
  %v891 = vpack.c.b16 %v755, %v747
  %v892 = vpack.c.b16 %v756, %v748
  %v893 = vpack.c.b16 %v757, %v749
  %v894 = vpack.c.b16 %v758, %v750
  %v895 = vpack.c.b16 %v759, %v751
  %v896 = vpack.c.b16 %v760, %v752
  %v897 = vpack.c.b16 %v761, %v753
  %v898 = vpack.c.b16 %v762, %v754
  %v899 = vpack.c.b16 %v771, %v763
  %v900 = vpack.c.b16 %v772, %v764
  %v901 = vpack.c.b16 %v773, %v765
  %v902 = vpack.c.b16 %v774, %v766
  %v903 = vpack.c.b16 %v775, %v767
  %v904 = vpack.c.b16 %v776, %v768
  %v905 = vpack.c.b16 %v777, %v769
  %v906 = vpack.c.b16 %v778, %v770
  %v1291 = vunpack.c.l.b16 %v139
  %v1292 = vunpack.c.h.b16 %v139
  %v1293 = vunpack.c.l.b16 %v140
  %v1294 = vunpack.c.h.b16 %v140
  %v1295 = vunpack.c.l.b16 %v141
  %v1296 = vunpack.c.h.b16 %v141
  %v1297 = vunpack.c.l.b16 %v142
  %v1298 = vunpack.c.h.b16 %v142
  %v1299 = vunpack.c.l.b16 %v143
  %v1300 = vunpack.c.h.b16 %v143
  %v1301 = vunpack.c.l.b16 %v144
  %v1302 = vunpack.c.h.b16 %v144
  %v1303 = vunpack.c.l.b16 %v145
  %v1304 = vunpack.c.h.b16 %v145
  %v1305 = vunpack.c.l.b16 %v146
  %v1306 = vunpack.c.h.b16 %v146
  %v1307 = vunpack.c.l.b16 %v147
  %v1308 = vunpack.c.h.b16 %v147
  %v1309 = vunpack.c.l.b16 %v148
  %v1310 = vunpack.c.h.b16 %v148
  %v1311 = vunpack.c.l.b16 %v149
  %v1312 = vunpack.c.h.b16 %v149
  %v1313 = vunpack.c.l.b16 %v150
  %v1314 = vunpack.c.h.b16 %v150
  %v1315 = vunpack.c.l.b16 %v151
  %v1316 = vunpack.c.h.b16 %v151
  %v1317 = vunpack.c.l.b16 %v152
  %v1318 = vunpack.c.h.b16 %v152
  %v1319 = vunpack.c.l.b16 %v153
  %v1320 = vunpack.c.h.b16 %v153
  %v1321 = vunpack.c.l.b16 %v154
  %v1322 = vunpack.c.h.b16 %v154
  %v1323 = vunpack.c.l.b16 %v155
  %v1324 = vunpack.c.h.b16 %v155
  %v1325 = vunpack.c.l.b16 %v156
  %v1326 = vunpack.c.h.b16 %v156
  %v1327 = vunpack.c.l.b16 %v157
  %v1328 = vunpack.c.h.b16 %v157
  %v1329 = vunpack.c.l.b16 %v158
  %v1330 = vunpack.c.h.b16 %v158
  %v1331 = vunpack.c.l.b16 %v159
  %v1332 = vunpack.c.h.b16 %v159
  %v1333 = vunpack.c.l.b16 %v160
  %v1334 = vunpack.c.h.b16 %v160
  %v1335 = vunpack.c.l.b16 %v161
  %v1336 = vunpack.c.h.b16 %v161
  %v1337 = vunpack.c.l.b16 %v162
  %v1338 = vunpack.c.h.b16 %v162
  %v1339 = vunpack.c.l.b16 %v163
  %v1340 = vunpack.c.h.b16 %v163
  %v1341 = vunpack.c.l.b16 %v164
  %v1342 = vunpack.c.h.b16 %v164
  %v1343 = vunpack.c.l.b16 %v165
  %v1344 = vunpack.c.h.b16 %v165
  %v1345 = vunpack.c.l.b16 %v166
  %v1346 = vunpack.c.h.b16 %v166
  %v1347 = vunpack.c.l.b16 %v167
  %v1348 = vunpack.c.h.b16 %v167
  %v1349 = vunpack.c.l.b16 %v168
  %v1350 = vunpack.c.h.b16 %v168
  %v1351 = vunpack.c.l.b16 %v169
  %v1352 = vunpack.c.h.b16 %v169
  %v1353 = vunpack.c.l.b16 %v170
  %v1354 = vunpack.c.h.b16 %v170
  %v1355 = vunpack.c.l.b16 %v171
  %v1356 = vunpack.c.h.b16 %v171
  %v1357 = vunpack.c.l.b16 %v172
  %v1358 = vunpack.c.h.b16 %v172
  %v1359 = vunpack.c.l.b16 %v173
  %v1360 = vunpack.c.h.b16 %v173
  %v1361 = vunpack.c.l.b16 %v174
  %v1362 = vunpack.c.h.b16 %v174
  %v1363 = vunpack.c.l.b16 %v175
  %v1364 = vunpack.c.h.b16 %v175
  %v1365 = vunpack.c.l.b16 %v176
  %v1366 = vunpack.c.h.b16 %v176
  %v1367 = vunpack.c.l.b16 %v177
  %v1368 = vunpack.c.h.b16 %v177
  %v1369 = vunpack.c.l.b16 %v178
  %v1370 = vunpack.c.h.b16 %v178
  %v1371 = vunpack.c.l.b16 %v179
  %v1372 = vunpack.c.h.b16 %v179
  %v1373 = vunpack.c.l.b16 %v180
  %v1374 = vunpack.c.h.b16 %v180
  %v1375 = vunpack.c.l.b16 %v181
  %v1376 = vunpack.c.h.b16 %v181
  %v1377 = vunpack.c.l.b16 %v182
  %v1378 = vunpack.c.h.b16 %v182
  %v1379 = vunpack.c.l.b16 %v183
  %v1380 = vunpack.c.h.b16 %v183
  %v1381 = vunpack.c.l.b16 %v184
  %v1382 = vunpack.c.h.b16 %v184
  %v1383 = vunpack.c.l.b16 %v185
  %v1384 = vunpack.c.h.b16 %v185
  %v1385 = vunpack.c.l.b16 %v186
  %v1386 = vunpack.c.h.b16 %v186
  %v1387 = vunpack.c.l.b16 %v187
  %v1388 = vunpack.c.h.b16 %v187
  %v1389 = vunpack.c.l.b16 %v188
  %v1390 = vunpack.c.h.b16 %v188
  %v1391 = vunpack.c.l.b16 %v189
  %v1392 = vunpack.c.h.b16 %v189
  %v1393 = vunpack.c.l.b16 %v190
  %v1394 = vunpack.c.h.b16 %v190
  %v1395 = vunpack.c.l.b16 %v191
  %v1396 = vunpack.c.h.b16 %v191
  %v1397 = vunpack.c.l.b16 %v192
  %v1398 = vunpack.c.h.b16 %v192
  %v1399 = vunpack.c.l.b16 %v193
  %v1400 = vunpack.c.h.b16 %v193
  %v1401 = vunpack.c.l.b16 %v194
  %v1402 = vunpack.c.h.b16 %v194
  %v1403 = vunpack.c.l.b16 %v195
  %v1404 = vunpack.c.h.b16 %v195
  %v1405 = vunpack.c.l.b16 %v196
  %v1406 = vunpack.c.h.b16 %v196
  %v1407 = vunpack.c.l.b16 %v197
  %v1408 = vunpack.c.h.b16 %v197
  %v1409 = vunpack.c.l.b16 %v198
  %v1410 = vunpack.c.h.b16 %v198
  %v1411 = vunpack.c.l.b16 %v199
  %v1412 = vunpack.c.h.b16 %v199
  %v1413 = vunpack.c.l.b16 %v200
  %v1414 = vunpack.c.h.b16 %v200
  %v1415 = vunpack.c.l.b16 %v201
  %v1416 = vunpack.c.h.b16 %v201
  %v1417 = vunpack.c.l.b16 %v202
  %v1418 = vunpack.c.h.b16 %v202
  %v1419 = vunpack.c.l.b16 %v203
  %v1420 = vunpack.c.h.b16 %v203
  %v1421 = vunpack.c.l.b16 %v204
  %v1422 = vunpack.c.h.b16 %v204
  %v1423 = vunpack.c.l.b16 %v205
  %v1424 = vunpack.c.h.b16 %v205
  %v1425 = vunpack.c.l.b16 %v206
  %v1426 = vunpack.c.h.b16 %v206
  %v1427 = vunpack.c.l.b16 %v207
  %v1428 = vunpack.c.h.b16 %v207
  %v1429 = vunpack.c.l.b16 %v208
  %v1430 = vunpack.c.h.b16 %v208
  %v1431 = vunpack.c.l.b16 %v209
  %v1432 = vunpack.c.h.b16 %v209
  %v1433 = vunpack.c.l.b16 %v210
  %v1434 = vunpack.c.h.b16 %v210
  %v1435 = vunpack.c.l.b16 %v211
  %v1436 = vunpack.c.h.b16 %v211
  %v1437 = vunpack.c.l.b16 %v212
  %v1438 = vunpack.c.h.b16 %v212
  %v1439 = vunpack.c.l.b16 %v213
  %v1440 = vunpack.c.h.b16 %v213
  %v1441 = vunpack.c.l.b16 %v214
  %v1442 = vunpack.c.h.b16 %v214
  %v1443 = vunpack.c.l.b16 %v215
  %v1444 = vunpack.c.h.b16 %v215
  %v1445 = vunpack.c.l.b16 %v216
  %v1446 = vunpack.c.h.b16 %v216
  %v1447 = vunpack.c.l.b16 %v217
  %v1448 = vunpack.c.h.b16 %v217
  %v1449 = vunpack.c.l.b16 %v218
  %v1450 = vunpack.c.h.b16 %v218
  %v1451 = vunpack.c.l.b16 %v219
  %v1452 = vunpack.c.h.b16 %v219
  %v1453 = vunpack.c.l.b16 %v220
  %v1454 = vunpack.c.h.b16 %v220
  %v1455 = vunpack.c.l.b16 %v221
  %v1456 = vunpack.c.h.b16 %v221
  %v1457 = vunpack.c.l.b16 %v222
  %v1458 = vunpack.c.h.b16 %v222
  %v1459 = vunpack.c.l.b16 %v223
  %v1460 = vunpack.c.h.b16 %v223
  %v1461 = vunpack.c.l.b16 %v224
  %v1462 = vunpack.c.h.b16 %v224
  %v1463 = vunpack.c.l.b16 %v225
  %v1464 = vunpack.c.h.b16 %v225
  %v1465 = vunpack.c.l.b16 %v226
  %v1466 = vunpack.c.h.b16 %v226
  %v1467 = vunpack.c.l.b16 %v227
  %v1468 = vunpack.c.h.b16 %v227
  %v1469 = vunpack.c.l.b16 %v228
  %v1470 = vunpack.c.h.b16 %v228
  %v1471 = vunpack.c.l.b16 %v229
  %v1472 = vunpack.c.h.b16 %v229
  %v1473 = vunpack.c.l.b16 %v230
  %v1474 = vunpack.c.h.b16 %v230
  %v1475 = vunpack.c.l.b16 %v231
  %v1476 = vunpack.c.h.b16 %v231
  %v1477 = vunpack.c.l.b16 %v232
  %v1478 = vunpack.c.h.b16 %v232
  %v1479 = vunpack.c.l.b16 %v233
  %v1480 = vunpack.c.h.b16 %v233
  %v1481 = vunpack.c.l.b16 %v234
  %v1482 = vunpack.c.h.b16 %v234
  %v1483 = vunpack.c.l.b16 %v235
  %v1484 = vunpack.c.h.b16 %v235
  %v1485 = vunpack.c.l.b16 %v236
  %v1486 = vunpack.c.h.b16 %v236
  %v1487 = vunpack.c.l.b16 %v237
  %v1488 = vunpack.c.h.b16 %v237
  %v1489 = vunpack.c.l.b16 %v238
  %v1490 = vunpack.c.h.b16 %v238
  %v1491 = vunpack.c.l.b16 %v239
  %v1492 = vunpack.c.h.b16 %v239
  %v1493 = vunpack.c.l.b16 %v240
  %v1494 = vunpack.c.h.b16 %v240
  %v1495 = vunpack.c.l.b16 %v241
  %v1496 = vunpack.c.h.b16 %v241
  %v1497 = vunpack.c.l.b16 %v242
  %v1498 = vunpack.c.h.b16 %v242
  %v1499 = vunpack.c.l.b16 %v243
  %v1500 = vunpack.c.h.b16 %v243
  %v1501 = vunpack.c.l.b16 %v244
  %v1502 = vunpack.c.h.b16 %v244
  %v1503 = vunpack.c.l.b16 %v245
  %v1504 = vunpack.c.h.b16 %v245
  %v1505 = vunpack.c.l.b16 %v246
  %v1506 = vunpack.c.h.b16 %v246
  %v1507 = vunpack.c.l.b16 %v247
  %v1508 = vunpack.c.h.b16 %v247
  %v1509 = vunpack.c.l.b16 %v248
  %v1510 = vunpack.c.h.b16 %v248
  %v1511 = vunpack.c.l.b16 %v249
  %v1512 = vunpack.c.h.b16 %v249
  %v1513 = vunpack.c.l.b16 %v250
  %v1514 = vunpack.c.h.b16 %v250
  %v1515 = vunpack.c.l.b16 %v251
  %v1516 = vunpack.c.h.b16 %v251
  %v1517 = vunpack.c.l.b16 %v252
  %v1518 = vunpack.c.h.b16 %v252
  %v1519 = vunpack.c.l.b16 %v253
  %v1520 = vunpack.c.h.b16 %v253
  %v1521 = vunpack.c.l.b16 %v254
  %v1522 = vunpack.c.h.b16 %v254
  %v1523 = vunpack.c.l.b16 %v255
  %v1524 = vunpack.c.h.b16 %v255
  %v1525 = vunpack.c.l.b16 %v256
  %v1526 = vunpack.c.h.b16 %v256
  %v1527 = vunpack.c.l.b16 %v257
  %v1528 = vunpack.c.h.b16 %v257
  %v1529 = vunpack.c.l.b16 %v258
  %v1530 = vunpack.c.h.b16 %v258
  %v1531 = vunpack.c.l.b16 %v259
  %v1532 = vunpack.c.h.b16 %v259
  %v1533 = vunpack.c.l.b16 %v260
  %v1534 = vunpack.c.h.b16 %v260
  %v1535 = vunpack.c.l.b16 %v261
  %v1536 = vunpack.c.h.b16 %v261
  %v1537 = vunpack.c.l.b16 %v262
  %v1538 = vunpack.c.h.b16 %v262
  %v1539 = vunpack.c.l.b16 %v263
  %v1540 = vunpack.c.h.b16 %v263
  %v1541 = vunpack.c.l.b16 %v264
  %v1542 = vunpack.c.h.b16 %v264
  %v1543 = vunpack.c.l.b16 %v265
  %v1544 = vunpack.c.h.b16 %v265
  %v1545 = vunpack.c.l.b16 %v266
  %v1546 = vunpack.c.h.b16 %v266
  %v1547 = vunpack.c.l.b16 %v267
  %v1548 = vunpack.c.h.b16 %v267
  %v1549 = vunpack.c.l.b16 %v268
  %v1550 = vunpack.c.h.b16 %v268
  %v1551 = vunpack.c.l.b16 %v269
  %v1552 = vunpack.c.h.b16 %v269
  %v1553 = vunpack.c.l.b16 %v270
  %v1554 = vunpack.c.h.b16 %v270
  %v1555 = vunpack.c.l.b16 %v271
  %v1556 = vunpack.c.h.b16 %v271
  %v1557 = vunpack.c.l.b16 %v272
  %v1558 = vunpack.c.h.b16 %v272
  %v1559 = vunpack.c.l.b16 %v273
  %v1560 = vunpack.c.h.b16 %v273
  %v1561 = vunpack.c.l.b16 %v274
  %v1562 = vunpack.c.h.b16 %v274
  %v1563 = vunpack.c.l.b16 %v275
  %v1564 = vunpack.c.h.b16 %v275
  %v1565 = vunpack.c.l.b16 %v276
  %v1566 = vunpack.c.h.b16 %v276
  %v1567 = vunpack.c.l.b16 %v277
  %v1568 = vunpack.c.h.b16 %v277
  %v1569 = vunpack.c.l.b16 %v278
  %v1570 = vunpack.c.h.b16 %v278
  %v1571 = vunpack.c.l.b16 %v279
  %v1572 = vunpack.c.h.b16 %v279
  %v1573 = vunpack.c.l.b16 %v280
  %v1574 = vunpack.c.h.b16 %v280
  %v1575 = vunpack.c.l.b16 %v281
  %v1576 = vunpack.c.h.b16 %v281
  %v1577 = vunpack.c.l.b16 %v282
  %v1578 = vunpack.c.h.b16 %v282
  %v1579 = vunpack.c.l.b16 %v283
  %v1580 = vunpack.c.h.b16 %v283
  %v1581 = vunpack.c.l.b16 %v284
  %v1582 = vunpack.c.h.b16 %v284
  %v1583 = vunpack.c.l.b16 %v285
  %v1584 = vunpack.c.h.b16 %v285
  %v1585 = vunpack.c.l.b16 %v286
  %v1586 = vunpack.c.h.b16 %v286
  %v1587 = vunpack.c.l.b16 %v287
  %v1588 = vunpack.c.h.b16 %v287
  %v1589 = vunpack.c.l.b16 %v288
  %v1590 = vunpack.c.h.b16 %v288
  %v1591 = vunpack.c.l.b16 %v289
  %v1592 = vunpack.c.h.b16 %v289
  %v1593 = vunpack.c.l.b16 %v290
  %v1594 = vunpack.c.h.b16 %v290
  %v1595 = vunpack.c.l.b16 %v291
  %v1596 = vunpack.c.h.b16 %v291
  %v1597 = vunpack.c.l.b16 %v292
  %v1598 = vunpack.c.h.b16 %v292
  %v1599 = vunpack.c.l.b16 %v293
  %v1600 = vunpack.c.h.b16 %v293
  %v1601 = vunpack.c.l.b16 %v294
  %v1602 = vunpack.c.h.b16 %v294
  %v1603 = vunpack.c.l.b16 %v295
  %v1604 = vunpack.c.h.b16 %v295
  %v1605 = vunpack.c.l.b16 %v296
  %v1606 = vunpack.c.h.b16 %v296
  %v1607 = vunpack.c.l.b16 %v297
  %v1608 = vunpack.c.h.b16 %v297
  %v1609 = vunpack.c.l.b16 %v298
  %v1610 = vunpack.c.h.b16 %v298
  %v1611 = vunpack.c.l.b16 %v299
  %v1612 = vunpack.c.h.b16 %v299
  %v1613 = vunpack.c.l.b16 %v300
  %v1614 = vunpack.c.h.b16 %v300
  %v1615 = vunpack.c.l.b16 %v301
  %v1616 = vunpack.c.h.b16 %v301
  %v1617 = vunpack.c.l.b16 %v302
  %v1618 = vunpack.c.h.b16 %v302
  %v1619 = vunpack.c.l.b16 %v303
  %v1620 = vunpack.c.h.b16 %v303
  %v1621 = vunpack.c.l.b16 %v304
  %v1622 = vunpack.c.h.b16 %v304
  %v1623 = vunpack.c.l.b16 %v305
  %v1624 = vunpack.c.h.b16 %v305
  %v1625 = vunpack.c.l.b16 %v306
  %v1626 = vunpack.c.h.b16 %v306
  %v1627 = vunpack.c.l.b16 %v307
  %v1628 = vunpack.c.h.b16 %v307
  %v1629 = vunpack.c.l.b16 %v308
  %v1630 = vunpack.c.h.b16 %v308
  %v1631 = vunpack.c.l.b16 %v309
  %v1632 = vunpack.c.h.b16 %v309
  %v1633 = vunpack.c.l.b16 %v310
  %v1634 = vunpack.c.h.b16 %v310
  %v1635 = vunpack.c.l.b16 %v311
  %v1636 = vunpack.c.h.b16 %v311
  %v1637 = vunpack.c.l.b16 %v312
  %v1638 = vunpack.c.h.b16 %v312
  %v1639 = vunpack.c.l.b16 %v313
  %v1640 = vunpack.c.h.b16 %v313
  %v1641 = vunpack.c.l.b16 %v314
  %v1642 = vunpack.c.h.b16 %v314
  %v1643 = vunpack.c.l.b16 %v315
  %v1644 = vunpack.c.h.b16 %v315
  %v1645 = vunpack.c.l.b16 %v316
  %v1646 = vunpack.c.h.b16 %v316
  %v1647 = vunpack.c.l.b16 %v317
  %v1648 = vunpack.c.h.b16 %v317
  %v1649 = vunpack.c.l.b16 %v318
  %v1650 = vunpack.c.h.b16 %v318
  %v1651 = vunpack.c.l.b16 %v319
  %v1652 = vunpack.c.h.b16 %v319
  %v1653 = vunpack.c.l.b16 %v320
  %v1654 = vunpack.c.h.b16 %v320
  %v1655 = vunpack.c.l.b16 %v321
  %v1656 = vunpack.c.h.b16 %v321
  %v1657 = vunpack.c.l.b16 %v322
  %v1658 = vunpack.c.h.b16 %v322
  %v1659 = vunpack.c.l.b16 %v323
  %v1660 = vunpack.c.h.b16 %v323
  %v1661 = vunpack.c.l.b16 %v324
  %v1662 = vunpack.c.h.b16 %v324
  %v1663 = vunpack.c.l.b16 %v325
  %v1664 = vunpack.c.h.b16 %v325
  %v1665 = vunpack.c.l.b16 %v326
  %v1666 = vunpack.c.h.b16 %v326
  %v1667 = vunpack.c.l.b16 %v327
  %v1668 = vunpack.c.h.b16 %v327
  %v1669 = vunpack.c.l.b16 %v328
  %v1670 = vunpack.c.h.b16 %v328
  %v1671 = vunpack.c.l.b16 %v329
  %v1672 = vunpack.c.h.b16 %v329
  %v1673 = vunpack.c.l.b16 %v330
  %v1674 = vunpack.c.h.b16 %v330
  %v1675 = vunpack.c.l.b16 %v331
  %v1676 = vunpack.c.h.b16 %v331
  %v1677 = vunpack.c.l.b16 %v332
  %v1678 = vunpack.c.h.b16 %v332
  %v1679 = vunpack.c.l.b16 %v333
  %v1680 = vunpack.c.h.b16 %v333
  %v1681 = vunpack.c.l.b16 %v334
  %v1682 = vunpack.c.h.b16 %v334
  %v1683 = vunpack.c.l.b16 %v335
  %v1684 = vunpack.c.h.b16 %v335
  %v1685 = vunpack.c.l.b16 %v336
  %v1686 = vunpack.c.h.b16 %v336
  %v1687 = vunpack.c.l.b16 %v337
  %v1688 = vunpack.c.h.b16 %v337
  %v1689 = vunpack.c.l.b16 %v338
  %v1690 = vunpack.c.h.b16 %v338
  %v1691 = vunpack.c.l.b16 %v339
  %v1692 = vunpack.c.h.b16 %v339
  %v1693 = vunpack.c.l.b16 %v340
  %v1694 = vunpack.c.h.b16 %v340
  %v1695 = vunpack.c.l.b16 %v341
  %v1696 = vunpack.c.h.b16 %v341
  %v1697 = vunpack.c.l.b16 %v342
  %v1698 = vunpack.c.h.b16 %v342
  %v1699 = vunpack.c.l.b16 %v343
  %v1700 = vunpack.c.h.b16 %v343
  %v1701 = vunpack.c.l.b16 %v344
  %v1702 = vunpack.c.h.b16 %v344
  %v1703 = vunpack.c.l.b16 %v345
  %v1704 = vunpack.c.h.b16 %v345
  %v1705 = vunpack.c.l.b16 %v346
  %v1706 = vunpack.c.h.b16 %v346
  %v1707 = vunpack.c.l.b16 %v347
  %v1708 = vunpack.c.h.b16 %v347
  %v1709 = vunpack.c.l.b16 %v348
  %v1710 = vunpack.c.h.b16 %v348
  %v1711 = vunpack.c.l.b16 %v349
  %v1712 = vunpack.c.h.b16 %v349
  %v1713 = vunpack.c.l.b16 %v350
  %v1714 = vunpack.c.h.b16 %v350
  %v1715 = vunpack.c.l.b16 %v351
  %v1716 = vunpack.c.h.b16 %v351
  %v1717 = vunpack.c.l.b16 %v352
  %v1718 = vunpack.c.h.b16 %v352
  %v1719 = vunpack.c.l.b16 %v353
  %v1720 = vunpack.c.h.b16 %v353
  %v1721 = vunpack.c.l.b16 %v354
  %v1722 = vunpack.c.h.b16 %v354
  %v1723 = vunpack.c.l.b16 %v355
  %v1724 = vunpack.c.h.b16 %v355
  %v1725 = vunpack.c.l.b16 %v356
  %v1726 = vunpack.c.h.b16 %v356
  %v1727 = vunpack.c.l.b16 %v357
  %v1728 = vunpack.c.h.b16 %v357
  %v1729 = vunpack.c.l.b16 %v358
  %v1730 = vunpack.c.h.b16 %v358
  %v1731 = vunpack.c.l.b16 %v359
  %v1732 = vunpack.c.h.b16 %v359
  %v1733 = vunpack.c.l.b16 %v360
  %v1734 = vunpack.c.h.b16 %v360
  %v1735 = vunpack.c.l.b16 %v361
  %v1736 = vunpack.c.h.b16 %v361
  %v1737 = vunpack.c.l.b16 %v362
  %v1738 = vunpack.c.h.b16 %v362
  %v1739 = vunpack.c.l.b16 %v363
  %v1740 = vunpack.c.h.b16 %v363
  %v1741 = vunpack.c.l.b16 %v364
  %v1742 = vunpack.c.h.b16 %v364
  %v1743 = vunpack.c.l.b16 %v365
  %v1744 = vunpack.c.h.b16 %v365
  %v1745 = vunpack.c.l.b16 %v366
  %v1746 = vunpack.c.h.b16 %v366
  %v1747 = vunpack.c.l.b16 %v367
  %v1748 = vunpack.c.h.b16 %v367
  %v1749 = vunpack.c.l.b16 %v368
  %v1750 = vunpack.c.h.b16 %v368
  %v1751 = vunpack.c.l.b16 %v369
  %v1752 = vunpack.c.h.b16 %v369
  %v1753 = vunpack.c.l.b16 %v370
  %v1754 = vunpack.c.h.b16 %v370
  %v1755 = vunpack.c.l.b16 %v371
  %v1756 = vunpack.c.h.b16 %v371
  %v1757 = vunpack.c.l.b16 %v372
  %v1758 = vunpack.c.h.b16 %v372
  %v1759 = vunpack.c.l.b16 %v373
  %v1760 = vunpack.c.h.b16 %v373
  %v1761 = vunpack.c.l.b16 %v374
  %v1762 = vunpack.c.h.b16 %v374
  %v1763 = vunpack.c.l.b16 %v375
  %v1764 = vunpack.c.h.b16 %v375
  %v1765 = vunpack.c.l.b16 %v376
  %v1766 = vunpack.c.h.b16 %v376
  %v1767 = vunpack.c.l.b16 %v377
  %v1768 = vunpack.c.h.b16 %v377
  %v1769 = vunpack.c.l.b16 %v378
  %v1770 = vunpack.c.h.b16 %v378
  %v1771 = vunpack.c.l.b16 %v379
  %v1772 = vunpack.c.h.b16 %v379
  %v1773 = vunpack.c.l.b16 %v380
  %v1774 = vunpack.c.h.b16 %v380
  %v1775 = vunpack.c.l.b16 %v381
  %v1776 = vunpack.c.h.b16 %v381
  %v1777 = vunpack.c.l.b16 %v382
  %v1778 = vunpack.c.h.b16 %v382
  %v1779 = vunpack.c.l.b16 %v383
  %v1780 = vunpack.c.h.b16 %v383
  %v1781 = vunpack.c.l.b16 %v384
  %v1782 = vunpack.c.h.b16 %v384
  %v1783 = vunpack.c.l.b16 %v385
  %v1784 = vunpack.c.h.b16 %v385
  %v1785 = vunpack.c.l.b16 %v386
  %v1786 = vunpack.c.h.b16 %v386
  %v1787 = vunpack.c.l.b16 %v387
  %v1788 = vunpack.c.h.b16 %v387
  %v1789 = vunpack.c.l.b16 %v388
  %v1790 = vunpack.c.h.b16 %v388
  %v1791 = vunpack.c.l.b16 %v389
  %v1792 = vunpack.c.h.b16 %v389
  %v1793 = vunpack.c.l.b16 %v390
  %v1794 = vunpack.c.h.b16 %v390
  %v1795 = vunpack.c.l.b16 %v391
  %v1796 = vunpack.c.h.b16 %v391
  %v1797 = vunpack.c.l.b16 %v392
  %v1798 = vunpack.c.h.b16 %v392
  %v1799 = vunpack.c.l.b16 %v393
  %v1800 = vunpack.c.h.b16 %v393
  %v1801 = vunpack.c.l.b16 %v394
  %v1802 = vunpack.c.h.b16 %v394
  %v1803 = vpack.c.b16 %v1295, %v1291
  %v1804 = vpack.c.b16 %v1296, %v1292
  %v1805 = vpack.c.b16 %v1297, %v1293
  %v1806 = vpack.c.b16 %v1298, %v1294
  %v1807 = vpack.c.b16 %v1303, %v1299
  %v1808 = vpack.c.b16 %v1304, %v1300
  %v1809 = vpack.c.b16 %v1305, %v1301
  %v1810 = vpack.c.b16 %v1306, %v1302
  %v1811 = vpack.c.b16 %v1311, %v1307
  %v1812 = vpack.c.b16 %v1312, %v1308
  %v1813 = vpack.c.b16 %v1313, %v1309
  %v1814 = vpack.c.b16 %v1314, %v1310
  %v1815 = vpack.c.b16 %v1319, %v1315
  %v1816 = vpack.c.b16 %v1320, %v1316
  %v1817 = vpack.c.b16 %v1321, %v1317
  %v1818 = vpack.c.b16 %v1322, %v1318
  %v1819 = vpack.c.b16 %v1327, %v1323
  %v1820 = vpack.c.b16 %v1328, %v1324
  %v1821 = vpack.c.b16 %v1329, %v1325
  %v1822 = vpack.c.b16 %v1330, %v1326
  %v1823 = vpack.c.b16 %v1335, %v1331
  %v1824 = vpack.c.b16 %v1336, %v1332
  %v1825 = vpack.c.b16 %v1337, %v1333
  %v1826 = vpack.c.b16 %v1338, %v1334
  %v1827 = vpack.c.b16 %v1343, %v1339
  %v1828 = vpack.c.b16 %v1344, %v1340
  %v1829 = vpack.c.b16 %v1345, %v1341
  %v1830 = vpack.c.b16 %v1346, %v1342
  %v1831 = vpack.c.b16 %v1351, %v1347
  %v1832 = vpack.c.b16 %v1352, %v1348
  %v1833 = vpack.c.b16 %v1353, %v1349
  %v1834 = vpack.c.b16 %v1354, %v1350
  %v1835 = vpack.c.b16 %v1359, %v1355
  %v1836 = vpack.c.b16 %v1360, %v1356
  %v1837 = vpack.c.b16 %v1361, %v1357
  %v1838 = vpack.c.b16 %v1362, %v1358
  %v1839 = vpack.c.b16 %v1367, %v1363
  %v1840 = vpack.c.b16 %v1368, %v1364
  %v1841 = vpack.c.b16 %v1369, %v1365
  %v1842 = vpack.c.b16 %v1370, %v1366
  %v1843 = vpack.c.b16 %v1375, %v1371
  %v1844 = vpack.c.b16 %v1376, %v1372
  %v1845 = vpack.c.b16 %v1377, %v1373
  %v1846 = vpack.c.b16 %v1378, %v1374
  %v1847 = vpack.c.b16 %v1383, %v1379
  %v1848 = vpack.c.b16 %v1384, %v1380
  %v1849 = vpack.c.b16 %v1385, %v1381
  %v1850 = vpack.c.b16 %v1386, %v1382
  %v1851 = vpack.c.b16 %v1391, %v1387
  %v1852 = vpack.c.b16 %v1392, %v1388
  %v1853 = vpack.c.b16 %v1393, %v1389
  %v1854 = vpack.c.b16 %v1394, %v1390
  %v1855 = vpack.c.b16 %v1399, %v1395
  %v1856 = vpack.c.b16 %v1400, %v1396
  %v1857 = vpack.c.b16 %v1401, %v1397
  %v1858 = vpack.c.b16 %v1402, %v1398
  %v1859 = vpack.c.b16 %v1407, %v1403
  %v1860 = vpack.c.b16 %v1408, %v1404
  %v1861 = vpack.c.b16 %v1409, %v1405
  %v1862 = vpack.c.b16 %v1410, %v1406
  %v1863 = vpack.c.b16 %v1415, %v1411
  %v1864 = vpack.c.b16 %v1416, %v1412
  %v1865 = vpack.c.b16 %v1417, %v1413
  %v1866 = vpack.c.b16 %v1418, %v1414
  %v1867 = vpack.c.b16 %v1423, %v1419
  %v1868 = vpack.c.b16 %v1424, %v1420
  %v1869 = vpack.c.b16 %v1425, %v1421
  %v1870 = vpack.c.b16 %v1426, %v1422
  %v1871 = vpack.c.b16 %v1431, %v1427
  %v1872 = vpack.c.b16 %v1432, %v1428
  %v1873 = vpack.c.b16 %v1433, %v1429
  %v1874 = vpack.c.b16 %v1434, %v1430
  %v1875 = vpack.c.b16 %v1439, %v1435
  %v1876 = vpack.c.b16 %v1440, %v1436
  %v1877 = vpack.c.b16 %v1441, %v1437
  %v1878 = vpack.c.b16 %v1442, %v1438
  %v1879 = vpack.c.b16 %v1447, %v1443
  %v1880 = vpack.c.b16 %v1448, %v1444
  %v1881 = vpack.c.b16 %v1449, %v1445
  %v1882 = vpack.c.b16 %v1450, %v1446
  %v1883 = vpack.c.b16 %v1455, %v1451
  %v1884 = vpack.c.b16 %v1456, %v1452
  %v1885 = vpack.c.b16 %v1457, %v1453
  %v1886 = vpack.c.b16 %v1458, %v1454
  %v1887 = vpack.c.b16 %v1463, %v1459
  %v1888 = vpack.c.b16 %v1464, %v1460
  %v1889 = vpack.c.b16 %v1465, %v1461
  %v1890 = vpack.c.b16 %v1466, %v1462
  %v1891 = vpack.c.b16 %v1471, %v1467
  %v1892 = vpack.c.b16 %v1472, %v1468
  %v1893 = vpack.c.b16 %v1473, %v1469
  %v1894 = vpack.c.b16 %v1474, %v1470
  %v1895 = vpack.c.b16 %v1479, %v1475
  %v1896 = vpack.c.b16 %v1480, %v1476
  %v1897 = vpack.c.b16 %v1481, %v1477
  %v1898 = vpack.c.b16 %v1482, %v1478
  %v1899 = vpack.c.b16 %v1487, %v1483
  %v1900 = vpack.c.b16 %v1488, %v1484
  %v1901 = vpack.c.b16 %v1489, %v1485
  %v1902 = vpack.c.b16 %v1490, %v1486
  %v1903 = vpack.c.b16 %v1495, %v1491
  %v1904 = vpack.c.b16 %v1496, %v1492
  %v1905 = vpack.c.b16 %v1497, %v1493
  %v1906 = vpack.c.b16 %v1498, %v1494
  %v1907 = vpack.c.b16 %v1503, %v1499
  %v1908 = vpack.c.b16 %v1504, %v1500
  %v1909 = vpack.c.b16 %v1505, %v1501
  %v1910 = vpack.c.b16 %v1506, %v1502
  %v1911 = vpack.c.b16 %v1511, %v1507
  %v1912 = vpack.c.b16 %v1512, %v1508
  %v1913 = vpack.c.b16 %v1513, %v1509
  %v1914 = vpack.c.b16 %v1514, %v1510
  %v1915 = vpack.c.b16 %v1519, %v1515
  %v1916 = vpack.c.b16 %v1520, %v1516
  %v1917 = vpack.c.b16 %v1521, %v1517
  %v1918 = vpack.c.b16 %v1522, %v1518
  %v1919 = vpack.c.b16 %v1527, %v1523
  %v1920 = vpack.c.b16 %v1528, %v1524
  %v1921 = vpack.c.b16 %v1529, %v1525
  %v1922 = vpack.c.b16 %v1530, %v1526
  %v1923 = vpack.c.b16 %v1535, %v1531
  %v1924 = vpack.c.b16 %v1536, %v1532
  %v1925 = vpack.c.b16 %v1537, %v1533
  %v1926 = vpack.c.b16 %v1538, %v1534
  %v1927 = vpack.c.b16 %v1543, %v1539
  %v1928 = vpack.c.b16 %v1544, %v1540
  %v1929 = vpack.c.b16 %v1545, %v1541
  %v1930 = vpack.c.b16 %v1546, %v1542
  %v1931 = vpack.c.b16 %v1551, %v1547
  %v1932 = vpack.c.b16 %v1552, %v1548
  %v1933 = vpack.c.b16 %v1553, %v1549
  %v1934 = vpack.c.b16 %v1554, %v1550
  %v1935 = vpack.c.b16 %v1559, %v1555
  %v1936 = vpack.c.b16 %v1560, %v1556
  %v1937 = vpack.c.b16 %v1561, %v1557
  %v1938 = vpack.c.b16 %v1562, %v1558
  %v1939 = vpack.c.b16 %v1567, %v1563
  %v1940 = vpack.c.b16 %v1568, %v1564
  %v1941 = vpack.c.b16 %v1569, %v1565
  %v1942 = vpack.c.b16 %v1570, %v1566
  %v1943 = vpack.c.b16 %v1575, %v1571
  %v1944 = vpack.c.b16 %v1576, %v1572
  %v1945 = vpack.c.b16 %v1577, %v1573
  %v1946 = vpack.c.b16 %v1578, %v1574
  %v1947 = vpack.c.b16 %v1583, %v1579
  %v1948 = vpack.c.b16 %v1584, %v1580
  %v1949 = vpack.c.b16 %v1585, %v1581
  %v1950 = vpack.c.b16 %v1586, %v1582
  %v1951 = vpack.c.b16 %v1591, %v1587
  %v1952 = vpack.c.b16 %v1592, %v1588
  %v1953 = vpack.c.b16 %v1593, %v1589
  %v1954 = vpack.c.b16 %v1594, %v1590
  %v1955 = vpack.c.b16 %v1599, %v1595
  %v1956 = vpack.c.b16 %v1600, %v1596
  %v1957 = vpack.c.b16 %v1601, %v1597
  %v1958 = vpack.c.b16 %v1602, %v1598
  %v1959 = vpack.c.b16 %v1607, %v1603
  %v1960 = vpack.c.b16 %v1608, %v1604
  %v1961 = vpack.c.b16 %v1609, %v1605
  %v1962 = vpack.c.b16 %v1610, %v1606
  %v1963 = vpack.c.b16 %v1615, %v1611
  %v1964 = vpack.c.b16 %v1616, %v1612
  %v1965 = vpack.c.b16 %v1617, %v1613
  %v1966 = vpack.c.b16 %v1618, %v1614
  %v1967 = vpack.c.b16 %v1623, %v1619
  %v1968 = vpack.c.b16 %v1624, %v1620
  %v1969 = vpack.c.b16 %v1625, %v1621
  %v1970 = vpack.c.b16 %v1626, %v1622
  %v1971 = vpack.c.b16 %v1631, %v1627
  %v1972 = vpack.c.b16 %v1632, %v1628
  %v1973 = vpack.c.b16 %v1633, %v1629
  %v1974 = vpack.c.b16 %v1634, %v1630
  %v1975 = vpack.c.b16 %v1639, %v1635
  %v1976 = vpack.c.b16 %v1640, %v1636
  %v1977 = vpack.c.b16 %v1641, %v1637
  %v1978 = vpack.c.b16 %v1642, %v1638
  %v1979 = vpack.c.b16 %v1647, %v1643
  %v1980 = vpack.c.b16 %v1648, %v1644
  %v1981 = vpack.c.b16 %v1649, %v1645
  %v1982 = vpack.c.b16 %v1650, %v1646
  %v1983 = vpack.c.b16 %v1655, %v1651
  %v1984 = vpack.c.b16 %v1656, %v1652
  %v1985 = vpack.c.b16 %v1657, %v1653
  %v1986 = vpack.c.b16 %v1658, %v1654
  %v1987 = vpack.c.b16 %v1663, %v1659
  %v1988 = vpack.c.b16 %v1664, %v1660
  %v1989 = vpack.c.b16 %v1665, %v1661
  %v1990 = vpack.c.b16 %v1666, %v1662
  %v1991 = vpack.c.b16 %v1671, %v1667
  %v1992 = vpack.c.b16 %v1672, %v1668
  %v1993 = vpack.c.b16 %v1673, %v1669
  %v1994 = vpack.c.b16 %v1674, %v1670
  %v1995 = vpack.c.b16 %v1679, %v1675
  %v1996 = vpack.c.b16 %v1680, %v1676
  %v1997 = vpack.c.b16 %v1681, %v1677
  %v1998 = vpack.c.b16 %v1682, %v1678
  %v1999 = vpack.c.b16 %v1687, %v1683
  %v2000 = vpack.c.b16 %v1688, %v1684
  %v2001 = vpack.c.b16 %v1689, %v1685
  %v2002 = vpack.c.b16 %v1690, %v1686
  %v2003 = vpack.c.b16 %v1695, %v1691
  %v2004 = vpack.c.b16 %v1696, %v1692
  %v2005 = vpack.c.b16 %v1697, %v1693
  %v2006 = vpack.c.b16 %v1698, %v1694
  %v2007 = vpack.c.b16 %v1703, %v1699
  %v2008 = vpack.c.b16 %v1704, %v1700
  %v2009 = vpack.c.b16 %v1705, %v1701
  %v2010 = vpack.c.b16 %v1706, %v1702
  %v2011 = vpack.c.b16 %v1711, %v1707
  %v2012 = vpack.c.b16 %v1712, %v1708
  %v2013 = vpack.c.b16 %v1713, %v1709
  %v2014 = vpack.c.b16 %v1714, %v1710
  %v2015 = vpack.c.b16 %v1719, %v1715
  %v2016 = vpack.c.b16 %v1720, %v1716
  %v2017 = vpack.c.b16 %v1721, %v1717
  %v2018 = vpack.c.b16 %v1722, %v1718
  %v2019 = vpack.c.b16 %v1727, %v1723
  %v2020 = vpack.c.b16 %v1728, %v1724
  %v2021 = vpack.c.b16 %v1729, %v1725
  %v2022 = vpack.c.b16 %v1730, %v1726
  %v2023 = vpack.c.b16 %v1735, %v1731
  %v2024 = vpack.c.b16 %v1736, %v1732
  %v2025 = vpack.c.b16 %v1737, %v1733
  %v2026 = vpack.c.b16 %v1738, %v1734
  %v2027 = vpack.c.b16 %v1743, %v1739
  %v2028 = vpack.c.b16 %v1744, %v1740
  %v2029 = vpack.c.b16 %v1745, %v1741
  %v2030 = vpack.c.b16 %v1746, %v1742
  %v2031 = vpack.c.b16 %v1751, %v1747
  %v2032 = vpack.c.b16 %v1752, %v1748
  %v2033 = vpack.c.b16 %v1753, %v1749
  %v2034 = vpack.c.b16 %v1754, %v1750
  %v2035 = vpack.c.b16 %v1759, %v1755
  %v2036 = vpack.c.b16 %v1760, %v1756
  %v2037 = vpack.c.b16 %v1761, %v1757
  %v2038 = vpack.c.b16 %v1762, %v1758
  %v2039 = vpack.c.b16 %v1767, %v1763
  %v2040 = vpack.c.b16 %v1768, %v1764
  %v2041 = vpack.c.b16 %v1769, %v1765
  %v2042 = vpack.c.b16 %v1770, %v1766
  %v2043 = vpack.c.b16 %v1775, %v1771
  %v2044 = vpack.c.b16 %v1776, %v1772
  %v2045 = vpack.c.b16 %v1777, %v1773
  %v2046 = vpack.c.b16 %v1778, %v1774
  %v2047 = vpack.c.b16 %v1783, %v1779
  %v2048 = vpack.c.b16 %v1784, %v1780
  %v2049 = vpack.c.b16 %v1785, %v1781
  %v2050 = vpack.c.b16 %v1786, %v1782
  %v2051 = vpack.c.b16 %v1791, %v1787
  %v2052 = vpack.c.b16 %v1792, %v1788
  %v2053 = vpack.c.b16 %v1793, %v1789
  %v2054 = vpack.c.b16 %v1794, %v1790
  %v2055 = vpack.c.b16 %v1799, %v1795
  %v2056 = vpack.c.b16 %v1800, %v1796
  %v2057 = vpack.c.b16 %v1801, %v1797
  %v2058 = vpack.c.b16 %v1802, %v1798
  %2315 = vmatpush.bf16.msra.mxu0 %v1831
  %2316 = vmatpush.bf16.msra.mxu0 %v1827
  %2317 = vmatpush.bf16.msra.mxu0 %v1823
  %2318 = vmatpush.bf16.msra.mxu0 %v1819
  %2319 = vmatpush.bf16.msra.mxu0 %v1815
  %2320 = vmatpush.bf16.msra.mxu0 %v1811
  %2321 = vmatpush.bf16.msra.mxu0 %v1807
  %2322 = vmatpush.bf16.msra.mxu0 %v1803
  %2323 = vmatmul.bf16.gmra.mxu0 %v779
  %v2324 = vpop.f32.mrf.mxu0
  %v2325 = vadd.f32 0.0, %v2324
  %v2326 = vpop.f32.mrf.mxu0
  %v2327 = vadd.f32 0.0, %v2326
  %2328 = vmatmul.bf16.gmra.mxu0 %v787
  %v2329 = vpop.f32.mrf.mxu0
  %v2330 = vadd.f32 0.0, %v2329
  %v2331 = vpop.f32.mrf.mxu0
  %v2332 = vadd.f32 0.0, %v2331
  %2333 = vmatmul.bf16.gmra.mxu0 %v795
  %v2334 = vpop.f32.mrf.mxu0
  %v2335 = vadd.f32 0.0, %v2334
  %v2336 = vpop.f32.mrf.mxu0
  %v2337 = vadd.f32 0.0, %v2336
  %2338 = vmatmul.bf16.gmra.mxu0 %v803
  %v2339 = vpop.f32.mrf.mxu0
  %v2340 = vadd.f32 0.0, %v2339
  %v2341 = vpop.f32.mrf.mxu0
  %v2342 = vadd.f32 0.0, %v2341
  %2343 = vmatmul.bf16.gmra.mxu0 %v811
  %v2344 = vpop.f32.mrf.mxu0
  %v2345 = vadd.f32 0.0, %v2344
  %v2346 = vpop.f32.mrf.mxu0
  %v2347 = vadd.f32 0.0, %v2346
  %2348 = vmatmul.bf16.gmra.mxu0 %v819
  %v2349 = vpop.f32.mrf.mxu0
  %v2350 = vadd.f32 0.0, %v2349
  %v2351 = vpop.f32.mrf.mxu0
  %v2352 = vadd.f32 0.0, %v2351
  %2353 = vmatmul.bf16.gmra.mxu0 %v827
  %v2354 = vpop.f32.mrf.mxu0
  %v2355 = vadd.f32 0.0, %v2354
  %v2356 = vpop.f32.mrf.mxu0
  %v2357 = vadd.f32 0.0, %v2356
  %2358 = vmatmul.bf16.gmra.mxu0 %v835
  %v2359 = vpop.f32.mrf.mxu0
  %v2360 = vadd.f32 0.0, %v2359
  %v2361 = vpop.f32.mrf.mxu0
  %v2362 = vadd.f32 0.0, %v2361
  %2363 = vmatmul.bf16.gmra.mxu0 %v843
  %v2364 = vpop.f32.mrf.mxu0
  %v2365 = vadd.f32 0.0, %v2364
  %v2366 = vpop.f32.mrf.mxu0
  %v2367 = vadd.f32 0.0, %v2366
  %2368 = vmatmul.bf16.gmra.mxu0 %v851
  %v2369 = vpop.f32.mrf.mxu0
  %v2370 = vadd.f32 0.0, %v2369
  %v2371 = vpop.f32.mrf.mxu0
  %v2372 = vadd.f32 0.0, %v2371
  %2373 = vmatmul.bf16.gmra.mxu0 %v859
  %v2374 = vpop.f32.mrf.mxu0
  %v2375 = vadd.f32 0.0, %v2374
  %v2376 = vpop.f32.mrf.mxu0
  %v2377 = vadd.f32 0.0, %v2376
  %2378 = vmatmul.bf16.gmra.mxu0 %v867
  %v2379 = vpop.f32.mrf.mxu0
  %v2380 = vadd.f32 0.0, %v2379
  %v2381 = vpop.f32.mrf.mxu0
  %v2382 = vadd.f32 0.0, %v2381
  %2383 = vmatmul.bf16.gmra.mxu0 %v875
  %v2384 = vpop.f32.mrf.mxu0
  %v2385 = vadd.f32 0.0, %v2384
  %v2386 = vpop.f32.mrf.mxu0
  %v2387 = vadd.f32 0.0, %v2386
  %2388 = vmatmul.bf16.gmra.mxu0 %v883
  %v2389 = vpop.f32.mrf.mxu0
  %v2390 = vadd.f32 0.0, %v2389
  %v2391 = vpop.f32.mrf.mxu0
  %v2392 = vadd.f32 0.0, %v2391
  %2393 = vmatmul.bf16.gmra.mxu0 %v891
  %v2394 = vpop.f32.mrf.mxu0
  %v2395 = vadd.f32 0.0, %v2394
  %v2396 = vpop.f32.mrf.mxu0
  %v2397 = vadd.f32 0.0, %v2396
  %2398 = vmatmul.bf16.gmra.mxu0 %v899
  %v2399 = vpop.f32.mrf.mxu0
  %v2400 = vadd.f32 0.0, %v2399
  %v2401 = vpop.f32.mrf.mxu0
  %v2402 = vadd.f32 0.0, %v2401
  %2403 = vdwg.mxu0
  %2404 = vmatpush.bf16.msra.mxu0 %v1863
  %2405 = vmatpush.bf16.msra.mxu0 %v1859
  %2406 = vmatpush.bf16.msra.mxu0 %v1855
  %2407 = vmatpush.bf16.msra.mxu0 %v1851
  %2408 = vmatpush.bf16.msra.mxu0 %v1847
  %2409 = vmatpush.bf16.msra.mxu0 %v1843
  %2410 = vmatpush.bf16.msra.mxu0 %v1839
  %2411 = vmatpush.bf16.msra.mxu0 %v1835
  %2412 = vmatmul.bf16.gmra.mxu0 %v780
  %v2413 = vpop.f32.mrf.mxu0
  %v2414 = vadd.f32 %v2325, %v2413
  %v2415 = vpop.f32.mrf.mxu0
  %v2416 = vadd.f32 %v2327, %v2415
  %2417 = vmatmul.bf16.gmra.mxu0 %v788
  %v2418 = vpop.f32.mrf.mxu0
  %v2419 = vadd.f32 %v2330, %v2418
  %v2420 = vpop.f32.mrf.mxu0
  %v2421 = vadd.f32 %v2332, %v2420
  %2422 = vmatmul.bf16.gmra.mxu0 %v796
  %v2423 = vpop.f32.mrf.mxu0
  %v2424 = vadd.f32 %v2335, %v2423
  %v2425 = vpop.f32.mrf.mxu0
  %v2426 = vadd.f32 %v2337, %v2425
  %2427 = vmatmul.bf16.gmra.mxu0 %v804
  %v2428 = vpop.f32.mrf.mxu0
  %v2429 = vadd.f32 %v2340, %v2428
  %v2430 = vpop.f32.mrf.mxu0
  %v2431 = vadd.f32 %v2342, %v2430
  %2432 = vmatmul.bf16.gmra.mxu0 %v812
  %v2433 = vpop.f32.mrf.mxu0
  %v2434 = vadd.f32 %v2345, %v2433
  %v2435 = vpop.f32.mrf.mxu0
  %v2436 = vadd.f32 %v2347, %v2435
  %2437 = vmatmul.bf16.gmra.mxu0 %v820
  %v2438 = vpop.f32.mrf.mxu0
  %v2439 = vadd.f32 %v2350, %v2438
  %v2440 = vpop.f32.mrf.mxu0
  %v2441 = vadd.f32 %v2352, %v2440
  %2442 = vmatmul.bf16.gmra.mxu0 %v828
  %v2443 = vpop.f32.mrf.mxu0
  %v2444 = vadd.f32 %v2355, %v2443
  %v2445 = vpop.f32.mrf.mxu0
  %v2446 = vadd.f32 %v2357, %v2445
  %2447 = vmatmul.bf16.gmra.mxu0 %v836
  %v2448 = vpop.f32.mrf.mxu0
  %v2449 = vadd.f32 %v2360, %v2448
  %v2450 = vpop.f32.mrf.mxu0
  %v2451 = vadd.f32 %v2362, %v2450
  %2452 = vmatmul.bf16.gmra.mxu0 %v844
  %v2453 = vpop.f32.mrf.mxu0
  %v2454 = vadd.f32 %v2365, %v2453
  %v2455 = vpop.f32.mrf.mxu0
  %v2456 = vadd.f32 %v2367, %v2455
  %2457 = vmatmul.bf16.gmra.mxu0 %v852
  %v2458 = vpop.f32.mrf.mxu0
  %v2459 = vadd.f32 %v2370, %v2458
  %v2460 = vpop.f32.mrf.mxu0
  %v2461 = vadd.f32 %v2372, %v2460
  %2462 = vmatmul.bf16.gmra.mxu0 %v860
  %v2463 = vpop.f32.mrf.mxu0
  %v2464 = vadd.f32 %v2375, %v2463
  %v2465 = vpop.f32.mrf.mxu0
  %v2466 = vadd.f32 %v2377, %v2465
  %2467 = vmatmul.bf16.gmra.mxu0 %v868
  %v2468 = vpop.f32.mrf.mxu0
  %v2469 = vadd.f32 %v2380, %v2468
  %v2470 = vpop.f32.mrf.mxu0
  %v2471 = vadd.f32 %v2382, %v2470
  %2472 = vmatmul.bf16.gmra.mxu0 %v876
  %v2473 = vpop.f32.mrf.mxu0
  %v2474 = vadd.f32 %v2385, %v2473
  %v2475 = vpop.f32.mrf.mxu0
  %v2476 = vadd.f32 %v2387, %v2475
  %2477 = vmatmul.bf16.gmra.mxu0 %v884
  %v2478 = vpop.f32.mrf.mxu0
  %v2479 = vadd.f32 %v2390, %v2478
  %v2480 = vpop.f32.mrf.mxu0
  %v2481 = vadd.f32 %v2392, %v2480
  %2482 = vmatmul.bf16.gmra.mxu0 %v892
  %v2483 = vpop.f32.mrf.mxu0
  %v2484 = vadd.f32 %v2395, %v2483
  %v2485 = vpop.f32.mrf.mxu0
  %v2486 = vadd.f32 %v2397, %v2485
  %2487 = vmatmul.bf16.gmra.mxu0 %v900
  %v2488 = vpop.f32.mrf.mxu0
  %v2489 = vadd.f32 %v2400, %v2488
  %v2490 = vpop.f32.mrf.mxu0
  %v2491 = vadd.f32 %v2402, %v2490
  %2492 = vdwg.mxu0
  %2493 = vmatpush.bf16.msra.mxu0 %v1895
  %2494 = vmatpush.bf16.msra.mxu0 %v1891
  %2495 = vmatpush.bf16.msra.mxu0 %v1887
  %2496 = vmatpush.bf16.msra.mxu0 %v1883
  %2497 = vmatpush.bf16.msra.mxu0 %v1879
  %2498 = vmatpush.bf16.msra.mxu0 %v1875
  %2499 = vmatpush.bf16.msra.mxu0 %v1871
  %2500 = vmatpush.bf16.msra.mxu0 %v1867
  %2501 = vmatmul.bf16.gmra.mxu0 %v781
  %v2502 = vpop.f32.mrf.mxu0
  %v2503 = vadd.f32 %v2414, %v2502
  %v2504 = vpop.f32.mrf.mxu0
  %v2505 = vadd.f32 %v2416, %v2504
  %2506 = vmatmul.bf16.gmra.mxu0 %v789
  %v2507 = vpop.f32.mrf.mxu0
  %v2508 = vadd.f32 %v2419, %v2507
  %v2509 = vpop.f32.mrf.mxu0
  %v2510 = vadd.f32 %v2421, %v2509
  %2511 = vmatmul.bf16.gmra.mxu0 %v797
  %v2512 = vpop.f32.mrf.mxu0
  %v2513 = vadd.f32 %v2424, %v2512
  %v2514 = vpop.f32.mrf.mxu0
  %v2515 = vadd.f32 %v2426, %v2514
  %2516 = vmatmul.bf16.gmra.mxu0 %v805
  %v2517 = vpop.f32.mrf.mxu0
  %v2518 = vadd.f32 %v2429, %v2517
  %v2519 = vpop.f32.mrf.mxu0
  %v2520 = vadd.f32 %v2431, %v2519
  %2521 = vmatmul.bf16.gmra.mxu0 %v813
  %v2522 = vpop.f32.mrf.mxu0
  %v2523 = vadd.f32 %v2434, %v2522
  %v2524 = vpop.f32.mrf.mxu0
  %v2525 = vadd.f32 %v2436, %v2524
  %2526 = vmatmul.bf16.gmra.mxu0 %v821
  %v2527 = vpop.f32.mrf.mxu0
  %v2528 = vadd.f32 %v2439, %v2527
  %v2529 = vpop.f32.mrf.mxu0
  %v2530 = vadd.f32 %v2441, %v2529
  %2531 = vmatmul.bf16.gmra.mxu0 %v829
  %v2532 = vpop.f32.mrf.mxu0
  %v2533 = vadd.f32 %v2444, %v2532
  %v2534 = vpop.f32.mrf.mxu0
  %v2535 = vadd.f32 %v2446, %v2534
  %2536 = vmatmul.bf16.gmra.mxu0 %v837
  %v2537 = vpop.f32.mrf.mxu0
  %v2538 = vadd.f32 %v2449, %v2537
  %v2539 = vpop.f32.mrf.mxu0
  %v2540 = vadd.f32 %v2451, %v2539
  %2541 = vmatmul.bf16.gmra.mxu0 %v845
  %v2542 = vpop.f32.mrf.mxu0
  %v2543 = vadd.f32 %v2454, %v2542
  %v2544 = vpop.f32.mrf.mxu0
  %v2545 = vadd.f32 %v2456, %v2544
  %2546 = vmatmul.bf16.gmra.mxu0 %v853
  %v2547 = vpop.f32.mrf.mxu0
  %v2548 = vadd.f32 %v2459, %v2547
  %v2549 = vpop.f32.mrf.mxu0
  %v2550 = vadd.f32 %v2461, %v2549
  %2551 = vmatmul.bf16.gmra.mxu0 %v861
  %v2552 = vpop.f32.mrf.mxu0
  %v2553 = vadd.f32 %v2464, %v2552
  %v2554 = vpop.f32.mrf.mxu0
  %v2555 = vadd.f32 %v2466, %v2554
  %2556 = vmatmul.bf16.gmra.mxu0 %v869
  %v2557 = vpop.f32.mrf.mxu0
  %v2558 = vadd.f32 %v2469, %v2557
  %v2559 = vpop.f32.mrf.mxu0
  %v2560 = vadd.f32 %v2471, %v2559
  %2561 = vmatmul.bf16.gmra.mxu0 %v877
  %v2562 = vpop.f32.mrf.mxu0
  %v2563 = vadd.f32 %v2474, %v2562
  %v2564 = vpop.f32.mrf.mxu0
  %v2565 = vadd.f32 %v2476, %v2564
  %2566 = vmatmul.bf16.gmra.mxu0 %v885
  %v2567 = vpop.f32.mrf.mxu0
  %v2568 = vadd.f32 %v2479, %v2567
  %v2569 = vpop.f32.mrf.mxu0
  %v2570 = vadd.f32 %v2481, %v2569
  %2571 = vmatmul.bf16.gmra.mxu0 %v893
  %v2572 = vpop.f32.mrf.mxu0
  %v2573 = vadd.f32 %v2484, %v2572
  %v2574 = vpop.f32.mrf.mxu0
  %v2575 = vadd.f32 %v2486, %v2574
  %2576 = vmatmul.bf16.gmra.mxu0 %v901
  %v2577 = vpop.f32.mrf.mxu0
  %v2578 = vadd.f32 %v2489, %v2577
  %v2579 = vpop.f32.mrf.mxu0
  %v2580 = vadd.f32 %v2491, %v2579
  %2581 = vdwg.mxu0
  %2582 = vmatpush.bf16.msra.mxu0 %v1927
  %2583 = vmatpush.bf16.msra.mxu0 %v1923
  %2584 = vmatpush.bf16.msra.mxu0 %v1919
  %2585 = vmatpush.bf16.msra.mxu0 %v1915
  %2586 = vmatpush.bf16.msra.mxu0 %v1911
  %2587 = vmatpush.bf16.msra.mxu0 %v1907
  %2588 = vmatpush.bf16.msra.mxu0 %v1903
  %2589 = vmatpush.bf16.msra.mxu0 %v1899
  %2590 = vmatmul.bf16.gmra.mxu0 %v782
  %v2591 = vpop.f32.mrf.mxu0
  %v2592 = vadd.f32 %v2503, %v2591
  %v2593 = vpop.f32.mrf.mxu0
  %v2594 = vadd.f32 %v2505, %v2593
  %2595 = vmatmul.bf16.gmra.mxu0 %v790
  %v2596 = vpop.f32.mrf.mxu0
  %v2597 = vadd.f32 %v2508, %v2596
  %v2598 = vpop.f32.mrf.mxu0
  %v2599 = vadd.f32 %v2510, %v2598
  %2600 = vmatmul.bf16.gmra.mxu0 %v798
  %v2601 = vpop.f32.mrf.mxu0
  %v2602 = vadd.f32 %v2513, %v2601
  %v2603 = vpop.f32.mrf.mxu0
  %v2604 = vadd.f32 %v2515, %v2603
  %2605 = vmatmul.bf16.gmra.mxu0 %v806
  %v2606 = vpop.f32.mrf.mxu0
  %v2607 = vadd.f32 %v2518, %v2606
  %v2608 = vpop.f32.mrf.mxu0
  %v2609 = vadd.f32 %v2520, %v2608
  %2610 = vmatmul.bf16.gmra.mxu0 %v814
  %v2611 = vpop.f32.mrf.mxu0
  %v2612 = vadd.f32 %v2523, %v2611
  %v2613 = vpop.f32.mrf.mxu0
  %v2614 = vadd.f32 %v2525, %v2613
  %2615 = vmatmul.bf16.gmra.mxu0 %v822
  %v2616 = vpop.f32.mrf.mxu0
  %v2617 = vadd.f32 %v2528, %v2616
  %v2618 = vpop.f32.mrf.mxu0
  %v2619 = vadd.f32 %v2530, %v2618
  %2620 = vmatmul.bf16.gmra.mxu0 %v830
  %v2621 = vpop.f32.mrf.mxu0
  %v2622 = vadd.f32 %v2533, %v2621
  %v2623 = vpop.f32.mrf.mxu0
  %v2624 = vadd.f32 %v2535, %v2623
  %2625 = vmatmul.bf16.gmra.mxu0 %v838
  %v2626 = vpop.f32.mrf.mxu0
  %v2627 = vadd.f32 %v2538, %v2626
  %v2628 = vpop.f32.mrf.mxu0
  %v2629 = vadd.f32 %v2540, %v2628
  %2630 = vmatmul.bf16.gmra.mxu0 %v846
  %v2631 = vpop.f32.mrf.mxu0
  %v2632 = vadd.f32 %v2543, %v2631
  %v2633 = vpop.f32.mrf.mxu0
  %v2634 = vadd.f32 %v2545, %v2633
  %2635 = vmatmul.bf16.gmra.mxu0 %v854
  %v2636 = vpop.f32.mrf.mxu0
  %v2637 = vadd.f32 %v2548, %v2636
  %v2638 = vpop.f32.mrf.mxu0
  %v2639 = vadd.f32 %v2550, %v2638
  %2640 = vmatmul.bf16.gmra.mxu0 %v862
  %v2641 = vpop.f32.mrf.mxu0
  %v2642 = vadd.f32 %v2553, %v2641
  %v2643 = vpop.f32.mrf.mxu0
  %v2644 = vadd.f32 %v2555, %v2643
  %2645 = vmatmul.bf16.gmra.mxu0 %v870
  %v2646 = vpop.f32.mrf.mxu0
  %v2647 = vadd.f32 %v2558, %v2646
  %v2648 = vpop.f32.mrf.mxu0
  %v2649 = vadd.f32 %v2560, %v2648
  %2650 = vmatmul.bf16.gmra.mxu0 %v878
  %v2651 = vpop.f32.mrf.mxu0
  %v2652 = vadd.f32 %v2563, %v2651
  %v2653 = vpop.f32.mrf.mxu0
  %v2654 = vadd.f32 %v2565, %v2653
  %2655 = vmatmul.bf16.gmra.mxu0 %v886
  %v2656 = vpop.f32.mrf.mxu0
  %v2657 = vadd.f32 %v2568, %v2656
  %v2658 = vpop.f32.mrf.mxu0
  %v2659 = vadd.f32 %v2570, %v2658
  %2660 = vmatmul.bf16.gmra.mxu0 %v894
  %v2661 = vpop.f32.mrf.mxu0
  %v2662 = vadd.f32 %v2573, %v2661
  %v2663 = vpop.f32.mrf.mxu0
  %v2664 = vadd.f32 %v2575, %v2663
  %2665 = vmatmul.bf16.gmra.mxu0 %v902
  %v2666 = vpop.f32.mrf.mxu0
  %v2667 = vadd.f32 %v2578, %v2666
  %v2668 = vpop.f32.mrf.mxu0
  %v2669 = vadd.f32 %v2580, %v2668
  %2670 = vdwg.mxu0
  %2671 = vmatpush.bf16.msra.mxu0 %v1959
  %2672 = vmatpush.bf16.msra.mxu0 %v1955
  %2673 = vmatpush.bf16.msra.mxu0 %v1951
  %2674 = vmatpush.bf16.msra.mxu0 %v1947
  %2675 = vmatpush.bf16.msra.mxu0 %v1943
  %2676 = vmatpush.bf16.msra.mxu0 %v1939
  %2677 = vmatpush.bf16.msra.mxu0 %v1935
  %2678 = vmatpush.bf16.msra.mxu0 %v1931
  %2679 = vmatmul.bf16.gmra.mxu0 %v783
  %v2680 = vpop.f32.mrf.mxu0
  %v2681 = vadd.f32 %v2592, %v2680
  %v2682 = vpop.f32.mrf.mxu0
  %v2683 = vadd.f32 %v2594, %v2682
  %2684 = vmatmul.bf16.gmra.mxu0 %v791
  %v2685 = vpop.f32.mrf.mxu0
  %v2686 = vadd.f32 %v2597, %v2685
  %v2687 = vpop.f32.mrf.mxu0
  %v2688 = vadd.f32 %v2599, %v2687
  %2689 = vmatmul.bf16.gmra.mxu0 %v799
  %v2690 = vpop.f32.mrf.mxu0
  %v2691 = vadd.f32 %v2602, %v2690
  %v2692 = vpop.f32.mrf.mxu0
  %v2693 = vadd.f32 %v2604, %v2692
  %2694 = vmatmul.bf16.gmra.mxu0 %v807
  %v2695 = vpop.f32.mrf.mxu0
  %v2696 = vadd.f32 %v2607, %v2695
  %v2697 = vpop.f32.mrf.mxu0
  %v2698 = vadd.f32 %v2609, %v2697
  %2699 = vmatmul.bf16.gmra.mxu0 %v815
  %v2700 = vpop.f32.mrf.mxu0
  %v2701 = vadd.f32 %v2612, %v2700
  %v2702 = vpop.f32.mrf.mxu0
  %v2703 = vadd.f32 %v2614, %v2702
  %2704 = vmatmul.bf16.gmra.mxu0 %v823
  %v2705 = vpop.f32.mrf.mxu0
  %v2706 = vadd.f32 %v2617, %v2705
  %v2707 = vpop.f32.mrf.mxu0
  %v2708 = vadd.f32 %v2619, %v2707
  %2709 = vmatmul.bf16.gmra.mxu0 %v831
  %v2710 = vpop.f32.mrf.mxu0
  %v2711 = vadd.f32 %v2622, %v2710
  %v2712 = vpop.f32.mrf.mxu0
  %v2713 = vadd.f32 %v2624, %v2712
  %2714 = vmatmul.bf16.gmra.mxu0 %v839
  %v2715 = vpop.f32.mrf.mxu0
  %v2716 = vadd.f32 %v2627, %v2715
  %v2717 = vpop.f32.mrf.mxu0
  %v2718 = vadd.f32 %v2629, %v2717
  %2719 = vmatmul.bf16.gmra.mxu0 %v847
  %v2720 = vpop.f32.mrf.mxu0
  %v2721 = vadd.f32 %v2632, %v2720
  %v2722 = vpop.f32.mrf.mxu0
  %v2723 = vadd.f32 %v2634, %v2722
  %2724 = vmatmul.bf16.gmra.mxu0 %v855
  %v2725 = vpop.f32.mrf.mxu0
  %v2726 = vadd.f32 %v2637, %v2725
  %v2727 = vpop.f32.mrf.mxu0
  %v2728 = vadd.f32 %v2639, %v2727
  %2729 = vmatmul.bf16.gmra.mxu0 %v863
  %v2730 = vpop.f32.mrf.mxu0
  %v2731 = vadd.f32 %v2642, %v2730
  %v2732 = vpop.f32.mrf.mxu0
  %v2733 = vadd.f32 %v2644, %v2732
  %2734 = vmatmul.bf16.gmra.mxu0 %v871
  %v2735 = vpop.f32.mrf.mxu0
  %v2736 = vadd.f32 %v2647, %v2735
  %v2737 = vpop.f32.mrf.mxu0
  %v2738 = vadd.f32 %v2649, %v2737
  %2739 = vmatmul.bf16.gmra.mxu0 %v879
  %v2740 = vpop.f32.mrf.mxu0
  %v2741 = vadd.f32 %v2652, %v2740
  %v2742 = vpop.f32.mrf.mxu0
  %v2743 = vadd.f32 %v2654, %v2742
  %2744 = vmatmul.bf16.gmra.mxu0 %v887
  %v2745 = vpop.f32.mrf.mxu0
  %v2746 = vadd.f32 %v2657, %v2745
  %v2747 = vpop.f32.mrf.mxu0
  %v2748 = vadd.f32 %v2659, %v2747
  %2749 = vmatmul.bf16.gmra.mxu0 %v895
  %v2750 = vpop.f32.mrf.mxu0
  %v2751 = vadd.f32 %v2662, %v2750
  %v2752 = vpop.f32.mrf.mxu0
  %v2753 = vadd.f32 %v2664, %v2752
  %2754 = vmatmul.bf16.gmra.mxu0 %v903
  %v2755 = vpop.f32.mrf.mxu0
  %v2756 = vadd.f32 %v2667, %v2755
  %v2757 = vpop.f32.mrf.mxu0
  %v2758 = vadd.f32 %v2669, %v2757
  %2759 = vdwg.mxu0
  %2760 = vmatpush.bf16.msra.mxu0 %v1991
  %2761 = vmatpush.bf16.msra.mxu0 %v1987
  %2762 = vmatpush.bf16.msra.mxu0 %v1983
  %2763 = vmatpush.bf16.msra.mxu0 %v1979
  %2764 = vmatpush.bf16.msra.mxu0 %v1975
  %2765 = vmatpush.bf16.msra.mxu0 %v1971
  %2766 = vmatpush.bf16.msra.mxu0 %v1967
  %2767 = vmatpush.bf16.msra.mxu0 %v1963
  %2768 = vmatmul.bf16.gmra.mxu0 %v784
  %v2769 = vpop.f32.mrf.mxu0
  %v2770 = vadd.f32 %v2681, %v2769
  %v2771 = vpop.f32.mrf.mxu0
  %v2772 = vadd.f32 %v2683, %v2771
  %2773 = vmatmul.bf16.gmra.mxu0 %v792
  %v2774 = vpop.f32.mrf.mxu0
  %v2775 = vadd.f32 %v2686, %v2774
  %v2776 = vpop.f32.mrf.mxu0
  %v2777 = vadd.f32 %v2688, %v2776
  %2778 = vmatmul.bf16.gmra.mxu0 %v800
  %v2779 = vpop.f32.mrf.mxu0
  %v2780 = vadd.f32 %v2691, %v2779
  %v2781 = vpop.f32.mrf.mxu0
  %v2782 = vadd.f32 %v2693, %v2781
  %2783 = vmatmul.bf16.gmra.mxu0 %v808
  %v2784 = vpop.f32.mrf.mxu0
  %v2785 = vadd.f32 %v2696, %v2784
  %v2786 = vpop.f32.mrf.mxu0
  %v2787 = vadd.f32 %v2698, %v2786
  %2788 = vmatmul.bf16.gmra.mxu0 %v816
  %v2789 = vpop.f32.mrf.mxu0
  %v2790 = vadd.f32 %v2701, %v2789
  %v2791 = vpop.f32.mrf.mxu0
  %v2792 = vadd.f32 %v2703, %v2791
  %2793 = vmatmul.bf16.gmra.mxu0 %v824
  %v2794 = vpop.f32.mrf.mxu0
  %v2795 = vadd.f32 %v2706, %v2794
  %v2796 = vpop.f32.mrf.mxu0
  %v2797 = vadd.f32 %v2708, %v2796
  %2798 = vmatmul.bf16.gmra.mxu0 %v832
  %v2799 = vpop.f32.mrf.mxu0
  %v2800 = vadd.f32 %v2711, %v2799
  %v2801 = vpop.f32.mrf.mxu0
  %v2802 = vadd.f32 %v2713, %v2801
  %2803 = vmatmul.bf16.gmra.mxu0 %v840
  %v2804 = vpop.f32.mrf.mxu0
  %v2805 = vadd.f32 %v2716, %v2804
  %v2806 = vpop.f32.mrf.mxu0
  %v2807 = vadd.f32 %v2718, %v2806
  %2808 = vmatmul.bf16.gmra.mxu0 %v848
  %v2809 = vpop.f32.mrf.mxu0
  %v2810 = vadd.f32 %v2721, %v2809
  %v2811 = vpop.f32.mrf.mxu0
  %v2812 = vadd.f32 %v2723, %v2811
  %2813 = vmatmul.bf16.gmra.mxu0 %v856
  %v2814 = vpop.f32.mrf.mxu0
  %v2815 = vadd.f32 %v2726, %v2814
  %v2816 = vpop.f32.mrf.mxu0
  %v2817 = vadd.f32 %v2728, %v2816
  %2818 = vmatmul.bf16.gmra.mxu0 %v864
  %v2819 = vpop.f32.mrf.mxu0
  %v2820 = vadd.f32 %v2731, %v2819
  %v2821 = vpop.f32.mrf.mxu0
  %v2822 = vadd.f32 %v2733, %v2821
  %2823 = vmatmul.bf16.gmra.mxu0 %v872
  %v2824 = vpop.f32.mrf.mxu0
  %v2825 = vadd.f32 %v2736, %v2824
  %v2826 = vpop.f32.mrf.mxu0
  %v2827 = vadd.f32 %v2738, %v2826
  %2828 = vmatmul.bf16.gmra.mxu0 %v880
  %v2829 = vpop.f32.mrf.mxu0
  %v2830 = vadd.f32 %v2741, %v2829
  %v2831 = vpop.f32.mrf.mxu0
  %v2832 = vadd.f32 %v2743, %v2831
  %2833 = vmatmul.bf16.gmra.mxu0 %v888
  %v2834 = vpop.f32.mrf.mxu0
  %v2835 = vadd.f32 %v2746, %v2834
  %v2836 = vpop.f32.mrf.mxu0
  %v2837 = vadd.f32 %v2748, %v2836
  %2838 = vmatmul.bf16.gmra.mxu0 %v896
  %v2839 = vpop.f32.mrf.mxu0
  %v2840 = vadd.f32 %v2751, %v2839
  %v2841 = vpop.f32.mrf.mxu0
  %v2842 = vadd.f32 %v2753, %v2841
  %2843 = vmatmul.bf16.gmra.mxu0 %v904
  %v2844 = vpop.f32.mrf.mxu0
  %v2845 = vadd.f32 %v2756, %v2844
  %v2846 = vpop.f32.mrf.mxu0
  %v2847 = vadd.f32 %v2758, %v2846
  %2848 = vdwg.mxu0
  %2849 = vmatpush.bf16.msra.mxu0 %v2023
  %2850 = vmatpush.bf16.msra.mxu0 %v2019
  %2851 = vmatpush.bf16.msra.mxu0 %v2015
  %2852 = vmatpush.bf16.msra.mxu0 %v2011
  %2853 = vmatpush.bf16.msra.mxu0 %v2007
  %2854 = vmatpush.bf16.msra.mxu0 %v2003
  %2855 = vmatpush.bf16.msra.mxu0 %v1999
  %2856 = vmatpush.bf16.msra.mxu0 %v1995
  %2857 = vmatmul.bf16.gmra.mxu0 %v785
  %v2858 = vpop.f32.mrf.mxu0
  %v2859 = vadd.f32 %v2770, %v2858
  %v2860 = vpop.f32.mrf.mxu0
  %v2861 = vadd.f32 %v2772, %v2860
  %2862 = vmatmul.bf16.gmra.mxu0 %v793
  %v2863 = vpop.f32.mrf.mxu0
  %v2864 = vadd.f32 %v2775, %v2863
  %v2865 = vpop.f32.mrf.mxu0
  %v2866 = vadd.f32 %v2777, %v2865
  %2867 = vmatmul.bf16.gmra.mxu0 %v801
  %v2868 = vpop.f32.mrf.mxu0
  %v2869 = vadd.f32 %v2780, %v2868
  %v2870 = vpop.f32.mrf.mxu0
  %v2871 = vadd.f32 %v2782, %v2870
  %2872 = vmatmul.bf16.gmra.mxu0 %v809
  %v2873 = vpop.f32.mrf.mxu0
  %v2874 = vadd.f32 %v2785, %v2873
  %v2875 = vpop.f32.mrf.mxu0
  %v2876 = vadd.f32 %v2787, %v2875
  %2877 = vmatmul.bf16.gmra.mxu0 %v817
  %v2878 = vpop.f32.mrf.mxu0
  %v2879 = vadd.f32 %v2790, %v2878
  %v2880 = vpop.f32.mrf.mxu0
  %v2881 = vadd.f32 %v2792, %v2880
  %2882 = vmatmul.bf16.gmra.mxu0 %v825
  %v2883 = vpop.f32.mrf.mxu0
  %v2884 = vadd.f32 %v2795, %v2883
  %v2885 = vpop.f32.mrf.mxu0
  %v2886 = vadd.f32 %v2797, %v2885
  %2887 = vmatmul.bf16.gmra.mxu0 %v833
  %v2888 = vpop.f32.mrf.mxu0
  %v2889 = vadd.f32 %v2800, %v2888
  %v2890 = vpop.f32.mrf.mxu0
  %v2891 = vadd.f32 %v2802, %v2890
  %2892 = vmatmul.bf16.gmra.mxu0 %v841
  %v2893 = vpop.f32.mrf.mxu0
  %v2894 = vadd.f32 %v2805, %v2893
  %v2895 = vpop.f32.mrf.mxu0
  %v2896 = vadd.f32 %v2807, %v2895
  %2897 = vmatmul.bf16.gmra.mxu0 %v849
  %v2898 = vpop.f32.mrf.mxu0
  %v2899 = vadd.f32 %v2810, %v2898
  %v2900 = vpop.f32.mrf.mxu0
  %v2901 = vadd.f32 %v2812, %v2900
  %2902 = vmatmul.bf16.gmra.mxu0 %v857
  %v2903 = vpop.f32.mrf.mxu0
  %v2904 = vadd.f32 %v2815, %v2903
  %v2905 = vpop.f32.mrf.mxu0
  %v2906 = vadd.f32 %v2817, %v2905
  %2907 = vmatmul.bf16.gmra.mxu0 %v865
  %v2908 = vpop.f32.mrf.mxu0
  %v2909 = vadd.f32 %v2820, %v2908
  %v2910 = vpop.f32.mrf.mxu0
  %v2911 = vadd.f32 %v2822, %v2910
  %2912 = vmatmul.bf16.gmra.mxu0 %v873
  %v2913 = vpop.f32.mrf.mxu0
  %v2914 = vadd.f32 %v2825, %v2913
  %v2915 = vpop.f32.mrf.mxu0
  %v2916 = vadd.f32 %v2827, %v2915
  %2917 = vmatmul.bf16.gmra.mxu0 %v881
  %v2918 = vpop.f32.mrf.mxu0
  %v2919 = vadd.f32 %v2830, %v2918
  %v2920 = vpop.f32.mrf.mxu0
  %v2921 = vadd.f32 %v2832, %v2920
  %2922 = vmatmul.bf16.gmra.mxu0 %v889
  %v2923 = vpop.f32.mrf.mxu0
  %v2924 = vadd.f32 %v2835, %v2923
  %v2925 = vpop.f32.mrf.mxu0
  %v2926 = vadd.f32 %v2837, %v2925
  %2927 = vmatmul.bf16.gmra.mxu0 %v897
  %v2928 = vpop.f32.mrf.mxu0
  %v2929 = vadd.f32 %v2840, %v2928
  %v2930 = vpop.f32.mrf.mxu0
  %v2931 = vadd.f32 %v2842, %v2930
  %2932 = vmatmul.bf16.gmra.mxu0 %v905
  %v2933 = vpop.f32.mrf.mxu0
  %v2934 = vadd.f32 %v2845, %v2933
  %v2935 = vpop.f32.mrf.mxu0
  %v2936 = vadd.f32 %v2847, %v2935
  %2937 = vdwg.mxu0
  %2938 = vmatpush.bf16.msra.mxu0 %v2055
  %2939 = vmatpush.bf16.msra.mxu0 %v2051
  %2940 = vmatpush.bf16.msra.mxu0 %v2047
  %2941 = vmatpush.bf16.msra.mxu0 %v2043
  %2942 = vmatpush.bf16.msra.mxu0 %v2039
  %2943 = vmatpush.bf16.msra.mxu0 %v2035
  %2944 = vmatpush.bf16.msra.mxu0 %v2031
  %2945 = vmatpush.bf16.msra.mxu0 %v2027
  %2946 = vmatmul.bf16.gmra.mxu0 %v786
  %v2947 = vpop.f32.mrf.mxu0
  %v2948 = vadd.f32 %v2859, %v2947
  %v2949 = vpop.f32.mrf.mxu0
  %v2950 = vadd.f32 %v2861, %v2949
  %2951 = vmatmul.bf16.gmra.mxu0 %v794
  %v2952 = vpop.f32.mrf.mxu0
  %v2953 = vadd.f32 %v2864, %v2952
  %v2954 = vpop.f32.mrf.mxu0
  %v2955 = vadd.f32 %v2866, %v2954
  %2956 = vmatmul.bf16.gmra.mxu0 %v802
  %v2957 = vpop.f32.mrf.mxu0
  %v2958 = vadd.f32 %v2869, %v2957
  %v2959 = vpop.f32.mrf.mxu0
  %v2960 = vadd.f32 %v2871, %v2959
  %2961 = vmatmul.bf16.gmra.mxu0 %v810
  %v2962 = vpop.f32.mrf.mxu0
  %v2963 = vadd.f32 %v2874, %v2962
  %v2964 = vpop.f32.mrf.mxu0
  %v2965 = vadd.f32 %v2876, %v2964
  %2966 = vmatmul.bf16.gmra.mxu0 %v818
  %v2967 = vpop.f32.mrf.mxu0
  %v2968 = vadd.f32 %v2879, %v2967
  %v2969 = vpop.f32.mrf.mxu0
  %v2970 = vadd.f32 %v2881, %v2969
  %2971 = vmatmul.bf16.gmra.mxu0 %v826
  %v2972 = vpop.f32.mrf.mxu0
  %v2973 = vadd.f32 %v2884, %v2972
  %v2974 = vpop.f32.mrf.mxu0
  %v2975 = vadd.f32 %v2886, %v2974
  %2976 = vmatmul.bf16.gmra.mxu0 %v834
  %v2977 = vpop.f32.mrf.mxu0
  %v2978 = vadd.f32 %v2889, %v2977
  %v2979 = vpop.f32.mrf.mxu0
  %v2980 = vadd.f32 %v2891, %v2979
  %2981 = vmatmul.bf16.gmra.mxu0 %v842
  %v2982 = vpop.f32.mrf.mxu0
  %v2983 = vadd.f32 %v2894, %v2982
  %v2984 = vpop.f32.mrf.mxu0
  %v2985 = vadd.f32 %v2896, %v2984
  %2986 = vmatmul.bf16.gmra.mxu0 %v850
  %v2987 = vpop.f32.mrf.mxu0
  %v2988 = vadd.f32 %v2899, %v2987
  %v2989 = vpop.f32.mrf.mxu0
  %v2990 = vadd.f32 %v2901, %v2989
  %2991 = vmatmul.bf16.gmra.mxu0 %v858
  %v2992 = vpop.f32.mrf.mxu0
  %v2993 = vadd.f32 %v2904, %v2992
  %v2994 = vpop.f32.mrf.mxu0
  %v2995 = vadd.f32 %v2906, %v2994
  %2996 = vmatmul.bf16.gmra.mxu0 %v866
  %v2997 = vpop.f32.mrf.mxu0
  %v2998 = vadd.f32 %v2909, %v2997
  %v2999 = vpop.f32.mrf.mxu0
  %v3000 = vadd.f32 %v2911, %v2999
  %3001 = vmatmul.bf16.gmra.mxu0 %v874
  %v3002 = vpop.f32.mrf.mxu0
  %v3003 = vadd.f32 %v2914, %v3002
  %v3004 = vpop.f32.mrf.mxu0
  %v3005 = vadd.f32 %v2916, %v3004
  %3006 = vmatmul.bf16.gmra.mxu0 %v882
  %v3007 = vpop.f32.mrf.mxu0
  %v3008 = vadd.f32 %v2919, %v3007
  %v3009 = vpop.f32.mrf.mxu0
  %v3010 = vadd.f32 %v2921, %v3009
  %3011 = vmatmul.bf16.gmra.mxu0 %v890
  %v3012 = vpop.f32.mrf.mxu0
  %v3013 = vadd.f32 %v2924, %v3012
  %v3014 = vpop.f32.mrf.mxu0
  %v3015 = vadd.f32 %v2926, %v3014
  %3016 = vmatmul.bf16.gmra.mxu0 %v898
  %v3017 = vpop.f32.mrf.mxu0
  %v3018 = vadd.f32 %v2929, %v3017
  %v3019 = vpop.f32.mrf.mxu0
  %v3020 = vadd.f32 %v2931, %v3019
  %3021 = vmatmul.bf16.gmra.mxu0 %v906
  %v3022 = vpop.f32.mrf.mxu0
  %v3023 = vadd.f32 %v2934, %v3022
  %v3024 = vpop.f32.mrf.mxu0
  %v3025 = vadd.f32 %v2936, %v3024
  %3026 = vdwg.mxu0
  %3027 = vmatpush.bf16.msra.mxu0 %v1832
  %3028 = vmatpush.bf16.msra.mxu0 %v1828
  %3029 = vmatpush.bf16.msra.mxu0 %v1824
  %3030 = vmatpush.bf16.msra.mxu0 %v1820
  %3031 = vmatpush.bf16.msra.mxu0 %v1816
  %3032 = vmatpush.bf16.msra.mxu0 %v1812
  %3033 = vmatpush.bf16.msra.mxu0 %v1808
  %3034 = vmatpush.bf16.msra.mxu0 %v1804
  %3035 = vmatmul.bf16.gmra.mxu0 %v779
  %v3036 = vpop.f32.mrf.mxu0
  %v3037 = vadd.f32 0.0, %v3036
  %v3038 = vpop.f32.mrf.mxu0
  %v3039 = vadd.f32 0.0, %v3038
  %3040 = vmatmul.bf16.gmra.mxu0 %v787
  %v3041 = vpop.f32.mrf.mxu0
  %v3042 = vadd.f32 0.0, %v3041
  %v3043 = vpop.f32.mrf.mxu0
  %v3044 = vadd.f32 0.0, %v3043
  %3045 = vmatmul.bf16.gmra.mxu0 %v795
  %v3046 = vpop.f32.mrf.mxu0
  %v3047 = vadd.f32 0.0, %v3046
  %v3048 = vpop.f32.mrf.mxu0
  %v3049 = vadd.f32 0.0, %v3048
  %3050 = vmatmul.bf16.gmra.mxu0 %v803
  %v3051 = vpop.f32.mrf.mxu0
  %v3052 = vadd.f32 0.0, %v3051
  %v3053 = vpop.f32.mrf.mxu0
  %v3054 = vadd.f32 0.0, %v3053
  %3055 = vmatmul.bf16.gmra.mxu0 %v811
  %v3056 = vpop.f32.mrf.mxu0
  %v3057 = vadd.f32 0.0, %v3056
  %v3058 = vpop.f32.mrf.mxu0
  %v3059 = vadd.f32 0.0, %v3058
  %3060 = vmatmul.bf16.gmra.mxu0 %v819
  %v3061 = vpop.f32.mrf.mxu0
  %v3062 = vadd.f32 0.0, %v3061
  %v3063 = vpop.f32.mrf.mxu0
  %v3064 = vadd.f32 0.0, %v3063
  %3065 = vmatmul.bf16.gmra.mxu0 %v827
  %v3066 = vpop.f32.mrf.mxu0
  %v3067 = vadd.f32 0.0, %v3066
  %v3068 = vpop.f32.mrf.mxu0
  %v3069 = vadd.f32 0.0, %v3068
  %3070 = vmatmul.bf16.gmra.mxu0 %v835
  %v3071 = vpop.f32.mrf.mxu0
  %v3072 = vadd.f32 0.0, %v3071
  %v3073 = vpop.f32.mrf.mxu0
  %v3074 = vadd.f32 0.0, %v3073
  %3075 = vmatmul.bf16.gmra.mxu0 %v843
  %v3076 = vpop.f32.mrf.mxu0
  %v3077 = vadd.f32 0.0, %v3076
  %v3078 = vpop.f32.mrf.mxu0
  %v3079 = vadd.f32 0.0, %v3078
  %3080 = vmatmul.bf16.gmra.mxu0 %v851
  %v3081 = vpop.f32.mrf.mxu0
  %v3082 = vadd.f32 0.0, %v3081
  %v3083 = vpop.f32.mrf.mxu0
  %v3084 = vadd.f32 0.0, %v3083
  %3085 = vmatmul.bf16.gmra.mxu0 %v859
  %v3086 = vpop.f32.mrf.mxu0
  %v3087 = vadd.f32 0.0, %v3086
  %v3088 = vpop.f32.mrf.mxu0
  %v3089 = vadd.f32 0.0, %v3088
  %3090 = vmatmul.bf16.gmra.mxu0 %v867
  %v3091 = vpop.f32.mrf.mxu0
  %v3092 = vadd.f32 0.0, %v3091
  %v3093 = vpop.f32.mrf.mxu0
  %v3094 = vadd.f32 0.0, %v3093
  %3095 = vmatmul.bf16.gmra.mxu0 %v875
  %v3096 = vpop.f32.mrf.mxu0
  %v3097 = vadd.f32 0.0, %v3096
  %v3098 = vpop.f32.mrf.mxu0
  %v3099 = vadd.f32 0.0, %v3098
  %3100 = vmatmul.bf16.gmra.mxu0 %v883
  %v3101 = vpop.f32.mrf.mxu0
  %v3102 = vadd.f32 0.0, %v3101
  %v3103 = vpop.f32.mrf.mxu0
  %v3104 = vadd.f32 0.0, %v3103
  %3105 = vmatmul.bf16.gmra.mxu0 %v891
  %v3106 = vpop.f32.mrf.mxu0
  %v3107 = vadd.f32 0.0, %v3106
  %v3108 = vpop.f32.mrf.mxu0
  %v3109 = vadd.f32 0.0, %v3108
  %3110 = vmatmul.bf16.gmra.mxu0 %v899
  %v3111 = vpop.f32.mrf.mxu0
  %v3112 = vadd.f32 0.0, %v3111
  %v3113 = vpop.f32.mrf.mxu0
  %v3114 = vadd.f32 0.0, %v3113
  %3115 = vdwg.mxu0
  %3116 = vmatpush.bf16.msra.mxu0 %v1864
  %3117 = vmatpush.bf16.msra.mxu0 %v1860
  %3118 = vmatpush.bf16.msra.mxu0 %v1856
  %3119 = vmatpush.bf16.msra.mxu0 %v1852
  %3120 = vmatpush.bf16.msra.mxu0 %v1848
  %3121 = vmatpush.bf16.msra.mxu0 %v1844
  %3122 = vmatpush.bf16.msra.mxu0 %v1840
  %3123 = vmatpush.bf16.msra.mxu0 %v1836
  %3124 = vmatmul.bf16.gmra.mxu0 %v780
  %v3125 = vpop.f32.mrf.mxu0
  %v3126 = vadd.f32 %v3037, %v3125
  %v3127 = vpop.f32.mrf.mxu0
  %v3128 = vadd.f32 %v3039, %v3127
  %3129 = vmatmul.bf16.gmra.mxu0 %v788
  %v3130 = vpop.f32.mrf.mxu0
  %v3131 = vadd.f32 %v3042, %v3130
  %v3132 = vpop.f32.mrf.mxu0
  %v3133 = vadd.f32 %v3044, %v3132
  %3134 = vmatmul.bf16.gmra.mxu0 %v796
  %v3135 = vpop.f32.mrf.mxu0
  %v3136 = vadd.f32 %v3047, %v3135
  %v3137 = vpop.f32.mrf.mxu0
  %v3138 = vadd.f32 %v3049, %v3137
  %3139 = vmatmul.bf16.gmra.mxu0 %v804
  %v3140 = vpop.f32.mrf.mxu0
  %v3141 = vadd.f32 %v3052, %v3140
  %v3142 = vpop.f32.mrf.mxu0
  %v3143 = vadd.f32 %v3054, %v3142
  %3144 = vmatmul.bf16.gmra.mxu0 %v812
  %v3145 = vpop.f32.mrf.mxu0
  %v3146 = vadd.f32 %v3057, %v3145
  %v3147 = vpop.f32.mrf.mxu0
  %v3148 = vadd.f32 %v3059, %v3147
  %3149 = vmatmul.bf16.gmra.mxu0 %v820
  %v3150 = vpop.f32.mrf.mxu0
  %v3151 = vadd.f32 %v3062, %v3150
  %v3152 = vpop.f32.mrf.mxu0
  %v3153 = vadd.f32 %v3064, %v3152
  %3154 = vmatmul.bf16.gmra.mxu0 %v828
  %v3155 = vpop.f32.mrf.mxu0
  %v3156 = vadd.f32 %v3067, %v3155
  %v3157 = vpop.f32.mrf.mxu0
  %v3158 = vadd.f32 %v3069, %v3157
  %3159 = vmatmul.bf16.gmra.mxu0 %v836
  %v3160 = vpop.f32.mrf.mxu0
  %v3161 = vadd.f32 %v3072, %v3160
  %v3162 = vpop.f32.mrf.mxu0
  %v3163 = vadd.f32 %v3074, %v3162
  %3164 = vmatmul.bf16.gmra.mxu0 %v844
  %v3165 = vpop.f32.mrf.mxu0
  %v3166 = vadd.f32 %v3077, %v3165
  %v3167 = vpop.f32.mrf.mxu0
  %v3168 = vadd.f32 %v3079, %v3167
  %3169 = vmatmul.bf16.gmra.mxu0 %v852
  %v3170 = vpop.f32.mrf.mxu0
  %v3171 = vadd.f32 %v3082, %v3170
  %v3172 = vpop.f32.mrf.mxu0
  %v3173 = vadd.f32 %v3084, %v3172
  %3174 = vmatmul.bf16.gmra.mxu0 %v860
  %v3175 = vpop.f32.mrf.mxu0
  %v3176 = vadd.f32 %v3087, %v3175
  %v3177 = vpop.f32.mrf.mxu0
  %v3178 = vadd.f32 %v3089, %v3177
  %3179 = vmatmul.bf16.gmra.mxu0 %v868
  %v3180 = vpop.f32.mrf.mxu0
  %v3181 = vadd.f32 %v3092, %v3180
  %v3182 = vpop.f32.mrf.mxu0
  %v3183 = vadd.f32 %v3094, %v3182
  %3184 = vmatmul.bf16.gmra.mxu0 %v876
  %v3185 = vpop.f32.mrf.mxu0
  %v3186 = vadd.f32 %v3097, %v3185
  %v3187 = vpop.f32.mrf.mxu0
  %v3188 = vadd.f32 %v3099, %v3187
  %3189 = vmatmul.bf16.gmra.mxu0 %v884
  %v3190 = vpop.f32.mrf.mxu0
  %v3191 = vadd.f32 %v3102, %v3190
  %v3192 = vpop.f32.mrf.mxu0
  %v3193 = vadd.f32 %v3104, %v3192
  %3194 = vmatmul.bf16.gmra.mxu0 %v892
  %v3195 = vpop.f32.mrf.mxu0
  %v3196 = vadd.f32 %v3107, %v3195
  %v3197 = vpop.f32.mrf.mxu0
  %v3198 = vadd.f32 %v3109, %v3197
  %3199 = vmatmul.bf16.gmra.mxu0 %v900
  %v3200 = vpop.f32.mrf.mxu0
  %v3201 = vadd.f32 %v3112, %v3200
  %v3202 = vpop.f32.mrf.mxu0
  %v3203 = vadd.f32 %v3114, %v3202
  %3204 = vdwg.mxu0
  %3205 = vmatpush.bf16.msra.mxu0 %v1896
  %3206 = vmatpush.bf16.msra.mxu0 %v1892
  %3207 = vmatpush.bf16.msra.mxu0 %v1888
  %3208 = vmatpush.bf16.msra.mxu0 %v1884
  %3209 = vmatpush.bf16.msra.mxu0 %v1880
  %3210 = vmatpush.bf16.msra.mxu0 %v1876
  %3211 = vmatpush.bf16.msra.mxu0 %v1872
  %3212 = vmatpush.bf16.msra.mxu0 %v1868
  %3213 = vmatmul.bf16.gmra.mxu0 %v781
  %v3214 = vpop.f32.mrf.mxu0
  %v3215 = vadd.f32 %v3126, %v3214
  %v3216 = vpop.f32.mrf.mxu0
  %v3217 = vadd.f32 %v3128, %v3216
  %3218 = vmatmul.bf16.gmra.mxu0 %v789
  %v3219 = vpop.f32.mrf.mxu0
  %v3220 = vadd.f32 %v3131, %v3219
  %v3221 = vpop.f32.mrf.mxu0
  %v3222 = vadd.f32 %v3133, %v3221
  %3223 = vmatmul.bf16.gmra.mxu0 %v797
  %v3224 = vpop.f32.mrf.mxu0
  %v3225 = vadd.f32 %v3136, %v3224
  %v3226 = vpop.f32.mrf.mxu0
  %v3227 = vadd.f32 %v3138, %v3226
  %3228 = vmatmul.bf16.gmra.mxu0 %v805
  %v3229 = vpop.f32.mrf.mxu0
  %v3230 = vadd.f32 %v3141, %v3229
  %v3231 = vpop.f32.mrf.mxu0
  %v3232 = vadd.f32 %v3143, %v3231
  %3233 = vmatmul.bf16.gmra.mxu0 %v813
  %v3234 = vpop.f32.mrf.mxu0
  %v3235 = vadd.f32 %v3146, %v3234
  %v3236 = vpop.f32.mrf.mxu0
  %v3237 = vadd.f32 %v3148, %v3236
  %3238 = vmatmul.bf16.gmra.mxu0 %v821
  %v3239 = vpop.f32.mrf.mxu0
  %v3240 = vadd.f32 %v3151, %v3239
  %v3241 = vpop.f32.mrf.mxu0
  %v3242 = vadd.f32 %v3153, %v3241
  %3243 = vmatmul.bf16.gmra.mxu0 %v829
  %v3244 = vpop.f32.mrf.mxu0
  %v3245 = vadd.f32 %v3156, %v3244
  %v3246 = vpop.f32.mrf.mxu0
  %v3247 = vadd.f32 %v3158, %v3246
  %3248 = vmatmul.bf16.gmra.mxu0 %v837
  %v3249 = vpop.f32.mrf.mxu0
  %v3250 = vadd.f32 %v3161, %v3249
  %v3251 = vpop.f32.mrf.mxu0
  %v3252 = vadd.f32 %v3163, %v3251
  %3253 = vmatmul.bf16.gmra.mxu0 %v845
  %v3254 = vpop.f32.mrf.mxu0
  %v3255 = vadd.f32 %v3166, %v3254
  %v3256 = vpop.f32.mrf.mxu0
  %v3257 = vadd.f32 %v3168, %v3256
  %3258 = vmatmul.bf16.gmra.mxu0 %v853
  %v3259 = vpop.f32.mrf.mxu0
  %v3260 = vadd.f32 %v3171, %v3259
  %v3261 = vpop.f32.mrf.mxu0
  %v3262 = vadd.f32 %v3173, %v3261
  %3263 = vmatmul.bf16.gmra.mxu0 %v861
  %v3264 = vpop.f32.mrf.mxu0
  %v3265 = vadd.f32 %v3176, %v3264
  %v3266 = vpop.f32.mrf.mxu0
  %v3267 = vadd.f32 %v3178, %v3266
  %3268 = vmatmul.bf16.gmra.mxu0 %v869
  %v3269 = vpop.f32.mrf.mxu0
  %v3270 = vadd.f32 %v3181, %v3269
  %v3271 = vpop.f32.mrf.mxu0
  %v3272 = vadd.f32 %v3183, %v3271
  %3273 = vmatmul.bf16.gmra.mxu0 %v877
  %v3274 = vpop.f32.mrf.mxu0
  %v3275 = vadd.f32 %v3186, %v3274
  %v3276 = vpop.f32.mrf.mxu0
  %v3277 = vadd.f32 %v3188, %v3276
  %3278 = vmatmul.bf16.gmra.mxu0 %v885
  %v3279 = vpop.f32.mrf.mxu0
  %v3280 = vadd.f32 %v3191, %v3279
  %v3281 = vpop.f32.mrf.mxu0
  %v3282 = vadd.f32 %v3193, %v3281
  %3283 = vmatmul.bf16.gmra.mxu0 %v893
  %v3284 = vpop.f32.mrf.mxu0
  %v3285 = vadd.f32 %v3196, %v3284
  %v3286 = vpop.f32.mrf.mxu0
  %v3287 = vadd.f32 %v3198, %v3286
  %3288 = vmatmul.bf16.gmra.mxu0 %v901
  %v3289 = vpop.f32.mrf.mxu0
  %v3290 = vadd.f32 %v3201, %v3289
  %v3291 = vpop.f32.mrf.mxu0
  %v3292 = vadd.f32 %v3203, %v3291
  %3293 = vdwg.mxu0
  %3294 = vmatpush.bf16.msra.mxu0 %v1928
  %3295 = vmatpush.bf16.msra.mxu0 %v1924
  %3296 = vmatpush.bf16.msra.mxu0 %v1920
  %3297 = vmatpush.bf16.msra.mxu0 %v1916
  %3298 = vmatpush.bf16.msra.mxu0 %v1912
  %3299 = vmatpush.bf16.msra.mxu0 %v1908
  %3300 = vmatpush.bf16.msra.mxu0 %v1904
  %3301 = vmatpush.bf16.msra.mxu0 %v1900
  %3302 = vmatmul.bf16.gmra.mxu0 %v782
  %v3303 = vpop.f32.mrf.mxu0
  %v3304 = vadd.f32 %v3215, %v3303
  %v3305 = vpop.f32.mrf.mxu0
  %v3306 = vadd.f32 %v3217, %v3305
  %3307 = vmatmul.bf16.gmra.mxu0 %v790
  %v3308 = vpop.f32.mrf.mxu0
  %v3309 = vadd.f32 %v3220, %v3308
  %v3310 = vpop.f32.mrf.mxu0
  %v3311 = vadd.f32 %v3222, %v3310
  %3312 = vmatmul.bf16.gmra.mxu0 %v798
  %v3313 = vpop.f32.mrf.mxu0
  %v3314 = vadd.f32 %v3225, %v3313
  %v3315 = vpop.f32.mrf.mxu0
  %v3316 = vadd.f32 %v3227, %v3315
  %3317 = vmatmul.bf16.gmra.mxu0 %v806
  %v3318 = vpop.f32.mrf.mxu0
  %v3319 = vadd.f32 %v3230, %v3318
  %v3320 = vpop.f32.mrf.mxu0
  %v3321 = vadd.f32 %v3232, %v3320
  %3322 = vmatmul.bf16.gmra.mxu0 %v814
  %v3323 = vpop.f32.mrf.mxu0
  %v3324 = vadd.f32 %v3235, %v3323
  %v3325 = vpop.f32.mrf.mxu0
  %v3326 = vadd.f32 %v3237, %v3325
  %3327 = vmatmul.bf16.gmra.mxu0 %v822
  %v3328 = vpop.f32.mrf.mxu0
  %v3329 = vadd.f32 %v3240, %v3328
  %v3330 = vpop.f32.mrf.mxu0
  %v3331 = vadd.f32 %v3242, %v3330
  %3332 = vmatmul.bf16.gmra.mxu0 %v830
  %v3333 = vpop.f32.mrf.mxu0
  %v3334 = vadd.f32 %v3245, %v3333
  %v3335 = vpop.f32.mrf.mxu0
  %v3336 = vadd.f32 %v3247, %v3335
  %3337 = vmatmul.bf16.gmra.mxu0 %v838
  %v3338 = vpop.f32.mrf.mxu0
  %v3339 = vadd.f32 %v3250, %v3338
  %v3340 = vpop.f32.mrf.mxu0
  %v3341 = vadd.f32 %v3252, %v3340
  %3342 = vmatmul.bf16.gmra.mxu0 %v846
  %v3343 = vpop.f32.mrf.mxu0
  %v3344 = vadd.f32 %v3255, %v3343
  %v3345 = vpop.f32.mrf.mxu0
  %v3346 = vadd.f32 %v3257, %v3345
  %3347 = vmatmul.bf16.gmra.mxu0 %v854
  %v3348 = vpop.f32.mrf.mxu0
  %v3349 = vadd.f32 %v3260, %v3348
  %v3350 = vpop.f32.mrf.mxu0
  %v3351 = vadd.f32 %v3262, %v3350
  %3352 = vmatmul.bf16.gmra.mxu0 %v862
  %v3353 = vpop.f32.mrf.mxu0
  %v3354 = vadd.f32 %v3265, %v3353
  %v3355 = vpop.f32.mrf.mxu0
  %v3356 = vadd.f32 %v3267, %v3355
  %3357 = vmatmul.bf16.gmra.mxu0 %v870
  %v3358 = vpop.f32.mrf.mxu0
  %v3359 = vadd.f32 %v3270, %v3358
  %v3360 = vpop.f32.mrf.mxu0
  %v3361 = vadd.f32 %v3272, %v3360
  %3362 = vmatmul.bf16.gmra.mxu0 %v878
  %v3363 = vpop.f32.mrf.mxu0
  %v3364 = vadd.f32 %v3275, %v3363
  %v3365 = vpop.f32.mrf.mxu0
  %v3366 = vadd.f32 %v3277, %v3365
  %3367 = vmatmul.bf16.gmra.mxu0 %v886
  %v3368 = vpop.f32.mrf.mxu0
  %v3369 = vadd.f32 %v3280, %v3368
  %v3370 = vpop.f32.mrf.mxu0
  %v3371 = vadd.f32 %v3282, %v3370
  %3372 = vmatmul.bf16.gmra.mxu0 %v894
  %v3373 = vpop.f32.mrf.mxu0
  %v3374 = vadd.f32 %v3285, %v3373
  %v3375 = vpop.f32.mrf.mxu0
  %v3376 = vadd.f32 %v3287, %v3375
  %3377 = vmatmul.bf16.gmra.mxu0 %v902
  %v3378 = vpop.f32.mrf.mxu0
  %v3379 = vadd.f32 %v3290, %v3378
  %v3380 = vpop.f32.mrf.mxu0
  %v3381 = vadd.f32 %v3292, %v3380
  %3382 = vdwg.mxu0
  %3383 = vmatpush.bf16.msra.mxu0 %v1960
  %3384 = vmatpush.bf16.msra.mxu0 %v1956
  %3385 = vmatpush.bf16.msra.mxu0 %v1952
  %3386 = vmatpush.bf16.msra.mxu0 %v1948
  %3387 = vmatpush.bf16.msra.mxu0 %v1944
  %3388 = vmatpush.bf16.msra.mxu0 %v1940
  %3389 = vmatpush.bf16.msra.mxu0 %v1936
  %3390 = vmatpush.bf16.msra.mxu0 %v1932
  %3391 = vmatmul.bf16.gmra.mxu0 %v783
  %v3392 = vpop.f32.mrf.mxu0
  %v3393 = vadd.f32 %v3304, %v3392
  %v3394 = vpop.f32.mrf.mxu0
  %v3395 = vadd.f32 %v3306, %v3394
  %3396 = vmatmul.bf16.gmra.mxu0 %v791
  %v3397 = vpop.f32.mrf.mxu0
  %v3398 = vadd.f32 %v3309, %v3397
  %v3399 = vpop.f32.mrf.mxu0
  %v3400 = vadd.f32 %v3311, %v3399
  %3401 = vmatmul.bf16.gmra.mxu0 %v799
  %v3402 = vpop.f32.mrf.mxu0
  %v3403 = vadd.f32 %v3314, %v3402
  %v3404 = vpop.f32.mrf.mxu0
  %v3405 = vadd.f32 %v3316, %v3404
  %3406 = vmatmul.bf16.gmra.mxu0 %v807
  %v3407 = vpop.f32.mrf.mxu0
  %v3408 = vadd.f32 %v3319, %v3407
  %v3409 = vpop.f32.mrf.mxu0
  %v3410 = vadd.f32 %v3321, %v3409
  %3411 = vmatmul.bf16.gmra.mxu0 %v815
  %v3412 = vpop.f32.mrf.mxu0
  %v3413 = vadd.f32 %v3324, %v3412
  %v3414 = vpop.f32.mrf.mxu0
  %v3415 = vadd.f32 %v3326, %v3414
  %3416 = vmatmul.bf16.gmra.mxu0 %v823
  %v3417 = vpop.f32.mrf.mxu0
  %v3418 = vadd.f32 %v3329, %v3417
  %v3419 = vpop.f32.mrf.mxu0
  %v3420 = vadd.f32 %v3331, %v3419
  %3421 = vmatmul.bf16.gmra.mxu0 %v831
  %v3422 = vpop.f32.mrf.mxu0
  %v3423 = vadd.f32 %v3334, %v3422
  %v3424 = vpop.f32.mrf.mxu0
  %v3425 = vadd.f32 %v3336, %v3424
  %3426 = vmatmul.bf16.gmra.mxu0 %v839
  %v3427 = vpop.f32.mrf.mxu0
  %v3428 = vadd.f32 %v3339, %v3427
  %v3429 = vpop.f32.mrf.mxu0
  %v3430 = vadd.f32 %v3341, %v3429
  %3431 = vmatmul.bf16.gmra.mxu0 %v847
  %v3432 = vpop.f32.mrf.mxu0
  %v3433 = vadd.f32 %v3344, %v3432
  %v3434 = vpop.f32.mrf.mxu0
  %v3435 = vadd.f32 %v3346, %v3434
  %3436 = vmatmul.bf16.gmra.mxu0 %v855
  %v3437 = vpop.f32.mrf.mxu0
  %v3438 = vadd.f32 %v3349, %v3437
  %v3439 = vpop.f32.mrf.mxu0
  %v3440 = vadd.f32 %v3351, %v3439
  %3441 = vmatmul.bf16.gmra.mxu0 %v863
  %v3442 = vpop.f32.mrf.mxu0
  %v3443 = vadd.f32 %v3354, %v3442
  %v3444 = vpop.f32.mrf.mxu0
  %v3445 = vadd.f32 %v3356, %v3444
  %3446 = vmatmul.bf16.gmra.mxu0 %v871
  %v3447 = vpop.f32.mrf.mxu0
  %v3448 = vadd.f32 %v3359, %v3447
  %v3449 = vpop.f32.mrf.mxu0
  %v3450 = vadd.f32 %v3361, %v3449
  %3451 = vmatmul.bf16.gmra.mxu0 %v879
  %v3452 = vpop.f32.mrf.mxu0
  %v3453 = vadd.f32 %v3364, %v3452
  %v3454 = vpop.f32.mrf.mxu0
  %v3455 = vadd.f32 %v3366, %v3454
  %3456 = vmatmul.bf16.gmra.mxu0 %v887
  %v3457 = vpop.f32.mrf.mxu0
  %v3458 = vadd.f32 %v3369, %v3457
  %v3459 = vpop.f32.mrf.mxu0
  %v3460 = vadd.f32 %v3371, %v3459
  %3461 = vmatmul.bf16.gmra.mxu0 %v895
  %v3462 = vpop.f32.mrf.mxu0
  %v3463 = vadd.f32 %v3374, %v3462
  %v3464 = vpop.f32.mrf.mxu0
  %v3465 = vadd.f32 %v3376, %v3464
  %3466 = vmatmul.bf16.gmra.mxu0 %v903
  %v3467 = vpop.f32.mrf.mxu0
  %v3468 = vadd.f32 %v3379, %v3467
  %v3469 = vpop.f32.mrf.mxu0
  %v3470 = vadd.f32 %v3381, %v3469
  %3471 = vdwg.mxu0
  %3472 = vmatpush.bf16.msra.mxu0 %v1992
  %3473 = vmatpush.bf16.msra.mxu0 %v1988
  %3474 = vmatpush.bf16.msra.mxu0 %v1984
  %3475 = vmatpush.bf16.msra.mxu0 %v1980
  %3476 = vmatpush.bf16.msra.mxu0 %v1976
  %3477 = vmatpush.bf16.msra.mxu0 %v1972
  %3478 = vmatpush.bf16.msra.mxu0 %v1968
  %3479 = vmatpush.bf16.msra.mxu0 %v1964
  %3480 = vmatmul.bf16.gmra.mxu0 %v784
  %v3481 = vpop.f32.mrf.mxu0
  %v3482 = vadd.f32 %v3393, %v3481
  %v3483 = vpop.f32.mrf.mxu0
  %v3484 = vadd.f32 %v3395, %v3483
  %3485 = vmatmul.bf16.gmra.mxu0 %v792
  %v3486 = vpop.f32.mrf.mxu0
  %v3487 = vadd.f32 %v3398, %v3486
  %v3488 = vpop.f32.mrf.mxu0
  %v3489 = vadd.f32 %v3400, %v3488
  %3490 = vmatmul.bf16.gmra.mxu0 %v800
  %v3491 = vpop.f32.mrf.mxu0
  %v3492 = vadd.f32 %v3403, %v3491
  %v3493 = vpop.f32.mrf.mxu0
  %v3494 = vadd.f32 %v3405, %v3493
  %3495 = vmatmul.bf16.gmra.mxu0 %v808
  %v3496 = vpop.f32.mrf.mxu0
  %v3497 = vadd.f32 %v3408, %v3496
  %v3498 = vpop.f32.mrf.mxu0
  %v3499 = vadd.f32 %v3410, %v3498
  %3500 = vmatmul.bf16.gmra.mxu0 %v816
  %v3501 = vpop.f32.mrf.mxu0
  %v3502 = vadd.f32 %v3413, %v3501
  %v3503 = vpop.f32.mrf.mxu0
  %v3504 = vadd.f32 %v3415, %v3503
  %3505 = vmatmul.bf16.gmra.mxu0 %v824
  %v3506 = vpop.f32.mrf.mxu0
  %v3507 = vadd.f32 %v3418, %v3506
  %v3508 = vpop.f32.mrf.mxu0
  %v3509 = vadd.f32 %v3420, %v3508
  %3510 = vmatmul.bf16.gmra.mxu0 %v832
  %v3511 = vpop.f32.mrf.mxu0
  %v3512 = vadd.f32 %v3423, %v3511
  %v3513 = vpop.f32.mrf.mxu0
  %v3514 = vadd.f32 %v3425, %v3513
  %3515 = vmatmul.bf16.gmra.mxu0 %v840
  %v3516 = vpop.f32.mrf.mxu0
  %v3517 = vadd.f32 %v3428, %v3516
  %v3518 = vpop.f32.mrf.mxu0
  %v3519 = vadd.f32 %v3430, %v3518
  %3520 = vmatmul.bf16.gmra.mxu0 %v848
  %v3521 = vpop.f32.mrf.mxu0
  %v3522 = vadd.f32 %v3433, %v3521
  %v3523 = vpop.f32.mrf.mxu0
  %v3524 = vadd.f32 %v3435, %v3523
  %3525 = vmatmul.bf16.gmra.mxu0 %v856
  %v3526 = vpop.f32.mrf.mxu0
  %v3527 = vadd.f32 %v3438, %v3526
  %v3528 = vpop.f32.mrf.mxu0
  %v3529 = vadd.f32 %v3440, %v3528
  %3530 = vmatmul.bf16.gmra.mxu0 %v864
  %v3531 = vpop.f32.mrf.mxu0
  %v3532 = vadd.f32 %v3443, %v3531
  %v3533 = vpop.f32.mrf.mxu0
  %v3534 = vadd.f32 %v3445, %v3533
  %3535 = vmatmul.bf16.gmra.mxu0 %v872
  %v3536 = vpop.f32.mrf.mxu0
  %v3537 = vadd.f32 %v3448, %v3536
  %v3538 = vpop.f32.mrf.mxu0
  %v3539 = vadd.f32 %v3450, %v3538
  %3540 = vmatmul.bf16.gmra.mxu0 %v880
  %v3541 = vpop.f32.mrf.mxu0
  %v3542 = vadd.f32 %v3453, %v3541
  %v3543 = vpop.f32.mrf.mxu0
  %v3544 = vadd.f32 %v3455, %v3543
  %3545 = vmatmul.bf16.gmra.mxu0 %v888
  %v3546 = vpop.f32.mrf.mxu0
  %v3547 = vadd.f32 %v3458, %v3546
  %v3548 = vpop.f32.mrf.mxu0
  %v3549 = vadd.f32 %v3460, %v3548
  %3550 = vmatmul.bf16.gmra.mxu0 %v896
  %v3551 = vpop.f32.mrf.mxu0
  %v3552 = vadd.f32 %v3463, %v3551
  %v3553 = vpop.f32.mrf.mxu0
  %v3554 = vadd.f32 %v3465, %v3553
  %3555 = vmatmul.bf16.gmra.mxu0 %v904
  %v3556 = vpop.f32.mrf.mxu0
  %v3557 = vadd.f32 %v3468, %v3556
  %v3558 = vpop.f32.mrf.mxu0
  %v3559 = vadd.f32 %v3470, %v3558
  %3560 = vdwg.mxu0
  %3561 = vmatpush.bf16.msra.mxu0 %v2024
  %3562 = vmatpush.bf16.msra.mxu0 %v2020
  %3563 = vmatpush.bf16.msra.mxu0 %v2016
  %3564 = vmatpush.bf16.msra.mxu0 %v2012
  %3565 = vmatpush.bf16.msra.mxu0 %v2008
  %3566 = vmatpush.bf16.msra.mxu0 %v2004
  %3567 = vmatpush.bf16.msra.mxu0 %v2000
  %3568 = vmatpush.bf16.msra.mxu0 %v1996
  %3569 = vmatmul.bf16.gmra.mxu0 %v785
  %v3570 = vpop.f32.mrf.mxu0
  %v3571 = vadd.f32 %v3482, %v3570
  %v3572 = vpop.f32.mrf.mxu0
  %v3573 = vadd.f32 %v3484, %v3572
  %3574 = vmatmul.bf16.gmra.mxu0 %v793
  %v3575 = vpop.f32.mrf.mxu0
  %v3576 = vadd.f32 %v3487, %v3575
  %v3577 = vpop.f32.mrf.mxu0
  %v3578 = vadd.f32 %v3489, %v3577
  %3579 = vmatmul.bf16.gmra.mxu0 %v801
  %v3580 = vpop.f32.mrf.mxu0
  %v3581 = vadd.f32 %v3492, %v3580
  %v3582 = vpop.f32.mrf.mxu0
  %v3583 = vadd.f32 %v3494, %v3582
  %3584 = vmatmul.bf16.gmra.mxu0 %v809
  %v3585 = vpop.f32.mrf.mxu0
  %v3586 = vadd.f32 %v3497, %v3585
  %v3587 = vpop.f32.mrf.mxu0
  %v3588 = vadd.f32 %v3499, %v3587
  %3589 = vmatmul.bf16.gmra.mxu0 %v817
  %v3590 = vpop.f32.mrf.mxu0
  %v3591 = vadd.f32 %v3502, %v3590
  %v3592 = vpop.f32.mrf.mxu0
  %v3593 = vadd.f32 %v3504, %v3592
  %3594 = vmatmul.bf16.gmra.mxu0 %v825
  %v3595 = vpop.f32.mrf.mxu0
  %v3596 = vadd.f32 %v3507, %v3595
  %v3597 = vpop.f32.mrf.mxu0
  %v3598 = vadd.f32 %v3509, %v3597
  %3599 = vmatmul.bf16.gmra.mxu0 %v833
  %v3600 = vpop.f32.mrf.mxu0
  %v3601 = vadd.f32 %v3512, %v3600
  %v3602 = vpop.f32.mrf.mxu0
  %v3603 = vadd.f32 %v3514, %v3602
  %3604 = vmatmul.bf16.gmra.mxu0 %v841
  %v3605 = vpop.f32.mrf.mxu0
  %v3606 = vadd.f32 %v3517, %v3605
  %v3607 = vpop.f32.mrf.mxu0
  %v3608 = vadd.f32 %v3519, %v3607
  %3609 = vmatmul.bf16.gmra.mxu0 %v849
  %v3610 = vpop.f32.mrf.mxu0
  %v3611 = vadd.f32 %v3522, %v3610
  %v3612 = vpop.f32.mrf.mxu0
  %v3613 = vadd.f32 %v3524, %v3612
  %3614 = vmatmul.bf16.gmra.mxu0 %v857
  %v3615 = vpop.f32.mrf.mxu0
  %v3616 = vadd.f32 %v3527, %v3615
  %v3617 = vpop.f32.mrf.mxu0
  %v3618 = vadd.f32 %v3529, %v3617
  %3619 = vmatmul.bf16.gmra.mxu0 %v865
  %v3620 = vpop.f32.mrf.mxu0
  %v3621 = vadd.f32 %v3532, %v3620
  %v3622 = vpop.f32.mrf.mxu0
  %v3623 = vadd.f32 %v3534, %v3622
  %3624 = vmatmul.bf16.gmra.mxu0 %v873
  %v3625 = vpop.f32.mrf.mxu0
  %v3626 = vadd.f32 %v3537, %v3625
  %v3627 = vpop.f32.mrf.mxu0
  %v3628 = vadd.f32 %v3539, %v3627
  %3629 = vmatmul.bf16.gmra.mxu0 %v881
  %v3630 = vpop.f32.mrf.mxu0
  %v3631 = vadd.f32 %v3542, %v3630
  %v3632 = vpop.f32.mrf.mxu0
  %v3633 = vadd.f32 %v3544, %v3632
  %3634 = vmatmul.bf16.gmra.mxu0 %v889
  %v3635 = vpop.f32.mrf.mxu0
  %v3636 = vadd.f32 %v3547, %v3635
  %v3637 = vpop.f32.mrf.mxu0
  %v3638 = vadd.f32 %v3549, %v3637
  %3639 = vmatmul.bf16.gmra.mxu0 %v897
  %v3640 = vpop.f32.mrf.mxu0
  %v3641 = vadd.f32 %v3552, %v3640
  %v3642 = vpop.f32.mrf.mxu0
  %v3643 = vadd.f32 %v3554, %v3642
  %3644 = vmatmul.bf16.gmra.mxu0 %v905
  %v3645 = vpop.f32.mrf.mxu0
  %v3646 = vadd.f32 %v3557, %v3645
  %v3647 = vpop.f32.mrf.mxu0
  %v3648 = vadd.f32 %v3559, %v3647
  %3649 = vdwg.mxu0
  %3650 = vmatpush.bf16.msra.mxu0 %v2056
  %3651 = vmatpush.bf16.msra.mxu0 %v2052
  %3652 = vmatpush.bf16.msra.mxu0 %v2048
  %3653 = vmatpush.bf16.msra.mxu0 %v2044
  %3654 = vmatpush.bf16.msra.mxu0 %v2040
  %3655 = vmatpush.bf16.msra.mxu0 %v2036
  %3656 = vmatpush.bf16.msra.mxu0 %v2032
  %3657 = vmatpush.bf16.msra.mxu0 %v2028
  %3658 = vmatmul.bf16.gmra.mxu0 %v786
  %v3659 = vpop.f32.mrf.mxu0
  %v3660 = vadd.f32 %v3571, %v3659
  %v3661 = vpop.f32.mrf.mxu0
  %v3662 = vadd.f32 %v3573, %v3661
  %3663 = vmatmul.bf16.gmra.mxu0 %v794
  %v3664 = vpop.f32.mrf.mxu0
  %v3665 = vadd.f32 %v3576, %v3664
  %v3666 = vpop.f32.mrf.mxu0
  %v3667 = vadd.f32 %v3578, %v3666
  %3668 = vmatmul.bf16.gmra.mxu0 %v802
  %v3669 = vpop.f32.mrf.mxu0
  %v3670 = vadd.f32 %v3581, %v3669
  %v3671 = vpop.f32.mrf.mxu0
  %v3672 = vadd.f32 %v3583, %v3671
  %3673 = vmatmul.bf16.gmra.mxu0 %v810
  %v3674 = vpop.f32.mrf.mxu0
  %v3675 = vadd.f32 %v3586, %v3674
  %v3676 = vpop.f32.mrf.mxu0
  %v3677 = vadd.f32 %v3588, %v3676
  %3678 = vmatmul.bf16.gmra.mxu0 %v818
  %v3679 = vpop.f32.mrf.mxu0
  %v3680 = vadd.f32 %v3591, %v3679
  %v3681 = vpop.f32.mrf.mxu0
  %v3682 = vadd.f32 %v3593, %v3681
  %3683 = vmatmul.bf16.gmra.mxu0 %v826
  %v3684 = vpop.f32.mrf.mxu0
  %v3685 = vadd.f32 %v3596, %v3684
  %v3686 = vpop.f32.mrf.mxu0
  %v3687 = vadd.f32 %v3598, %v3686
  %3688 = vmatmul.bf16.gmra.mxu0 %v834
  %v3689 = vpop.f32.mrf.mxu0
  %v3690 = vadd.f32 %v3601, %v3689
  %v3691 = vpop.f32.mrf.mxu0
  %v3692 = vadd.f32 %v3603, %v3691
  %3693 = vmatmul.bf16.gmra.mxu0 %v842
  %v3694 = vpop.f32.mrf.mxu0
  %v3695 = vadd.f32 %v3606, %v3694
  %v3696 = vpop.f32.mrf.mxu0
  %v3697 = vadd.f32 %v3608, %v3696
  %3698 = vmatmul.bf16.gmra.mxu0 %v850
  %v3699 = vpop.f32.mrf.mxu0
  %v3700 = vadd.f32 %v3611, %v3699
  %v3701 = vpop.f32.mrf.mxu0
  %v3702 = vadd.f32 %v3613, %v3701
  %3703 = vmatmul.bf16.gmra.mxu0 %v858
  %v3704 = vpop.f32.mrf.mxu0
  %v3705 = vadd.f32 %v3616, %v3704
  %v3706 = vpop.f32.mrf.mxu0
  %v3707 = vadd.f32 %v3618, %v3706
  %3708 = vmatmul.bf16.gmra.mxu0 %v866
  %v3709 = vpop.f32.mrf.mxu0
  %v3710 = vadd.f32 %v3621, %v3709
  %v3711 = vpop.f32.mrf.mxu0
  %v3712 = vadd.f32 %v3623, %v3711
  %3713 = vmatmul.bf16.gmra.mxu0 %v874
  %v3714 = vpop.f32.mrf.mxu0
  %v3715 = vadd.f32 %v3626, %v3714
  %v3716 = vpop.f32.mrf.mxu0
  %v3717 = vadd.f32 %v3628, %v3716
  %3718 = vmatmul.bf16.gmra.mxu0 %v882
  %v3719 = vpop.f32.mrf.mxu0
  %v3720 = vadd.f32 %v3631, %v3719
  %v3721 = vpop.f32.mrf.mxu0
  %v3722 = vadd.f32 %v3633, %v3721
  %3723 = vmatmul.bf16.gmra.mxu0 %v890
  %v3724 = vpop.f32.mrf.mxu0
  %v3725 = vadd.f32 %v3636, %v3724
  %v3726 = vpop.f32.mrf.mxu0
  %v3727 = vadd.f32 %v3638, %v3726
  %3728 = vmatmul.bf16.gmra.mxu0 %v898
  %v3729 = vpop.f32.mrf.mxu0
  %v3730 = vadd.f32 %v3641, %v3729
  %v3731 = vpop.f32.mrf.mxu0
  %v3732 = vadd.f32 %v3643, %v3731
  %3733 = vmatmul.bf16.gmra.mxu0 %v906
  %v3734 = vpop.f32.mrf.mxu0
  %v3735 = vadd.f32 %v3646, %v3734
  %v3736 = vpop.f32.mrf.mxu0
  %v3737 = vadd.f32 %v3648, %v3736
  %3738 = vdwg.mxu0
  %3739 = vmatpush.bf16.msra.mxu0 %v1833
  %3740 = vmatpush.bf16.msra.mxu0 %v1829
  %3741 = vmatpush.bf16.msra.mxu0 %v1825
  %3742 = vmatpush.bf16.msra.mxu0 %v1821
  %3743 = vmatpush.bf16.msra.mxu0 %v1817
  %3744 = vmatpush.bf16.msra.mxu0 %v1813
  %3745 = vmatpush.bf16.msra.mxu0 %v1809
  %3746 = vmatpush.bf16.msra.mxu0 %v1805
  %3747 = vmatmul.bf16.gmra.mxu0 %v779
  %v3748 = vpop.f32.mrf.mxu0
  %v3749 = vadd.f32 0.0, %v3748
  %v3750 = vpop.f32.mrf.mxu0
  %v3751 = vadd.f32 0.0, %v3750
  %3752 = vmatmul.bf16.gmra.mxu0 %v787
  %v3753 = vpop.f32.mrf.mxu0
  %v3754 = vadd.f32 0.0, %v3753
  %v3755 = vpop.f32.mrf.mxu0
  %v3756 = vadd.f32 0.0, %v3755
  %3757 = vmatmul.bf16.gmra.mxu0 %v795
  %v3758 = vpop.f32.mrf.mxu0
  %v3759 = vadd.f32 0.0, %v3758
  %v3760 = vpop.f32.mrf.mxu0
  %v3761 = vadd.f32 0.0, %v3760
  %3762 = vmatmul.bf16.gmra.mxu0 %v803
  %v3763 = vpop.f32.mrf.mxu0
  %v3764 = vadd.f32 0.0, %v3763
  %v3765 = vpop.f32.mrf.mxu0
  %v3766 = vadd.f32 0.0, %v3765
  %3767 = vmatmul.bf16.gmra.mxu0 %v811
  %v3768 = vpop.f32.mrf.mxu0
  %v3769 = vadd.f32 0.0, %v3768
  %v3770 = vpop.f32.mrf.mxu0
  %v3771 = vadd.f32 0.0, %v3770
  %3772 = vmatmul.bf16.gmra.mxu0 %v819
  %v3773 = vpop.f32.mrf.mxu0
  %v3774 = vadd.f32 0.0, %v3773
  %v3775 = vpop.f32.mrf.mxu0
  %v3776 = vadd.f32 0.0, %v3775
  %3777 = vmatmul.bf16.gmra.mxu0 %v827
  %v3778 = vpop.f32.mrf.mxu0
  %v3779 = vadd.f32 0.0, %v3778
  %v3780 = vpop.f32.mrf.mxu0
  %v3781 = vadd.f32 0.0, %v3780
  %3782 = vmatmul.bf16.gmra.mxu0 %v835
  %v3783 = vpop.f32.mrf.mxu0
  %v3784 = vadd.f32 0.0, %v3783
  %v3785 = vpop.f32.mrf.mxu0
  %v3786 = vadd.f32 0.0, %v3785
  %3787 = vmatmul.bf16.gmra.mxu0 %v843
  %v3788 = vpop.f32.mrf.mxu0
  %v3789 = vadd.f32 0.0, %v3788
  %v3790 = vpop.f32.mrf.mxu0
  %v3791 = vadd.f32 0.0, %v3790
  %3792 = vmatmul.bf16.gmra.mxu0 %v851
  %v3793 = vpop.f32.mrf.mxu0
  %v3794 = vadd.f32 0.0, %v3793
  %v3795 = vpop.f32.mrf.mxu0
  %v3796 = vadd.f32 0.0, %v3795
  %3797 = vmatmul.bf16.gmra.mxu0 %v859
  %v3798 = vpop.f32.mrf.mxu0
  %v3799 = vadd.f32 0.0, %v3798
  %v3800 = vpop.f32.mrf.mxu0
  %v3801 = vadd.f32 0.0, %v3800
  %3802 = vmatmul.bf16.gmra.mxu0 %v867
  %v3803 = vpop.f32.mrf.mxu0
  %v3804 = vadd.f32 0.0, %v3803
  %v3805 = vpop.f32.mrf.mxu0
  %v3806 = vadd.f32 0.0, %v3805
  %3807 = vmatmul.bf16.gmra.mxu0 %v875
  %v3808 = vpop.f32.mrf.mxu0
  %v3809 = vadd.f32 0.0, %v3808
  %v3810 = vpop.f32.mrf.mxu0
  %v3811 = vadd.f32 0.0, %v3810
  %3812 = vmatmul.bf16.gmra.mxu0 %v883
  %v3813 = vpop.f32.mrf.mxu0
  %v3814 = vadd.f32 0.0, %v3813
  %v3815 = vpop.f32.mrf.mxu0
  %v3816 = vadd.f32 0.0, %v3815
  %3817 = vmatmul.bf16.gmra.mxu0 %v891
  %v3818 = vpop.f32.mrf.mxu0
  %v3819 = vadd.f32 0.0, %v3818
  %v3820 = vpop.f32.mrf.mxu0
  %v3821 = vadd.f32 0.0, %v3820
  %3822 = vmatmul.bf16.gmra.mxu0 %v899
  %v3823 = vpop.f32.mrf.mxu0
  %v3824 = vadd.f32 0.0, %v3823
  %v3825 = vpop.f32.mrf.mxu0
  %v3826 = vadd.f32 0.0, %v3825
  %3827 = vdwg.mxu0
  %3828 = vmatpush.bf16.msra.mxu0 %v1865
  %3829 = vmatpush.bf16.msra.mxu0 %v1861
  %3830 = vmatpush.bf16.msra.mxu0 %v1857
  %3831 = vmatpush.bf16.msra.mxu0 %v1853
  %3832 = vmatpush.bf16.msra.mxu0 %v1849
  %3833 = vmatpush.bf16.msra.mxu0 %v1845
  %3834 = vmatpush.bf16.msra.mxu0 %v1841
  %3835 = vmatpush.bf16.msra.mxu0 %v1837
  %3836 = vmatmul.bf16.gmra.mxu0 %v780
  %v3837 = vpop.f32.mrf.mxu0
  %v3838 = vadd.f32 %v3749, %v3837
  %v3839 = vpop.f32.mrf.mxu0
  %v3840 = vadd.f32 %v3751, %v3839
  %3841 = vmatmul.bf16.gmra.mxu0 %v788
  %v3842 = vpop.f32.mrf.mxu0
  %v3843 = vadd.f32 %v3754, %v3842
  %v3844 = vpop.f32.mrf.mxu0
  %v3845 = vadd.f32 %v3756, %v3844
  %3846 = vmatmul.bf16.gmra.mxu0 %v796
  %v3847 = vpop.f32.mrf.mxu0
  %v3848 = vadd.f32 %v3759, %v3847
  %v3849 = vpop.f32.mrf.mxu0
  %v3850 = vadd.f32 %v3761, %v3849
  %3851 = vmatmul.bf16.gmra.mxu0 %v804
  %v3852 = vpop.f32.mrf.mxu0
  %v3853 = vadd.f32 %v3764, %v3852
  %v3854 = vpop.f32.mrf.mxu0
  %v3855 = vadd.f32 %v3766, %v3854
  %3856 = vmatmul.bf16.gmra.mxu0 %v812
  %v3857 = vpop.f32.mrf.mxu0
  %v3858 = vadd.f32 %v3769, %v3857
  %v3859 = vpop.f32.mrf.mxu0
  %v3860 = vadd.f32 %v3771, %v3859
  %3861 = vmatmul.bf16.gmra.mxu0 %v820
  %v3862 = vpop.f32.mrf.mxu0
  %v3863 = vadd.f32 %v3774, %v3862
  %v3864 = vpop.f32.mrf.mxu0
  %v3865 = vadd.f32 %v3776, %v3864
  %3866 = vmatmul.bf16.gmra.mxu0 %v828
  %v3867 = vpop.f32.mrf.mxu0
  %v3868 = vadd.f32 %v3779, %v3867
  %v3869 = vpop.f32.mrf.mxu0
  %v3870 = vadd.f32 %v3781, %v3869
  %3871 = vmatmul.bf16.gmra.mxu0 %v836
  %v3872 = vpop.f32.mrf.mxu0
  %v3873 = vadd.f32 %v3784, %v3872
  %v3874 = vpop.f32.mrf.mxu0
  %v3875 = vadd.f32 %v3786, %v3874
  %3876 = vmatmul.bf16.gmra.mxu0 %v844
  %v3877 = vpop.f32.mrf.mxu0
  %v3878 = vadd.f32 %v3789, %v3877
  %v3879 = vpop.f32.mrf.mxu0
  %v3880 = vadd.f32 %v3791, %v3879
  %3881 = vmatmul.bf16.gmra.mxu0 %v852
  %v3882 = vpop.f32.mrf.mxu0
  %v3883 = vadd.f32 %v3794, %v3882
  %v3884 = vpop.f32.mrf.mxu0
  %v3885 = vadd.f32 %v3796, %v3884
  %3886 = vmatmul.bf16.gmra.mxu0 %v860
  %v3887 = vpop.f32.mrf.mxu0
  %v3888 = vadd.f32 %v3799, %v3887
  %v3889 = vpop.f32.mrf.mxu0
  %v3890 = vadd.f32 %v3801, %v3889
  %3891 = vmatmul.bf16.gmra.mxu0 %v868
  %v3892 = vpop.f32.mrf.mxu0
  %v3893 = vadd.f32 %v3804, %v3892
  %v3894 = vpop.f32.mrf.mxu0
  %v3895 = vadd.f32 %v3806, %v3894
  %3896 = vmatmul.bf16.gmra.mxu0 %v876
  %v3897 = vpop.f32.mrf.mxu0
  %v3898 = vadd.f32 %v3809, %v3897
  %v3899 = vpop.f32.mrf.mxu0
  %v3900 = vadd.f32 %v3811, %v3899
  %3901 = vmatmul.bf16.gmra.mxu0 %v884
  %v3902 = vpop.f32.mrf.mxu0
  %v3903 = vadd.f32 %v3814, %v3902
  %v3904 = vpop.f32.mrf.mxu0
  %v3905 = vadd.f32 %v3816, %v3904
  %3906 = vmatmul.bf16.gmra.mxu0 %v892
  %v3907 = vpop.f32.mrf.mxu0
  %v3908 = vadd.f32 %v3819, %v3907
  %v3909 = vpop.f32.mrf.mxu0
  %v3910 = vadd.f32 %v3821, %v3909
  %3911 = vmatmul.bf16.gmra.mxu0 %v900
  %v3912 = vpop.f32.mrf.mxu0
  %v3913 = vadd.f32 %v3824, %v3912
  %v3914 = vpop.f32.mrf.mxu0
  %v3915 = vadd.f32 %v3826, %v3914
  %3916 = vdwg.mxu0
  %3917 = vmatpush.bf16.msra.mxu0 %v1897
  %3918 = vmatpush.bf16.msra.mxu0 %v1893
  %3919 = vmatpush.bf16.msra.mxu0 %v1889
  %3920 = vmatpush.bf16.msra.mxu0 %v1885
  %3921 = vmatpush.bf16.msra.mxu0 %v1881
  %3922 = vmatpush.bf16.msra.mxu0 %v1877
  %3923 = vmatpush.bf16.msra.mxu0 %v1873
  %3924 = vmatpush.bf16.msra.mxu0 %v1869
  %3925 = vmatmul.bf16.gmra.mxu0 %v781
  %v3926 = vpop.f32.mrf.mxu0
  %v3927 = vadd.f32 %v3838, %v3926
  %v3928 = vpop.f32.mrf.mxu0
  %v3929 = vadd.f32 %v3840, %v3928
  %3930 = vmatmul.bf16.gmra.mxu0 %v789
  %v3931 = vpop.f32.mrf.mxu0
  %v3932 = vadd.f32 %v3843, %v3931
  %v3933 = vpop.f32.mrf.mxu0
  %v3934 = vadd.f32 %v3845, %v3933
  %3935 = vmatmul.bf16.gmra.mxu0 %v797
  %v3936 = vpop.f32.mrf.mxu0
  %v3937 = vadd.f32 %v3848, %v3936
  %v3938 = vpop.f32.mrf.mxu0
  %v3939 = vadd.f32 %v3850, %v3938
  %3940 = vmatmul.bf16.gmra.mxu0 %v805
  %v3941 = vpop.f32.mrf.mxu0
  %v3942 = vadd.f32 %v3853, %v3941
  %v3943 = vpop.f32.mrf.mxu0
  %v3944 = vadd.f32 %v3855, %v3943
  %3945 = vmatmul.bf16.gmra.mxu0 %v813
  %v3946 = vpop.f32.mrf.mxu0
  %v3947 = vadd.f32 %v3858, %v3946
  %v3948 = vpop.f32.mrf.mxu0
  %v3949 = vadd.f32 %v3860, %v3948
  %3950 = vmatmul.bf16.gmra.mxu0 %v821
  %v3951 = vpop.f32.mrf.mxu0
  %v3952 = vadd.f32 %v3863, %v3951
  %v3953 = vpop.f32.mrf.mxu0
  %v3954 = vadd.f32 %v3865, %v3953
  %3955 = vmatmul.bf16.gmra.mxu0 %v829
  %v3956 = vpop.f32.mrf.mxu0
  %v3957 = vadd.f32 %v3868, %v3956
  %v3958 = vpop.f32.mrf.mxu0
  %v3959 = vadd.f32 %v3870, %v3958
  %3960 = vmatmul.bf16.gmra.mxu0 %v837
  %v3961 = vpop.f32.mrf.mxu0
  %v3962 = vadd.f32 %v3873, %v3961
  %v3963 = vpop.f32.mrf.mxu0
  %v3964 = vadd.f32 %v3875, %v3963
  %3965 = vmatmul.bf16.gmra.mxu0 %v845
  %v3966 = vpop.f32.mrf.mxu0
  %v3967 = vadd.f32 %v3878, %v3966
  %v3968 = vpop.f32.mrf.mxu0
  %v3969 = vadd.f32 %v3880, %v3968
  %3970 = vmatmul.bf16.gmra.mxu0 %v853
  %v3971 = vpop.f32.mrf.mxu0
  %v3972 = vadd.f32 %v3883, %v3971
  %v3973 = vpop.f32.mrf.mxu0
  %v3974 = vadd.f32 %v3885, %v3973
  %3975 = vmatmul.bf16.gmra.mxu0 %v861
  %v3976 = vpop.f32.mrf.mxu0
  %v3977 = vadd.f32 %v3888, %v3976
  %v3978 = vpop.f32.mrf.mxu0
  %v3979 = vadd.f32 %v3890, %v3978
  %3980 = vmatmul.bf16.gmra.mxu0 %v869
  %v3981 = vpop.f32.mrf.mxu0
  %v3982 = vadd.f32 %v3893, %v3981
  %v3983 = vpop.f32.mrf.mxu0
  %v3984 = vadd.f32 %v3895, %v3983
  %3985 = vmatmul.bf16.gmra.mxu0 %v877
  %v3986 = vpop.f32.mrf.mxu0
  %v3987 = vadd.f32 %v3898, %v3986
  %v3988 = vpop.f32.mrf.mxu0
  %v3989 = vadd.f32 %v3900, %v3988
  %3990 = vmatmul.bf16.gmra.mxu0 %v885
  %v3991 = vpop.f32.mrf.mxu0
  %v3992 = vadd.f32 %v3903, %v3991
  %v3993 = vpop.f32.mrf.mxu0
  %v3994 = vadd.f32 %v3905, %v3993
  %3995 = vmatmul.bf16.gmra.mxu0 %v893
  %v3996 = vpop.f32.mrf.mxu0
  %v3997 = vadd.f32 %v3908, %v3996
  %v3998 = vpop.f32.mrf.mxu0
  %v3999 = vadd.f32 %v3910, %v3998
  %4000 = vmatmul.bf16.gmra.mxu0 %v901
  %v4001 = vpop.f32.mrf.mxu0
  %v4002 = vadd.f32 %v3913, %v4001
  %v4003 = vpop.f32.mrf.mxu0
  %v4004 = vadd.f32 %v3915, %v4003
  %4005 = vdwg.mxu0
  %4006 = vmatpush.bf16.msra.mxu0 %v1929
  %4007 = vmatpush.bf16.msra.mxu0 %v1925
  %4008 = vmatpush.bf16.msra.mxu0 %v1921
  %4009 = vmatpush.bf16.msra.mxu0 %v1917
  %4010 = vmatpush.bf16.msra.mxu0 %v1913
  %4011 = vmatpush.bf16.msra.mxu0 %v1909
  %4012 = vmatpush.bf16.msra.mxu0 %v1905
  %4013 = vmatpush.bf16.msra.mxu0 %v1901
  %4014 = vmatmul.bf16.gmra.mxu0 %v782
  %v4015 = vpop.f32.mrf.mxu0
  %v4016 = vadd.f32 %v3927, %v4015
  %v4017 = vpop.f32.mrf.mxu0
  %v4018 = vadd.f32 %v3929, %v4017
  %4019 = vmatmul.bf16.gmra.mxu0 %v790
  %v4020 = vpop.f32.mrf.mxu0
  %v4021 = vadd.f32 %v3932, %v4020
  %v4022 = vpop.f32.mrf.mxu0
  %v4023 = vadd.f32 %v3934, %v4022
  %4024 = vmatmul.bf16.gmra.mxu0 %v798
  %v4025 = vpop.f32.mrf.mxu0
  %v4026 = vadd.f32 %v3937, %v4025
  %v4027 = vpop.f32.mrf.mxu0
  %v4028 = vadd.f32 %v3939, %v4027
  %4029 = vmatmul.bf16.gmra.mxu0 %v806
  %v4030 = vpop.f32.mrf.mxu0
  %v4031 = vadd.f32 %v3942, %v4030
  %v4032 = vpop.f32.mrf.mxu0
  %v4033 = vadd.f32 %v3944, %v4032
  %4034 = vmatmul.bf16.gmra.mxu0 %v814
  %v4035 = vpop.f32.mrf.mxu0
  %v4036 = vadd.f32 %v3947, %v4035
  %v4037 = vpop.f32.mrf.mxu0
  %v4038 = vadd.f32 %v3949, %v4037
  %4039 = vmatmul.bf16.gmra.mxu0 %v822
  %v4040 = vpop.f32.mrf.mxu0
  %v4041 = vadd.f32 %v3952, %v4040
  %v4042 = vpop.f32.mrf.mxu0
  %v4043 = vadd.f32 %v3954, %v4042
  %4044 = vmatmul.bf16.gmra.mxu0 %v830
  %v4045 = vpop.f32.mrf.mxu0
  %v4046 = vadd.f32 %v3957, %v4045
  %v4047 = vpop.f32.mrf.mxu0
  %v4048 = vadd.f32 %v3959, %v4047
  %4049 = vmatmul.bf16.gmra.mxu0 %v838
  %v4050 = vpop.f32.mrf.mxu0
  %v4051 = vadd.f32 %v3962, %v4050
  %v4052 = vpop.f32.mrf.mxu0
  %v4053 = vadd.f32 %v3964, %v4052
  %4054 = vmatmul.bf16.gmra.mxu0 %v846
  %v4055 = vpop.f32.mrf.mxu0
  %v4056 = vadd.f32 %v3967, %v4055
  %v4057 = vpop.f32.mrf.mxu0
  %v4058 = vadd.f32 %v3969, %v4057
  %4059 = vmatmul.bf16.gmra.mxu0 %v854
  %v4060 = vpop.f32.mrf.mxu0
  %v4061 = vadd.f32 %v3972, %v4060
  %v4062 = vpop.f32.mrf.mxu0
  %v4063 = vadd.f32 %v3974, %v4062
  %4064 = vmatmul.bf16.gmra.mxu0 %v862
  %v4065 = vpop.f32.mrf.mxu0
  %v4066 = vadd.f32 %v3977, %v4065
  %v4067 = vpop.f32.mrf.mxu0
  %v4068 = vadd.f32 %v3979, %v4067
  %4069 = vmatmul.bf16.gmra.mxu0 %v870
  %v4070 = vpop.f32.mrf.mxu0
  %v4071 = vadd.f32 %v3982, %v4070
  %v4072 = vpop.f32.mrf.mxu0
  %v4073 = vadd.f32 %v3984, %v4072
  %4074 = vmatmul.bf16.gmra.mxu0 %v878
  %v4075 = vpop.f32.mrf.mxu0
  %v4076 = vadd.f32 %v3987, %v4075
  %v4077 = vpop.f32.mrf.mxu0
  %v4078 = vadd.f32 %v3989, %v4077
  %4079 = vmatmul.bf16.gmra.mxu0 %v886
  %v4080 = vpop.f32.mrf.mxu0
  %v4081 = vadd.f32 %v3992, %v4080
  %v4082 = vpop.f32.mrf.mxu0
  %v4083 = vadd.f32 %v3994, %v4082
  %4084 = vmatmul.bf16.gmra.mxu0 %v894
  %v4085 = vpop.f32.mrf.mxu0
  %v4086 = vadd.f32 %v3997, %v4085
  %v4087 = vpop.f32.mrf.mxu0
  %v4088 = vadd.f32 %v3999, %v4087
  %4089 = vmatmul.bf16.gmra.mxu0 %v902
  %v4090 = vpop.f32.mrf.mxu0
  %v4091 = vadd.f32 %v4002, %v4090
  %v4092 = vpop.f32.mrf.mxu0
  %v4093 = vadd.f32 %v4004, %v4092
  %4094 = vdwg.mxu0
  %4095 = vmatpush.bf16.msra.mxu0 %v1961
  %4096 = vmatpush.bf16.msra.mxu0 %v1957
  %4097 = vmatpush.bf16.msra.mxu0 %v1953
  %4098 = vmatpush.bf16.msra.mxu0 %v1949
  %4099 = vmatpush.bf16.msra.mxu0 %v1945
  %4100 = vmatpush.bf16.msra.mxu0 %v1941
  %4101 = vmatpush.bf16.msra.mxu0 %v1937
  %4102 = vmatpush.bf16.msra.mxu0 %v1933
  %4103 = vmatmul.bf16.gmra.mxu0 %v783
  %v4104 = vpop.f32.mrf.mxu0
  %v4105 = vadd.f32 %v4016, %v4104
  %v4106 = vpop.f32.mrf.mxu0
  %v4107 = vadd.f32 %v4018, %v4106
  %4108 = vmatmul.bf16.gmra.mxu0 %v791
  %v4109 = vpop.f32.mrf.mxu0
  %v4110 = vadd.f32 %v4021, %v4109
  %v4111 = vpop.f32.mrf.mxu0
  %v4112 = vadd.f32 %v4023, %v4111
  %4113 = vmatmul.bf16.gmra.mxu0 %v799
  %v4114 = vpop.f32.mrf.mxu0
  %v4115 = vadd.f32 %v4026, %v4114
  %v4116 = vpop.f32.mrf.mxu0
  %v4117 = vadd.f32 %v4028, %v4116
  %4118 = vmatmul.bf16.gmra.mxu0 %v807
  %v4119 = vpop.f32.mrf.mxu0
  %v4120 = vadd.f32 %v4031, %v4119
  %v4121 = vpop.f32.mrf.mxu0
  %v4122 = vadd.f32 %v4033, %v4121
  %4123 = vmatmul.bf16.gmra.mxu0 %v815
  %v4124 = vpop.f32.mrf.mxu0
  %v4125 = vadd.f32 %v4036, %v4124
  %v4126 = vpop.f32.mrf.mxu0
  %v4127 = vadd.f32 %v4038, %v4126
  %4128 = vmatmul.bf16.gmra.mxu0 %v823
  %v4129 = vpop.f32.mrf.mxu0
  %v4130 = vadd.f32 %v4041, %v4129
  %v4131 = vpop.f32.mrf.mxu0
  %v4132 = vadd.f32 %v4043, %v4131
  %4133 = vmatmul.bf16.gmra.mxu0 %v831
  %v4134 = vpop.f32.mrf.mxu0
  %v4135 = vadd.f32 %v4046, %v4134
  %v4136 = vpop.f32.mrf.mxu0
  %v4137 = vadd.f32 %v4048, %v4136
  %4138 = vmatmul.bf16.gmra.mxu0 %v839
  %v4139 = vpop.f32.mrf.mxu0
  %v4140 = vadd.f32 %v4051, %v4139
  %v4141 = vpop.f32.mrf.mxu0
  %v4142 = vadd.f32 %v4053, %v4141
  %4143 = vmatmul.bf16.gmra.mxu0 %v847
  %v4144 = vpop.f32.mrf.mxu0
  %v4145 = vadd.f32 %v4056, %v4144
  %v4146 = vpop.f32.mrf.mxu0
  %v4147 = vadd.f32 %v4058, %v4146
  %4148 = vmatmul.bf16.gmra.mxu0 %v855
  %v4149 = vpop.f32.mrf.mxu0
  %v4150 = vadd.f32 %v4061, %v4149
  %v4151 = vpop.f32.mrf.mxu0
  %v4152 = vadd.f32 %v4063, %v4151
  %4153 = vmatmul.bf16.gmra.mxu0 %v863
  %v4154 = vpop.f32.mrf.mxu0
  %v4155 = vadd.f32 %v4066, %v4154
  %v4156 = vpop.f32.mrf.mxu0
  %v4157 = vadd.f32 %v4068, %v4156
  %4158 = vmatmul.bf16.gmra.mxu0 %v871
  %v4159 = vpop.f32.mrf.mxu0
  %v4160 = vadd.f32 %v4071, %v4159
  %v4161 = vpop.f32.mrf.mxu0
  %v4162 = vadd.f32 %v4073, %v4161
  %4163 = vmatmul.bf16.gmra.mxu0 %v879
  %v4164 = vpop.f32.mrf.mxu0
  %v4165 = vadd.f32 %v4076, %v4164
  %v4166 = vpop.f32.mrf.mxu0
  %v4167 = vadd.f32 %v4078, %v4166
  %4168 = vmatmul.bf16.gmra.mxu0 %v887
  %v4169 = vpop.f32.mrf.mxu0
  %v4170 = vadd.f32 %v4081, %v4169
  %v4171 = vpop.f32.mrf.mxu0
  %v4172 = vadd.f32 %v4083, %v4171
  %4173 = vmatmul.bf16.gmra.mxu0 %v895
  %v4174 = vpop.f32.mrf.mxu0
  %v4175 = vadd.f32 %v4086, %v4174
  %v4176 = vpop.f32.mrf.mxu0
  %v4177 = vadd.f32 %v4088, %v4176
  %4178 = vmatmul.bf16.gmra.mxu0 %v903
  %v4179 = vpop.f32.mrf.mxu0
  %v4180 = vadd.f32 %v4091, %v4179
  %v4181 = vpop.f32.mrf.mxu0
  %v4182 = vadd.f32 %v4093, %v4181
  %4183 = vdwg.mxu0
  %4184 = vmatpush.bf16.msra.mxu0 %v1993
  %4185 = vmatpush.bf16.msra.mxu0 %v1989
  %4186 = vmatpush.bf16.msra.mxu0 %v1985
  %4187 = vmatpush.bf16.msra.mxu0 %v1981
  %4188 = vmatpush.bf16.msra.mxu0 %v1977
  %4189 = vmatpush.bf16.msra.mxu0 %v1973
  %4190 = vmatpush.bf16.msra.mxu0 %v1969
  %4191 = vmatpush.bf16.msra.mxu0 %v1965
  %4192 = vmatmul.bf16.gmra.mxu0 %v784
  %v4193 = vpop.f32.mrf.mxu0
  %v4194 = vadd.f32 %v4105, %v4193
  %v4195 = vpop.f32.mrf.mxu0
  %v4196 = vadd.f32 %v4107, %v4195
  %4197 = vmatmul.bf16.gmra.mxu0 %v792
  %v4198 = vpop.f32.mrf.mxu0
  %v4199 = vadd.f32 %v4110, %v4198
  %v4200 = vpop.f32.mrf.mxu0
  %v4201 = vadd.f32 %v4112, %v4200
  %4202 = vmatmul.bf16.gmra.mxu0 %v800
  %v4203 = vpop.f32.mrf.mxu0
  %v4204 = vadd.f32 %v4115, %v4203
  %v4205 = vpop.f32.mrf.mxu0
  %v4206 = vadd.f32 %v4117, %v4205
  %4207 = vmatmul.bf16.gmra.mxu0 %v808
  %v4208 = vpop.f32.mrf.mxu0
  %v4209 = vadd.f32 %v4120, %v4208
  %v4210 = vpop.f32.mrf.mxu0
  %v4211 = vadd.f32 %v4122, %v4210
  %4212 = vmatmul.bf16.gmra.mxu0 %v816
  %v4213 = vpop.f32.mrf.mxu0
  %v4214 = vadd.f32 %v4125, %v4213
  %v4215 = vpop.f32.mrf.mxu0
  %v4216 = vadd.f32 %v4127, %v4215
  %4217 = vmatmul.bf16.gmra.mxu0 %v824
  %v4218 = vpop.f32.mrf.mxu0
  %v4219 = vadd.f32 %v4130, %v4218
  %v4220 = vpop.f32.mrf.mxu0
  %v4221 = vadd.f32 %v4132, %v4220
  %4222 = vmatmul.bf16.gmra.mxu0 %v832
  %v4223 = vpop.f32.mrf.mxu0
  %v4224 = vadd.f32 %v4135, %v4223
  %v4225 = vpop.f32.mrf.mxu0
  %v4226 = vadd.f32 %v4137, %v4225
  %4227 = vmatmul.bf16.gmra.mxu0 %v840
  %v4228 = vpop.f32.mrf.mxu0
  %v4229 = vadd.f32 %v4140, %v4228
  %v4230 = vpop.f32.mrf.mxu0
  %v4231 = vadd.f32 %v4142, %v4230
  %4232 = vmatmul.bf16.gmra.mxu0 %v848
  %v4233 = vpop.f32.mrf.mxu0
  %v4234 = vadd.f32 %v4145, %v4233
  %v4235 = vpop.f32.mrf.mxu0
  %v4236 = vadd.f32 %v4147, %v4235
  %4237 = vmatmul.bf16.gmra.mxu0 %v856
  %v4238 = vpop.f32.mrf.mxu0
  %v4239 = vadd.f32 %v4150, %v4238
  %v4240 = vpop.f32.mrf.mxu0
  %v4241 = vadd.f32 %v4152, %v4240
  %4242 = vmatmul.bf16.gmra.mxu0 %v864
  %v4243 = vpop.f32.mrf.mxu0
  %v4244 = vadd.f32 %v4155, %v4243
  %v4245 = vpop.f32.mrf.mxu0
  %v4246 = vadd.f32 %v4157, %v4245
  %4247 = vmatmul.bf16.gmra.mxu0 %v872
  %v4248 = vpop.f32.mrf.mxu0
  %v4249 = vadd.f32 %v4160, %v4248
  %v4250 = vpop.f32.mrf.mxu0
  %v4251 = vadd.f32 %v4162, %v4250
  %4252 = vmatmul.bf16.gmra.mxu0 %v880
  %v4253 = vpop.f32.mrf.mxu0
  %v4254 = vadd.f32 %v4165, %v4253
  %v4255 = vpop.f32.mrf.mxu0
  %v4256 = vadd.f32 %v4167, %v4255
  %4257 = vmatmul.bf16.gmra.mxu0 %v888
  %v4258 = vpop.f32.mrf.mxu0
  %v4259 = vadd.f32 %v4170, %v4258
  %v4260 = vpop.f32.mrf.mxu0
  %v4261 = vadd.f32 %v4172, %v4260
  %4262 = vmatmul.bf16.gmra.mxu0 %v896
  %v4263 = vpop.f32.mrf.mxu0
  %v4264 = vadd.f32 %v4175, %v4263
  %v4265 = vpop.f32.mrf.mxu0
  %v4266 = vadd.f32 %v4177, %v4265
  %4267 = vmatmul.bf16.gmra.mxu0 %v904
  %v4268 = vpop.f32.mrf.mxu0
  %v4269 = vadd.f32 %v4180, %v4268
  %v4270 = vpop.f32.mrf.mxu0
  %v4271 = vadd.f32 %v4182, %v4270
  %4272 = vdwg.mxu0
  %4273 = vmatpush.bf16.msra.mxu0 %v2025
  %4274 = vmatpush.bf16.msra.mxu0 %v2021
  %4275 = vmatpush.bf16.msra.mxu0 %v2017
  %4276 = vmatpush.bf16.msra.mxu0 %v2013
  %4277 = vmatpush.bf16.msra.mxu0 %v2009
  %4278 = vmatpush.bf16.msra.mxu0 %v2005
  %4279 = vmatpush.bf16.msra.mxu0 %v2001
  %4280 = vmatpush.bf16.msra.mxu0 %v1997
  %4281 = vmatmul.bf16.gmra.mxu0 %v785
  %v4282 = vpop.f32.mrf.mxu0
  %v4283 = vadd.f32 %v4194, %v4282
  %v4284 = vpop.f32.mrf.mxu0
  %v4285 = vadd.f32 %v4196, %v4284
  %4286 = vmatmul.bf16.gmra.mxu0 %v793
  %v4287 = vpop.f32.mrf.mxu0
  %v4288 = vadd.f32 %v4199, %v4287
  %v4289 = vpop.f32.mrf.mxu0
  %v4290 = vadd.f32 %v4201, %v4289
  %4291 = vmatmul.bf16.gmra.mxu0 %v801
  %v4292 = vpop.f32.mrf.mxu0
  %v4293 = vadd.f32 %v4204, %v4292
  %v4294 = vpop.f32.mrf.mxu0
  %v4295 = vadd.f32 %v4206, %v4294
  %4296 = vmatmul.bf16.gmra.mxu0 %v809
  %v4297 = vpop.f32.mrf.mxu0
  %v4298 = vadd.f32 %v4209, %v4297
  %v4299 = vpop.f32.mrf.mxu0
  %v4300 = vadd.f32 %v4211, %v4299
  %4301 = vmatmul.bf16.gmra.mxu0 %v817
  %v4302 = vpop.f32.mrf.mxu0
  %v4303 = vadd.f32 %v4214, %v4302
  %v4304 = vpop.f32.mrf.mxu0
  %v4305 = vadd.f32 %v4216, %v4304
  %4306 = vmatmul.bf16.gmra.mxu0 %v825
  %v4307 = vpop.f32.mrf.mxu0
  %v4308 = vadd.f32 %v4219, %v4307
  %v4309 = vpop.f32.mrf.mxu0
  %v4310 = vadd.f32 %v4221, %v4309
  %4311 = vmatmul.bf16.gmra.mxu0 %v833
  %v4312 = vpop.f32.mrf.mxu0
  %v4313 = vadd.f32 %v4224, %v4312
  %v4314 = vpop.f32.mrf.mxu0
  %v4315 = vadd.f32 %v4226, %v4314
  %4316 = vmatmul.bf16.gmra.mxu0 %v841
  %v4317 = vpop.f32.mrf.mxu0
  %v4318 = vadd.f32 %v4229, %v4317
  %v4319 = vpop.f32.mrf.mxu0
  %v4320 = vadd.f32 %v4231, %v4319
  %4321 = vmatmul.bf16.gmra.mxu0 %v849
  %v4322 = vpop.f32.mrf.mxu0
  %v4323 = vadd.f32 %v4234, %v4322
  %v4324 = vpop.f32.mrf.mxu0
  %v4325 = vadd.f32 %v4236, %v4324
  %4326 = vmatmul.bf16.gmra.mxu0 %v857
  %v4327 = vpop.f32.mrf.mxu0
  %v4328 = vadd.f32 %v4239, %v4327
  %v4329 = vpop.f32.mrf.mxu0
  %v4330 = vadd.f32 %v4241, %v4329
  %4331 = vmatmul.bf16.gmra.mxu0 %v865
  %v4332 = vpop.f32.mrf.mxu0
  %v4333 = vadd.f32 %v4244, %v4332
  %v4334 = vpop.f32.mrf.mxu0
  %v4335 = vadd.f32 %v4246, %v4334
  %4336 = vmatmul.bf16.gmra.mxu0 %v873
  %v4337 = vpop.f32.mrf.mxu0
  %v4338 = vadd.f32 %v4249, %v4337
  %v4339 = vpop.f32.mrf.mxu0
  %v4340 = vadd.f32 %v4251, %v4339
  %4341 = vmatmul.bf16.gmra.mxu0 %v881
  %v4342 = vpop.f32.mrf.mxu0
  %v4343 = vadd.f32 %v4254, %v4342
  %v4344 = vpop.f32.mrf.mxu0
  %v4345 = vadd.f32 %v4256, %v4344
  %4346 = vmatmul.bf16.gmra.mxu0 %v889
  %v4347 = vpop.f32.mrf.mxu0
  %v4348 = vadd.f32 %v4259, %v4347
  %v4349 = vpop.f32.mrf.mxu0
  %v4350 = vadd.f32 %v4261, %v4349
  %4351 = vmatmul.bf16.gmra.mxu0 %v897
  %v4352 = vpop.f32.mrf.mxu0
  %v4353 = vadd.f32 %v4264, %v4352
  %v4354 = vpop.f32.mrf.mxu0
  %v4355 = vadd.f32 %v4266, %v4354
  %4356 = vmatmul.bf16.gmra.mxu0 %v905
  %v4357 = vpop.f32.mrf.mxu0
  %v4358 = vadd.f32 %v4269, %v4357
  %v4359 = vpop.f32.mrf.mxu0
  %v4360 = vadd.f32 %v4271, %v4359
  %4361 = vdwg.mxu0
  %4362 = vmatpush.bf16.msra.mxu0 %v2057
  %4363 = vmatpush.bf16.msra.mxu0 %v2053
  %4364 = vmatpush.bf16.msra.mxu0 %v2049
  %4365 = vmatpush.bf16.msra.mxu0 %v2045
  %4366 = vmatpush.bf16.msra.mxu0 %v2041
  %4367 = vmatpush.bf16.msra.mxu0 %v2037
  %4368 = vmatpush.bf16.msra.mxu0 %v2033
  %4369 = vmatpush.bf16.msra.mxu0 %v2029
  %4370 = vmatmul.bf16.gmra.mxu0 %v786
  %v4371 = vpop.f32.mrf.mxu0
  %v4372 = vadd.f32 %v4283, %v4371
  %v4373 = vpop.f32.mrf.mxu0
  %v4374 = vadd.f32 %v4285, %v4373
  %4375 = vmatmul.bf16.gmra.mxu0 %v794
  %v4376 = vpop.f32.mrf.mxu0
  %v4377 = vadd.f32 %v4288, %v4376
  %v4378 = vpop.f32.mrf.mxu0
  %v4379 = vadd.f32 %v4290, %v4378
  %4380 = vmatmul.bf16.gmra.mxu0 %v802
  %v4381 = vpop.f32.mrf.mxu0
  %v4382 = vadd.f32 %v4293, %v4381
  %v4383 = vpop.f32.mrf.mxu0
  %v4384 = vadd.f32 %v4295, %v4383
  %4385 = vmatmul.bf16.gmra.mxu0 %v810
  %v4386 = vpop.f32.mrf.mxu0
  %v4387 = vadd.f32 %v4298, %v4386
  %v4388 = vpop.f32.mrf.mxu0
  %v4389 = vadd.f32 %v4300, %v4388
  %4390 = vmatmul.bf16.gmra.mxu0 %v818
  %v4391 = vpop.f32.mrf.mxu0
  %v4392 = vadd.f32 %v4303, %v4391
  %v4393 = vpop.f32.mrf.mxu0
  %v4394 = vadd.f32 %v4305, %v4393
  %4395 = vmatmul.bf16.gmra.mxu0 %v826
  %v4396 = vpop.f32.mrf.mxu0
  %v4397 = vadd.f32 %v4308, %v4396
  %v4398 = vpop.f32.mrf.mxu0
  %v4399 = vadd.f32 %v4310, %v4398
  %4400 = vmatmul.bf16.gmra.mxu0 %v834
  %v4401 = vpop.f32.mrf.mxu0
  %v4402 = vadd.f32 %v4313, %v4401
  %v4403 = vpop.f32.mrf.mxu0
  %v4404 = vadd.f32 %v4315, %v4403
  %4405 = vmatmul.bf16.gmra.mxu0 %v842
  %v4406 = vpop.f32.mrf.mxu0
  %v4407 = vadd.f32 %v4318, %v4406
  %v4408 = vpop.f32.mrf.mxu0
  %v4409 = vadd.f32 %v4320, %v4408
  %4410 = vmatmul.bf16.gmra.mxu0 %v850
  %v4411 = vpop.f32.mrf.mxu0
  %v4412 = vadd.f32 %v4323, %v4411
  %v4413 = vpop.f32.mrf.mxu0
  %v4414 = vadd.f32 %v4325, %v4413
  %4415 = vmatmul.bf16.gmra.mxu0 %v858
  %v4416 = vpop.f32.mrf.mxu0
  %v4417 = vadd.f32 %v4328, %v4416
  %v4418 = vpop.f32.mrf.mxu0
  %v4419 = vadd.f32 %v4330, %v4418
  %4420 = vmatmul.bf16.gmra.mxu0 %v866
  %v4421 = vpop.f32.mrf.mxu0
  %v4422 = vadd.f32 %v4333, %v4421
  %v4423 = vpop.f32.mrf.mxu0
  %v4424 = vadd.f32 %v4335, %v4423
  %4425 = vmatmul.bf16.gmra.mxu0 %v874
  %v4426 = vpop.f32.mrf.mxu0
  %v4427 = vadd.f32 %v4338, %v4426
  %v4428 = vpop.f32.mrf.mxu0
  %v4429 = vadd.f32 %v4340, %v4428
  %4430 = vmatmul.bf16.gmra.mxu0 %v882
  %v4431 = vpop.f32.mrf.mxu0
  %v4432 = vadd.f32 %v4343, %v4431
  %v4433 = vpop.f32.mrf.mxu0
  %v4434 = vadd.f32 %v4345, %v4433
  %4435 = vmatmul.bf16.gmra.mxu0 %v890
  %v4436 = vpop.f32.mrf.mxu0
  %v4437 = vadd.f32 %v4348, %v4436
  %v4438 = vpop.f32.mrf.mxu0
  %v4439 = vadd.f32 %v4350, %v4438
  %4440 = vmatmul.bf16.gmra.mxu0 %v898
  %v4441 = vpop.f32.mrf.mxu0
  %v4442 = vadd.f32 %v4353, %v4441
  %v4443 = vpop.f32.mrf.mxu0
  %v4444 = vadd.f32 %v4355, %v4443
  %4445 = vmatmul.bf16.gmra.mxu0 %v906
  %v4446 = vpop.f32.mrf.mxu0
  %v4447 = vadd.f32 %v4358, %v4446
  %v4448 = vpop.f32.mrf.mxu0
  %v4449 = vadd.f32 %v4360, %v4448
  %4450 = vdwg.mxu0
  %4451 = vmatpush.bf16.msra.mxu0 %v1834
  %4452 = vmatpush.bf16.msra.mxu0 %v1830
  %4453 = vmatpush.bf16.msra.mxu0 %v1826
  %4454 = vmatpush.bf16.msra.mxu0 %v1822
  %4455 = vmatpush.bf16.msra.mxu0 %v1818
  %4456 = vmatpush.bf16.msra.mxu0 %v1814
  %4457 = vmatpush.bf16.msra.mxu0 %v1810
  %4458 = vmatpush.bf16.msra.mxu0 %v1806
  %4459 = vmatmul.bf16.gmra.mxu0 %v779
  %v4460 = vpop.f32.mrf.mxu0
  %v4461 = vadd.f32 0.0, %v4460
  %v4462 = vpop.f32.mrf.mxu0
  %v4463 = vadd.f32 0.0, %v4462
  %4464 = vmatmul.bf16.gmra.mxu0 %v787
  %v4465 = vpop.f32.mrf.mxu0
  %v4466 = vadd.f32 0.0, %v4465
  %v4467 = vpop.f32.mrf.mxu0
  %v4468 = vadd.f32 0.0, %v4467
  %4469 = vmatmul.bf16.gmra.mxu0 %v795
  %v4470 = vpop.f32.mrf.mxu0
  %v4471 = vadd.f32 0.0, %v4470
  %v4472 = vpop.f32.mrf.mxu0
  %v4473 = vadd.f32 0.0, %v4472
  %4474 = vmatmul.bf16.gmra.mxu0 %v803
  %v4475 = vpop.f32.mrf.mxu0
  %v4476 = vadd.f32 0.0, %v4475
  %v4477 = vpop.f32.mrf.mxu0
  %v4478 = vadd.f32 0.0, %v4477
  %4479 = vmatmul.bf16.gmra.mxu0 %v811
  %v4480 = vpop.f32.mrf.mxu0
  %v4481 = vadd.f32 0.0, %v4480
  %v4482 = vpop.f32.mrf.mxu0
  %v4483 = vadd.f32 0.0, %v4482
  %4484 = vmatmul.bf16.gmra.mxu0 %v819
  %v4485 = vpop.f32.mrf.mxu0
  %v4486 = vadd.f32 0.0, %v4485
  %v4487 = vpop.f32.mrf.mxu0
  %v4488 = vadd.f32 0.0, %v4487
  %4489 = vmatmul.bf16.gmra.mxu0 %v827
  %v4490 = vpop.f32.mrf.mxu0
  %v4491 = vadd.f32 0.0, %v4490
  %v4492 = vpop.f32.mrf.mxu0
  %v4493 = vadd.f32 0.0, %v4492
  %4494 = vmatmul.bf16.gmra.mxu0 %v835
  %v4495 = vpop.f32.mrf.mxu0
  %v4496 = vadd.f32 0.0, %v4495
  %v4497 = vpop.f32.mrf.mxu0
  %v4498 = vadd.f32 0.0, %v4497
  %4499 = vmatmul.bf16.gmra.mxu0 %v843
  %v4500 = vpop.f32.mrf.mxu0
  %v4501 = vadd.f32 0.0, %v4500
  %v4502 = vpop.f32.mrf.mxu0
  %v4503 = vadd.f32 0.0, %v4502
  %4504 = vmatmul.bf16.gmra.mxu0 %v851
  %v4505 = vpop.f32.mrf.mxu0
  %v4506 = vadd.f32 0.0, %v4505
  %v4507 = vpop.f32.mrf.mxu0
  %v4508 = vadd.f32 0.0, %v4507
  %4509 = vmatmul.bf16.gmra.mxu0 %v859
  %v4510 = vpop.f32.mrf.mxu0
  %v4511 = vadd.f32 0.0, %v4510
  %v4512 = vpop.f32.mrf.mxu0
  %v4513 = vadd.f32 0.0, %v4512
  %4514 = vmatmul.bf16.gmra.mxu0 %v867
  %v4515 = vpop.f32.mrf.mxu0
  %v4516 = vadd.f32 0.0, %v4515
  %v4517 = vpop.f32.mrf.mxu0
  %v4518 = vadd.f32 0.0, %v4517
  %4519 = vmatmul.bf16.gmra.mxu0 %v875
  %v4520 = vpop.f32.mrf.mxu0
  %v4521 = vadd.f32 0.0, %v4520
  %v4522 = vpop.f32.mrf.mxu0
  %v4523 = vadd.f32 0.0, %v4522
  %4524 = vmatmul.bf16.gmra.mxu0 %v883
  %v4525 = vpop.f32.mrf.mxu0
  %v4526 = vadd.f32 0.0, %v4525
  %v4527 = vpop.f32.mrf.mxu0
  %v4528 = vadd.f32 0.0, %v4527
  %4529 = vmatmul.bf16.gmra.mxu0 %v891
  %v4530 = vpop.f32.mrf.mxu0
  %v4531 = vadd.f32 0.0, %v4530
  %v4532 = vpop.f32.mrf.mxu0
  %v4533 = vadd.f32 0.0, %v4532
  %4534 = vmatmul.bf16.gmra.mxu0 %v899
  %v4535 = vpop.f32.mrf.mxu0
  %v4536 = vadd.f32 0.0, %v4535
  %v4537 = vpop.f32.mrf.mxu0
  %v4538 = vadd.f32 0.0, %v4537
  %4539 = vdwg.mxu0
  %4540 = vmatpush.bf16.msra.mxu0 %v1866
  %4541 = vmatpush.bf16.msra.mxu0 %v1862
  %4542 = vmatpush.bf16.msra.mxu0 %v1858
  %4543 = vmatpush.bf16.msra.mxu0 %v1854
  %4544 = vmatpush.bf16.msra.mxu0 %v1850
  %4545 = vmatpush.bf16.msra.mxu0 %v1846
  %4546 = vmatpush.bf16.msra.mxu0 %v1842
  %4547 = vmatpush.bf16.msra.mxu0 %v1838
  %4548 = vmatmul.bf16.gmra.mxu0 %v780
  %v4549 = vpop.f32.mrf.mxu0
  %v4550 = vadd.f32 %v4461, %v4549
  %v4551 = vpop.f32.mrf.mxu0
  %v4552 = vadd.f32 %v4463, %v4551
  %4553 = vmatmul.bf16.gmra.mxu0 %v788
  %v4554 = vpop.f32.mrf.mxu0
  %v4555 = vadd.f32 %v4466, %v4554
  %v4556 = vpop.f32.mrf.mxu0
  %v4557 = vadd.f32 %v4468, %v4556
  %4558 = vmatmul.bf16.gmra.mxu0 %v796
  %v4559 = vpop.f32.mrf.mxu0
  %v4560 = vadd.f32 %v4471, %v4559
  %v4561 = vpop.f32.mrf.mxu0
  %v4562 = vadd.f32 %v4473, %v4561
  %4563 = vmatmul.bf16.gmra.mxu0 %v804
  %v4564 = vpop.f32.mrf.mxu0
  %v4565 = vadd.f32 %v4476, %v4564
  %v4566 = vpop.f32.mrf.mxu0
  %v4567 = vadd.f32 %v4478, %v4566
  %4568 = vmatmul.bf16.gmra.mxu0 %v812
  %v4569 = vpop.f32.mrf.mxu0
  %v4570 = vadd.f32 %v4481, %v4569
  %v4571 = vpop.f32.mrf.mxu0
  %v4572 = vadd.f32 %v4483, %v4571
  %4573 = vmatmul.bf16.gmra.mxu0 %v820
  %v4574 = vpop.f32.mrf.mxu0
  %v4575 = vadd.f32 %v4486, %v4574
  %v4576 = vpop.f32.mrf.mxu0
  %v4577 = vadd.f32 %v4488, %v4576
  %4578 = vmatmul.bf16.gmra.mxu0 %v828
  %v4579 = vpop.f32.mrf.mxu0
  %v4580 = vadd.f32 %v4491, %v4579
  %v4581 = vpop.f32.mrf.mxu0
  %v4582 = vadd.f32 %v4493, %v4581
  %4583 = vmatmul.bf16.gmra.mxu0 %v836
  %v4584 = vpop.f32.mrf.mxu0
  %v4585 = vadd.f32 %v4496, %v4584
  %v4586 = vpop.f32.mrf.mxu0
  %v4587 = vadd.f32 %v4498, %v4586
  %4588 = vmatmul.bf16.gmra.mxu0 %v844
  %v4589 = vpop.f32.mrf.mxu0
  %v4590 = vadd.f32 %v4501, %v4589
  %v4591 = vpop.f32.mrf.mxu0
  %v4592 = vadd.f32 %v4503, %v4591
  %4593 = vmatmul.bf16.gmra.mxu0 %v852
  %v4594 = vpop.f32.mrf.mxu0
  %v4595 = vadd.f32 %v4506, %v4594
  %v4596 = vpop.f32.mrf.mxu0
  %v4597 = vadd.f32 %v4508, %v4596
  %4598 = vmatmul.bf16.gmra.mxu0 %v860
  %v4599 = vpop.f32.mrf.mxu0
  %v4600 = vadd.f32 %v4511, %v4599
  %v4601 = vpop.f32.mrf.mxu0
  %v4602 = vadd.f32 %v4513, %v4601
  %4603 = vmatmul.bf16.gmra.mxu0 %v868
  %v4604 = vpop.f32.mrf.mxu0
  %v4605 = vadd.f32 %v4516, %v4604
  %v4606 = vpop.f32.mrf.mxu0
  %v4607 = vadd.f32 %v4518, %v4606
  %4608 = vmatmul.bf16.gmra.mxu0 %v876
  %v4609 = vpop.f32.mrf.mxu0
  %v4610 = vadd.f32 %v4521, %v4609
  %v4611 = vpop.f32.mrf.mxu0
  %v4612 = vadd.f32 %v4523, %v4611
  %4613 = vmatmul.bf16.gmra.mxu0 %v884
  %v4614 = vpop.f32.mrf.mxu0
  %v4615 = vadd.f32 %v4526, %v4614
  %v4616 = vpop.f32.mrf.mxu0
  %v4617 = vadd.f32 %v4528, %v4616
  %4618 = vmatmul.bf16.gmra.mxu0 %v892
  %v4619 = vpop.f32.mrf.mxu0
  %v4620 = vadd.f32 %v4531, %v4619
  %v4621 = vpop.f32.mrf.mxu0
  %v4622 = vadd.f32 %v4533, %v4621
  %4623 = vmatmul.bf16.gmra.mxu0 %v900
  %v4624 = vpop.f32.mrf.mxu0
  %v4625 = vadd.f32 %v4536, %v4624
  %v4626 = vpop.f32.mrf.mxu0
  %v4627 = vadd.f32 %v4538, %v4626
  %4628 = vdwg.mxu0
  %4629 = vmatpush.bf16.msra.mxu0 %v1898
  %4630 = vmatpush.bf16.msra.mxu0 %v1894
  %4631 = vmatpush.bf16.msra.mxu0 %v1890
  %4632 = vmatpush.bf16.msra.mxu0 %v1886
  %4633 = vmatpush.bf16.msra.mxu0 %v1882
  %4634 = vmatpush.bf16.msra.mxu0 %v1878
  %4635 = vmatpush.bf16.msra.mxu0 %v1874
  %4636 = vmatpush.bf16.msra.mxu0 %v1870
  %4637 = vmatmul.bf16.gmra.mxu0 %v781
  %v4638 = vpop.f32.mrf.mxu0
  %v4639 = vadd.f32 %v4550, %v4638
  %v4640 = vpop.f32.mrf.mxu0
  %v4641 = vadd.f32 %v4552, %v4640
  %4642 = vmatmul.bf16.gmra.mxu0 %v789
  %v4643 = vpop.f32.mrf.mxu0
  %v4644 = vadd.f32 %v4555, %v4643
  %v4645 = vpop.f32.mrf.mxu0
  %v4646 = vadd.f32 %v4557, %v4645
  %4647 = vmatmul.bf16.gmra.mxu0 %v797
  %v4648 = vpop.f32.mrf.mxu0
  %v4649 = vadd.f32 %v4560, %v4648
  %v4650 = vpop.f32.mrf.mxu0
  %v4651 = vadd.f32 %v4562, %v4650
  %4652 = vmatmul.bf16.gmra.mxu0 %v805
  %v4653 = vpop.f32.mrf.mxu0
  %v4654 = vadd.f32 %v4565, %v4653
  %v4655 = vpop.f32.mrf.mxu0
  %v4656 = vadd.f32 %v4567, %v4655
  %4657 = vmatmul.bf16.gmra.mxu0 %v813
  %v4658 = vpop.f32.mrf.mxu0
  %v4659 = vadd.f32 %v4570, %v4658
  %v4660 = vpop.f32.mrf.mxu0
  %v4661 = vadd.f32 %v4572, %v4660
  %4662 = vmatmul.bf16.gmra.mxu0 %v821
  %v4663 = vpop.f32.mrf.mxu0
  %v4664 = vadd.f32 %v4575, %v4663
  %v4665 = vpop.f32.mrf.mxu0
  %v4666 = vadd.f32 %v4577, %v4665
  %4667 = vmatmul.bf16.gmra.mxu0 %v829
  %v4668 = vpop.f32.mrf.mxu0
  %v4669 = vadd.f32 %v4580, %v4668
  %v4670 = vpop.f32.mrf.mxu0
  %v4671 = vadd.f32 %v4582, %v4670
  %4672 = vmatmul.bf16.gmra.mxu0 %v837
  %v4673 = vpop.f32.mrf.mxu0
  %v4674 = vadd.f32 %v4585, %v4673
  %v4675 = vpop.f32.mrf.mxu0
  %v4676 = vadd.f32 %v4587, %v4675
  %4677 = vmatmul.bf16.gmra.mxu0 %v845
  %v4678 = vpop.f32.mrf.mxu0
  %v4679 = vadd.f32 %v4590, %v4678
  %v4680 = vpop.f32.mrf.mxu0
  %v4681 = vadd.f32 %v4592, %v4680
  %4682 = vmatmul.bf16.gmra.mxu0 %v853
  %v4683 = vpop.f32.mrf.mxu0
  %v4684 = vadd.f32 %v4595, %v4683
  %v4685 = vpop.f32.mrf.mxu0
  %v4686 = vadd.f32 %v4597, %v4685
  %4687 = vmatmul.bf16.gmra.mxu0 %v861
  %v4688 = vpop.f32.mrf.mxu0
  %v4689 = vadd.f32 %v4600, %v4688
  %v4690 = vpop.f32.mrf.mxu0
  %v4691 = vadd.f32 %v4602, %v4690
  %4692 = vmatmul.bf16.gmra.mxu0 %v869
  %v4693 = vpop.f32.mrf.mxu0
  %v4694 = vadd.f32 %v4605, %v4693
  %v4695 = vpop.f32.mrf.mxu0
  %v4696 = vadd.f32 %v4607, %v4695
  %4697 = vmatmul.bf16.gmra.mxu0 %v877
  %v4698 = vpop.f32.mrf.mxu0
  %v4699 = vadd.f32 %v4610, %v4698
  %v4700 = vpop.f32.mrf.mxu0
  %v4701 = vadd.f32 %v4612, %v4700
  %4702 = vmatmul.bf16.gmra.mxu0 %v885
  %v4703 = vpop.f32.mrf.mxu0
  %v4704 = vadd.f32 %v4615, %v4703
  %v4705 = vpop.f32.mrf.mxu0
  %v4706 = vadd.f32 %v4617, %v4705
  %4707 = vmatmul.bf16.gmra.mxu0 %v893
  %v4708 = vpop.f32.mrf.mxu0
  %v4709 = vadd.f32 %v4620, %v4708
  %v4710 = vpop.f32.mrf.mxu0
  %v4711 = vadd.f32 %v4622, %v4710
  %4712 = vmatmul.bf16.gmra.mxu0 %v901
  %v4713 = vpop.f32.mrf.mxu0
  %v4714 = vadd.f32 %v4625, %v4713
  %v4715 = vpop.f32.mrf.mxu0
  %v4716 = vadd.f32 %v4627, %v4715
  %4717 = vdwg.mxu0
  %4718 = vmatpush.bf16.msra.mxu0 %v1930
  %4719 = vmatpush.bf16.msra.mxu0 %v1926
  %4720 = vmatpush.bf16.msra.mxu0 %v1922
  %4721 = vmatpush.bf16.msra.mxu0 %v1918
  %4722 = vmatpush.bf16.msra.mxu0 %v1914
  %4723 = vmatpush.bf16.msra.mxu0 %v1910
  %4724 = vmatpush.bf16.msra.mxu0 %v1906
  %4725 = vmatpush.bf16.msra.mxu0 %v1902
  %4726 = vmatmul.bf16.gmra.mxu0 %v782
  %v4727 = vpop.f32.mrf.mxu0
  %v4728 = vadd.f32 %v4639, %v4727
  %v4729 = vpop.f32.mrf.mxu0
  %v4730 = vadd.f32 %v4641, %v4729
  %4731 = vmatmul.bf16.gmra.mxu0 %v790
  %v4732 = vpop.f32.mrf.mxu0
  %v4733 = vadd.f32 %v4644, %v4732
  %v4734 = vpop.f32.mrf.mxu0
  %v4735 = vadd.f32 %v4646, %v4734
  %4736 = vmatmul.bf16.gmra.mxu0 %v798
  %v4737 = vpop.f32.mrf.mxu0
  %v4738 = vadd.f32 %v4649, %v4737
  %v4739 = vpop.f32.mrf.mxu0
  %v4740 = vadd.f32 %v4651, %v4739
  %4741 = vmatmul.bf16.gmra.mxu0 %v806
  %v4742 = vpop.f32.mrf.mxu0
  %v4743 = vadd.f32 %v4654, %v4742
  %v4744 = vpop.f32.mrf.mxu0
  %v4745 = vadd.f32 %v4656, %v4744
  %4746 = vmatmul.bf16.gmra.mxu0 %v814
  %v4747 = vpop.f32.mrf.mxu0
  %v4748 = vadd.f32 %v4659, %v4747
  %v4749 = vpop.f32.mrf.mxu0
  %v4750 = vadd.f32 %v4661, %v4749
  %4751 = vmatmul.bf16.gmra.mxu0 %v822
  %v4752 = vpop.f32.mrf.mxu0
  %v4753 = vadd.f32 %v4664, %v4752
  %v4754 = vpop.f32.mrf.mxu0
  %v4755 = vadd.f32 %v4666, %v4754
  %4756 = vmatmul.bf16.gmra.mxu0 %v830
  %v4757 = vpop.f32.mrf.mxu0
  %v4758 = vadd.f32 %v4669, %v4757
  %v4759 = vpop.f32.mrf.mxu0
  %v4760 = vadd.f32 %v4671, %v4759
  %4761 = vmatmul.bf16.gmra.mxu0 %v838
  %v4762 = vpop.f32.mrf.mxu0
  %v4763 = vadd.f32 %v4674, %v4762
  %v4764 = vpop.f32.mrf.mxu0
  %v4765 = vadd.f32 %v4676, %v4764
  %4766 = vmatmul.bf16.gmra.mxu0 %v846
  %v4767 = vpop.f32.mrf.mxu0
  %v4768 = vadd.f32 %v4679, %v4767
  %v4769 = vpop.f32.mrf.mxu0
  %v4770 = vadd.f32 %v4681, %v4769
  %4771 = vmatmul.bf16.gmra.mxu0 %v854
  %v4772 = vpop.f32.mrf.mxu0
  %v4773 = vadd.f32 %v4684, %v4772
  %v4774 = vpop.f32.mrf.mxu0
  %v4775 = vadd.f32 %v4686, %v4774
  %4776 = vmatmul.bf16.gmra.mxu0 %v862
  %v4777 = vpop.f32.mrf.mxu0
  %v4778 = vadd.f32 %v4689, %v4777
  %v4779 = vpop.f32.mrf.mxu0
  %v4780 = vadd.f32 %v4691, %v4779
  %4781 = vmatmul.bf16.gmra.mxu0 %v870
  %v4782 = vpop.f32.mrf.mxu0
  %v4783 = vadd.f32 %v4694, %v4782
  %v4784 = vpop.f32.mrf.mxu0
  %v4785 = vadd.f32 %v4696, %v4784
  %4786 = vmatmul.bf16.gmra.mxu0 %v878
  %v4787 = vpop.f32.mrf.mxu0
  %v4788 = vadd.f32 %v4699, %v4787
  %v4789 = vpop.f32.mrf.mxu0
  %v4790 = vadd.f32 %v4701, %v4789
  %4791 = vmatmul.bf16.gmra.mxu0 %v886
  %v4792 = vpop.f32.mrf.mxu0
  %v4793 = vadd.f32 %v4704, %v4792
  %v4794 = vpop.f32.mrf.mxu0
  %v4795 = vadd.f32 %v4706, %v4794
  %4796 = vmatmul.bf16.gmra.mxu0 %v894
  %v4797 = vpop.f32.mrf.mxu0
  %v4798 = vadd.f32 %v4709, %v4797
  %v4799 = vpop.f32.mrf.mxu0
  %v4800 = vadd.f32 %v4711, %v4799
  %4801 = vmatmul.bf16.gmra.mxu0 %v902
  %v4802 = vpop.f32.mrf.mxu0
  %v4803 = vadd.f32 %v4714, %v4802
  %v4804 = vpop.f32.mrf.mxu0
  %v4805 = vadd.f32 %v4716, %v4804
  %4806 = vdwg.mxu0
  %4807 = vmatpush.bf16.msra.mxu0 %v1962
  %4808 = vmatpush.bf16.msra.mxu0 %v1958
  %4809 = vmatpush.bf16.msra.mxu0 %v1954
  %4810 = vmatpush.bf16.msra.mxu0 %v1950
  %4811 = vmatpush.bf16.msra.mxu0 %v1946
  %4812 = vmatpush.bf16.msra.mxu0 %v1942
  %4813 = vmatpush.bf16.msra.mxu0 %v1938
  %4814 = vmatpush.bf16.msra.mxu0 %v1934
  %4815 = vmatmul.bf16.gmra.mxu0 %v783
  %v4816 = vpop.f32.mrf.mxu0
  %v4817 = vadd.f32 %v4728, %v4816
  %v4818 = vpop.f32.mrf.mxu0
  %v4819 = vadd.f32 %v4730, %v4818
  %4820 = vmatmul.bf16.gmra.mxu0 %v791
  %v4821 = vpop.f32.mrf.mxu0
  %v4822 = vadd.f32 %v4733, %v4821
  %v4823 = vpop.f32.mrf.mxu0
  %v4824 = vadd.f32 %v4735, %v4823
  %4825 = vmatmul.bf16.gmra.mxu0 %v799
  %v4826 = vpop.f32.mrf.mxu0
  %v4827 = vadd.f32 %v4738, %v4826
  %v4828 = vpop.f32.mrf.mxu0
  %v4829 = vadd.f32 %v4740, %v4828
  %4830 = vmatmul.bf16.gmra.mxu0 %v807
  %v4831 = vpop.f32.mrf.mxu0
  %v4832 = vadd.f32 %v4743, %v4831
  %v4833 = vpop.f32.mrf.mxu0
  %v4834 = vadd.f32 %v4745, %v4833
  %4835 = vmatmul.bf16.gmra.mxu0 %v815
  %v4836 = vpop.f32.mrf.mxu0
  %v4837 = vadd.f32 %v4748, %v4836
  %v4838 = vpop.f32.mrf.mxu0
  %v4839 = vadd.f32 %v4750, %v4838
  %4840 = vmatmul.bf16.gmra.mxu0 %v823
  %v4841 = vpop.f32.mrf.mxu0
  %v4842 = vadd.f32 %v4753, %v4841
  %v4843 = vpop.f32.mrf.mxu0
  %v4844 = vadd.f32 %v4755, %v4843
  %4845 = vmatmul.bf16.gmra.mxu0 %v831
  %v4846 = vpop.f32.mrf.mxu0
  %v4847 = vadd.f32 %v4758, %v4846
  %v4848 = vpop.f32.mrf.mxu0
  %v4849 = vadd.f32 %v4760, %v4848
  %4850 = vmatmul.bf16.gmra.mxu0 %v839
  %v4851 = vpop.f32.mrf.mxu0
  %v4852 = vadd.f32 %v4763, %v4851
  %v4853 = vpop.f32.mrf.mxu0
  %v4854 = vadd.f32 %v4765, %v4853
  %4855 = vmatmul.bf16.gmra.mxu0 %v847
  %v4856 = vpop.f32.mrf.mxu0
  %v4857 = vadd.f32 %v4768, %v4856
  %v4858 = vpop.f32.mrf.mxu0
  %v4859 = vadd.f32 %v4770, %v4858
  %4860 = vmatmul.bf16.gmra.mxu0 %v855
  %v4861 = vpop.f32.mrf.mxu0
  %v4862 = vadd.f32 %v4773, %v4861
  %v4863 = vpop.f32.mrf.mxu0
  %v4864 = vadd.f32 %v4775, %v4863
  %4865 = vmatmul.bf16.gmra.mxu0 %v863
  %v4866 = vpop.f32.mrf.mxu0
  %v4867 = vadd.f32 %v4778, %v4866
  %v4868 = vpop.f32.mrf.mxu0
  %v4869 = vadd.f32 %v4780, %v4868
  %4870 = vmatmul.bf16.gmra.mxu0 %v871
  %v4871 = vpop.f32.mrf.mxu0
  %v4872 = vadd.f32 %v4783, %v4871
  %v4873 = vpop.f32.mrf.mxu0
  %v4874 = vadd.f32 %v4785, %v4873
  %4875 = vmatmul.bf16.gmra.mxu0 %v879
  %v4876 = vpop.f32.mrf.mxu0
  %v4877 = vadd.f32 %v4788, %v4876
  %v4878 = vpop.f32.mrf.mxu0
  %v4879 = vadd.f32 %v4790, %v4878
  %4880 = vmatmul.bf16.gmra.mxu0 %v887
  %v4881 = vpop.f32.mrf.mxu0
  %v4882 = vadd.f32 %v4793, %v4881
  %v4883 = vpop.f32.mrf.mxu0
  %v4884 = vadd.f32 %v4795, %v4883
  %4885 = vmatmul.bf16.gmra.mxu0 %v895
  %v4886 = vpop.f32.mrf.mxu0
  %v4887 = vadd.f32 %v4798, %v4886
  %v4888 = vpop.f32.mrf.mxu0
  %v4889 = vadd.f32 %v4800, %v4888
  %4890 = vmatmul.bf16.gmra.mxu0 %v903
  %v4891 = vpop.f32.mrf.mxu0
  %v4892 = vadd.f32 %v4803, %v4891
  %v4893 = vpop.f32.mrf.mxu0
  %v4894 = vadd.f32 %v4805, %v4893
  %4895 = vdwg.mxu0
  %4896 = vmatpush.bf16.msra.mxu0 %v1994
  %4897 = vmatpush.bf16.msra.mxu0 %v1990
  %4898 = vmatpush.bf16.msra.mxu0 %v1986
  %4899 = vmatpush.bf16.msra.mxu0 %v1982
  %4900 = vmatpush.bf16.msra.mxu0 %v1978
  %4901 = vmatpush.bf16.msra.mxu0 %v1974
  %4902 = vmatpush.bf16.msra.mxu0 %v1970
  %4903 = vmatpush.bf16.msra.mxu0 %v1966
  %4904 = vmatmul.bf16.gmra.mxu0 %v784
  %v4905 = vpop.f32.mrf.mxu0
  %v4906 = vadd.f32 %v4817, %v4905
  %v4907 = vpop.f32.mrf.mxu0
  %v4908 = vadd.f32 %v4819, %v4907
  %4909 = vmatmul.bf16.gmra.mxu0 %v792
  %v4910 = vpop.f32.mrf.mxu0
  %v4911 = vadd.f32 %v4822, %v4910
  %v4912 = vpop.f32.mrf.mxu0
  %v4913 = vadd.f32 %v4824, %v4912
  %4914 = vmatmul.bf16.gmra.mxu0 %v800
  %v4915 = vpop.f32.mrf.mxu0
  %v4916 = vadd.f32 %v4827, %v4915
  %v4917 = vpop.f32.mrf.mxu0
  %v4918 = vadd.f32 %v4829, %v4917
  %4919 = vmatmul.bf16.gmra.mxu0 %v808
  %v4920 = vpop.f32.mrf.mxu0
  %v4921 = vadd.f32 %v4832, %v4920
  %v4922 = vpop.f32.mrf.mxu0
  %v4923 = vadd.f32 %v4834, %v4922
  %4924 = vmatmul.bf16.gmra.mxu0 %v816
  %v4925 = vpop.f32.mrf.mxu0
  %v4926 = vadd.f32 %v4837, %v4925
  %v4927 = vpop.f32.mrf.mxu0
  %v4928 = vadd.f32 %v4839, %v4927
  %4929 = vmatmul.bf16.gmra.mxu0 %v824
  %v4930 = vpop.f32.mrf.mxu0
  %v4931 = vadd.f32 %v4842, %v4930
  %v4932 = vpop.f32.mrf.mxu0
  %v4933 = vadd.f32 %v4844, %v4932
  %4934 = vmatmul.bf16.gmra.mxu0 %v832
  %v4935 = vpop.f32.mrf.mxu0
  %v4936 = vadd.f32 %v4847, %v4935
  %v4937 = vpop.f32.mrf.mxu0
  %v4938 = vadd.f32 %v4849, %v4937
  %4939 = vmatmul.bf16.gmra.mxu0 %v840
  %v4940 = vpop.f32.mrf.mxu0
  %v4941 = vadd.f32 %v4852, %v4940
  %v4942 = vpop.f32.mrf.mxu0
  %v4943 = vadd.f32 %v4854, %v4942
  %4944 = vmatmul.bf16.gmra.mxu0 %v848
  %v4945 = vpop.f32.mrf.mxu0
  %v4946 = vadd.f32 %v4857, %v4945
  %v4947 = vpop.f32.mrf.mxu0
  %v4948 = vadd.f32 %v4859, %v4947
  %4949 = vmatmul.bf16.gmra.mxu0 %v856
  %v4950 = vpop.f32.mrf.mxu0
  %v4951 = vadd.f32 %v4862, %v4950
  %v4952 = vpop.f32.mrf.mxu0
  %v4953 = vadd.f32 %v4864, %v4952
  %4954 = vmatmul.bf16.gmra.mxu0 %v864
  %v4955 = vpop.f32.mrf.mxu0
  %v4956 = vadd.f32 %v4867, %v4955
  %v4957 = vpop.f32.mrf.mxu0
  %v4958 = vadd.f32 %v4869, %v4957
  %4959 = vmatmul.bf16.gmra.mxu0 %v872
  %v4960 = vpop.f32.mrf.mxu0
  %v4961 = vadd.f32 %v4872, %v4960
  %v4962 = vpop.f32.mrf.mxu0
  %v4963 = vadd.f32 %v4874, %v4962
  %4964 = vmatmul.bf16.gmra.mxu0 %v880
  %v4965 = vpop.f32.mrf.mxu0
  %v4966 = vadd.f32 %v4877, %v4965
  %v4967 = vpop.f32.mrf.mxu0
  %v4968 = vadd.f32 %v4879, %v4967
  %4969 = vmatmul.bf16.gmra.mxu0 %v888
  %v4970 = vpop.f32.mrf.mxu0
  %v4971 = vadd.f32 %v4882, %v4970
  %v4972 = vpop.f32.mrf.mxu0
  %v4973 = vadd.f32 %v4884, %v4972
  %4974 = vmatmul.bf16.gmra.mxu0 %v896
  %v4975 = vpop.f32.mrf.mxu0
  %v4976 = vadd.f32 %v4887, %v4975
  %v4977 = vpop.f32.mrf.mxu0
  %v4978 = vadd.f32 %v4889, %v4977
  %4979 = vmatmul.bf16.gmra.mxu0 %v904
  %v4980 = vpop.f32.mrf.mxu0
  %v4981 = vadd.f32 %v4892, %v4980
  %v4982 = vpop.f32.mrf.mxu0
  %v4983 = vadd.f32 %v4894, %v4982
  %4984 = vdwg.mxu0
  %4985 = vmatpush.bf16.msra.mxu0 %v2026
  %4986 = vmatpush.bf16.msra.mxu0 %v2022
  %4987 = vmatpush.bf16.msra.mxu0 %v2018
  %4988 = vmatpush.bf16.msra.mxu0 %v2014
  %4989 = vmatpush.bf16.msra.mxu0 %v2010
  %4990 = vmatpush.bf16.msra.mxu0 %v2006
  %4991 = vmatpush.bf16.msra.mxu0 %v2002
  %4992 = vmatpush.bf16.msra.mxu0 %v1998
  %4993 = vmatmul.bf16.gmra.mxu0 %v785
  %v4994 = vpop.f32.mrf.mxu0
  %v4995 = vadd.f32 %v4906, %v4994
  %v4996 = vpop.f32.mrf.mxu0
  %v4997 = vadd.f32 %v4908, %v4996
  %4998 = vmatmul.bf16.gmra.mxu0 %v793
  %v4999 = vpop.f32.mrf.mxu0
  %v5000 = vadd.f32 %v4911, %v4999
  %v5001 = vpop.f32.mrf.mxu0
  %v5002 = vadd.f32 %v4913, %v5001
  %5003 = vmatmul.bf16.gmra.mxu0 %v801
  %v5004 = vpop.f32.mrf.mxu0
  %v5005 = vadd.f32 %v4916, %v5004
  %v5006 = vpop.f32.mrf.mxu0
  %v5007 = vadd.f32 %v4918, %v5006
  %5008 = vmatmul.bf16.gmra.mxu0 %v809
  %v5009 = vpop.f32.mrf.mxu0
  %v5010 = vadd.f32 %v4921, %v5009
  %v5011 = vpop.f32.mrf.mxu0
  %v5012 = vadd.f32 %v4923, %v5011
  %5013 = vmatmul.bf16.gmra.mxu0 %v817
  %v5014 = vpop.f32.mrf.mxu0
  %v5015 = vadd.f32 %v4926, %v5014
  %v5016 = vpop.f32.mrf.mxu0
  %v5017 = vadd.f32 %v4928, %v5016
  %5018 = vmatmul.bf16.gmra.mxu0 %v825
  %v5019 = vpop.f32.mrf.mxu0
  %v5020 = vadd.f32 %v4931, %v5019
  %v5021 = vpop.f32.mrf.mxu0
  %v5022 = vadd.f32 %v4933, %v5021
  %5023 = vmatmul.bf16.gmra.mxu0 %v833
  %v5024 = vpop.f32.mrf.mxu0
  %v5025 = vadd.f32 %v4936, %v5024
  %v5026 = vpop.f32.mrf.mxu0
  %v5027 = vadd.f32 %v4938, %v5026
  %5028 = vmatmul.bf16.gmra.mxu0 %v841
  %v5029 = vpop.f32.mrf.mxu0
  %v5030 = vadd.f32 %v4941, %v5029
  %v5031 = vpop.f32.mrf.mxu0
  %v5032 = vadd.f32 %v4943, %v5031
  %5033 = vmatmul.bf16.gmra.mxu0 %v849
  %v5034 = vpop.f32.mrf.mxu0
  %v5035 = vadd.f32 %v4946, %v5034
  %v5036 = vpop.f32.mrf.mxu0
  %v5037 = vadd.f32 %v4948, %v5036
  %5038 = vmatmul.bf16.gmra.mxu0 %v857
  %v5039 = vpop.f32.mrf.mxu0
  %v5040 = vadd.f32 %v4951, %v5039
  %v5041 = vpop.f32.mrf.mxu0
  %v5042 = vadd.f32 %v4953, %v5041
  %5043 = vmatmul.bf16.gmra.mxu0 %v865
  %v5044 = vpop.f32.mrf.mxu0
  %v5045 = vadd.f32 %v4956, %v5044
  %v5046 = vpop.f32.mrf.mxu0
  %v5047 = vadd.f32 %v4958, %v5046
  %5048 = vmatmul.bf16.gmra.mxu0 %v873
  %v5049 = vpop.f32.mrf.mxu0
  %v5050 = vadd.f32 %v4961, %v5049
  %v5051 = vpop.f32.mrf.mxu0
  %v5052 = vadd.f32 %v4963, %v5051
  %5053 = vmatmul.bf16.gmra.mxu0 %v881
  %v5054 = vpop.f32.mrf.mxu0
  %v5055 = vadd.f32 %v4966, %v5054
  %v5056 = vpop.f32.mrf.mxu0
  %v5057 = vadd.f32 %v4968, %v5056
  %5058 = vmatmul.bf16.gmra.mxu0 %v889
  %v5059 = vpop.f32.mrf.mxu0
  %v5060 = vadd.f32 %v4971, %v5059
  %v5061 = vpop.f32.mrf.mxu0
  %v5062 = vadd.f32 %v4973, %v5061
  %5063 = vmatmul.bf16.gmra.mxu0 %v897
  %v5064 = vpop.f32.mrf.mxu0
  %v5065 = vadd.f32 %v4976, %v5064
  %v5066 = vpop.f32.mrf.mxu0
  %v5067 = vadd.f32 %v4978, %v5066
  %5068 = vmatmul.bf16.gmra.mxu0 %v905
  %v5069 = vpop.f32.mrf.mxu0
  %v5070 = vadd.f32 %v4981, %v5069
  %v5071 = vpop.f32.mrf.mxu0
  %v5072 = vadd.f32 %v4983, %v5071
  %5073 = vdwg.mxu0
  %5074 = vmatpush.bf16.msra.mxu0 %v2058
  %5075 = vmatpush.bf16.msra.mxu0 %v2054
  %5076 = vmatpush.bf16.msra.mxu0 %v2050
  %5077 = vmatpush.bf16.msra.mxu0 %v2046
  %5078 = vmatpush.bf16.msra.mxu0 %v2042
  %5079 = vmatpush.bf16.msra.mxu0 %v2038
  %5080 = vmatpush.bf16.msra.mxu0 %v2034
  %5081 = vmatpush.bf16.msra.mxu0 %v2030
  %5082 = vmatmul.bf16.gmra.mxu0 %v786
  %v5083 = vpop.f32.mrf.mxu0
  %v5084 = vadd.f32 %v4995, %v5083
  %v5085 = vpop.f32.mrf.mxu0
  %v5086 = vadd.f32 %v4997, %v5085
  %5087 = vmatmul.bf16.gmra.mxu0 %v794
  %v5088 = vpop.f32.mrf.mxu0
  %v5089 = vadd.f32 %v5000, %v5088
  %v5090 = vpop.f32.mrf.mxu0
  %v5091 = vadd.f32 %v5002, %v5090
  %5092 = vmatmul.bf16.gmra.mxu0 %v802
  %v5093 = vpop.f32.mrf.mxu0
  %v5094 = vadd.f32 %v5005, %v5093
  %v5095 = vpop.f32.mrf.mxu0
  %v5096 = vadd.f32 %v5007, %v5095
  %5097 = vmatmul.bf16.gmra.mxu0 %v810
  %v5098 = vpop.f32.mrf.mxu0
  %v5099 = vadd.f32 %v5010, %v5098
  %v5100 = vpop.f32.mrf.mxu0
  %v5101 = vadd.f32 %v5012, %v5100
  %5102 = vmatmul.bf16.gmra.mxu0 %v818
  %v5103 = vpop.f32.mrf.mxu0
  %v5104 = vadd.f32 %v5015, %v5103
  %v5105 = vpop.f32.mrf.mxu0
  %v5106 = vadd.f32 %v5017, %v5105
  %5107 = vmatmul.bf16.gmra.mxu0 %v826
  %v5108 = vpop.f32.mrf.mxu0
  %v5109 = vadd.f32 %v5020, %v5108
  %v5110 = vpop.f32.mrf.mxu0
  %v5111 = vadd.f32 %v5022, %v5110
  %5112 = vmatmul.bf16.gmra.mxu0 %v834
  %v5113 = vpop.f32.mrf.mxu0
  %v5114 = vadd.f32 %v5025, %v5113
  %v5115 = vpop.f32.mrf.mxu0
  %v5116 = vadd.f32 %v5027, %v5115
  %5117 = vmatmul.bf16.gmra.mxu0 %v842
  %v5118 = vpop.f32.mrf.mxu0
  %v5119 = vadd.f32 %v5030, %v5118
  %v5120 = vpop.f32.mrf.mxu0
  %v5121 = vadd.f32 %v5032, %v5120
  %5122 = vmatmul.bf16.gmra.mxu0 %v850
  %v5123 = vpop.f32.mrf.mxu0
  %v5124 = vadd.f32 %v5035, %v5123
  %v5125 = vpop.f32.mrf.mxu0
  %v5126 = vadd.f32 %v5037, %v5125
  %5127 = vmatmul.bf16.gmra.mxu0 %v858
  %v5128 = vpop.f32.mrf.mxu0
  %v5129 = vadd.f32 %v5040, %v5128
  %v5130 = vpop.f32.mrf.mxu0
  %v5131 = vadd.f32 %v5042, %v5130
  %5132 = vmatmul.bf16.gmra.mxu0 %v866
  %v5133 = vpop.f32.mrf.mxu0
  %v5134 = vadd.f32 %v5045, %v5133
  %v5135 = vpop.f32.mrf.mxu0
  %v5136 = vadd.f32 %v5047, %v5135
  %5137 = vmatmul.bf16.gmra.mxu0 %v874
  %v5138 = vpop.f32.mrf.mxu0
  %v5139 = vadd.f32 %v5050, %v5138
  %v5140 = vpop.f32.mrf.mxu0
  %v5141 = vadd.f32 %v5052, %v5140
  %5142 = vmatmul.bf16.gmra.mxu0 %v882
  %v5143 = vpop.f32.mrf.mxu0
  %v5144 = vadd.f32 %v5055, %v5143
  %v5145 = vpop.f32.mrf.mxu0
  %v5146 = vadd.f32 %v5057, %v5145
  %5147 = vmatmul.bf16.gmra.mxu0 %v890
  %v5148 = vpop.f32.mrf.mxu0
  %v5149 = vadd.f32 %v5060, %v5148
  %v5150 = vpop.f32.mrf.mxu0
  %v5151 = vadd.f32 %v5062, %v5150
  %5152 = vmatmul.bf16.gmra.mxu0 %v898
  %v5153 = vpop.f32.mrf.mxu0
  %v5154 = vadd.f32 %v5065, %v5153
  %v5155 = vpop.f32.mrf.mxu0
  %v5156 = vadd.f32 %v5067, %v5155
  %5157 = vmatmul.bf16.gmra.mxu0 %v906
  %v5158 = vpop.f32.mrf.mxu0
  %v5159 = vadd.f32 %v5070, %v5158
  %v5160 = vpop.f32.mrf.mxu0
  %v5161 = vadd.f32 %v5072, %v5160
  %5162 = vdwg.mxu0
  %v5163 = vmax.f32 %v2948, 0.0
  %v5164 = vmax.f32 %v3660, 0.0
  %v5165 = vmax.f32 %v4372, 0.0
  %v5166 = vmax.f32 %v5084, 0.0
  %v5167 = vmax.f32 %v2950, 0.0
  %v5168 = vmax.f32 %v3662, 0.0
  %v5169 = vmax.f32 %v4374, 0.0
  %v5170 = vmax.f32 %v5086, 0.0
  %v5171 = vmax.f32 %v2953, 0.0
  %v5172 = vmax.f32 %v3665, 0.0
  %v5173 = vmax.f32 %v4377, 0.0
  %v5174 = vmax.f32 %v5089, 0.0
  %v5175 = vmax.f32 %v2955, 0.0
  %v5176 = vmax.f32 %v3667, 0.0
  %v5177 = vmax.f32 %v4379, 0.0
  %v5178 = vmax.f32 %v5091, 0.0
  %v5179 = vmax.f32 %v2958, 0.0
  %v5180 = vmax.f32 %v3670, 0.0
  %v5181 = vmax.f32 %v4382, 0.0
  %v5182 = vmax.f32 %v5094, 0.0
  %v5183 = vmax.f32 %v2960, 0.0
  %v5184 = vmax.f32 %v3672, 0.0
  %v5185 = vmax.f32 %v4384, 0.0
  %v5186 = vmax.f32 %v5096, 0.0
  %v5187 = vmax.f32 %v2963, 0.0
  %v5188 = vmax.f32 %v3675, 0.0
  %v5189 = vmax.f32 %v4387, 0.0
  %v5190 = vmax.f32 %v5099, 0.0
  %v5191 = vmax.f32 %v2965, 0.0
  %v5192 = vmax.f32 %v3677, 0.0
  %v5193 = vmax.f32 %v4389, 0.0
  %v5194 = vmax.f32 %v5101, 0.0
  %v5195 = vmax.f32 %v2968, 0.0
  %v5196 = vmax.f32 %v3680, 0.0
  %v5197 = vmax.f32 %v4392, 0.0
  %v5198 = vmax.f32 %v5104, 0.0
  %v5199 = vmax.f32 %v2970, 0.0
  %v5200 = vmax.f32 %v3682, 0.0
  %v5201 = vmax.f32 %v4394, 0.0
  %v5202 = vmax.f32 %v5106, 0.0
  %v5203 = vmax.f32 %v2973, 0.0
  %v5204 = vmax.f32 %v3685, 0.0
  %v5205 = vmax.f32 %v4397, 0.0
  %v5206 = vmax.f32 %v5109, 0.0
  %v5207 = vmax.f32 %v2975, 0.0
  %v5208 = vmax.f32 %v3687, 0.0
  %v5209 = vmax.f32 %v4399, 0.0
  %v5210 = vmax.f32 %v5111, 0.0
  %v5211 = vmax.f32 %v2978, 0.0
  %v5212 = vmax.f32 %v3690, 0.0
  %v5213 = vmax.f32 %v4402, 0.0
  %v5214 = vmax.f32 %v5114, 0.0
  %v5215 = vmax.f32 %v2980, 0.0
  %v5216 = vmax.f32 %v3692, 0.0
  %v5217 = vmax.f32 %v4404, 0.0
  %v5218 = vmax.f32 %v5116, 0.0
  %v5219 = vmax.f32 %v2983, 0.0
  %v5220 = vmax.f32 %v3695, 0.0
  %v5221 = vmax.f32 %v4407, 0.0
  %v5222 = vmax.f32 %v5119, 0.0
  %v5223 = vmax.f32 %v2985, 0.0
  %v5224 = vmax.f32 %v3697, 0.0
  %v5225 = vmax.f32 %v4409, 0.0
  %v5226 = vmax.f32 %v5121, 0.0
  %v5227 = vmax.f32 %v2988, 0.0
  %v5228 = vmax.f32 %v3700, 0.0
  %v5229 = vmax.f32 %v4412, 0.0
  %v5230 = vmax.f32 %v5124, 0.0
  %v5231 = vmax.f32 %v2990, 0.0
  %v5232 = vmax.f32 %v3702, 0.0
  %v5233 = vmax.f32 %v4414, 0.0
  %v5234 = vmax.f32 %v5126, 0.0
  %v5235 = vmax.f32 %v2993, 0.0
  %v5236 = vmax.f32 %v3705, 0.0
  %v5237 = vmax.f32 %v4417, 0.0
  %v5238 = vmax.f32 %v5129, 0.0
  %v5239 = vmax.f32 %v2995, 0.0
  %v5240 = vmax.f32 %v3707, 0.0
  %v5241 = vmax.f32 %v4419, 0.0
  %v5242 = vmax.f32 %v5131, 0.0
  %v5243 = vmax.f32 %v2998, 0.0
  %v5244 = vmax.f32 %v3710, 0.0
  %v5245 = vmax.f32 %v4422, 0.0
  %v5246 = vmax.f32 %v5134, 0.0
  %v5247 = vmax.f32 %v3000, 0.0
  %v5248 = vmax.f32 %v3712, 0.0
  %v5249 = vmax.f32 %v4424, 0.0
  %v5250 = vmax.f32 %v5136, 0.0
  %v5251 = vmax.f32 %v3003, 0.0
  %v5252 = vmax.f32 %v3715, 0.0
  %v5253 = vmax.f32 %v4427, 0.0
  %v5254 = vmax.f32 %v5139, 0.0
  %v5255 = vmax.f32 %v3005, 0.0
  %v5256 = vmax.f32 %v3717, 0.0
  %v5257 = vmax.f32 %v4429, 0.0
  %v5258 = vmax.f32 %v5141, 0.0
  %v5259 = vmax.f32 %v3008, 0.0
  %v5260 = vmax.f32 %v3720, 0.0
  %v5261 = vmax.f32 %v4432, 0.0
  %v5262 = vmax.f32 %v5144, 0.0
  %v5263 = vmax.f32 %v3010, 0.0
  %v5264 = vmax.f32 %v3722, 0.0
  %v5265 = vmax.f32 %v4434, 0.0
  %v5266 = vmax.f32 %v5146, 0.0
  %v5267 = vmax.f32 %v3013, 0.0
  %v5268 = vmax.f32 %v3725, 0.0
  %v5269 = vmax.f32 %v4437, 0.0
  %v5270 = vmax.f32 %v5149, 0.0
  %v5271 = vmax.f32 %v3015, 0.0
  %v5272 = vmax.f32 %v3727, 0.0
  %v5273 = vmax.f32 %v4439, 0.0
  %v5274 = vmax.f32 %v5151, 0.0
  %v5275 = vmax.f32 %v3018, 0.0
  %v5276 = vmax.f32 %v3730, 0.0
  %v5277 = vmax.f32 %v4442, 0.0
  %v5278 = vmax.f32 %v5154, 0.0
  %v5279 = vmax.f32 %v3020, 0.0
  %v5280 = vmax.f32 %v3732, 0.0
  %v5281 = vmax.f32 %v4444, 0.0
  %v5282 = vmax.f32 %v5156, 0.0
  %v5283 = vmax.f32 %v3023, 0.0
  %v5284 = vmax.f32 %v3735, 0.0
  %v5285 = vmax.f32 %v4447, 0.0
  %v5286 = vmax.f32 %v5159, 0.0
  %v5287 = vmax.f32 %v3025, 0.0
  %v5288 = vmax.f32 %v3737, 0.0
  %v5289 = vmax.f32 %v4449, 0.0
  %v5290 = vmax.f32 %v5161, 0.0
  %v5291 = vmul.f32 %v5163, %v5163
  %v5292 = vmul.f32 %v5164, %v5164
  %v5293 = vmul.f32 %v5165, %v5165
  %v5294 = vmul.f32 %v5166, %v5166
  %v5295 = vmul.f32 %v5167, %v5167
  %v5296 = vmul.f32 %v5168, %v5168
  %v5297 = vmul.f32 %v5169, %v5169
  %v5298 = vmul.f32 %v5170, %v5170
  %v5299 = vmul.f32 %v5171, %v5171
  %v5300 = vmul.f32 %v5172, %v5172
  %v5301 = vmul.f32 %v5173, %v5173
  %v5302 = vmul.f32 %v5174, %v5174
  %v5303 = vmul.f32 %v5175, %v5175
  %v5304 = vmul.f32 %v5176, %v5176
  %v5305 = vmul.f32 %v5177, %v5177
  %v5306 = vmul.f32 %v5178, %v5178
  %v5307 = vmul.f32 %v5179, %v5179
  %v5308 = vmul.f32 %v5180, %v5180
  %v5309 = vmul.f32 %v5181, %v5181
  %v5310 = vmul.f32 %v5182, %v5182
  %v5311 = vmul.f32 %v5183, %v5183
  %v5312 = vmul.f32 %v5184, %v5184
  %v5313 = vmul.f32 %v5185, %v5185
  %v5314 = vmul.f32 %v5186, %v5186
  %v5315 = vmul.f32 %v5187, %v5187
  %v5316 = vmul.f32 %v5188, %v5188
  %v5317 = vmul.f32 %v5189, %v5189
  %v5318 = vmul.f32 %v5190, %v5190
  %v5319 = vmul.f32 %v5191, %v5191
  %v5320 = vmul.f32 %v5192, %v5192
  %v5321 = vmul.f32 %v5193, %v5193
  %v5322 = vmul.f32 %v5194, %v5194
  %v5323 = vmul.f32 %v5195, %v5195
  %v5324 = vmul.f32 %v5196, %v5196
  %v5325 = vmul.f32 %v5197, %v5197
  %v5326 = vmul.f32 %v5198, %v5198
  %v5327 = vmul.f32 %v5199, %v5199
  %v5328 = vmul.f32 %v5200, %v5200
  %v5329 = vmul.f32 %v5201, %v5201
  %v5330 = vmul.f32 %v5202, %v5202
  %v5331 = vmul.f32 %v5203, %v5203
  %v5332 = vmul.f32 %v5204, %v5204
  %v5333 = vmul.f32 %v5205, %v5205
  %v5334 = vmul.f32 %v5206, %v5206
  %v5335 = vmul.f32 %v5207, %v5207
  %v5336 = vmul.f32 %v5208, %v5208
  %v5337 = vmul.f32 %v5209, %v5209
  %v5338 = vmul.f32 %v5210, %v5210
  %v5339 = vmul.f32 %v5211, %v5211
  %v5340 = vmul.f32 %v5212, %v5212
  %v5341 = vmul.f32 %v5213, %v5213
  %v5342 = vmul.f32 %v5214, %v5214
  %v5343 = vmul.f32 %v5215, %v5215
  %v5344 = vmul.f32 %v5216, %v5216
  %v5345 = vmul.f32 %v5217, %v5217
  %v5346 = vmul.f32 %v5218, %v5218
  %v5347 = vmul.f32 %v5219, %v5219
  %v5348 = vmul.f32 %v5220, %v5220
  %v5349 = vmul.f32 %v5221, %v5221
  %v5350 = vmul.f32 %v5222, %v5222
  %v5351 = vmul.f32 %v5223, %v5223
  %v5352 = vmul.f32 %v5224, %v5224
  %v5353 = vmul.f32 %v5225, %v5225
  %v5354 = vmul.f32 %v5226, %v5226
  %v5355 = vmul.f32 %v5227, %v5227
  %v5356 = vmul.f32 %v5228, %v5228
  %v5357 = vmul.f32 %v5229, %v5229
  %v5358 = vmul.f32 %v5230, %v5230
  %v5359 = vmul.f32 %v5231, %v5231
  %v5360 = vmul.f32 %v5232, %v5232
  %v5361 = vmul.f32 %v5233, %v5233
  %v5362 = vmul.f32 %v5234, %v5234
  %v5363 = vmul.f32 %v5235, %v5235
  %v5364 = vmul.f32 %v5236, %v5236
  %v5365 = vmul.f32 %v5237, %v5237
  %v5366 = vmul.f32 %v5238, %v5238
  %v5367 = vmul.f32 %v5239, %v5239
  %v5368 = vmul.f32 %v5240, %v5240
  %v5369 = vmul.f32 %v5241, %v5241
  %v5370 = vmul.f32 %v5242, %v5242
  %v5371 = vmul.f32 %v5243, %v5243
  %v5372 = vmul.f32 %v5244, %v5244
  %v5373 = vmul.f32 %v5245, %v5245
  %v5374 = vmul.f32 %v5246, %v5246
  %v5375 = vmul.f32 %v5247, %v5247
  %v5376 = vmul.f32 %v5248, %v5248
  %v5377 = vmul.f32 %v5249, %v5249
  %v5378 = vmul.f32 %v5250, %v5250
  %v5379 = vmul.f32 %v5251, %v5251
  %v5380 = vmul.f32 %v5252, %v5252
  %v5381 = vmul.f32 %v5253, %v5253
  %v5382 = vmul.f32 %v5254, %v5254
  %v5383 = vmul.f32 %v5255, %v5255
  %v5384 = vmul.f32 %v5256, %v5256
  %v5385 = vmul.f32 %v5257, %v5257
  %v5386 = vmul.f32 %v5258, %v5258
  %v5387 = vmul.f32 %v5259, %v5259
  %v5388 = vmul.f32 %v5260, %v5260
  %v5389 = vmul.f32 %v5261, %v5261
  %v5390 = vmul.f32 %v5262, %v5262
  %v5391 = vmul.f32 %v5263, %v5263
  %v5392 = vmul.f32 %v5264, %v5264
  %v5393 = vmul.f32 %v5265, %v5265
  %v5394 = vmul.f32 %v5266, %v5266
  %v5395 = vmul.f32 %v5267, %v5267
  %v5396 = vmul.f32 %v5268, %v5268
  %v5397 = vmul.f32 %v5269, %v5269
  %v5398 = vmul.f32 %v5270, %v5270
  %v5399 = vmul.f32 %v5271, %v5271
  %v5400 = vmul.f32 %v5272, %v5272
  %v5401 = vmul.f32 %v5273, %v5273
  %v5402 = vmul.f32 %v5274, %v5274
  %v5403 = vmul.f32 %v5275, %v5275
  %v5404 = vmul.f32 %v5276, %v5276
  %v5405 = vmul.f32 %v5277, %v5277
  %v5406 = vmul.f32 %v5278, %v5278
  %v5407 = vmul.f32 %v5279, %v5279
  %v5408 = vmul.f32 %v5280, %v5280
  %v5409 = vmul.f32 %v5281, %v5281
  %v5410 = vmul.f32 %v5282, %v5282
  %v5411 = vmul.f32 %v5283, %v5283
  %v5412 = vmul.f32 %v5284, %v5284
  %v5413 = vmul.f32 %v5285, %v5285
  %v5414 = vmul.f32 %v5286, %v5286
  %v5415 = vmul.f32 %v5287, %v5287
  %v5416 = vmul.f32 %v5288, %v5288
  %v5417 = vmul.f32 %v5289, %v5289
  %v5418 = vmul.f32 %v5290, %v5290
  %v5419 = vadd.f32 %v5291, %v5292
  %v5420 = vadd.f32 %v5419, %v5293
  %v5421 = vadd.f32 %v5420, %v5294
  %5422 = vadd.xlane.f32.xlu0 %v5421
  %v5423 = vpop.xlane.xlu0 %5422
  %v5424 = vadd.f32 %v5295, %v5296
  %v5425 = vadd.f32 %v5424, %v5297
  %v5426 = vadd.f32 %v5425, %v5298
  %5427 = vadd.xlane.f32.xlu0 %v5426
  %v5428 = vpop.xlane.xlu0 %5427
  %v5429 = vadd.f32 %v5299, %v5300
  %v5430 = vadd.f32 %v5429, %v5301
  %v5431 = vadd.f32 %v5430, %v5302
  %5432 = vadd.xlane.f32.xlu0 %v5431
  %v5433 = vpop.xlane.xlu0 %5432
  %v5434 = vadd.f32 %v5303, %v5304
  %v5435 = vadd.f32 %v5434, %v5305
  %v5436 = vadd.f32 %v5435, %v5306
  %5437 = vadd.xlane.f32.xlu0 %v5436
  %v5438 = vpop.xlane.xlu0 %5437
  %v5439 = vadd.f32 %v5307, %v5308
  %v5440 = vadd.f32 %v5439, %v5309
  %v5441 = vadd.f32 %v5440, %v5310
  %5442 = vadd.xlane.f32.xlu0 %v5441
  %v5443 = vpop.xlane.xlu0 %5442
  %v5444 = vadd.f32 %v5311, %v5312
  %v5445 = vadd.f32 %v5444, %v5313
  %v5446 = vadd.f32 %v5445, %v5314
  %5447 = vadd.xlane.f32.xlu0 %v5446
  %v5448 = vpop.xlane.xlu0 %5447
  %v5449 = vadd.f32 %v5315, %v5316
  %v5450 = vadd.f32 %v5449, %v5317
  %v5451 = vadd.f32 %v5450, %v5318
  %5452 = vadd.xlane.f32.xlu0 %v5451
  %v5453 = vpop.xlane.xlu0 %5452
  %v5454 = vadd.f32 %v5319, %v5320
  %v5455 = vadd.f32 %v5454, %v5321
  %v5456 = vadd.f32 %v5455, %v5322
  %5457 = vadd.xlane.f32.xlu0 %v5456
  %v5458 = vpop.xlane.xlu0 %5457
  %v5459 = vadd.f32 %v5323, %v5324
  %v5460 = vadd.f32 %v5459, %v5325
  %v5461 = vadd.f32 %v5460, %v5326
  %5462 = vadd.xlane.f32.xlu0 %v5461
  %v5463 = vpop.xlane.xlu0 %5462
  %v5464 = vadd.f32 %v5327, %v5328
  %v5465 = vadd.f32 %v5464, %v5329
  %v5466 = vadd.f32 %v5465, %v5330
  %5467 = vadd.xlane.f32.xlu0 %v5466
  %v5468 = vpop.xlane.xlu0 %5467
  %v5469 = vadd.f32 %v5331, %v5332
  %v5470 = vadd.f32 %v5469, %v5333
  %v5471 = vadd.f32 %v5470, %v5334
  %5472 = vadd.xlane.f32.xlu0 %v5471
  %v5473 = vpop.xlane.xlu0 %5472
  %v5474 = vadd.f32 %v5335, %v5336
  %v5475 = vadd.f32 %v5474, %v5337
  %v5476 = vadd.f32 %v5475, %v5338
  %5477 = vadd.xlane.f32.xlu0 %v5476
  %v5478 = vpop.xlane.xlu0 %5477
  %v5479 = vadd.f32 %v5339, %v5340
  %v5480 = vadd.f32 %v5479, %v5341
  %v5481 = vadd.f32 %v5480, %v5342
  %5482 = vadd.xlane.f32.xlu0 %v5481
  %v5483 = vpop.xlane.xlu0 %5482
  %v5484 = vadd.f32 %v5343, %v5344
  %v5485 = vadd.f32 %v5484, %v5345
  %v5486 = vadd.f32 %v5485, %v5346
  %5487 = vadd.xlane.f32.xlu0 %v5486
  %v5488 = vpop.xlane.xlu0 %5487
  %v5489 = vadd.f32 %v5347, %v5348
  %v5490 = vadd.f32 %v5489, %v5349
  %v5491 = vadd.f32 %v5490, %v5350
  %5492 = vadd.xlane.f32.xlu0 %v5491
  %v5493 = vpop.xlane.xlu0 %5492
  %v5494 = vadd.f32 %v5351, %v5352
  %v5495 = vadd.f32 %v5494, %v5353
  %v5496 = vadd.f32 %v5495, %v5354
  %5497 = vadd.xlane.f32.xlu0 %v5496
  %v5498 = vpop.xlane.xlu0 %5497
  %v5499 = vadd.f32 %v5355, %v5356
  %v5500 = vadd.f32 %v5499, %v5357
  %v5501 = vadd.f32 %v5500, %v5358
  %5502 = vadd.xlane.f32.xlu0 %v5501
  %v5503 = vpop.xlane.xlu0 %5502
  %v5504 = vadd.f32 %v5359, %v5360
  %v5505 = vadd.f32 %v5504, %v5361
  %v5506 = vadd.f32 %v5505, %v5362
  %5507 = vadd.xlane.f32.xlu0 %v5506
  %v5508 = vpop.xlane.xlu0 %5507
  %v5509 = vadd.f32 %v5363, %v5364
  %v5510 = vadd.f32 %v5509, %v5365
  %v5511 = vadd.f32 %v5510, %v5366
  %5512 = vadd.xlane.f32.xlu0 %v5511
  %v5513 = vpop.xlane.xlu0 %5512
  %v5514 = vadd.f32 %v5367, %v5368
  %v5515 = vadd.f32 %v5514, %v5369
  %v5516 = vadd.f32 %v5515, %v5370
  %5517 = vadd.xlane.f32.xlu0 %v5516
  %v5518 = vpop.xlane.xlu0 %5517
  %v5519 = vadd.f32 %v5371, %v5372
  %v5520 = vadd.f32 %v5519, %v5373
  %v5521 = vadd.f32 %v5520, %v5374
  %5522 = vadd.xlane.f32.xlu0 %v5521
  %v5523 = vpop.xlane.xlu0 %5522
  %v5524 = vadd.f32 %v5375, %v5376
  %v5525 = vadd.f32 %v5524, %v5377
  %v5526 = vadd.f32 %v5525, %v5378
  %5527 = vadd.xlane.f32.xlu0 %v5526
  %v5528 = vpop.xlane.xlu0 %5527
  %v5529 = vadd.f32 %v5379, %v5380
  %v5530 = vadd.f32 %v5529, %v5381
  %v5531 = vadd.f32 %v5530, %v5382
  %5532 = vadd.xlane.f32.xlu0 %v5531
  %v5533 = vpop.xlane.xlu0 %5532
  %v5534 = vadd.f32 %v5383, %v5384
  %v5535 = vadd.f32 %v5534, %v5385
  %v5536 = vadd.f32 %v5535, %v5386
  %5537 = vadd.xlane.f32.xlu0 %v5536
  %v5538 = vpop.xlane.xlu0 %5537
  %v5539 = vadd.f32 %v5387, %v5388
  %v5540 = vadd.f32 %v5539, %v5389
  %v5541 = vadd.f32 %v5540, %v5390
  %5542 = vadd.xlane.f32.xlu0 %v5541
  %v5543 = vpop.xlane.xlu0 %5542
  %v5544 = vadd.f32 %v5391, %v5392
  %v5545 = vadd.f32 %v5544, %v5393
  %v5546 = vadd.f32 %v5545, %v5394
  %5547 = vadd.xlane.f32.xlu0 %v5546
  %v5548 = vpop.xlane.xlu0 %5547
  %v5549 = vadd.f32 %v5395, %v5396
  %v5550 = vadd.f32 %v5549, %v5397
  %v5551 = vadd.f32 %v5550, %v5398
  %5552 = vadd.xlane.f32.xlu0 %v5551
  %v5553 = vpop.xlane.xlu0 %5552
  %v5554 = vadd.f32 %v5399, %v5400
  %v5555 = vadd.f32 %v5554, %v5401
  %v5556 = vadd.f32 %v5555, %v5402
  %5557 = vadd.xlane.f32.xlu0 %v5556
  %v5558 = vpop.xlane.xlu0 %5557
  %v5559 = vadd.f32 %v5403, %v5404
  %v5560 = vadd.f32 %v5559, %v5405
  %v5561 = vadd.f32 %v5560, %v5406
  %5562 = vadd.xlane.f32.xlu0 %v5561
  %v5563 = vpop.xlane.xlu0 %5562
  %v5564 = vadd.f32 %v5407, %v5408
  %v5565 = vadd.f32 %v5564, %v5409
  %v5566 = vadd.f32 %v5565, %v5410
  %5567 = vadd.xlane.f32.xlu0 %v5566
  %v5568 = vpop.xlane.xlu0 %5567
  %v5569 = vadd.f32 %v5411, %v5412
  %v5570 = vadd.f32 %v5569, %v5413
  %v5571 = vadd.f32 %v5570, %v5414
  %5572 = vadd.xlane.f32.xlu0 %v5571
  %v5573 = vpop.xlane.xlu0 %5572
  %v5574 = vadd.f32 %v5415, %v5416
  %v5575 = vadd.f32 %v5574, %v5417
  %v5576 = vadd.f32 %v5575, %v5418
  %5577 = vadd.xlane.f32.xlu0 %v5576
  %v5578 = vpop.xlane.xlu0 %5577
  %v5579 = vmax.f32 %v5423, 1e-24
  %v5580 = vmax.f32 %v5428, 1e-24
  %v5581 = vmax.f32 %v5433, 1e-24
  %v5582 = vmax.f32 %v5438, 1e-24
  %v5583 = vmax.f32 %v5443, 1e-24
  %v5584 = vmax.f32 %v5448, 1e-24
  %v5585 = vmax.f32 %v5453, 1e-24
  %v5586 = vmax.f32 %v5458, 1e-24
  %v5587 = vmax.f32 %v5463, 1e-24
  %v5588 = vmax.f32 %v5468, 1e-24
  %v5589 = vmax.f32 %v5473, 1e-24
  %v5590 = vmax.f32 %v5478, 1e-24
  %v5591 = vmax.f32 %v5483, 1e-24
  %v5592 = vmax.f32 %v5488, 1e-24
  %v5593 = vmax.f32 %v5493, 1e-24
  %v5594 = vmax.f32 %v5498, 1e-24
  %v5595 = vmax.f32 %v5503, 1e-24
  %v5596 = vmax.f32 %v5508, 1e-24
  %v5597 = vmax.f32 %v5513, 1e-24
  %v5598 = vmax.f32 %v5518, 1e-24
  %v5599 = vmax.f32 %v5523, 1e-24
  %v5600 = vmax.f32 %v5528, 1e-24
  %v5601 = vmax.f32 %v5533, 1e-24
  %v5602 = vmax.f32 %v5538, 1e-24
  %v5603 = vmax.f32 %v5543, 1e-24
  %v5604 = vmax.f32 %v5548, 1e-24
  %v5605 = vmax.f32 %v5553, 1e-24
  %v5606 = vmax.f32 %v5558, 1e-24
  %v5607 = vmax.f32 %v5563, 1e-24
  %v5608 = vmax.f32 %v5568, 1e-24
  %v5609 = vmax.f32 %v5573, 1e-24
  %v5610 = vmax.f32 %v5578, 1e-24
  %v5611 = vrsqrt.pop %v5579
  %v5612 = vmul.f32 %v5611, %v5579
  %v5613 = vmul.f32 %v5612, %v5611
  %v5614 = vmul.f32 0.5, %v5613
  %v5615 = vsub.f32 1.5, %v5614
  %v5616 = vmul.f32 %v5611, %v5615
  %vm5617 = vweird.f32 %v5579
  %vm5618 = vweird.f32 %v5611
  %vm5619 = vmor %vm5617, %vm5618
  %v5620 = vsel %vm5619, %v5611, %v5616
  %v5621 = vrsqrt.pop %v5580
  %v5622 = vmul.f32 %v5621, %v5580
  %v5623 = vmul.f32 %v5622, %v5621
  %v5624 = vmul.f32 0.5, %v5623
  %v5625 = vsub.f32 1.5, %v5624
  %v5626 = vmul.f32 %v5621, %v5625
  %vm5627 = vweird.f32 %v5580
  %vm5628 = vweird.f32 %v5621
  %vm5629 = vmor %vm5627, %vm5628
  %v5630 = vsel %vm5629, %v5621, %v5626
  %v5631 = vrsqrt.pop %v5581
  %v5632 = vmul.f32 %v5631, %v5581
  %v5633 = vmul.f32 %v5632, %v5631
  %v5634 = vmul.f32 0.5, %v5633
  %v5635 = vsub.f32 1.5, %v5634
  %v5636 = vmul.f32 %v5631, %v5635
  %vm5637 = vweird.f32 %v5581
  %vm5638 = vweird.f32 %v5631
  %vm5639 = vmor %vm5637, %vm5638
  %v5640 = vsel %vm5639, %v5631, %v5636
  %v5641 = vrsqrt.pop %v5582
  %v5642 = vmul.f32 %v5641, %v5582
  %v5643 = vmul.f32 %v5642, %v5641
  %v5644 = vmul.f32 0.5, %v5643
  %v5645 = vsub.f32 1.5, %v5644
  %v5646 = vmul.f32 %v5641, %v5645
  %vm5647 = vweird.f32 %v5582
  %vm5648 = vweird.f32 %v5641
  %vm5649 = vmor %vm5647, %vm5648
  %v5650 = vsel %vm5649, %v5641, %v5646
  %v5651 = vrsqrt.pop %v5583
  %v5652 = vmul.f32 %v5651, %v5583
  %v5653 = vmul.f32 %v5652, %v5651
  %v5654 = vmul.f32 0.5, %v5653
  %v5655 = vsub.f32 1.5, %v5654
  %v5656 = vmul.f32 %v5651, %v5655
  %vm5657 = vweird.f32 %v5583
  %vm5658 = vweird.f32 %v5651
  %vm5659 = vmor %vm5657, %vm5658
  %v5660 = vsel %vm5659, %v5651, %v5656
  %v5661 = vrsqrt.pop %v5584
  %v5662 = vmul.f32 %v5661, %v5584
  %v5663 = vmul.f32 %v5662, %v5661
  %v5664 = vmul.f32 0.5, %v5663
  %v5665 = vsub.f32 1.5, %v5664
  %v5666 = vmul.f32 %v5661, %v5665
  %vm5667 = vweird.f32 %v5584
  %vm5668 = vweird.f32 %v5661
  %vm5669 = vmor %vm5667, %vm5668
  %v5670 = vsel %vm5669, %v5661, %v5666
  %v5671 = vrsqrt.pop %v5585
  %v5672 = vmul.f32 %v5671, %v5585
  %v5673 = vmul.f32 %v5672, %v5671
  %v5674 = vmul.f32 0.5, %v5673
  %v5675 = vsub.f32 1.5, %v5674
  %v5676 = vmul.f32 %v5671, %v5675
  %vm5677 = vweird.f32 %v5585
  %vm5678 = vweird.f32 %v5671
  %vm5679 = vmor %vm5677, %vm5678
  %v5680 = vsel %vm5679, %v5671, %v5676
  %v5681 = vrsqrt.pop %v5586
  %v5682 = vmul.f32 %v5681, %v5586
  %v5683 = vmul.f32 %v5682, %v5681
  %v5684 = vmul.f32 0.5, %v5683
  %v5685 = vsub.f32 1.5, %v5684
  %v5686 = vmul.f32 %v5681, %v5685
  %vm5687 = vweird.f32 %v5586
  %vm5688 = vweird.f32 %v5681
  %vm5689 = vmor %vm5687, %vm5688
  %v5690 = vsel %vm5689, %v5681, %v5686
  %v5691 = vrsqrt.pop %v5587
  %v5692 = vmul.f32 %v5691, %v5587
  %v5693 = vmul.f32 %v5692, %v5691
  %v5694 = vmul.f32 0.5, %v5693
  %v5695 = vsub.f32 1.5, %v5694
  %v5696 = vmul.f32 %v5691, %v5695
  %vm5697 = vweird.f32 %v5587
  %vm5698 = vweird.f32 %v5691
  %vm5699 = vmor %vm5697, %vm5698
  %v5700 = vsel %vm5699, %v5691, %v5696
  %v5701 = vrsqrt.pop %v5588
  %v5702 = vmul.f32 %v5701, %v5588
  %v5703 = vmul.f32 %v5702, %v5701
  %v5704 = vmul.f32 0.5, %v5703
  %v5705 = vsub.f32 1.5, %v5704
  %v5706 = vmul.f32 %v5701, %v5705
  %vm5707 = vweird.f32 %v5588
  %vm5708 = vweird.f32 %v5701
  %vm5709 = vmor %vm5707, %vm5708
  %v5710 = vsel %vm5709, %v5701, %v5706
  %v5711 = vrsqrt.pop %v5589
  %v5712 = vmul.f32 %v5711, %v5589
  %v5713 = vmul.f32 %v5712, %v5711
  %v5714 = vmul.f32 0.5, %v5713
  %v5715 = vsub.f32 1.5, %v5714
  %v5716 = vmul.f32 %v5711, %v5715
  %vm5717 = vweird.f32 %v5589
  %vm5718 = vweird.f32 %v5711
  %vm5719 = vmor %vm5717, %vm5718
  %v5720 = vsel %vm5719, %v5711, %v5716
  %v5721 = vrsqrt.pop %v5590
  %v5722 = vmul.f32 %v5721, %v5590
  %v5723 = vmul.f32 %v5722, %v5721
  %v5724 = vmul.f32 0.5, %v5723
  %v5725 = vsub.f32 1.5, %v5724
  %v5726 = vmul.f32 %v5721, %v5725
  %vm5727 = vweird.f32 %v5590
  %vm5728 = vweird.f32 %v5721
  %vm5729 = vmor %vm5727, %vm5728
  %v5730 = vsel %vm5729, %v5721, %v5726
  %v5731 = vrsqrt.pop %v5591
  %v5732 = vmul.f32 %v5731, %v5591
  %v5733 = vmul.f32 %v5732, %v5731
  %v5734 = vmul.f32 0.5, %v5733
  %v5735 = vsub.f32 1.5, %v5734
  %v5736 = vmul.f32 %v5731, %v5735
  %vm5737 = vweird.f32 %v5591
  %vm5738 = vweird.f32 %v5731
  %vm5739 = vmor %vm5737, %vm5738
  %v5740 = vsel %vm5739, %v5731, %v5736
  %v5741 = vrsqrt.pop %v5592
  %v5742 = vmul.f32 %v5741, %v5592
  %v5743 = vmul.f32 %v5742, %v5741
  %v5744 = vmul.f32 0.5, %v5743
  %v5745 = vsub.f32 1.5, %v5744
  %v5746 = vmul.f32 %v5741, %v5745
  %vm5747 = vweird.f32 %v5592
  %vm5748 = vweird.f32 %v5741
  %vm5749 = vmor %vm5747, %vm5748
  %v5750 = vsel %vm5749, %v5741, %v5746
  %v5751 = vrsqrt.pop %v5593
  %v5752 = vmul.f32 %v5751, %v5593
  %v5753 = vmul.f32 %v5752, %v5751
  %v5754 = vmul.f32 0.5, %v5753
  %v5755 = vsub.f32 1.5, %v5754
  %v5756 = vmul.f32 %v5751, %v5755
  %vm5757 = vweird.f32 %v5593
  %vm5758 = vweird.f32 %v5751
  %vm5759 = vmor %vm5757, %vm5758
  %v5760 = vsel %vm5759, %v5751, %v5756
  %v5761 = vrsqrt.pop %v5594
  %v5762 = vmul.f32 %v5761, %v5594
  %v5763 = vmul.f32 %v5762, %v5761
  %v5764 = vmul.f32 0.5, %v5763
  %v5765 = vsub.f32 1.5, %v5764
  %v5766 = vmul.f32 %v5761, %v5765
  %vm5767 = vweird.f32 %v5594
  %vm5768 = vweird.f32 %v5761
  %vm5769 = vmor %vm5767, %vm5768
  %v5770 = vsel %vm5769, %v5761, %v5766
  %v5771 = vrsqrt.pop %v5595
  %v5772 = vmul.f32 %v5771, %v5595
  %v5773 = vmul.f32 %v5772, %v5771
  %v5774 = vmul.f32 0.5, %v5773
  %v5775 = vsub.f32 1.5, %v5774
  %v5776 = vmul.f32 %v5771, %v5775
  %vm5777 = vweird.f32 %v5595
  %vm5778 = vweird.f32 %v5771
  %vm5779 = vmor %vm5777, %vm5778
  %v5780 = vsel %vm5779, %v5771, %v5776
  %v5781 = vrsqrt.pop %v5596
  %v5782 = vmul.f32 %v5781, %v5596
  %v5783 = vmul.f32 %v5782, %v5781
  %v5784 = vmul.f32 0.5, %v5783
  %v5785 = vsub.f32 1.5, %v5784
  %v5786 = vmul.f32 %v5781, %v5785
  %vm5787 = vweird.f32 %v5596
  %vm5788 = vweird.f32 %v5781
  %vm5789 = vmor %vm5787, %vm5788
  %v5790 = vsel %vm5789, %v5781, %v5786
  %v5791 = vrsqrt.pop %v5597
  %v5792 = vmul.f32 %v5791, %v5597
  %v5793 = vmul.f32 %v5792, %v5791
  %v5794 = vmul.f32 0.5, %v5793
  %v5795 = vsub.f32 1.5, %v5794
  %v5796 = vmul.f32 %v5791, %v5795
  %vm5797 = vweird.f32 %v5597
  %vm5798 = vweird.f32 %v5791
  %vm5799 = vmor %vm5797, %vm5798
  %v5800 = vsel %vm5799, %v5791, %v5796
  %v5801 = vrsqrt.pop %v5598
  %v5802 = vmul.f32 %v5801, %v5598
  %v5803 = vmul.f32 %v5802, %v5801
  %v5804 = vmul.f32 0.5, %v5803
  %v5805 = vsub.f32 1.5, %v5804
  %v5806 = vmul.f32 %v5801, %v5805
  %vm5807 = vweird.f32 %v5598
  %vm5808 = vweird.f32 %v5801
  %vm5809 = vmor %vm5807, %vm5808
  %v5810 = vsel %vm5809, %v5801, %v5806
  %v5811 = vrsqrt.pop %v5599
  %v5812 = vmul.f32 %v5811, %v5599
  %v5813 = vmul.f32 %v5812, %v5811
  %v5814 = vmul.f32 0.5, %v5813
  %v5815 = vsub.f32 1.5, %v5814
  %v5816 = vmul.f32 %v5811, %v5815
  %vm5817 = vweird.f32 %v5599
  %vm5818 = vweird.f32 %v5811
  %vm5819 = vmor %vm5817, %vm5818
  %v5820 = vsel %vm5819, %v5811, %v5816
  %v5821 = vrsqrt.pop %v5600
  %v5822 = vmul.f32 %v5821, %v5600
  %v5823 = vmul.f32 %v5822, %v5821
  %v5824 = vmul.f32 0.5, %v5823
  %v5825 = vsub.f32 1.5, %v5824
  %v5826 = vmul.f32 %v5821, %v5825
  %vm5827 = vweird.f32 %v5600
  %vm5828 = vweird.f32 %v5821
  %vm5829 = vmor %vm5827, %vm5828
  %v5830 = vsel %vm5829, %v5821, %v5826
  %v5831 = vrsqrt.pop %v5601
  %v5832 = vmul.f32 %v5831, %v5601
  %v5833 = vmul.f32 %v5832, %v5831
  %v5834 = vmul.f32 0.5, %v5833
  %v5835 = vsub.f32 1.5, %v5834
  %v5836 = vmul.f32 %v5831, %v5835
  %vm5837 = vweird.f32 %v5601
  %vm5838 = vweird.f32 %v5831
  %vm5839 = vmor %vm5837, %vm5838
  %v5840 = vsel %vm5839, %v5831, %v5836
  %v5841 = vrsqrt.pop %v5602
  %v5842 = vmul.f32 %v5841, %v5602
  %v5843 = vmul.f32 %v5842, %v5841
  %v5844 = vmul.f32 0.5, %v5843
  %v5845 = vsub.f32 1.5, %v5844
  %v5846 = vmul.f32 %v5841, %v5845
  %vm5847 = vweird.f32 %v5602
  %vm5848 = vweird.f32 %v5841
  %vm5849 = vmor %vm5847, %vm5848
  %v5850 = vsel %vm5849, %v5841, %v5846
  %v5851 = vrsqrt.pop %v5603
  %v5852 = vmul.f32 %v5851, %v5603
  %v5853 = vmul.f32 %v5852, %v5851
  %v5854 = vmul.f32 0.5, %v5853
  %v5855 = vsub.f32 1.5, %v5854
  %v5856 = vmul.f32 %v5851, %v5855
  %vm5857 = vweird.f32 %v5603
  %vm5858 = vweird.f32 %v5851
  %vm5859 = vmor %vm5857, %vm5858
  %v5860 = vsel %vm5859, %v5851, %v5856
  %v5861 = vrsqrt.pop %v5604
  %v5862 = vmul.f32 %v5861, %v5604
  %v5863 = vmul.f32 %v5862, %v5861
  %v5864 = vmul.f32 0.5, %v5863
  %v5865 = vsub.f32 1.5, %v5864
  %v5866 = vmul.f32 %v5861, %v5865
  %vm5867 = vweird.f32 %v5604
  %vm5868 = vweird.f32 %v5861
  %vm5869 = vmor %vm5867, %vm5868
  %v5870 = vsel %vm5869, %v5861, %v5866
  %v5871 = vrsqrt.pop %v5605
  %v5872 = vmul.f32 %v5871, %v5605
  %v5873 = vmul.f32 %v5872, %v5871
  %v5874 = vmul.f32 0.5, %v5873
  %v5875 = vsub.f32 1.5, %v5874
  %v5876 = vmul.f32 %v5871, %v5875
  %vm5877 = vweird.f32 %v5605
  %vm5878 = vweird.f32 %v5871
  %vm5879 = vmor %vm5877, %vm5878
  %v5880 = vsel %vm5879, %v5871, %v5876
  %v5881 = vrsqrt.pop %v5606
  %v5882 = vmul.f32 %v5881, %v5606
  %v5883 = vmul.f32 %v5882, %v5881
  %v5884 = vmul.f32 0.5, %v5883
  %v5885 = vsub.f32 1.5, %v5884
  %v5886 = vmul.f32 %v5881, %v5885
  %vm5887 = vweird.f32 %v5606
  %vm5888 = vweird.f32 %v5881
  %vm5889 = vmor %vm5887, %vm5888
  %v5890 = vsel %vm5889, %v5881, %v5886
  %v5891 = vrsqrt.pop %v5607
  %v5892 = vmul.f32 %v5891, %v5607
  %v5893 = vmul.f32 %v5892, %v5891
  %v5894 = vmul.f32 0.5, %v5893
  %v5895 = vsub.f32 1.5, %v5894
  %v5896 = vmul.f32 %v5891, %v5895
  %vm5897 = vweird.f32 %v5607
  %vm5898 = vweird.f32 %v5891
  %vm5899 = vmor %vm5897, %vm5898
  %v5900 = vsel %vm5899, %v5891, %v5896
  %v5901 = vrsqrt.pop %v5608
  %v5902 = vmul.f32 %v5901, %v5608
  %v5903 = vmul.f32 %v5902, %v5901
  %v5904 = vmul.f32 0.5, %v5903
  %v5905 = vsub.f32 1.5, %v5904
  %v5906 = vmul.f32 %v5901, %v5905
  %vm5907 = vweird.f32 %v5608
  %vm5908 = vweird.f32 %v5901
  %vm5909 = vmor %vm5907, %vm5908
  %v5910 = vsel %vm5909, %v5901, %v5906
  %v5911 = vrsqrt.pop %v5609
  %v5912 = vmul.f32 %v5911, %v5609
  %v5913 = vmul.f32 %v5912, %v5911
  %v5914 = vmul.f32 0.5, %v5913
  %v5915 = vsub.f32 1.5, %v5914
  %v5916 = vmul.f32 %v5911, %v5915
  %vm5917 = vweird.f32 %v5609
  %vm5918 = vweird.f32 %v5911
  %vm5919 = vmor %vm5917, %vm5918
  %v5920 = vsel %vm5919, %v5911, %v5916
  %v5921 = vrsqrt.pop %v5610
  %v5922 = vmul.f32 %v5921, %v5610
  %v5923 = vmul.f32 %v5922, %v5921
  %v5924 = vmul.f32 0.5, %v5923
  %v5925 = vsub.f32 1.5, %v5924
  %v5926 = vmul.f32 %v5921, %v5925
  %vm5927 = vweird.f32 %v5610
  %vm5928 = vweird.f32 %v5921
  %vm5929 = vmor %vm5927, %vm5928
  %v5930 = vsel %vm5929, %v5921, %v5926
  %v5931 = vmul.f32 %v5163, %v5620
  %v5932 = vmul.f32 %v5164, %v5620
  %v5933 = vmul.f32 %v5165, %v5620
  %v5934 = vmul.f32 %v5166, %v5620
  %v5935 = vmul.f32 %v5167, %v5630
  %v5936 = vmul.f32 %v5168, %v5630
  %v5937 = vmul.f32 %v5169, %v5630
  %v5938 = vmul.f32 %v5170, %v5630
  %v5939 = vmul.f32 %v5171, %v5640
  %v5940 = vmul.f32 %v5172, %v5640
  %v5941 = vmul.f32 %v5173, %v5640
  %v5942 = vmul.f32 %v5174, %v5640
  %v5943 = vmul.f32 %v5175, %v5650
  %v5944 = vmul.f32 %v5176, %v5650
  %v5945 = vmul.f32 %v5177, %v5650
  %v5946 = vmul.f32 %v5178, %v5650
  %v5947 = vmul.f32 %v5179, %v5660
  %v5948 = vmul.f32 %v5180, %v5660
  %v5949 = vmul.f32 %v5181, %v5660
  %v5950 = vmul.f32 %v5182, %v5660
  %v5951 = vmul.f32 %v5183, %v5670
  %v5952 = vmul.f32 %v5184, %v5670
  %v5953 = vmul.f32 %v5185, %v5670
  %v5954 = vmul.f32 %v5186, %v5670
  %v5955 = vmul.f32 %v5187, %v5680
  %v5956 = vmul.f32 %v5188, %v5680
  %v5957 = vmul.f32 %v5189, %v5680
  %v5958 = vmul.f32 %v5190, %v5680
  %v5959 = vmul.f32 %v5191, %v5690
  %v5960 = vmul.f32 %v5192, %v5690
  %v5961 = vmul.f32 %v5193, %v5690
  %v5962 = vmul.f32 %v5194, %v5690
  %v5963 = vmul.f32 %v5195, %v5700
  %v5964 = vmul.f32 %v5196, %v5700
  %v5965 = vmul.f32 %v5197, %v5700
  %v5966 = vmul.f32 %v5198, %v5700
  %v5967 = vmul.f32 %v5199, %v5710
  %v5968 = vmul.f32 %v5200, %v5710
  %v5969 = vmul.f32 %v5201, %v5710
  %v5970 = vmul.f32 %v5202, %v5710
  %v5971 = vmul.f32 %v5203, %v5720
  %v5972 = vmul.f32 %v5204, %v5720
  %v5973 = vmul.f32 %v5205, %v5720
  %v5974 = vmul.f32 %v5206, %v5720
  %v5975 = vmul.f32 %v5207, %v5730
  %v5976 = vmul.f32 %v5208, %v5730
  %v5977 = vmul.f32 %v5209, %v5730
  %v5978 = vmul.f32 %v5210, %v5730
  %v5979 = vmul.f32 %v5211, %v5740
  %v5980 = vmul.f32 %v5212, %v5740
  %v5981 = vmul.f32 %v5213, %v5740
  %v5982 = vmul.f32 %v5214, %v5740
  %v5983 = vmul.f32 %v5215, %v5750
  %v5984 = vmul.f32 %v5216, %v5750
  %v5985 = vmul.f32 %v5217, %v5750
  %v5986 = vmul.f32 %v5218, %v5750
  %v5987 = vmul.f32 %v5219, %v5760
  %v5988 = vmul.f32 %v5220, %v5760
  %v5989 = vmul.f32 %v5221, %v5760
  %v5990 = vmul.f32 %v5222, %v5760
  %v5991 = vmul.f32 %v5223, %v5770
  %v5992 = vmul.f32 %v5224, %v5770
  %v5993 = vmul.f32 %v5225, %v5770
  %v5994 = vmul.f32 %v5226, %v5770
  %v5995 = vmul.f32 %v5227, %v5780
  %v5996 = vmul.f32 %v5228, %v5780
  %v5997 = vmul.f32 %v5229, %v5780
  %v5998 = vmul.f32 %v5230, %v5780
  %v5999 = vmul.f32 %v5231, %v5790
  %v6000 = vmul.f32 %v5232, %v5790
  %v6001 = vmul.f32 %v5233, %v5790
  %v6002 = vmul.f32 %v5234, %v5790
  %v6003 = vmul.f32 %v5235, %v5800
  %v6004 = vmul.f32 %v5236, %v5800
  %v6005 = vmul.f32 %v5237, %v5800
  %v6006 = vmul.f32 %v5238, %v5800
  %v6007 = vmul.f32 %v5239, %v5810
  %v6008 = vmul.f32 %v5240, %v5810
  %v6009 = vmul.f32 %v5241, %v5810
  %v6010 = vmul.f32 %v5242, %v5810
  %v6011 = vmul.f32 %v5243, %v5820
  %v6012 = vmul.f32 %v5244, %v5820
  %v6013 = vmul.f32 %v5245, %v5820
  %v6014 = vmul.f32 %v5246, %v5820
  %v6015 = vmul.f32 %v5247, %v5830
  %v6016 = vmul.f32 %v5248, %v5830
  %v6017 = vmul.f32 %v5249, %v5830
  %v6018 = vmul.f32 %v5250, %v5830
  %v6019 = vmul.f32 %v5251, %v5840
  %v6020 = vmul.f32 %v5252, %v5840
  %v6021 = vmul.f32 %v5253, %v5840
  %v6022 = vmul.f32 %v5254, %v5840
  %v6023 = vmul.f32 %v5255, %v5850
  %v6024 = vmul.f32 %v5256, %v5850
  %v6025 = vmul.f32 %v5257, %v5850
  %v6026 = vmul.f32 %v5258, %v5850
  %v6027 = vmul.f32 %v5259, %v5860
  %v6028 = vmul.f32 %v5260, %v5860
  %v6029 = vmul.f32 %v5261, %v5860
  %v6030 = vmul.f32 %v5262, %v5860
  %v6031 = vmul.f32 %v5263, %v5870
  %v6032 = vmul.f32 %v5264, %v5870
  %v6033 = vmul.f32 %v5265, %v5870
  %v6034 = vmul.f32 %v5266, %v5870
  %v6035 = vmul.f32 %v5267, %v5880
  %v6036 = vmul.f32 %v5268, %v5880
  %v6037 = vmul.f32 %v5269, %v5880
  %v6038 = vmul.f32 %v5270, %v5880
  %v6039 = vmul.f32 %v5271, %v5890
  %v6040 = vmul.f32 %v5272, %v5890
  %v6041 = vmul.f32 %v5273, %v5890
  %v6042 = vmul.f32 %v5274, %v5890
  %v6043 = vmul.f32 %v5275, %v5900
  %v6044 = vmul.f32 %v5276, %v5900
  %v6045 = vmul.f32 %v5277, %v5900
  %v6046 = vmul.f32 %v5278, %v5900
  %v6047 = vmul.f32 %v5279, %v5910
  %v6048 = vmul.f32 %v5280, %v5910
  %v6049 = vmul.f32 %v5281, %v5910
  %v6050 = vmul.f32 %v5282, %v5910
  %v6051 = vmul.f32 %v5283, %v5920
  %v6052 = vmul.f32 %v5284, %v5920
  %v6053 = vmul.f32 %v5285, %v5920
  %v6054 = vmul.f32 %v5286, %v5920
  %v6055 = vmul.f32 %v5287, %v5930
  %v6056 = vmul.f32 %v5288, %v5930
  %v6057 = vmul.f32 %v5289, %v5930
  %v6058 = vmul.f32 %v5290, %v5930
  %v6059 = vpack.c.bf16 %v5932, %v5931
  %v6060 = vpack.c.bf16 %v5934, %v5933
  %v6061 = vpack.c.bf16 %v5936, %v5935
  %v6062 = vpack.c.bf16 %v5938, %v5937
  %v6063 = vpack.c.bf16 %v5940, %v5939
  %v6064 = vpack.c.bf16 %v5942, %v5941
  %v6065 = vpack.c.bf16 %v5944, %v5943
  %v6066 = vpack.c.bf16 %v5946, %v5945
  %v6067 = vpack.c.bf16 %v5948, %v5947
  %v6068 = vpack.c.bf16 %v5950, %v5949
  %v6069 = vpack.c.bf16 %v5952, %v5951
  %v6070 = vpack.c.bf16 %v5954, %v5953
  %v6071 = vpack.c.bf16 %v5956, %v5955
  %v6072 = vpack.c.bf16 %v5958, %v5957
  %v6073 = vpack.c.bf16 %v5960, %v5959
  %v6074 = vpack.c.bf16 %v5962, %v5961
  %v6075 = vpack.c.bf16 %v5964, %v5963
  %v6076 = vpack.c.bf16 %v5966, %v5965
  %v6077 = vpack.c.bf16 %v5968, %v5967
  %v6078 = vpack.c.bf16 %v5970, %v5969
  %v6079 = vpack.c.bf16 %v5972, %v5971
  %v6080 = vpack.c.bf16 %v5974, %v5973
  %v6081 = vpack.c.bf16 %v5976, %v5975
  %v6082 = vpack.c.bf16 %v5978, %v5977
  %v6083 = vpack.c.bf16 %v5980, %v5979
  %v6084 = vpack.c.bf16 %v5982, %v5981
  %v6085 = vpack.c.bf16 %v5984, %v5983
  %v6086 = vpack.c.bf16 %v5986, %v5985
  %v6087 = vpack.c.bf16 %v5988, %v5987
  %v6088 = vpack.c.bf16 %v5990, %v5989
  %v6089 = vpack.c.bf16 %v5992, %v5991
  %v6090 = vpack.c.bf16 %v5994, %v5993
  %v6091 = vpack.c.bf16 %v5996, %v5995
  %v6092 = vpack.c.bf16 %v5998, %v5997
  %v6093 = vpack.c.bf16 %v6000, %v5999
  %v6094 = vpack.c.bf16 %v6002, %v6001
  %v6095 = vpack.c.bf16 %v6004, %v6003
  %v6096 = vpack.c.bf16 %v6006, %v6005
  %v6097 = vpack.c.bf16 %v6008, %v6007
  %v6098 = vpack.c.bf16 %v6010, %v6009
  %v6099 = vpack.c.bf16 %v6012, %v6011
  %v6100 = vpack.c.bf16 %v6014, %v6013
  %v6101 = vpack.c.bf16 %v6016, %v6015
  %v6102 = vpack.c.bf16 %v6018, %v6017
  %v6103 = vpack.c.bf16 %v6020, %v6019
  %v6104 = vpack.c.bf16 %v6022, %v6021
  %v6105 = vpack.c.bf16 %v6024, %v6023
  %v6106 = vpack.c.bf16 %v6026, %v6025
  %v6107 = vpack.c.bf16 %v6028, %v6027
  %v6108 = vpack.c.bf16 %v6030, %v6029
  %v6109 = vpack.c.bf16 %v6032, %v6031
  %v6110 = vpack.c.bf16 %v6034, %v6033
  %v6111 = vpack.c.bf16 %v6036, %v6035
  %v6112 = vpack.c.bf16 %v6038, %v6037
  %v6113 = vpack.c.bf16 %v6040, %v6039
  %v6114 = vpack.c.bf16 %v6042, %v6041
  %v6115 = vpack.c.bf16 %v6044, %v6043
  %v6116 = vpack.c.bf16 %v6046, %v6045
  %v6117 = vpack.c.bf16 %v6048, %v6047
  %v6118 = vpack.c.bf16 %v6050, %v6049
  %v6119 = vpack.c.bf16 %v6052, %v6051
  %v6120 = vpack.c.bf16 %v6054, %v6053
  %v6121 = vpack.c.bf16 %v6056, %v6055
  %v6122 = vpack.c.bf16 %v6058, %v6057
  %6123 = vst [vmem:[%s2] sm:$0xff] %v6059
  %6124 = vst [vmem:[%s2 + $0x8] sm:$0xff] %v6060
  %6125 = vst [vmem:[%s2 + $0x10] sm:$0xff] %v6061
  %6126 = vst [vmem:[%s2 + $0x18] sm:$0xff] %v6062
  %6127 = vst [vmem:[%s2 + $0x20] sm:$0xff] %v6063
  %6128 = vst [vmem:[%s2 + $0x28] sm:$0xff] %v6064
  %6129 = vst [vmem:[%s2 + $0x30] sm:$0xff] %v6065
  %6130 = vst [vmem:[%s2 + $0x38] sm:$0xff] %v6066
  %6131 = vst [vmem:[%s2 + $0x40] sm:$0xff] %v6067
  %6132 = vst [vmem:[%s2 + $0x48] sm:$0xff] %v6068
  %6133 = vst [vmem:[%s2 + $0x50] sm:$0xff] %v6069
  %6134 = vst [vmem:[%s2 + $0x58] sm:$0xff] %v6070
  %6135 = vst [vmem:[%s2 + $0x60] sm:$0xff] %v6071
  %6136 = vst [vmem:[%s2 + $0x68] sm:$0xff] %v6072
  %6137 = vst [vmem:[%s2 + $0x70] sm:$0xff] %v6073
  %6138 = vst [vmem:[%s2 + $0x78] sm:$0xff] %v6074
  %6139 = vst [vmem:[%s2 + $0x80] sm:$0xff] %v6075
  %6140 = vst [vmem:[%s2 + $0x88] sm:$0xff] %v6076
  %6141 = vst [vmem:[%s2 + $0x90] sm:$0xff] %v6077
  %6142 = vst [vmem:[%s2 + $0x98] sm:$0xff] %v6078
  %6143 = vst [vmem:[%s2 + $0xa0] sm:$0xff] %v6079
  %6144 = vst [vmem:[%s2 + $0xa8] sm:$0xff] %v6080
  %6145 = vst [vmem:[%s2 + $0xb0] sm:$0xff] %v6081
  %6146 = vst [vmem:[%s2 + $0xb8] sm:$0xff] %v6082
  %6147 = vst [vmem:[%s2 + $0xc0] sm:$0xff] %v6083
  %6148 = vst [vmem:[%s2 + $0xc8] sm:$0xff] %v6084
  %6149 = vst [vmem:[%s2 + $0xd0] sm:$0xff] %v6085
  %6150 = vst [vmem:[%s2 + $0xd8] sm:$0xff] %v6086
  %6151 = vst [vmem:[%s2 + $0xe0] sm:$0xff] %v6087
  %6152 = vst [vmem:[%s2 + $0xe8] sm:$0xff] %v6088
  %6153 = vst [vmem:[%s2 + $0xf0] sm:$0xff] %v6089
  %6154 = vst [vmem:[%s2 + $0xf8] sm:$0xff] %v6090
  %6155 = vst [vmem:[%s2 + $0x100] sm:$0xff] %v6091
  %6156 = vst [vmem:[%s2 + $0x108] sm:$0xff] %v6092
  %6157 = vst [vmem:[%s2 + $0x110] sm:$0xff] %v6093
  %6158 = vst [vmem:[%s2 + $0x118] sm:$0xff] %v6094
  %6159 = vst [vmem:[%s2 + $0x120] sm:$0xff] %v6095
  %6160 = vst [vmem:[%s2 + $0x128] sm:$0xff] %v6096
  %6161 = vst [vmem:[%s2 + $0x130] sm:$0xff] %v6097
  %6162 = vst [vmem:[%s2 + $0x138] sm:$0xff] %v6098
  %6163 = vst [vmem:[%s2 + $0x140] sm:$0xff] %v6099
  %6164 = vst [vmem:[%s2 + $0x148] sm:$0xff] %v6100
  %6165 = vst [vmem:[%s2 + $0x150] sm:$0xff] %v6101
  %6166 = vst [vmem:[%s2 + $0x158] sm:$0xff] %v6102
  %6167 = vst [vmem:[%s2 + $0x160] sm:$0xff] %v6103
  %6168 = vst [vmem:[%s2 + $0x168] sm:$0xff] %v6104
  %6169 = vst [vmem:[%s2 + $0x170] sm:$0xff] %v6105
  %6170 = vst [vmem:[%s2 + $0x178] sm:$0xff] %v6106
  %6171 = vst [vmem:[%s2 + $0x180] sm:$0xff] %v6107
  %6172 = vst [vmem:[%s2 + $0x188] sm:$0xff] %v6108
  %6173 = vst [vmem:[%s2 + $0x190] sm:$0xff] %v6109
  %6174 = vst [vmem:[%s2 + $0x198] sm:$0xff] %v6110
  %6175 = vst [vmem:[%s2 + $0x1a0] sm:$0xff] %v6111
  %6176 = vst [vmem:[%s2 + $0x1a8] sm:$0xff] %v6112
  %6177 = vst [vmem:[%s2 + $0x1b0] sm:$0xff] %v6113
  %6178 = vst [vmem:[%s2 + $0x1b8] sm:$0xff] %v6114
  %6179 = vst [vmem:[%s2 + $0x1c0] sm:$0xff] %v6115
  %6180 = vst [vmem:[%s2 + $0x1c8] sm:$0xff] %v6116
  %6181 = vst [vmem:[%s2 + $0x1d0] sm:$0xff] %v6117
  %6182 = vst [vmem:[%s2 + $0x1d8] sm:$0xff] %v6118
  %6183 = vst [vmem:[%s2 + $0x1e0] sm:$0xff] %v6119
  %6184 = vst [vmem:[%s2 + $0x1e8] sm:$0xff] %v6120
  %6185 = vst [vmem:[%s2 + $0x1f0] sm:$0xff] %v6121
  %6186 = vst [vmem:[%s2 + $0x1f8] sm:$0xff] %v6122
  // Predicated region
  $region10: #{cycle_time_forward.3} parent=0 // pred_check
    _
  $region11: #{cycle_time_forward.3} parent=0 // pred_check_branch
    %6188 = sbr.rel (0) target = $region13
  $region12: #{cycle_time_forward.3} parent=0 // pred_region
    _
  $region13: #{cycle_time_forward.3} parent=0 // pred_fallthru
    _
  // Predicated region
  $region14: #{cycle_time_forward.3} parent=0 // pred_check
    _
  $region15: #{cycle_time_forward.3} parent=0 // pred_check_branch
    %6190 = sbr.rel (0) target = $region17
  $region16: #{cycle_time_forward.3} parent=0 // pred_region
    _
  $region17: #{cycle_time_forward.3} parent=0 // pred_fallthru
    _

// kernel: cycle_time_forward.5
$region0: #{cycle_time_forward.5}
  #allocation0 [shape = 'u32[]', space=smem, size = 0x4, offset = 0x4, fixed_abs, tag = 'smem constant byte address 0x4 - core index']
  #allocation1 [shape = 'u32[72,128]{1,0:T(1,128)}', space=vmem, size = 0x9000, scoped, tag = 'internal scratch']
  %s0 = inlined_call_operand.vmem [shape: bf16[2,128,512], index: 0, kind: input, shape index: {}]
  %s1 = inlined_call_operand.vmem [shape: bf16[2,512,128], index: 1, kind: input, shape index: {}]
  %s2 = inlined_call_operand.vmem [shape: f32[2,2,64,128], index: 2, kind: output, shape index: {}]
  %s3 = sld [smem:[#allocation0]]
  $region41: #{cycle_time_forward.5} parent=0
    _
  %s5 = ssub.s32 1, %s3
  %s6 = scalar_select 0, %s5, %s3
  loop: start=0, step=1, limit=4
  $region2: #{cycle_time_forward.5} parent=0 // loop_pre_header
    _
  $region3: #{cycle_time_forward.5} parent=0 // loop_header
    %s8 = sphi 0, %s12
    %p9 = scmp.ge.s32.totalorder %s8, 4
    %s18 = sphi 0, %s20
    %s21 = sphi 0, %s18
    %s22 = sphi 0, %s21
    %s38 = sphi 0, %s22
    %s44 = sphi 0, %s46
    %s47 = sphi 0, %s44
    %s48 = sphi 0, %s47
    %s64 = sphi 0, %s48
    %s70 = sphi 0, %s72
    %s73 = sphi 0, %s70
    %s74 = sphi 0, %s73
    %s90 = sphi 0, %s74
  $region4: #{cycle_time_forward.5} parent=0 // loop_header_branch
    %11 = sbr.rel (%p9) target = $region8
  $region5: #{cycle_time_forward.5} parent=0 // loop_body
    %s13 = ssub.s32 %s8, 1
    %s14 = ssub.s32 %s8, 2
    %s15 = sadd.s32 %s8, 1
    %s16 = ssub.s32 %s8, %s15
    %p17 = scmp.eq.s32.totalorder %s16, 0
    %s19 = sadd.s32 %s18, 1
    %s20 = scalar_select %p17, %s18, %s19
    %p23 = pneg %p17
    %p24 = scmp.eq.s32.totalorder %s8, 1
    %p25 = por %p23, %p24
    %p26 = scmp.ne.s32.totalorder %s18, %s21
    %p27 = scmp.eq.s32.totalorder %s8, 0
    %p28 = por %p26, %p27
    %p29 = scmp.ne.s32.totalorder %s18, %s21
    %p30 = scmp.eq.s32.totalorder %s13, 1
    %p31 = por %p29, %p30
    %p32 = scmp.ne.s32.totalorder %s21, %s22
    %p33 = scmp.eq.s32.totalorder %s13, 0
    %p34 = por %p32, %p33
    %p35 = scmp.ne.s32.totalorder %s21, %s22
    %p36 = scmp.eq.s32.totalorder %s14, 1
    %p37 = por %p35, %p36
    %p39 = scmp.ne.s32.totalorder %s22, %s38
    %p40 = scmp.eq.s32.totalorder %s14, 0
    %p41 = por %p39, %p40
    %s42 = ssub.s32 %s8, %s15
    %p43 = scmp.eq.s32.totalorder %s42, 0
    %s45 = sadd.s32 %s44, 1
    %s46 = scalar_select %p43, %s44, %s45
    %p49 = pneg %p43
    %p50 = scmp.eq.s32.totalorder %s8, 1
    %p51 = por %p49, %p50
    %p52 = scmp.ne.s32.totalorder %s44, %s47
    %p53 = scmp.eq.s32.totalorder %s8, 0
    %p54 = por %p52, %p53
    %p55 = scmp.ne.s32.totalorder %s44, %s47
    %p56 = scmp.eq.s32.totalorder %s13, 1
    %p57 = por %p55, %p56
    %p58 = scmp.ne.s32.totalorder %s47, %s48
    %p59 = scmp.eq.s32.totalorder %s13, 0
    %p60 = por %p58, %p59
    %p61 = scmp.ne.s32.totalorder %s47, %s48
    %p62 = scmp.eq.s32.totalorder %s14, 1
    %p63 = por %p61, %p62
    %p65 = scmp.ne.s32.totalorder %s48, %s64
    %p66 = scmp.eq.s32.totalorder %s14, 0
    %p67 = por %p65, %p66
    %s68 = ssub.s32 %s8, %s15
    %p69 = scmp.eq.s32.totalorder %s68, 0
    %s71 = sadd.s32 %s70, 1
    %s72 = scalar_select %p69, %s70, %s71
    %p75 = pneg %p69
    %p76 = scmp.eq.s32.totalorder %s8, 1
    %p77 = por %p75, %p76
    %p78 = scmp.ne.s32.totalorder %s70, %s73
    %p79 = scmp.eq.s32.totalorder %s8, 0
    %p80 = por %p78, %p79
    %p81 = scmp.ne.s32.totalorder %s70, %s73
    %p82 = scmp.eq.s32.totalorder %s13, 1
    %p83 = por %p81, %p82
    %p84 = scmp.ne.s32.totalorder %s73, %s74
    %p85 = scmp.eq.s32.totalorder %s13, 0
    %p86 = por %p84, %p85
    %p87 = scmp.ne.s32.totalorder %s73, %s74
    %p88 = scmp.eq.s32.totalorder %s14, 1
    %p89 = por %p87, %p88
    %p91 = scmp.ne.s32.totalorder %s74, %s90
    %p92 = scmp.eq.s32.totalorder %s14, 0
    %p93 = por %p91, %p92
    %p94 = scmp.le.s32.totalorder 1, %s8
    %p95 = scmp.lt.s32.totalorder %s8, 3
    %p96 = pnand %p94, %p95
    %p97 = pneg %p96
    // Predicated region
    $region9: #{cycle_time_forward.5} parent=5 // pred_check
      _
    $region10: #{cycle_time_forward.5} parent=5 // pred_check_branch
      %99 = sbr.rel (%p96) target = $region12
    $region11: #{cycle_time_forward.5} parent=5 // pred_region
      %s100 = ssub.s32 %s8, 1
    $region12: #{cycle_time_forward.5} parent=5 // pred_fallthru
      _
    %p101 = scmp.lt.s32.totalorder %s8, 2
    // Predicated region
    $region13: #{cycle_time_forward.5} parent=5 // pred_check
      %p102 = pneg %p101
    $region14: #{cycle_time_forward.5} parent=5 // pred_check_branch
      %104 = sbr.rel (%p102) target = $region16
    $region15: #{cycle_time_forward.5} parent=5 // pred_region
      // Predicated region
      $region17: #{cycle_time_forward.5} parent=15 // pred_check
        %p105 = pneg %p28
      $region18: #{cycle_time_forward.5} parent=15 // pred_check_branch
        %107 = sbr.rel (%p105) target = $region20
      $region19: #{cycle_time_forward.5} parent=15 // pred_region
        %p108 = scmp.lt.s32.totalorder %s8, 1
        %s109 = scalar_select %p108, %s8, 1
        %s110 = smul.addr %s109, 64
        %s111 = smul.addr %s110, 4
        %s112 = scalar_lea.vmem %s0, %s111
      $region20: #{cycle_time_forward.5} parent=15 // pred_fallthru
        _
      // Predicated region
      $region21: #{cycle_time_forward.5} parent=15 // pred_check
        %p113 = pneg %p54
      $region22: #{cycle_time_forward.5} parent=15 // pred_check_branch
        %115 = sbr.rel (%p113) target = $region24
      $region23: #{cycle_time_forward.5} parent=15 // pred_region
        %p116 = scmp.lt.s32.totalorder %s8, 1
        %s117 = scalar_select %p116, %s8, 1
        %s118 = smul.addr %s117, 64
        %s119 = smul.addr %s118, 4
        %s120 = scalar_lea.vmem %s1, %s119
      $region24: #{cycle_time_forward.5} parent=15 // pred_fallthru
        _
    $region16: #{cycle_time_forward.5} parent=5 // pred_fallthru
      _
    %p121 = scmp.le.s32.totalorder 1, %s8
    %p122 = scmp.lt.s32.totalorder %s8, 3
    %p123 = pnand %p121, %p122
    %p124 = pneg %p123
    // Predicated region
    $region25: #{cycle_time_forward.5} parent=5 // pred_check
      _
    $region26: #{cycle_time_forward.5} parent=5 // pred_check_branch
      %126 = sbr.rel (%p123) target = $region28
    $region27: #{cycle_time_forward.5} parent=5 // pred_region
      %s127 = ssub.s32 %s8, 1
      %p128 = scmp.lt.s32.totalorder %s13, 1
      %s129 = scalar_select %p128, %s13, 1
      %s130 = smul.addr %s129, 64
      %s131 = smul.addr %s130, 4
      %s132 = scalar_lea.vmem %s0, %s131
      %p133 = pneg %p34
      %p134 = pneg %p31
      %p135 = scmp.lt.s32.totalorder %s13, 1
      %s136 = scalar_select %p135, %s13, 1
      %s137 = smul.addr %s136, 64
      %s138 = smul.addr %s137, 4
      %s139 = scalar_lea.vmem %s1, %s138
      %p140 = pneg %p60
      %p141 = pneg %p57
      %p142 = pneg %p86
      %p143 = pneg %p83
      %p144 = scmp.lt.s32.totalorder %s13, 1
      %s145 = scalar_select %p144, %s13, 1
      %s146 = smul.addr %s145, 16
      %s147 = smul.addr %s146, 8
      %s148 = scalar_lea.vmem %s2, %s147
      %p149 = scmp.lt.s32.totalorder %s13, 1
      %s150 = scalar_select %p149, %s13, 1
      %s151 = smul.addr %s150, 64
      %s152 = smul.addr %s151, 4
      %s153 = scalar_lea.vmem %s0, %s152
      %p154 = scmp.lt.s32.totalorder %s13, 1
      %s155 = scalar_select %p154, %s13, 1
      %s156 = smul.addr %s155, 64
      %s157 = smul.addr %s156, 4
      %s158 = scalar_lea.vmem %s1, %s157
      %p159 = scmp.lt.s32.totalorder %s13, 1
      %s160 = scalar_select %p159, %s13, 1
      %s161 = smul.addr %s160, 16
      %s162 = smul.addr %s161, 8
      %s163 = scalar_lea.vmem %s2, %s162
      %v164 = vld [vmem:[%s153] sm:$0xff]
      %v165 = vld [vmem:[%s153 + $0x8] sm:$0xff]
      %v166 = vld [vmem:[%s153 + $0x10] sm:$0xff]
      %v167 = vld [vmem:[%s153 + $0x18] sm:$0xff]
      %v168 = vld [vmem:[%s153 + $0x20] sm:$0xff]
      %v169 = vld [vmem:[%s153 + $0x28] sm:$0xff]
      %v170 = vld [vmem:[%s153 + $0x30] sm:$0xff]
      %v171 = vld [vmem:[%s153 + $0x38] sm:$0xff]
      %v172 = vld [vmem:[%s153 + $0x40] sm:$0xff]
      %v173 = vld [vmem:[%s153 + $0x48] sm:$0xff]
      %v174 = vld [vmem:[%s153 + $0x50] sm:$0xff]
      %v175 = vld [vmem:[%s153 + $0x58] sm:$0xff]
      %v176 = vld [vmem:[%s153 + $0x60] sm:$0xff]
      %v177 = vld [vmem:[%s153 + $0x68] sm:$0xff]
      %v178 = vld [vmem:[%s153 + $0x70] sm:$0xff]
      %v179 = vld [vmem:[%s153 + $0x78] sm:$0xff]
      %v180 = vld [vmem:[%s153 + $0x80] sm:$0xff]
      %v181 = vld [vmem:[%s153 + $0x88] sm:$0xff]
      %v182 = vld [vmem:[%s153 + $0x90] sm:$0xff]
      %v183 = vld [vmem:[%s153 + $0x98] sm:$0xff]
      %v184 = vld [vmem:[%s153 + $0xa0] sm:$0xff]
      %v185 = vld [vmem:[%s153 + $0xa8] sm:$0xff]
      %v186 = vld [vmem:[%s153 + $0xb0] sm:$0xff]
      %v187 = vld [vmem:[%s153 + $0xb8] sm:$0xff]
      %v188 = vld [vmem:[%s153 + $0xc0] sm:$0xff]
      %v189 = vld [vmem:[%s153 + $0xc8] sm:$0xff]
      %v190 = vld [vmem:[%s153 + $0xd0] sm:$0xff]
      %v191 = vld [vmem:[%s153 + $0xd8] sm:$0xff]
      %v192 = vld [vmem:[%s153 + $0xe0] sm:$0xff]
      %v193 = vld [vmem:[%s153 + $0xe8] sm:$0xff]
      %v194 = vld [vmem:[%s153 + $0xf0] sm:$0xff]
      %v195 = vld [vmem:[%s153 + $0xf8] sm:$0xff]
      %v196 = vld [vmem:[%s158] sm:$0xf]
      %v197 = vld [vmem:[%s158 + $0x4] sm:$0xf]
      %v198 = vld [vmem:[%s158 + $0x8] sm:$0xf]
      %v199 = vld [vmem:[%s158 + $0xc] sm:$0xf]
      %v200 = vld [vmem:[%s158 + $0x10] sm:$0xf]
      %v201 = vld [vmem:[%s158 + $0x14] sm:$0xf]
      %v202 = vld [vmem:[%s158 + $0x18] sm:$0xf]
      %v203 = vld [vmem:[%s158 + $0x1c] sm:$0xf]
      %v204 = vld [vmem:[%s158 + $0x20] sm:$0xf]
      %v205 = vld [vmem:[%s158 + $0x24] sm:$0xf]
      %v206 = vld [vmem:[%s158 + $0x28] sm:$0xf]
      %v207 = vld [vmem:[%s158 + $0x2c] sm:$0xf]
      %v208 = vld [vmem:[%s158 + $0x30] sm:$0xf]
      %v209 = vld [vmem:[%s158 + $0x34] sm:$0xf]
      %v210 = vld [vmem:[%s158 + $0x38] sm:$0xf]
      %v211 = vld [vmem:[%s158 + $0x3c] sm:$0xf]
      %v212 = vld [vmem:[%s158 + $0x40] sm:$0xf]
      %v213 = vld [vmem:[%s158 + $0x44] sm:$0xf]
      %v214 = vld [vmem:[%s158 + $0x48] sm:$0xf]
      %v215 = vld [vmem:[%s158 + $0x4c] sm:$0xf]
      %v216 = vld [vmem:[%s158 + $0x50] sm:$0xf]
      %v217 = vld [vmem:[%s158 + $0x54] sm:$0xf]
      %v218 = vld [vmem:[%s158 + $0x58] sm:$0xf]
      %v219 = vld [vmem:[%s158 + $0x5c] sm:$0xf]
      %v220 = vld [vmem:[%s158 + $0x60] sm:$0xf]
      %v221 = vld [vmem:[%s158 + $0x64] sm:$0xf]
      %v222 = vld [vmem:[%s158 + $0x68] sm:$0xf]
      %v223 = vld [vmem:[%s158 + $0x6c] sm:$0xf]
      %v224 = vld [vmem:[%s158 + $0x70] sm:$0xf]
      %v225 = vld [vmem:[%s158 + $0x74] sm:$0xf]
      %v226 = vld [vmem:[%s158 + $0x78] sm:$0xf]
      %v227 = vld [vmem:[%s158 + $0x7c] sm:$0xf]
      %v228 = vld [vmem:[%s158 + $0x80] sm:$0xf]
      %v229 = vld [vmem:[%s158 + $0x84] sm:$0xf]
      %v230 = vld [vmem:[%s158 + $0x88] sm:$0xf]
      %v231 = vld [vmem:[%s158 + $0x8c] sm:$0xf]
      %v232 = vld [vmem:[%s158 + $0x90] sm:$0xf]
      %v233 = vld [vmem:[%s158 + $0x94] sm:$0xf]
      %v234 = vld [vmem:[%s158 + $0x98] sm:$0xf]
      %v235 = vld [vmem:[%s158 + $0x9c] sm:$0xf]
      %v236 = vld [vmem:[%s158 + $0xa0] sm:$0xf]
      %v237 = vld [vmem:[%s158 + $0xa4] sm:$0xf]
      %v238 = vld [vmem:[%s158 + $0xa8] sm:$0xf]
      %v239 = vld [vmem:[%s158 + $0xac] sm:$0xf]
      %v240 = vld [vmem:[%s158 + $0xb0] sm:$0xf]
      %v241 = vld [vmem:[%s158 + $0xb4] sm:$0xf]
      %v242 = vld [vmem:[%s158 + $0xb8] sm:$0xf]
      %v243 = vld [vmem:[%s158 + $0xbc] sm:$0xf]
      %v244 = vld [vmem:[%s158 + $0xc0] sm:$0xf]
      %v245 = vld [vmem:[%s158 + $0xc4] sm:$0xf]
      %v246 = vld [vmem:[%s158 + $0xc8] sm:$0xf]
      %v247 = vld [vmem:[%s158 + $0xcc] sm:$0xf]
      %v248 = vld [vmem:[%s158 + $0xd0] sm:$0xf]
      %v249 = vld [vmem:[%s158 + $0xd4] sm:$0xf]
      %v250 = vld [vmem:[%s158 + $0xd8] sm:$0xf]
      %v251 = vld [vmem:[%s158 + $0xdc] sm:$0xf]
      %v252 = vld [vmem:[%s158 + $0xe0] sm:$0xf]
      %v253 = vld [vmem:[%s158 + $0xe4] sm:$0xf]
      %v254 = vld [vmem:[%s158 + $0xe8] sm:$0xf]
      %v255 = vld [vmem:[%s158 + $0xec] sm:$0xf]
      %v256 = vld [vmem:[%s158 + $0xf0] sm:$0xf]
      %v257 = vld [vmem:[%s158 + $0xf4] sm:$0xf]
      %v258 = vld [vmem:[%s158 + $0xf8] sm:$0xf]
      %v259 = vld [vmem:[%s158 + $0xfc] sm:$0xf]
      %v292 = vunpack.c.l.b16 %v164
      %v293 = vunpack.c.h.b16 %v164
      %v294 = vunpack.c.l.b16 %v165
      %v295 = vunpack.c.h.b16 %v165
      %v296 = vunpack.c.l.b16 %v166
      %v297 = vunpack.c.h.b16 %v166
      %v298 = vunpack.c.l.b16 %v167
      %v299 = vunpack.c.h.b16 %v167
      %v300 = vunpack.c.l.b16 %v168
      %v301 = vunpack.c.h.b16 %v168
      %v302 = vunpack.c.l.b16 %v169
      %v303 = vunpack.c.h.b16 %v169
      %v304 = vunpack.c.l.b16 %v170
      %v305 = vunpack.c.h.b16 %v170
      %v306 = vunpack.c.l.b16 %v171
      %v307 = vunpack.c.h.b16 %v171
      %v308 = vunpack.c.l.b16 %v172
      %v309 = vunpack.c.h.b16 %v172
      %v310 = vunpack.c.l.b16 %v173
      %v311 = vunpack.c.h.b16 %v173
      %v312 = vunpack.c.l.b16 %v174
      %v313 = vunpack.c.h.b16 %v174
      %v314 = vunpack.c.l.b16 %v175
      %v315 = vunpack.c.h.b16 %v175
      %v316 = vunpack.c.l.b16 %v176
      %v317 = vunpack.c.h.b16 %v176
      %v318 = vunpack.c.l.b16 %v177
      %v319 = vunpack.c.h.b16 %v177
      %v320 = vunpack.c.l.b16 %v178
      %v321 = vunpack.c.h.b16 %v178
      %v322 = vunpack.c.l.b16 %v179
      %v323 = vunpack.c.h.b16 %v179
      %v324 = vunpack.c.l.b16 %v180
      %v325 = vunpack.c.h.b16 %v180
      %v326 = vunpack.c.l.b16 %v181
      %v327 = vunpack.c.h.b16 %v181
      %v328 = vunpack.c.l.b16 %v182
      %v329 = vunpack.c.h.b16 %v182
      %v330 = vunpack.c.l.b16 %v183
      %v331 = vunpack.c.h.b16 %v183
      %v332 = vunpack.c.l.b16 %v184
      %v333 = vunpack.c.h.b16 %v184
      %v334 = vunpack.c.l.b16 %v185
      %v335 = vunpack.c.h.b16 %v185
      %v336 = vunpack.c.l.b16 %v186
      %v337 = vunpack.c.h.b16 %v186
      %v338 = vunpack.c.l.b16 %v187
      %v339 = vunpack.c.h.b16 %v187
      %v340 = vunpack.c.l.b16 %v188
      %v341 = vunpack.c.h.b16 %v188
      %v342 = vunpack.c.l.b16 %v189
      %v343 = vunpack.c.h.b16 %v189
      %v344 = vunpack.c.l.b16 %v190
      %v345 = vunpack.c.h.b16 %v190
      %v346 = vunpack.c.l.b16 %v191
      %v347 = vunpack.c.h.b16 %v191
      %v348 = vunpack.c.l.b16 %v192
      %v349 = vunpack.c.h.b16 %v192
      %v350 = vunpack.c.l.b16 %v193
      %v351 = vunpack.c.h.b16 %v193
      %v352 = vunpack.c.l.b16 %v194
      %v353 = vunpack.c.h.b16 %v194
      %v354 = vunpack.c.l.b16 %v195
      %v355 = vunpack.c.h.b16 %v195
      %v356 = vpack.c.b16 %v296, %v292
      %v357 = vpack.c.b16 %v297, %v293
      %v358 = vpack.c.b16 %v298, %v294
      %v359 = vpack.c.b16 %v299, %v295
      %v360 = vpack.c.b16 %v304, %v300
      %v361 = vpack.c.b16 %v305, %v301
      %v362 = vpack.c.b16 %v306, %v302
      %v363 = vpack.c.b16 %v307, %v303
      %v364 = vpack.c.b16 %v312, %v308
      %v365 = vpack.c.b16 %v313, %v309
      %v366 = vpack.c.b16 %v314, %v310
      %v367 = vpack.c.b16 %v315, %v311
      %v368 = vpack.c.b16 %v320, %v316
      %v369 = vpack.c.b16 %v321, %v317
      %v370 = vpack.c.b16 %v322, %v318
      %v371 = vpack.c.b16 %v323, %v319
      %v372 = vpack.c.b16 %v328, %v324
      %v373 = vpack.c.b16 %v329, %v325
      %v374 = vpack.c.b16 %v330, %v326
      %v375 = vpack.c.b16 %v331, %v327
      %v376 = vpack.c.b16 %v336, %v332
      %v377 = vpack.c.b16 %v337, %v333
      %v378 = vpack.c.b16 %v338, %v334
      %v379 = vpack.c.b16 %v339, %v335
      %v380 = vpack.c.b16 %v344, %v340
      %v381 = vpack.c.b16 %v345, %v341
      %v382 = vpack.c.b16 %v346, %v342
      %v383 = vpack.c.b16 %v347, %v343
      %v384 = vpack.c.b16 %v352, %v348
      %v385 = vpack.c.b16 %v353, %v349
      %v386 = vpack.c.b16 %v354, %v350
      %v387 = vpack.c.b16 %v355, %v351
      %v484 = vunpack.c.l.b16 %v196
      %v485 = vunpack.c.l.b16 %v197
      %v486 = vunpack.c.l.b16 %v198
      %v487 = vunpack.c.l.b16 %v199
      %v488 = vunpack.c.l.b16 %v200
      %v489 = vunpack.c.l.b16 %v201
      %v490 = vunpack.c.l.b16 %v202
      %v491 = vunpack.c.l.b16 %v203
      %v492 = vunpack.c.l.b16 %v204
      %v493 = vunpack.c.l.b16 %v205
      %v494 = vunpack.c.l.b16 %v206
      %v495 = vunpack.c.l.b16 %v207
      %v496 = vunpack.c.l.b16 %v208
      %v497 = vunpack.c.l.b16 %v209
      %v498 = vunpack.c.l.b16 %v210
      %v499 = vunpack.c.l.b16 %v211
      %v500 = vunpack.c.l.b16 %v212
      %v501 = vunpack.c.l.b16 %v213
      %v502 = vunpack.c.l.b16 %v214
      %v503 = vunpack.c.l.b16 %v215
      %v504 = vunpack.c.l.b16 %v216
      %v505 = vunpack.c.l.b16 %v217
      %v506 = vunpack.c.l.b16 %v218
      %v507 = vunpack.c.l.b16 %v219
      %v508 = vunpack.c.l.b16 %v220
      %v509 = vunpack.c.l.b16 %v221
      %v510 = vunpack.c.l.b16 %v222
      %v511 = vunpack.c.l.b16 %v223
      %v512 = vunpack.c.l.b16 %v224
      %v513 = vunpack.c.l.b16 %v225
      %v514 = vunpack.c.l.b16 %v226
      %v515 = vunpack.c.l.b16 %v227
      %v516 = vunpack.c.l.b16 %v228
      %v517 = vunpack.c.l.b16 %v229
      %v518 = vunpack.c.l.b16 %v230
      %v519 = vunpack.c.l.b16 %v231
      %v520 = vunpack.c.l.b16 %v232
      %v521 = vunpack.c.l.b16 %v233
      %v522 = vunpack.c.l.b16 %v234
      %v523 = vunpack.c.l.b16 %v235
      %v524 = vunpack.c.l.b16 %v236
      %v525 = vunpack.c.l.b16 %v237
      %v526 = vunpack.c.l.b16 %v238
      %v527 = vunpack.c.l.b16 %v239
      %v528 = vunpack.c.l.b16 %v240
      %v529 = vunpack.c.l.b16 %v241
      %v530 = vunpack.c.l.b16 %v242
      %v531 = vunpack.c.l.b16 %v243
      %v532 = vunpack.c.l.b16 %v244
      %v533 = vunpack.c.l.b16 %v245
      %v534 = vunpack.c.l.b16 %v246
      %v535 = vunpack.c.l.b16 %v247
      %v536 = vunpack.c.l.b16 %v248
      %v537 = vunpack.c.l.b16 %v249
      %v538 = vunpack.c.l.b16 %v250
      %v539 = vunpack.c.l.b16 %v251
      %v540 = vunpack.c.l.b16 %v252
      %v541 = vunpack.c.l.b16 %v253
      %v542 = vunpack.c.l.b16 %v254
      %v543 = vunpack.c.l.b16 %v255
      %v544 = vunpack.c.l.b16 %v256
      %v545 = vunpack.c.l.b16 %v257
      %v546 = vunpack.c.l.b16 %v258
      %v547 = vunpack.c.l.b16 %v259
      %v548 = vpack.c.b16 %v485, %v484
      %v549 = vpack.c.b16 %v487, %v486
      %v550 = vpack.c.b16 %v489, %v488
      %v551 = vpack.c.b16 %v491, %v490
      %v552 = vpack.c.b16 %v493, %v492
      %v553 = vpack.c.b16 %v495, %v494
      %v554 = vpack.c.b16 %v497, %v496
      %v555 = vpack.c.b16 %v499, %v498
      %v556 = vpack.c.b16 %v501, %v500
      %v557 = vpack.c.b16 %v503, %v502
      %v558 = vpack.c.b16 %v505, %v504
      %v559 = vpack.c.b16 %v507, %v506
      %v560 = vpack.c.b16 %v509, %v508
      %v561 = vpack.c.b16 %v511, %v510
      %v562 = vpack.c.b16 %v513, %v512
      %v563 = vpack.c.b16 %v515, %v514
      %v564 = vpack.c.b16 %v517, %v516
      %v565 = vpack.c.b16 %v519, %v518
      %v566 = vpack.c.b16 %v521, %v520
      %v567 = vpack.c.b16 %v523, %v522
      %v568 = vpack.c.b16 %v525, %v524
      %v569 = vpack.c.b16 %v527, %v526
      %v570 = vpack.c.b16 %v529, %v528
      %v571 = vpack.c.b16 %v531, %v530
      %v572 = vpack.c.b16 %v533, %v532
      %v573 = vpack.c.b16 %v535, %v534
      %v574 = vpack.c.b16 %v537, %v536
      %v575 = vpack.c.b16 %v539, %v538
      %v576 = vpack.c.b16 %v541, %v540
      %v577 = vpack.c.b16 %v543, %v542
      %v578 = vpack.c.b16 %v545, %v544
      %v579 = vpack.c.b16 %v547, %v546
      %612 = vmatpush.bf16.msra.mxu0 %v555
      %613 = vmatpush.bf16.msra.mxu0 %v554
      %614 = vmatpush.bf16.msra.mxu0 %v553
      %615 = vmatpush.bf16.msra.mxu0 %v552
      %616 = vmatpush.bf16.msra.mxu0 %v551
      %617 = vmatpush.bf16.msra.mxu0 %v550
      %618 = vmatpush.bf16.msra.mxu0 %v549
      %619 = vmatpush.bf16.msra.mxu0 %v548
      %620 = vmatmul.bf16.gmra.mxu0 %v356
      %v621 = vpop.f32.mrf.mxu0
      %v622 = vadd.f32 0.0, %v621
      %v623 = vpop.f32.mrf.mxu0
      %v624 = vadd.f32 0.0, %v623
      %625 = vmatmul.bf16.gmra.mxu0 %v360
      %v626 = vpop.f32.mrf.mxu0
      %v627 = vadd.f32 0.0, %v626
      %v628 = vpop.f32.mrf.mxu0
      %v629 = vadd.f32 0.0, %v628
      %630 = vmatmul.bf16.gmra.mxu0 %v364
      %v631 = vpop.f32.mrf.mxu0
      %v632 = vadd.f32 0.0, %v631
      %v633 = vpop.f32.mrf.mxu0
      %v634 = vadd.f32 0.0, %v633
      %635 = vmatmul.bf16.gmra.mxu0 %v368
      %v636 = vpop.f32.mrf.mxu0
      %v637 = vadd.f32 0.0, %v636
      %v638 = vpop.f32.mrf.mxu0
      %v639 = vadd.f32 0.0, %v638
      %640 = vmatmul.bf16.gmra.mxu0 %v372
      %v641 = vpop.f32.mrf.mxu0
      %v642 = vadd.f32 0.0, %v641
      %v643 = vpop.f32.mrf.mxu0
      %v644 = vadd.f32 0.0, %v643
      %645 = vmatmul.bf16.gmra.mxu0 %v376
      %v646 = vpop.f32.mrf.mxu0
      %v647 = vadd.f32 0.0, %v646
      %v648 = vpop.f32.mrf.mxu0
      %v649 = vadd.f32 0.0, %v648
      %650 = vmatmul.bf16.gmra.mxu0 %v380
      %v651 = vpop.f32.mrf.mxu0
      %v652 = vadd.f32 0.0, %v651
      %v653 = vpop.f32.mrf.mxu0
      %v654 = vadd.f32 0.0, %v653
      %655 = vmatmul.bf16.gmra.mxu0 %v384
      %v656 = vpop.f32.mrf.mxu0
      %v657 = vadd.f32 0.0, %v656
      %v658 = vpop.f32.mrf.mxu0
      %v659 = vadd.f32 0.0, %v658
      %660 = vdwg.mxu0
      %661 = vmatpush.bf16.msra.mxu0 %v563
      %662 = vmatpush.bf16.msra.mxu0 %v562
      %663 = vmatpush.bf16.msra.mxu0 %v561
      %664 = vmatpush.bf16.msra.mxu0 %v560
      %665 = vmatpush.bf16.msra.mxu0 %v559
      %666 = vmatpush.bf16.msra.mxu0 %v558
      %667 = vmatpush.bf16.msra.mxu0 %v557
      %668 = vmatpush.bf16.msra.mxu0 %v556
      %669 = vmatmul.bf16.gmra.mxu0 %v357
      %v670 = vpop.f32.mrf.mxu0
      %v671 = vadd.f32 %v622, %v670
      %v672 = vpop.f32.mrf.mxu0
      %v673 = vadd.f32 %v624, %v672
      %674 = vmatmul.bf16.gmra.mxu0 %v361
      %v675 = vpop.f32.mrf.mxu0
      %v676 = vadd.f32 %v627, %v675
      %v677 = vpop.f32.mrf.mxu0
      %v678 = vadd.f32 %v629, %v677
      %679 = vmatmul.bf16.gmra.mxu0 %v365
      %v680 = vpop.f32.mrf.mxu0
      %v681 = vadd.f32 %v632, %v680
      %v682 = vpop.f32.mrf.mxu0
      %v683 = vadd.f32 %v634, %v682
      %684 = vmatmul.bf16.gmra.mxu0 %v369
      %v685 = vpop.f32.mrf.mxu0
      %v686 = vadd.f32 %v637, %v685
      %v687 = vpop.f32.mrf.mxu0
      %v688 = vadd.f32 %v639, %v687
      %689 = vmatmul.bf16.gmra.mxu0 %v373
      %v690 = vpop.f32.mrf.mxu0
      %v691 = vadd.f32 %v642, %v690
      %v692 = vpop.f32.mrf.mxu0
      %v693 = vadd.f32 %v644, %v692
      %694 = vmatmul.bf16.gmra.mxu0 %v377
      %v695 = vpop.f32.mrf.mxu0
      %v696 = vadd.f32 %v647, %v695
      %v697 = vpop.f32.mrf.mxu0
      %v698 = vadd.f32 %v649, %v697
      %699 = vmatmul.bf16.gmra.mxu0 %v381
      %v700 = vpop.f32.mrf.mxu0
      %v701 = vadd.f32 %v652, %v700
      %v702 = vpop.f32.mrf.mxu0
      %v703 = vadd.f32 %v654, %v702
      %704 = vmatmul.bf16.gmra.mxu0 %v385
      %v705 = vpop.f32.mrf.mxu0
      %v706 = vadd.f32 %v657, %v705
      %v707 = vpop.f32.mrf.mxu0
      %v708 = vadd.f32 %v659, %v707
      %709 = vdwg.mxu0
      %710 = vmatpush.bf16.msra.mxu0 %v571
      %711 = vmatpush.bf16.msra.mxu0 %v570
      %712 = vmatpush.bf16.msra.mxu0 %v569
      %713 = vmatpush.bf16.msra.mxu0 %v568
      %714 = vmatpush.bf16.msra.mxu0 %v567
      %715 = vmatpush.bf16.msra.mxu0 %v566
      %716 = vmatpush.bf16.msra.mxu0 %v565
      %717 = vmatpush.bf16.msra.mxu0 %v564
      %718 = vmatmul.bf16.gmra.mxu0 %v358
      %v719 = vpop.f32.mrf.mxu0
      %v720 = vadd.f32 %v671, %v719
      %v721 = vpop.f32.mrf.mxu0
      %v722 = vadd.f32 %v673, %v721
      %723 = vmatmul.bf16.gmra.mxu0 %v362
      %v724 = vpop.f32.mrf.mxu0
      %v725 = vadd.f32 %v676, %v724
      %v726 = vpop.f32.mrf.mxu0
      %v727 = vadd.f32 %v678, %v726
      %728 = vmatmul.bf16.gmra.mxu0 %v366
      %v729 = vpop.f32.mrf.mxu0
      %v730 = vadd.f32 %v681, %v729
      %v731 = vpop.f32.mrf.mxu0
      %v732 = vadd.f32 %v683, %v731
      %733 = vmatmul.bf16.gmra.mxu0 %v370
      %v734 = vpop.f32.mrf.mxu0
      %v735 = vadd.f32 %v686, %v734
      %v736 = vpop.f32.mrf.mxu0
      %v737 = vadd.f32 %v688, %v736
      %738 = vmatmul.bf16.gmra.mxu0 %v374
      %v739 = vpop.f32.mrf.mxu0
      %v740 = vadd.f32 %v691, %v739
      %v741 = vpop.f32.mrf.mxu0
      %v742 = vadd.f32 %v693, %v741
      %743 = vmatmul.bf16.gmra.mxu0 %v378
      %v744 = vpop.f32.mrf.mxu0
      %v745 = vadd.f32 %v696, %v744
      %v746 = vpop.f32.mrf.mxu0
      %v747 = vadd.f32 %v698, %v746
      %748 = vmatmul.bf16.gmra.mxu0 %v382
      %v749 = vpop.f32.mrf.mxu0
      %v750 = vadd.f32 %v701, %v749
      %v751 = vpop.f32.mrf.mxu0
      %v752 = vadd.f32 %v703, %v751
      %753 = vmatmul.bf16.gmra.mxu0 %v386
      %v754 = vpop.f32.mrf.mxu0
      %v755 = vadd.f32 %v706, %v754
      %v756 = vpop.f32.mrf.mxu0
      %v757 = vadd.f32 %v708, %v756
      %758 = vdwg.mxu0
      %759 = vmatpush.bf16.msra.mxu0 %v579
      %760 = vmatpush.bf16.msra.mxu0 %v578
      %761 = vmatpush.bf16.msra.mxu0 %v577
      %762 = vmatpush.bf16.msra.mxu0 %v576
      %763 = vmatpush.bf16.msra.mxu0 %v575
      %764 = vmatpush.bf16.msra.mxu0 %v574
      %765 = vmatpush.bf16.msra.mxu0 %v573
      %766 = vmatpush.bf16.msra.mxu0 %v572
      %767 = vmatmul.bf16.gmra.mxu0 %v359
      %v768 = vpop.f32.mrf.mxu0
      %v769 = vadd.f32 %v720, %v768
      %v770 = vpop.f32.mrf.mxu0
      %v771 = vadd.f32 %v722, %v770
      %772 = vmatmul.bf16.gmra.mxu0 %v363
      %v773 = vpop.f32.mrf.mxu0
      %v774 = vadd.f32 %v725, %v773
      %v775 = vpop.f32.mrf.mxu0
      %v776 = vadd.f32 %v727, %v775
      %777 = vmatmul.bf16.gmra.mxu0 %v367
      %v778 = vpop.f32.mrf.mxu0
      %v779 = vadd.f32 %v730, %v778
      %v780 = vpop.f32.mrf.mxu0
      %v781 = vadd.f32 %v732, %v780
      %782 = vmatmul.bf16.gmra.mxu0 %v371
      %v783 = vpop.f32.mrf.mxu0
      %v784 = vadd.f32 %v735, %v783
      %v785 = vpop.f32.mrf.mxu0
      %v786 = vadd.f32 %v737, %v785
      %787 = vmatmul.bf16.gmra.mxu0 %v375
      %v788 = vpop.f32.mrf.mxu0
      %v789 = vadd.f32 %v740, %v788
      %v790 = vpop.f32.mrf.mxu0
      %v791 = vadd.f32 %v742, %v790
      %792 = vmatmul.bf16.gmra.mxu0 %v379
      %v793 = vpop.f32.mrf.mxu0
      %v794 = vadd.f32 %v745, %v793
      %v795 = vpop.f32.mrf.mxu0
      %v796 = vadd.f32 %v747, %v795
      %797 = vmatmul.bf16.gmra.mxu0 %v383
      %v798 = vpop.f32.mrf.mxu0
      %v799 = vadd.f32 %v750, %v798
      %v800 = vpop.f32.mrf.mxu0
      %v801 = vadd.f32 %v752, %v800
      %802 = vmatmul.bf16.gmra.mxu0 %v387
      %v803 = vpop.f32.mrf.mxu0
      %v804 = vadd.f32 %v755, %v803
      %v805 = vpop.f32.mrf.mxu0
      %v806 = vadd.f32 %v757, %v805
      %807 = vdwg.mxu0
      %v808 = vmax.f32 %v769, %v779
      %v809 = vmax.f32 %v771, %v781
      %v810 = vmax.f32 %v774, %v784
      %v811 = vmax.f32 %v776, %v786
      %v812 = vmax.f32 %v808, %v809
      %v813 = vmax.f32 %v810, %v811
      %v814 = vmax.f32 %v812, %v813
      %v815 = vrot.slane %v814, 4
      %v816 = vmax.f32 %v814, %v815
      %v817 = vrot.slane %v816, 2
      %v818 = vmax.f32 %v816, %v817
      %v819 = vrot.slane %v818, 1
      %v820 = vmax.f32 %v818, %v819
      %v821 = vsub.f32 %v769, %v820
      %v822 = vsub.f32 %v771, %v820
      %v823 = vsub.f32 %v774, %v820
      %v824 = vsub.f32 %v776, %v820
      %v825 = vsub.f32 %v779, %v820
      %v826 = vsub.f32 %v781, %v820
      %v827 = vsub.f32 %v784, %v820
      %v828 = vsub.f32 %v786, %v820
      %v829 = vmul.f32 %v821, 1.442695
      %v830 = vpow.pop %v829
      %v831 = vmul.f32 %v822, 1.442695
      %v832 = vpow.pop %v831
      %v833 = vmul.f32 %v823, 1.442695
      %v834 = vpow.pop %v833
      %v835 = vmul.f32 %v824, 1.442695
      %v836 = vpow.pop %v835
      %v837 = vmul.f32 %v825, 1.442695
      %v838 = vpow.pop %v837
      %v839 = vmul.f32 %v826, 1.442695
      %v840 = vpow.pop %v839
      %v841 = vmul.f32 %v827, 1.442695
      %v842 = vpow.pop %v841
      %v843 = vmul.f32 %v828, 1.442695
      %v844 = vpow.pop %v843
      %v845 = vadd.f32 %v830, %v832
      %v846 = vadd.f32 %v845, %v834
      %v847 = vadd.f32 %v846, %v836
      %v848 = vadd.f32 %v847, %v838
      %v849 = vadd.f32 %v848, %v840
      %v850 = vadd.f32 %v849, %v842
      %v851 = vadd.f32 %v850, %v844
      %v852 = vrot.slane %v851, 4
      %v853 = vadd.f32 %v851, %v852
      %v854 = vrot.slane %v853, 2
      %v855 = vadd.f32 %v853, %v854
      %v856 = vrot.slane %v855, 1
      %v857 = vadd.f32 %v855, %v856
      %v858 = vrcp.pop %v857
      %v859 = vmul.f32 %v830, %v858
      %v860 = vmul.f32 %v832, %v858
      %v861 = vmul.f32 %v834, %v858
      %v862 = vmul.f32 %v836, %v858
      %v863 = vmul.f32 %v838, %v858
      %v864 = vmul.f32 %v840, %v858
      %v865 = vmul.f32 %v842, %v858
      %v866 = vmul.f32 %v844, %v858
      %867 = vst [vmem:[%s163] sm:$0xff] %v859
      %868 = vst [vmem:[%s163 + $0x8] sm:$0xff] %v860
      %869 = vst [vmem:[%s163 + $0x10] sm:$0xff] %v861
      %870 = vst [vmem:[%s163 + $0x18] sm:$0xff] %v862
      %871 = vst [vmem:[%s163 + $0x20] sm:$0xff] %v863
      %872 = vst [vmem:[%s163 + $0x28] sm:$0xff] %v864
      %873 = vst [vmem:[%s163 + $0x30] sm:$0xff] %v865
      %874 = vst [vmem:[%s163 + $0x38] sm:$0xff] %v866
      %v875 = vmax.f32 %v789, %v799
      %v876 = vmax.f32 %v791, %v801
      %v877 = vmax.f32 %v794, %v804
      %v878 = vmax.f32 %v796, %v806
      %v879 = vmax.f32 %v875, %v876
      %v880 = vmax.f32 %v877, %v878
      %v881 = vmax.f32 %v879, %v880
      %v882 = vrot.slane %v881, 4
      %v883 = vmax.f32 %v881, %v882
      %v884 = vrot.slane %v883, 2
      %v885 = vmax.f32 %v883, %v884
      %v886 = vrot.slane %v885, 1
      %v887 = vmax.f32 %v885, %v886
      %v888 = vsub.f32 %v789, %v887
      %v889 = vsub.f32 %v791, %v887
      %v890 = vsub.f32 %v794, %v887
      %v891 = vsub.f32 %v796, %v887
      %v892 = vsub.f32 %v799, %v887
      %v893 = vsub.f32 %v801, %v887
      %v894 = vsub.f32 %v804, %v887
      %v895 = vsub.f32 %v806, %v887
      %v896 = vmul.f32 %v888, 1.442695
      %v897 = vpow.pop %v896
      %v898 = vmul.f32 %v889, 1.442695
      %v899 = vpow.pop %v898
      %v900 = vmul.f32 %v890, 1.442695
      %v901 = vpow.pop %v900
      %v902 = vmul.f32 %v891, 1.442695
      %v903 = vpow.pop %v902
      %v904 = vmul.f32 %v892, 1.442695
      %v905 = vpow.pop %v904
      %v906 = vmul.f32 %v893, 1.442695
      %v907 = vpow.pop %v906
      %v908 = vmul.f32 %v894, 1.442695
      %v909 = vpow.pop %v908
      %v910 = vmul.f32 %v895, 1.442695
      %v911 = vpow.pop %v910
      %v912 = vadd.f32 %v897, %v899
      %v913 = vadd.f32 %v912, %v901
      %v914 = vadd.f32 %v913, %v903
      %v915 = vadd.f32 %v914, %v905
      %v916 = vadd.f32 %v915, %v907
      %v917 = vadd.f32 %v916, %v909
      %v918 = vadd.f32 %v917, %v911
      %v919 = vrot.slane %v918, 4
      %v920 = vadd.f32 %v918, %v919
      %v921 = vrot.slane %v920, 2
      %v922 = vadd.f32 %v920, %v921
      %v923 = vrot.slane %v922, 1
      %v924 = vadd.f32 %v922, %v923
      %v925 = vrcp.pop %v924
      %v926 = vmul.f32 %v897, %v925
      %v927 = vmul.f32 %v899, %v925
      %v928 = vmul.f32 %v901, %v925
      %v929 = vmul.f32 %v903, %v925
      %v930 = vmul.f32 %v905, %v925
      %v931 = vmul.f32 %v907, %v925
      %v932 = vmul.f32 %v909, %v925
      %v933 = vmul.f32 %v911, %v925
      %s934 = scalar_lea.vmem %s163, 64
      %935 = vst [vmem:[%s934] sm:$0xff] %v926
      %936 = vst [vmem:[%s934 + $0x8] sm:$0xff] %v927
      %937 = vst [vmem:[%s934 + $0x10] sm:$0xff] %v928
      %938 = vst [vmem:[%s934 + $0x18] sm:$0xff] %v929
      %939 = vst [vmem:[%s934 + $0x20] sm:$0xff] %v930
      %940 = vst [vmem:[%s934 + $0x28] sm:$0xff] %v931
      %941 = vst [vmem:[%s934 + $0x30] sm:$0xff] %v932
      %942 = vst [vmem:[%s934 + $0x38] sm:$0xff] %v933
      %p943 = scmp.lt.s32.totalorder %s13, 1
      %s944 = scalar_select %p943, %s13, 1
      %s945 = smul.addr %s944, 16
      %s946 = smul.addr %s945, 8
      %s947 = scalar_lea.vmem %s2, %s946
      // Predicated region
      $region29: #{cycle_time_forward.5} parent=27 // pred_check
        %p948 = pneg %p83
      $region30: #{cycle_time_forward.5} parent=27 // pred_check_branch
        %950 = sbr.rel (%p948) target = $region32
      $region31: #{cycle_time_forward.5} parent=27 // pred_region
        _
      $region32: #{cycle_time_forward.5} parent=27 // pred_fallthru
        _
    $region28: #{cycle_time_forward.5} parent=5 // pred_fallthru
      _
    %p951 = scmp.le.s32.totalorder 2, %s8
    // Predicated region
    $region33: #{cycle_time_forward.5} parent=5 // pred_check
      %p952 = pneg %p951
    $region34: #{cycle_time_forward.5} parent=5 // pred_check_branch
      %954 = sbr.rel (%p952) target = $region36
    $region35: #{cycle_time_forward.5} parent=5 // pred_region
      %s955 = ssub.s32 %s8, 2
      // Predicated region
      $region37: #{cycle_time_forward.5} parent=35 // pred_check
        %p956 = pneg %p89
      $region38: #{cycle_time_forward.5} parent=35 // pred_check_branch
        %958 = sbr.rel (%p956) target = $region40
      $region39: #{cycle_time_forward.5} parent=35 // pred_region
        %p959 = scmp.lt.s32.totalorder %s14, 1
        %s960 = scalar_select %p959, %s14, 1
        %s961 = smul.addr %s960, 16
        %s962 = smul.addr %s961, 8
        %s963 = scalar_lea.vmem %s2, %s962
      $region40: #{cycle_time_forward.5} parent=35 // pred_fallthru
        _
    $region36: #{cycle_time_forward.5} parent=5 // pred_fallthru
      _
  $region6: #{cycle_time_forward.5} parent=0 // loop_footer
    %s12 = sadd.s32 1, %s8
  $region7: #{cycle_time_forward.5} parent=0 // loop_footer_branch
    %7 = sbr.rel target = $region3
  $region8: #{cycle_time_forward.5} parent=0 // loop_exit
    _

// kernel: cycle_time_forward.4
$region0: #{cycle_time_forward.4}
  #allocation0 [shape = 'u32[]', space=smem, size = 0x4, offset = 0x4, fixed_abs, tag = 'smem constant byte address 0x4 - core index']
  #allocation1 [shape = 'u32[72,128]{1,0:T(1,128)}', space=vmem, size = 0x9000, scoped, tag = 'internal scratch']
  %s0 = inlined_call_operand.vmem [shape: bf16[128,1024], index: 0, kind: input, shape index: {}]
  %s1 = inlined_call_operand.vmem [shape: bf16[1024,512], index: 1, kind: input, shape index: {}]
  %s2 = inlined_call_operand.vmem [shape: bf16[128,512], index: 2, kind: output, shape index: {}]
  %s3 = sld [smem:[#allocation0]]
  $region18: #{cycle_time_forward.4} parent=0
    _
  %s5 = ssub.s32 1, %s3
  %s6 = scalar_select 0, %s5, %s3
  // Predicated region
  $region2: #{cycle_time_forward.4} parent=0 // pred_check
    _
  $region3: #{cycle_time_forward.4} parent=0 // pred_check_branch
    %8 = sbr.rel (0) target = $region5
  $region4: #{cycle_time_forward.4} parent=0 // pred_region
    _
  $region5: #{cycle_time_forward.4} parent=0 // pred_fallthru
    _
  // Predicated region
  $region6: #{cycle_time_forward.4} parent=0 // pred_check
    _
  $region7: #{cycle_time_forward.4} parent=0 // pred_check_branch
    %10 = sbr.rel (0) target = $region9
  $region8: #{cycle_time_forward.4} parent=0 // pred_region
    _
  $region9: #{cycle_time_forward.4} parent=0 // pred_fallthru
    _
  %v11 = vld [vmem:[%s0] sm:$0xff]
  %v12 = vld [vmem:[%s0 + $0x8] sm:$0xff]
  %v13 = vld [vmem:[%s0 + $0x10] sm:$0xff]
  %v14 = vld [vmem:[%s0 + $0x18] sm:$0xff]
  %v15 = vld [vmem:[%s0 + $0x20] sm:$0xff]
  %v16 = vld [vmem:[%s0 + $0x28] sm:$0xff]
  %v17 = vld [vmem:[%s0 + $0x30] sm:$0xff]
  %v18 = vld [vmem:[%s0 + $0x38] sm:$0xff]
  %v19 = vld [vmem:[%s0 + $0x40] sm:$0xff]
  %v20 = vld [vmem:[%s0 + $0x48] sm:$0xff]
  %v21 = vld [vmem:[%s0 + $0x50] sm:$0xff]
  %v22 = vld [vmem:[%s0 + $0x58] sm:$0xff]
  %v23 = vld [vmem:[%s0 + $0x60] sm:$0xff]
  %v24 = vld [vmem:[%s0 + $0x68] sm:$0xff]
  %v25 = vld [vmem:[%s0 + $0x70] sm:$0xff]
  %v26 = vld [vmem:[%s0 + $0x78] sm:$0xff]
  %v27 = vld [vmem:[%s0 + $0x80] sm:$0xff]
  %v28 = vld [vmem:[%s0 + $0x88] sm:$0xff]
  %v29 = vld [vmem:[%s0 + $0x90] sm:$0xff]
  %v30 = vld [vmem:[%s0 + $0x98] sm:$0xff]
  %v31 = vld [vmem:[%s0 + $0xa0] sm:$0xff]
  %v32 = vld [vmem:[%s0 + $0xa8] sm:$0xff]
  %v33 = vld [vmem:[%s0 + $0xb0] sm:$0xff]
  %v34 = vld [vmem:[%s0 + $0xb8] sm:$0xff]
  %v35 = vld [vmem:[%s0 + $0xc0] sm:$0xff]
  %v36 = vld [vmem:[%s0 + $0xc8] sm:$0xff]
  %v37 = vld [vmem:[%s0 + $0xd0] sm:$0xff]
  %v38 = vld [vmem:[%s0 + $0xd8] sm:$0xff]
  %v39 = vld [vmem:[%s0 + $0xe0] sm:$0xff]
  %v40 = vld [vmem:[%s0 + $0xe8] sm:$0xff]
  %v41 = vld [vmem:[%s0 + $0xf0] sm:$0xff]
  %v42 = vld [vmem:[%s0 + $0xf8] sm:$0xff]
  %v43 = vld [vmem:[%s0 + $0x100] sm:$0xff]
  %v44 = vld [vmem:[%s0 + $0x108] sm:$0xff]
  %v45 = vld [vmem:[%s0 + $0x110] sm:$0xff]
  %v46 = vld [vmem:[%s0 + $0x118] sm:$0xff]
  %v47 = vld [vmem:[%s0 + $0x120] sm:$0xff]
  %v48 = vld [vmem:[%s0 + $0x128] sm:$0xff]
  %v49 = vld [vmem:[%s0 + $0x130] sm:$0xff]
  %v50 = vld [vmem:[%s0 + $0x138] sm:$0xff]
  %v51 = vld [vmem:[%s0 + $0x140] sm:$0xff]
  %v52 = vld [vmem:[%s0 + $0x148] sm:$0xff]
  %v53 = vld [vmem:[%s0 + $0x150] sm:$0xff]
  %v54 = vld [vmem:[%s0 + $0x158] sm:$0xff]
  %v55 = vld [vmem:[%s0 + $0x160] sm:$0xff]
  %v56 = vld [vmem:[%s0 + $0x168] sm:$0xff]
  %v57 = vld [vmem:[%s0 + $0x170] sm:$0xff]
  %v58 = vld [vmem:[%s0 + $0x178] sm:$0xff]
  %v59 = vld [vmem:[%s0 + $0x180] sm:$0xff]
  %v60 = vld [vmem:[%s0 + $0x188] sm:$0xff]
  %v61 = vld [vmem:[%s0 + $0x190] sm:$0xff]
  %v62 = vld [vmem:[%s0 + $0x198] sm:$0xff]
  %v63 = vld [vmem:[%s0 + $0x1a0] sm:$0xff]
  %v64 = vld [vmem:[%s0 + $0x1a8] sm:$0xff]
  %v65 = vld [vmem:[%s0 + $0x1b0] sm:$0xff]
  %v66 = vld [vmem:[%s0 + $0x1b8] sm:$0xff]
  %v67 = vld [vmem:[%s0 + $0x1c0] sm:$0xff]
  %v68 = vld [vmem:[%s0 + $0x1c8] sm:$0xff]
  %v69 = vld [vmem:[%s0 + $0x1d0] sm:$0xff]
  %v70 = vld [vmem:[%s0 + $0x1d8] sm:$0xff]
  %v71 = vld [vmem:[%s0 + $0x1e0] sm:$0xff]
  %v72 = vld [vmem:[%s0 + $0x1e8] sm:$0xff]
  %v73 = vld [vmem:[%s0 + $0x1f0] sm:$0xff]
  %v74 = vld [vmem:[%s0 + $0x1f8] sm:$0xff]
  %v75 = vld [vmem:[%s1] sm:$0xff]
  %v76 = vld [vmem:[%s1 + $0x8] sm:$0xff]
  %v77 = vld [vmem:[%s1 + $0x10] sm:$0xff]
  %v78 = vld [vmem:[%s1 + $0x18] sm:$0xff]
  %v79 = vld [vmem:[%s1 + $0x20] sm:$0xff]
  %v80 = vld [vmem:[%s1 + $0x28] sm:$0xff]
  %v81 = vld [vmem:[%s1 + $0x30] sm:$0xff]
  %v82 = vld [vmem:[%s1 + $0x38] sm:$0xff]
  %v83 = vld [vmem:[%s1 + $0x40] sm:$0xff]
  %v84 = vld [vmem:[%s1 + $0x48] sm:$0xff]
  %v85 = vld [vmem:[%s1 + $0x50] sm:$0xff]
  %v86 = vld [vmem:[%s1 + $0x58] sm:$0xff]
  %v87 = vld [vmem:[%s1 + $0x60] sm:$0xff]
  %v88 = vld [vmem:[%s1 + $0x68] sm:$0xff]
  %v89 = vld [vmem:[%s1 + $0x70] sm:$0xff]
  %v90 = vld [vmem:[%s1 + $0x78] sm:$0xff]
  %v91 = vld [vmem:[%s1 + $0x80] sm:$0xff]
  %v92 = vld [vmem:[%s1 + $0x88] sm:$0xff]
  %v93 = vld [vmem:[%s1 + $0x90] sm:$0xff]
  %v94 = vld [vmem:[%s1 + $0x98] sm:$0xff]
  %v95 = vld [vmem:[%s1 + $0xa0] sm:$0xff]
  %v96 = vld [vmem:[%s1 + $0xa8] sm:$0xff]
  %v97 = vld [vmem:[%s1 + $0xb0] sm:$0xff]
  %v98 = vld [vmem:[%s1 + $0xb8] sm:$0xff]
  %v99 = vld [vmem:[%s1 + $0xc0] sm:$0xff]
  %v100 = vld [vmem:[%s1 + $0xc8] sm:$0xff]
  %v101 = vld [vmem:[%s1 + $0xd0] sm:$0xff]
  %v102 = vld [vmem:[%s1 + $0xd8] sm:$0xff]
  %v103 = vld [vmem:[%s1 + $0xe0] sm:$0xff]
  %v104 = vld [vmem:[%s1 + $0xe8] sm:$0xff]
  %v105 = vld [vmem:[%s1 + $0xf0] sm:$0xff]
  %v106 = vld [vmem:[%s1 + $0xf8] sm:$0xff]
  %v107 = vld [vmem:[%s1 + $0x100] sm:$0xff]
  %v108 = vld [vmem:[%s1 + $0x108] sm:$0xff]
  %v109 = vld [vmem:[%s1 + $0x110] sm:$0xff]
  %v110 = vld [vmem:[%s1 + $0x118] sm:$0xff]
  %v111 = vld [vmem:[%s1 + $0x120] sm:$0xff]
  %v112 = vld [vmem:[%s1 + $0x128] sm:$0xff]
  %v113 = vld [vmem:[%s1 + $0x130] sm:$0xff]
  %v114 = vld [vmem:[%s1 + $0x138] sm:$0xff]
  %v115 = vld [vmem:[%s1 + $0x140] sm:$0xff]
  %v116 = vld [vmem:[%s1 + $0x148] sm:$0xff]
  %v117 = vld [vmem:[%s1 + $0x150] sm:$0xff]
  %v118 = vld [vmem:[%s1 + $0x158] sm:$0xff]
  %v119 = vld [vmem:[%s1 + $0x160] sm:$0xff]
  %v120 = vld [vmem:[%s1 + $0x168] sm:$0xff]
  %v121 = vld [vmem:[%s1 + $0x170] sm:$0xff]
  %v122 = vld [vmem:[%s1 + $0x178] sm:$0xff]
  %v123 = vld [vmem:[%s1 + $0x180] sm:$0xff]
  %v124 = vld [vmem:[%s1 + $0x188] sm:$0xff]
  %v125 = vld [vmem:[%s1 + $0x190] sm:$0xff]
  %v126 = vld [vmem:[%s1 + $0x198] sm:$0xff]
  %v127 = vld [vmem:[%s1 + $0x1a0] sm:$0xff]
  %v128 = vld [vmem:[%s1 + $0x1a8] sm:$0xff]
  %v129 = vld [vmem:[%s1 + $0x1b0] sm:$0xff]
  %v130 = vld [vmem:[%s1 + $0x1b8] sm:$0xff]
  %v131 = vld [vmem:[%s1 + $0x1c0] sm:$0xff]
  %v132 = vld [vmem:[%s1 + $0x1c8] sm:$0xff]
  %v133 = vld [vmem:[%s1 + $0x1d0] sm:$0xff]
  %v134 = vld [vmem:[%s1 + $0x1d8] sm:$0xff]
  %v135 = vld [vmem:[%s1 + $0x1e0] sm:$0xff]
  %v136 = vld [vmem:[%s1 + $0x1e8] sm:$0xff]
  %v137 = vld [vmem:[%s1 + $0x1f0] sm:$0xff]
  %v138 = vld [vmem:[%s1 + $0x1f8] sm:$0xff]
  %v139 = vld [vmem:[%s1 + $0x200] sm:$0xff]
  %v140 = vld [vmem:[%s1 + $0x208] sm:$0xff]
  %v141 = vld [vmem:[%s1 + $0x210] sm:$0xff]
  %v142 = vld [vmem:[%s1 + $0x218] sm:$0xff]
  %v143 = vld [vmem:[%s1 + $0x220] sm:$0xff]
  %v144 = vld [vmem:[%s1 + $0x228] sm:$0xff]
  %v145 = vld [vmem:[%s1 + $0x230] sm:$0xff]
  %v146 = vld [vmem:[%s1 + $0x238] sm:$0xff]
  %v147 = vld [vmem:[%s1 + $0x240] sm:$0xff]
  %v148 = vld [vmem:[%s1 + $0x248] sm:$0xff]
  %v149 = vld [vmem:[%s1 + $0x250] sm:$0xff]
  %v150 = vld [vmem:[%s1 + $0x258] sm:$0xff]
  %v151 = vld [vmem:[%s1 + $0x260] sm:$0xff]
  %v152 = vld [vmem:[%s1 + $0x268] sm:$0xff]
  %v153 = vld [vmem:[%s1 + $0x270] sm:$0xff]
  %v154 = vld [vmem:[%s1 + $0x278] sm:$0xff]
  %v155 = vld [vmem:[%s1 + $0x280] sm:$0xff]
  %v156 = vld [vmem:[%s1 + $0x288] sm:$0xff]
  %v157 = vld [vmem:[%s1 + $0x290] sm:$0xff]
  %v158 = vld [vmem:[%s1 + $0x298] sm:$0xff]
  %v159 = vld [vmem:[%s1 + $0x2a0] sm:$0xff]
  %v160 = vld [vmem:[%s1 + $0x2a8] sm:$0xff]
  %v161 = vld [vmem:[%s1 + $0x2b0] sm:$0xff]
  %v162 = vld [vmem:[%s1 + $0x2b8] sm:$0xff]
  %v163 = vld [vmem:[%s1 + $0x2c0] sm:$0xff]
  %v164 = vld [vmem:[%s1 + $0x2c8] sm:$0xff]
  %v165 = vld [vmem:[%s1 + $0x2d0] sm:$0xff]
  %v166 = vld [vmem:[%s1 + $0x2d8] sm:$0xff]
  %v167 = vld [vmem:[%s1 + $0x2e0] sm:$0xff]
  %v168 = vld [vmem:[%s1 + $0x2e8] sm:$0xff]
  %v169 = vld [vmem:[%s1 + $0x2f0] sm:$0xff]
  %v170 = vld [vmem:[%s1 + $0x2f8] sm:$0xff]
  %v171 = vld [vmem:[%s1 + $0x300] sm:$0xff]
  %v172 = vld [vmem:[%s1 + $0x308] sm:$0xff]
  %v173 = vld [vmem:[%s1 + $0x310] sm:$0xff]
  %v174 = vld [vmem:[%s1 + $0x318] sm:$0xff]
  %v175 = vld [vmem:[%s1 + $0x320] sm:$0xff]
  %v176 = vld [vmem:[%s1 + $0x328] sm:$0xff]
  %v177 = vld [vmem:[%s1 + $0x330] sm:$0xff]
  %v178 = vld [vmem:[%s1 + $0x338] sm:$0xff]
  %v179 = vld [vmem:[%s1 + $0x340] sm:$0xff]
  %v180 = vld [vmem:[%s1 + $0x348] sm:$0xff]
  %v181 = vld [vmem:[%s1 + $0x350] sm:$0xff]
  %v182 = vld [vmem:[%s1 + $0x358] sm:$0xff]
  %v183 = vld [vmem:[%s1 + $0x360] sm:$0xff]
  %v184 = vld [vmem:[%s1 + $0x368] sm:$0xff]
  %v185 = vld [vmem:[%s1 + $0x370] sm:$0xff]
  %v186 = vld [vmem:[%s1 + $0x378] sm:$0xff]
  %v187 = vld [vmem:[%s1 + $0x380] sm:$0xff]
  %v188 = vld [vmem:[%s1 + $0x388] sm:$0xff]
  %v189 = vld [vmem:[%s1 + $0x390] sm:$0xff]
  %v190 = vld [vmem:[%s1 + $0x398] sm:$0xff]
  %v191 = vld [vmem:[%s1 + $0x3a0] sm:$0xff]
  %v192 = vld [vmem:[%s1 + $0x3a8] sm:$0xff]
  %v193 = vld [vmem:[%s1 + $0x3b0] sm:$0xff]
  %v194 = vld [vmem:[%s1 + $0x3b8] sm:$0xff]
  %v195 = vld [vmem:[%s1 + $0x3c0] sm:$0xff]
  %v196 = vld [vmem:[%s1 + $0x3c8] sm:$0xff]
  %v197 = vld [vmem:[%s1 + $0x3d0] sm:$0xff]
  %v198 = vld [vmem:[%s1 + $0x3d8] sm:$0xff]
  %v199 = vld [vmem:[%s1 + $0x3e0] sm:$0xff]
  %v200 = vld [vmem:[%s1 + $0x3e8] sm:$0xff]
  %v201 = vld [vmem:[%s1 + $0x3f0] sm:$0xff]
  %v202 = vld [vmem:[%s1 + $0x3f8] sm:$0xff]
  %v203 = vld [vmem:[%s1 + $0x400] sm:$0xff]
  %v204 = vld [vmem:[%s1 + $0x408] sm:$0xff]
  %v205 = vld [vmem:[%s1 + $0x410] sm:$0xff]
  %v206 = vld [vmem:[%s1 + $0x418] sm:$0xff]
  %v207 = vld [vmem:[%s1 + $0x420] sm:$0xff]
  %v208 = vld [vmem:[%s1 + $0x428] sm:$0xff]
  %v209 = vld [vmem:[%s1 + $0x430] sm:$0xff]
  %v210 = vld [vmem:[%s1 + $0x438] sm:$0xff]
  %v211 = vld [vmem:[%s1 + $0x440] sm:$0xff]
  %v212 = vld [vmem:[%s1 + $0x448] sm:$0xff]
  %v213 = vld [vmem:[%s1 + $0x450] sm:$0xff]
  %v214 = vld [vmem:[%s1 + $0x458] sm:$0xff]
  %v215 = vld [vmem:[%s1 + $0x460] sm:$0xff]
  %v216 = vld [vmem:[%s1 + $0x468] sm:$0xff]
  %v217 = vld [vmem:[%s1 + $0x470] sm:$0xff]
  %v218 = vld [vmem:[%s1 + $0x478] sm:$0xff]
  %v219 = vld [vmem:[%s1 + $0x480] sm:$0xff]
  %v220 = vld [vmem:[%s1 + $0x488] sm:$0xff]
  %v221 = vld [vmem:[%s1 + $0x490] sm:$0xff]
  %v222 = vld [vmem:[%s1 + $0x498] sm:$0xff]
  %v223 = vld [vmem:[%s1 + $0x4a0] sm:$0xff]
  %v224 = vld [vmem:[%s1 + $0x4a8] sm:$0xff]
  %v225 = vld [vmem:[%s1 + $0x4b0] sm:$0xff]
  %v226 = vld [vmem:[%s1 + $0x4b8] sm:$0xff]
  %v227 = vld [vmem:[%s1 + $0x4c0] sm:$0xff]
  %v228 = vld [vmem:[%s1 + $0x4c8] sm:$0xff]
  %v229 = vld [vmem:[%s1 + $0x4d0] sm:$0xff]
  %v230 = vld [vmem:[%s1 + $0x4d8] sm:$0xff]
  %v231 = vld [vmem:[%s1 + $0x4e0] sm:$0xff]
  %v232 = vld [vmem:[%s1 + $0x4e8] sm:$0xff]
  %v233 = vld [vmem:[%s1 + $0x4f0] sm:$0xff]
  %v234 = vld [vmem:[%s1 + $0x4f8] sm:$0xff]
  %v235 = vld [vmem:[%s1 + $0x500] sm:$0xff]
  %v236 = vld [vmem:[%s1 + $0x508] sm:$0xff]
  %v237 = vld [vmem:[%s1 + $0x510] sm:$0xff]
  %v238 = vld [vmem:[%s1 + $0x518] sm:$0xff]
  %v239 = vld [vmem:[%s1 + $0x520] sm:$0xff]
  %v240 = vld [vmem:[%s1 + $0x528] sm:$0xff]
  %v241 = vld [vmem:[%s1 + $0x530] sm:$0xff]
  %v242 = vld [vmem:[%s1 + $0x538] sm:$0xff]
  %v243 = vld [vmem:[%s1 + $0x540] sm:$0xff]
  %v244 = vld [vmem:[%s1 + $0x548] sm:$0xff]
  %v245 = vld [vmem:[%s1 + $0x550] sm:$0xff]
  %v246 = vld [vmem:[%s1 + $0x558] sm:$0xff]
  %v247 = vld [vmem:[%s1 + $0x560] sm:$0xff]
  %v248 = vld [vmem:[%s1 + $0x568] sm:$0xff]
  %v249 = vld [vmem:[%s1 + $0x570] sm:$0xff]
  %v250 = vld [vmem:[%s1 + $0x578] sm:$0xff]
  %v251 = vld [vmem:[%s1 + $0x580] sm:$0xff]
  %v252 = vld [vmem:[%s1 + $0x588] sm:$0xff]
  %v253 = vld [vmem:[%s1 + $0x590] sm:$0xff]
  %v254 = vld [vmem:[%s1 + $0x598] sm:$0xff]
  %v255 = vld [vmem:[%s1 + $0x5a0] sm:$0xff]
  %v256 = vld [vmem:[%s1 + $0x5a8] sm:$0xff]
  %v257 = vld [vmem:[%s1 + $0x5b0] sm:$0xff]
  %v258 = vld [vmem:[%s1 + $0x5b8] sm:$0xff]
  %v259 = vld [vmem:[%s1 + $0x5c0] sm:$0xff]
  %v260 = vld [vmem:[%s1 + $0x5c8] sm:$0xff]
  %v261 = vld [vmem:[%s1 + $0x5d0] sm:$0xff]
  %v262 = vld [vmem:[%s1 + $0x5d8] sm:$0xff]
  %v263 = vld [vmem:[%s1 + $0x5e0] sm:$0xff]
  %v264 = vld [vmem:[%s1 + $0x5e8] sm:$0xff]
  %v265 = vld [vmem:[%s1 + $0x5f0] sm:$0xff]
  %v266 = vld [vmem:[%s1 + $0x5f8] sm:$0xff]
  %v267 = vld [vmem:[%s1 + $0x600] sm:$0xff]
  %v268 = vld [vmem:[%s1 + $0x608] sm:$0xff]
  %v269 = vld [vmem:[%s1 + $0x610] sm:$0xff]
  %v270 = vld [vmem:[%s1 + $0x618] sm:$0xff]
  %v271 = vld [vmem:[%s1 + $0x620] sm:$0xff]
  %v272 = vld [vmem:[%s1 + $0x628] sm:$0xff]
  %v273 = vld [vmem:[%s1 + $0x630] sm:$0xff]
  %v274 = vld [vmem:[%s1 + $0x638] sm:$0xff]
  %v275 = vld [vmem:[%s1 + $0x640] sm:$0xff]
  %v276 = vld [vmem:[%s1 + $0x648] sm:$0xff]
  %v277 = vld [vmem:[%s1 + $0x650] sm:$0xff]
  %v278 = vld [vmem:[%s1 + $0x658] sm:$0xff]
  %v279 = vld [vmem:[%s1 + $0x660] sm:$0xff]
  %v280 = vld [vmem:[%s1 + $0x668] sm:$0xff]
  %v281 = vld [vmem:[%s1 + $0x670] sm:$0xff]
  %v282 = vld [vmem:[%s1 + $0x678] sm:$0xff]
  %v283 = vld [vmem:[%s1 + $0x680] sm:$0xff]
  %v284 = vld [vmem:[%s1 + $0x688] sm:$0xff]
  %v285 = vld [vmem:[%s1 + $0x690] sm:$0xff]
  %v286 = vld [vmem:[%s1 + $0x698] sm:$0xff]
  %v287 = vld [vmem:[%s1 + $0x6a0] sm:$0xff]
  %v288 = vld [vmem:[%s1 + $0x6a8] sm:$0xff]
  %v289 = vld [vmem:[%s1 + $0x6b0] sm:$0xff]
  %v290 = vld [vmem:[%s1 + $0x6b8] sm:$0xff]
  %v291 = vld [vmem:[%s1 + $0x6c0] sm:$0xff]
  %v292 = vld [vmem:[%s1 + $0x6c8] sm:$0xff]
  %v293 = vld [vmem:[%s1 + $0x6d0] sm:$0xff]
  %v294 = vld [vmem:[%s1 + $0x6d8] sm:$0xff]
  %v295 = vld [vmem:[%s1 + $0x6e0] sm:$0xff]
  %v296 = vld [vmem:[%s1 + $0x6e8] sm:$0xff]
  %v297 = vld [vmem:[%s1 + $0x6f0] sm:$0xff]
  %v298 = vld [vmem:[%s1 + $0x6f8] sm:$0xff]
  %v299 = vld [vmem:[%s1 + $0x700] sm:$0xff]
  %v300 = vld [vmem:[%s1 + $0x708] sm:$0xff]
  %v301 = vld [vmem:[%s1 + $0x710] sm:$0xff]
  %v302 = vld [vmem:[%s1 + $0x718] sm:$0xff]
  %v303 = vld [vmem:[%s1 + $0x720] sm:$0xff]
  %v304 = vld [vmem:[%s1 + $0x728] sm:$0xff]
  %v305 = vld [vmem:[%s1 + $0x730] sm:$0xff]
  %v306 = vld [vmem:[%s1 + $0x738] sm:$0xff]
  %v307 = vld [vmem:[%s1 + $0x740] sm:$0xff]
  %v308 = vld [vmem:[%s1 + $0x748] sm:$0xff]
  %v309 = vld [vmem:[%s1 + $0x750] sm:$0xff]
  %v310 = vld [vmem:[%s1 + $0x758] sm:$0xff]
  %v311 = vld [vmem:[%s1 + $0x760] sm:$0xff]
  %v312 = vld [vmem:[%s1 + $0x768] sm:$0xff]
  %v313 = vld [vmem:[%s1 + $0x770] sm:$0xff]
  %v314 = vld [vmem:[%s1 + $0x778] sm:$0xff]
  %v315 = vld [vmem:[%s1 + $0x780] sm:$0xff]
  %v316 = vld [vmem:[%s1 + $0x788] sm:$0xff]
  %v317 = vld [vmem:[%s1 + $0x790] sm:$0xff]
  %v318 = vld [vmem:[%s1 + $0x798] sm:$0xff]
  %v319 = vld [vmem:[%s1 + $0x7a0] sm:$0xff]
  %v320 = vld [vmem:[%s1 + $0x7a8] sm:$0xff]
  %v321 = vld [vmem:[%s1 + $0x7b0] sm:$0xff]
  %v322 = vld [vmem:[%s1 + $0x7b8] sm:$0xff]
  %v323 = vld [vmem:[%s1 + $0x7c0] sm:$0xff]
  %v324 = vld [vmem:[%s1 + $0x7c8] sm:$0xff]
  %v325 = vld [vmem:[%s1 + $0x7d0] sm:$0xff]
  %v326 = vld [vmem:[%s1 + $0x7d8] sm:$0xff]
  %v327 = vld [vmem:[%s1 + $0x7e0] sm:$0xff]
  %v328 = vld [vmem:[%s1 + $0x7e8] sm:$0xff]
  %v329 = vld [vmem:[%s1 + $0x7f0] sm:$0xff]
  %v330 = vld [vmem:[%s1 + $0x7f8] sm:$0xff]
  %v395 = vunpack.c.l.b16 %v11
  %v396 = vunpack.c.h.b16 %v11
  %v397 = vunpack.c.l.b16 %v12
  %v398 = vunpack.c.h.b16 %v12
  %v399 = vunpack.c.l.b16 %v13
  %v400 = vunpack.c.h.b16 %v13
  %v401 = vunpack.c.l.b16 %v14
  %v402 = vunpack.c.h.b16 %v14
  %v403 = vunpack.c.l.b16 %v15
  %v404 = vunpack.c.h.b16 %v15
  %v405 = vunpack.c.l.b16 %v16
  %v406 = vunpack.c.h.b16 %v16
  %v407 = vunpack.c.l.b16 %v17
  %v408 = vunpack.c.h.b16 %v17
  %v409 = vunpack.c.l.b16 %v18
  %v410 = vunpack.c.h.b16 %v18
  %v411 = vunpack.c.l.b16 %v19
  %v412 = vunpack.c.h.b16 %v19
  %v413 = vunpack.c.l.b16 %v20
  %v414 = vunpack.c.h.b16 %v20
  %v415 = vunpack.c.l.b16 %v21
  %v416 = vunpack.c.h.b16 %v21
  %v417 = vunpack.c.l.b16 %v22
  %v418 = vunpack.c.h.b16 %v22
  %v419 = vunpack.c.l.b16 %v23
  %v420 = vunpack.c.h.b16 %v23
  %v421 = vunpack.c.l.b16 %v24
  %v422 = vunpack.c.h.b16 %v24
  %v423 = vunpack.c.l.b16 %v25
  %v424 = vunpack.c.h.b16 %v25
  %v425 = vunpack.c.l.b16 %v26
  %v426 = vunpack.c.h.b16 %v26
  %v427 = vunpack.c.l.b16 %v27
  %v428 = vunpack.c.h.b16 %v27
  %v429 = vunpack.c.l.b16 %v28
  %v430 = vunpack.c.h.b16 %v28
  %v431 = vunpack.c.l.b16 %v29
  %v432 = vunpack.c.h.b16 %v29
  %v433 = vunpack.c.l.b16 %v30
  %v434 = vunpack.c.h.b16 %v30
  %v435 = vunpack.c.l.b16 %v31
  %v436 = vunpack.c.h.b16 %v31
  %v437 = vunpack.c.l.b16 %v32
  %v438 = vunpack.c.h.b16 %v32
  %v439 = vunpack.c.l.b16 %v33
  %v440 = vunpack.c.h.b16 %v33
  %v441 = vunpack.c.l.b16 %v34
  %v442 = vunpack.c.h.b16 %v34
  %v443 = vunpack.c.l.b16 %v35
  %v444 = vunpack.c.h.b16 %v35
  %v445 = vunpack.c.l.b16 %v36
  %v446 = vunpack.c.h.b16 %v36
  %v447 = vunpack.c.l.b16 %v37
  %v448 = vunpack.c.h.b16 %v37
  %v449 = vunpack.c.l.b16 %v38
  %v450 = vunpack.c.h.b16 %v38
  %v451 = vunpack.c.l.b16 %v39
  %v452 = vunpack.c.h.b16 %v39
  %v453 = vunpack.c.l.b16 %v40
  %v454 = vunpack.c.h.b16 %v40
  %v455 = vunpack.c.l.b16 %v41
  %v456 = vunpack.c.h.b16 %v41
  %v457 = vunpack.c.l.b16 %v42
  %v458 = vunpack.c.h.b16 %v42
  %v459 = vunpack.c.l.b16 %v43
  %v460 = vunpack.c.h.b16 %v43
  %v461 = vunpack.c.l.b16 %v44
  %v462 = vunpack.c.h.b16 %v44
  %v463 = vunpack.c.l.b16 %v45
  %v464 = vunpack.c.h.b16 %v45
  %v465 = vunpack.c.l.b16 %v46
  %v466 = vunpack.c.h.b16 %v46
  %v467 = vunpack.c.l.b16 %v47
  %v468 = vunpack.c.h.b16 %v47
  %v469 = vunpack.c.l.b16 %v48
  %v470 = vunpack.c.h.b16 %v48
  %v471 = vunpack.c.l.b16 %v49
  %v472 = vunpack.c.h.b16 %v49
  %v473 = vunpack.c.l.b16 %v50
  %v474 = vunpack.c.h.b16 %v50
  %v475 = vunpack.c.l.b16 %v51
  %v476 = vunpack.c.h.b16 %v51
  %v477 = vunpack.c.l.b16 %v52
  %v478 = vunpack.c.h.b16 %v52
  %v479 = vunpack.c.l.b16 %v53
  %v480 = vunpack.c.h.b16 %v53
  %v481 = vunpack.c.l.b16 %v54
  %v482 = vunpack.c.h.b16 %v54
  %v483 = vunpack.c.l.b16 %v55
  %v484 = vunpack.c.h.b16 %v55
  %v485 = vunpack.c.l.b16 %v56
  %v486 = vunpack.c.h.b16 %v56
  %v487 = vunpack.c.l.b16 %v57
  %v488 = vunpack.c.h.b16 %v57
  %v489 = vunpack.c.l.b16 %v58
  %v490 = vunpack.c.h.b16 %v58
  %v491 = vunpack.c.l.b16 %v59
  %v492 = vunpack.c.h.b16 %v59
  %v493 = vunpack.c.l.b16 %v60
  %v494 = vunpack.c.h.b16 %v60
  %v495 = vunpack.c.l.b16 %v61
  %v496 = vunpack.c.h.b16 %v61
  %v497 = vunpack.c.l.b16 %v62
  %v498 = vunpack.c.h.b16 %v62
  %v499 = vunpack.c.l.b16 %v63
  %v500 = vunpack.c.h.b16 %v63
  %v501 = vunpack.c.l.b16 %v64
  %v502 = vunpack.c.h.b16 %v64
  %v503 = vunpack.c.l.b16 %v65
  %v504 = vunpack.c.h.b16 %v65
  %v505 = vunpack.c.l.b16 %v66
  %v506 = vunpack.c.h.b16 %v66
  %v507 = vunpack.c.l.b16 %v67
  %v508 = vunpack.c.h.b16 %v67
  %v509 = vunpack.c.l.b16 %v68
  %v510 = vunpack.c.h.b16 %v68
  %v511 = vunpack.c.l.b16 %v69
  %v512 = vunpack.c.h.b16 %v69
  %v513 = vunpack.c.l.b16 %v70
  %v514 = vunpack.c.h.b16 %v70
  %v515 = vunpack.c.l.b16 %v71
  %v516 = vunpack.c.h.b16 %v71
  %v517 = vunpack.c.l.b16 %v72
  %v518 = vunpack.c.h.b16 %v72
  %v519 = vunpack.c.l.b16 %v73
  %v520 = vunpack.c.h.b16 %v73
  %v521 = vunpack.c.l.b16 %v74
  %v522 = vunpack.c.h.b16 %v74
  %v523 = vpack.c.b16 %v403, %v395
  %v524 = vpack.c.b16 %v404, %v396
  %v525 = vpack.c.b16 %v405, %v397
  %v526 = vpack.c.b16 %v406, %v398
  %v527 = vpack.c.b16 %v407, %v399
  %v528 = vpack.c.b16 %v408, %v400
  %v529 = vpack.c.b16 %v409, %v401
  %v530 = vpack.c.b16 %v410, %v402
  %v531 = vpack.c.b16 %v419, %v411
  %v532 = vpack.c.b16 %v420, %v412
  %v533 = vpack.c.b16 %v421, %v413
  %v534 = vpack.c.b16 %v422, %v414
  %v535 = vpack.c.b16 %v423, %v415
  %v536 = vpack.c.b16 %v424, %v416
  %v537 = vpack.c.b16 %v425, %v417
  %v538 = vpack.c.b16 %v426, %v418
  %v539 = vpack.c.b16 %v435, %v427
  %v540 = vpack.c.b16 %v436, %v428
  %v541 = vpack.c.b16 %v437, %v429
  %v542 = vpack.c.b16 %v438, %v430
  %v543 = vpack.c.b16 %v439, %v431
  %v544 = vpack.c.b16 %v440, %v432
  %v545 = vpack.c.b16 %v441, %v433
  %v546 = vpack.c.b16 %v442, %v434
  %v547 = vpack.c.b16 %v451, %v443
  %v548 = vpack.c.b16 %v452, %v444
  %v549 = vpack.c.b16 %v453, %v445
  %v550 = vpack.c.b16 %v454, %v446
  %v551 = vpack.c.b16 %v455, %v447
  %v552 = vpack.c.b16 %v456, %v448
  %v553 = vpack.c.b16 %v457, %v449
  %v554 = vpack.c.b16 %v458, %v450
  %v555 = vpack.c.b16 %v467, %v459
  %v556 = vpack.c.b16 %v468, %v460
  %v557 = vpack.c.b16 %v469, %v461
  %v558 = vpack.c.b16 %v470, %v462
  %v559 = vpack.c.b16 %v471, %v463
  %v560 = vpack.c.b16 %v472, %v464
  %v561 = vpack.c.b16 %v473, %v465
  %v562 = vpack.c.b16 %v474, %v466
  %v563 = vpack.c.b16 %v483, %v475
  %v564 = vpack.c.b16 %v484, %v476
  %v565 = vpack.c.b16 %v485, %v477
  %v566 = vpack.c.b16 %v486, %v478
  %v567 = vpack.c.b16 %v487, %v479
  %v568 = vpack.c.b16 %v488, %v480
  %v569 = vpack.c.b16 %v489, %v481
  %v570 = vpack.c.b16 %v490, %v482
  %v571 = vpack.c.b16 %v499, %v491
  %v572 = vpack.c.b16 %v500, %v492
  %v573 = vpack.c.b16 %v501, %v493
  %v574 = vpack.c.b16 %v502, %v494
  %v575 = vpack.c.b16 %v503, %v495
  %v576 = vpack.c.b16 %v504, %v496
  %v577 = vpack.c.b16 %v505, %v497
  %v578 = vpack.c.b16 %v506, %v498
  %v579 = vpack.c.b16 %v515, %v507
  %v580 = vpack.c.b16 %v516, %v508
  %v581 = vpack.c.b16 %v517, %v509
  %v582 = vpack.c.b16 %v518, %v510
  %v583 = vpack.c.b16 %v519, %v511
  %v584 = vpack.c.b16 %v520, %v512
  %v585 = vpack.c.b16 %v521, %v513
  %v586 = vpack.c.b16 %v522, %v514
  %v907 = vunpack.c.l.b16 %v75
  %v908 = vunpack.c.h.b16 %v75
  %v909 = vunpack.c.l.b16 %v76
  %v910 = vunpack.c.h.b16 %v76
  %v911 = vunpack.c.l.b16 %v77
  %v912 = vunpack.c.h.b16 %v77
  %v913 = vunpack.c.l.b16 %v78
  %v914 = vunpack.c.h.b16 %v78
  %v915 = vunpack.c.l.b16 %v79
  %v916 = vunpack.c.h.b16 %v79
  %v917 = vunpack.c.l.b16 %v80
  %v918 = vunpack.c.h.b16 %v80
  %v919 = vunpack.c.l.b16 %v81
  %v920 = vunpack.c.h.b16 %v81
  %v921 = vunpack.c.l.b16 %v82
  %v922 = vunpack.c.h.b16 %v82
  %v923 = vunpack.c.l.b16 %v83
  %v924 = vunpack.c.h.b16 %v83
  %v925 = vunpack.c.l.b16 %v84
  %v926 = vunpack.c.h.b16 %v84
  %v927 = vunpack.c.l.b16 %v85
  %v928 = vunpack.c.h.b16 %v85
  %v929 = vunpack.c.l.b16 %v86
  %v930 = vunpack.c.h.b16 %v86
  %v931 = vunpack.c.l.b16 %v87
  %v932 = vunpack.c.h.b16 %v87
  %v933 = vunpack.c.l.b16 %v88
  %v934 = vunpack.c.h.b16 %v88
  %v935 = vunpack.c.l.b16 %v89
  %v936 = vunpack.c.h.b16 %v89
  %v937 = vunpack.c.l.b16 %v90
  %v938 = vunpack.c.h.b16 %v90
  %v939 = vunpack.c.l.b16 %v91
  %v940 = vunpack.c.h.b16 %v91
  %v941 = vunpack.c.l.b16 %v92
  %v942 = vunpack.c.h.b16 %v92
  %v943 = vunpack.c.l.b16 %v93
  %v944 = vunpack.c.h.b16 %v93
  %v945 = vunpack.c.l.b16 %v94
  %v946 = vunpack.c.h.b16 %v94
  %v947 = vunpack.c.l.b16 %v95
  %v948 = vunpack.c.h.b16 %v95
  %v949 = vunpack.c.l.b16 %v96
  %v950 = vunpack.c.h.b16 %v96
  %v951 = vunpack.c.l.b16 %v97
  %v952 = vunpack.c.h.b16 %v97
  %v953 = vunpack.c.l.b16 %v98
  %v954 = vunpack.c.h.b16 %v98
  %v955 = vunpack.c.l.b16 %v99
  %v956 = vunpack.c.h.b16 %v99
  %v957 = vunpack.c.l.b16 %v100
  %v958 = vunpack.c.h.b16 %v100
  %v959 = vunpack.c.l.b16 %v101
  %v960 = vunpack.c.h.b16 %v101
  %v961 = vunpack.c.l.b16 %v102
  %v962 = vunpack.c.h.b16 %v102
  %v963 = vunpack.c.l.b16 %v103
  %v964 = vunpack.c.h.b16 %v103
  %v965 = vunpack.c.l.b16 %v104
  %v966 = vunpack.c.h.b16 %v104
  %v967 = vunpack.c.l.b16 %v105
  %v968 = vunpack.c.h.b16 %v105
  %v969 = vunpack.c.l.b16 %v106
  %v970 = vunpack.c.h.b16 %v106
  %v971 = vunpack.c.l.b16 %v107
  %v972 = vunpack.c.h.b16 %v107
  %v973 = vunpack.c.l.b16 %v108
  %v974 = vunpack.c.h.b16 %v108
  %v975 = vunpack.c.l.b16 %v109
  %v976 = vunpack.c.h.b16 %v109
  %v977 = vunpack.c.l.b16 %v110
  %v978 = vunpack.c.h.b16 %v110
  %v979 = vunpack.c.l.b16 %v111
  %v980 = vunpack.c.h.b16 %v111
  %v981 = vunpack.c.l.b16 %v112
  %v982 = vunpack.c.h.b16 %v112
  %v983 = vunpack.c.l.b16 %v113
  %v984 = vunpack.c.h.b16 %v113
  %v985 = vunpack.c.l.b16 %v114
  %v986 = vunpack.c.h.b16 %v114
  %v987 = vunpack.c.l.b16 %v115
  %v988 = vunpack.c.h.b16 %v115
  %v989 = vunpack.c.l.b16 %v116
  %v990 = vunpack.c.h.b16 %v116
  %v991 = vunpack.c.l.b16 %v117
  %v992 = vunpack.c.h.b16 %v117
  %v993 = vunpack.c.l.b16 %v118
  %v994 = vunpack.c.h.b16 %v118
  %v995 = vunpack.c.l.b16 %v119
  %v996 = vunpack.c.h.b16 %v119
  %v997 = vunpack.c.l.b16 %v120
  %v998 = vunpack.c.h.b16 %v120
  %v999 = vunpack.c.l.b16 %v121
  %v1000 = vunpack.c.h.b16 %v121
  %v1001 = vunpack.c.l.b16 %v122
  %v1002 = vunpack.c.h.b16 %v122
  %v1003 = vunpack.c.l.b16 %v123
  %v1004 = vunpack.c.h.b16 %v123
  %v1005 = vunpack.c.l.b16 %v124
  %v1006 = vunpack.c.h.b16 %v124
  %v1007 = vunpack.c.l.b16 %v125
  %v1008 = vunpack.c.h.b16 %v125
  %v1009 = vunpack.c.l.b16 %v126
  %v1010 = vunpack.c.h.b16 %v126
  %v1011 = vunpack.c.l.b16 %v127
  %v1012 = vunpack.c.h.b16 %v127
  %v1013 = vunpack.c.l.b16 %v128
  %v1014 = vunpack.c.h.b16 %v128
  %v1015 = vunpack.c.l.b16 %v129
  %v1016 = vunpack.c.h.b16 %v129
  %v1017 = vunpack.c.l.b16 %v130
  %v1018 = vunpack.c.h.b16 %v130
  %v1019 = vunpack.c.l.b16 %v131
  %v1020 = vunpack.c.h.b16 %v131
  %v1021 = vunpack.c.l.b16 %v132
  %v1022 = vunpack.c.h.b16 %v132
  %v1023 = vunpack.c.l.b16 %v133
  %v1024 = vunpack.c.h.b16 %v133
  %v1025 = vunpack.c.l.b16 %v134
  %v1026 = vunpack.c.h.b16 %v134
  %v1027 = vunpack.c.l.b16 %v135
  %v1028 = vunpack.c.h.b16 %v135
  %v1029 = vunpack.c.l.b16 %v136
  %v1030 = vunpack.c.h.b16 %v136
  %v1031 = vunpack.c.l.b16 %v137
  %v1032 = vunpack.c.h.b16 %v137
  %v1033 = vunpack.c.l.b16 %v138
  %v1034 = vunpack.c.h.b16 %v138
  %v1035 = vunpack.c.l.b16 %v139
  %v1036 = vunpack.c.h.b16 %v139
  %v1037 = vunpack.c.l.b16 %v140
  %v1038 = vunpack.c.h.b16 %v140
  %v1039 = vunpack.c.l.b16 %v141
  %v1040 = vunpack.c.h.b16 %v141
  %v1041 = vunpack.c.l.b16 %v142
  %v1042 = vunpack.c.h.b16 %v142
  %v1043 = vunpack.c.l.b16 %v143
  %v1044 = vunpack.c.h.b16 %v143
  %v1045 = vunpack.c.l.b16 %v144
  %v1046 = vunpack.c.h.b16 %v144
  %v1047 = vunpack.c.l.b16 %v145
  %v1048 = vunpack.c.h.b16 %v145
  %v1049 = vunpack.c.l.b16 %v146
  %v1050 = vunpack.c.h.b16 %v146
  %v1051 = vunpack.c.l.b16 %v147
  %v1052 = vunpack.c.h.b16 %v147
  %v1053 = vunpack.c.l.b16 %v148
  %v1054 = vunpack.c.h.b16 %v148
  %v1055 = vunpack.c.l.b16 %v149
  %v1056 = vunpack.c.h.b16 %v149
  %v1057 = vunpack.c.l.b16 %v150
  %v1058 = vunpack.c.h.b16 %v150
  %v1059 = vunpack.c.l.b16 %v151
  %v1060 = vunpack.c.h.b16 %v151
  %v1061 = vunpack.c.l.b16 %v152
  %v1062 = vunpack.c.h.b16 %v152
  %v1063 = vunpack.c.l.b16 %v153
  %v1064 = vunpack.c.h.b16 %v153
  %v1065 = vunpack.c.l.b16 %v154
  %v1066 = vunpack.c.h.b16 %v154
  %v1067 = vunpack.c.l.b16 %v155
  %v1068 = vunpack.c.h.b16 %v155
  %v1069 = vunpack.c.l.b16 %v156
  %v1070 = vunpack.c.h.b16 %v156
  %v1071 = vunpack.c.l.b16 %v157
  %v1072 = vunpack.c.h.b16 %v157
  %v1073 = vunpack.c.l.b16 %v158
  %v1074 = vunpack.c.h.b16 %v158
  %v1075 = vunpack.c.l.b16 %v159
  %v1076 = vunpack.c.h.b16 %v159
  %v1077 = vunpack.c.l.b16 %v160
  %v1078 = vunpack.c.h.b16 %v160
  %v1079 = vunpack.c.l.b16 %v161
  %v1080 = vunpack.c.h.b16 %v161
  %v1081 = vunpack.c.l.b16 %v162
  %v1082 = vunpack.c.h.b16 %v162
  %v1083 = vunpack.c.l.b16 %v163
  %v1084 = vunpack.c.h.b16 %v163
  %v1085 = vunpack.c.l.b16 %v164
  %v1086 = vunpack.c.h.b16 %v164
  %v1087 = vunpack.c.l.b16 %v165
  %v1088 = vunpack.c.h.b16 %v165
  %v1089 = vunpack.c.l.b16 %v166
  %v1090 = vunpack.c.h.b16 %v166
  %v1091 = vunpack.c.l.b16 %v167
  %v1092 = vunpack.c.h.b16 %v167
  %v1093 = vunpack.c.l.b16 %v168
  %v1094 = vunpack.c.h.b16 %v168
  %v1095 = vunpack.c.l.b16 %v169
  %v1096 = vunpack.c.h.b16 %v169
  %v1097 = vunpack.c.l.b16 %v170
  %v1098 = vunpack.c.h.b16 %v170
  %v1099 = vunpack.c.l.b16 %v171
  %v1100 = vunpack.c.h.b16 %v171
  %v1101 = vunpack.c.l.b16 %v172
  %v1102 = vunpack.c.h.b16 %v172
  %v1103 = vunpack.c.l.b16 %v173
  %v1104 = vunpack.c.h.b16 %v173
  %v1105 = vunpack.c.l.b16 %v174
  %v1106 = vunpack.c.h.b16 %v174
  %v1107 = vunpack.c.l.b16 %v175
  %v1108 = vunpack.c.h.b16 %v175
  %v1109 = vunpack.c.l.b16 %v176
  %v1110 = vunpack.c.h.b16 %v176
  %v1111 = vunpack.c.l.b16 %v177
  %v1112 = vunpack.c.h.b16 %v177
  %v1113 = vunpack.c.l.b16 %v178
  %v1114 = vunpack.c.h.b16 %v178
  %v1115 = vunpack.c.l.b16 %v179
  %v1116 = vunpack.c.h.b16 %v179
  %v1117 = vunpack.c.l.b16 %v180
  %v1118 = vunpack.c.h.b16 %v180
  %v1119 = vunpack.c.l.b16 %v181
  %v1120 = vunpack.c.h.b16 %v181
  %v1121 = vunpack.c.l.b16 %v182
  %v1122 = vunpack.c.h.b16 %v182
  %v1123 = vunpack.c.l.b16 %v183
  %v1124 = vunpack.c.h.b16 %v183
  %v1125 = vunpack.c.l.b16 %v184
  %v1126 = vunpack.c.h.b16 %v184
  %v1127 = vunpack.c.l.b16 %v185
  %v1128 = vunpack.c.h.b16 %v185
  %v1129 = vunpack.c.l.b16 %v186
  %v1130 = vunpack.c.h.b16 %v186
  %v1131 = vunpack.c.l.b16 %v187
  %v1132 = vunpack.c.h.b16 %v187
  %v1133 = vunpack.c.l.b16 %v188
  %v1134 = vunpack.c.h.b16 %v188
  %v1135 = vunpack.c.l.b16 %v189
  %v1136 = vunpack.c.h.b16 %v189
  %v1137 = vunpack.c.l.b16 %v190
  %v1138 = vunpack.c.h.b16 %v190
  %v1139 = vunpack.c.l.b16 %v191
  %v1140 = vunpack.c.h.b16 %v191
  %v1141 = vunpack.c.l.b16 %v192
  %v1142 = vunpack.c.h.b16 %v192
  %v1143 = vunpack.c.l.b16 %v193
  %v1144 = vunpack.c.h.b16 %v193
  %v1145 = vunpack.c.l.b16 %v194
  %v1146 = vunpack.c.h.b16 %v194
  %v1147 = vunpack.c.l.b16 %v195
  %v1148 = vunpack.c.h.b16 %v195
  %v1149 = vunpack.c.l.b16 %v196
  %v1150 = vunpack.c.h.b16 %v196
  %v1151 = vunpack.c.l.b16 %v197
  %v1152 = vunpack.c.h.b16 %v197
  %v1153 = vunpack.c.l.b16 %v198
  %v1154 = vunpack.c.h.b16 %v198
  %v1155 = vunpack.c.l.b16 %v199
  %v1156 = vunpack.c.h.b16 %v199
  %v1157 = vunpack.c.l.b16 %v200
  %v1158 = vunpack.c.h.b16 %v200
  %v1159 = vunpack.c.l.b16 %v201
  %v1160 = vunpack.c.h.b16 %v201
  %v1161 = vunpack.c.l.b16 %v202
  %v1162 = vunpack.c.h.b16 %v202
  %v1163 = vunpack.c.l.b16 %v203
  %v1164 = vunpack.c.h.b16 %v203
  %v1165 = vunpack.c.l.b16 %v204
  %v1166 = vunpack.c.h.b16 %v204
  %v1167 = vunpack.c.l.b16 %v205
  %v1168 = vunpack.c.h.b16 %v205
  %v1169 = vunpack.c.l.b16 %v206
  %v1170 = vunpack.c.h.b16 %v206
  %v1171 = vunpack.c.l.b16 %v207
  %v1172 = vunpack.c.h.b16 %v207
  %v1173 = vunpack.c.l.b16 %v208
  %v1174 = vunpack.c.h.b16 %v208
  %v1175 = vunpack.c.l.b16 %v209
  %v1176 = vunpack.c.h.b16 %v209
  %v1177 = vunpack.c.l.b16 %v210
  %v1178 = vunpack.c.h.b16 %v210
  %v1179 = vunpack.c.l.b16 %v211
  %v1180 = vunpack.c.h.b16 %v211
  %v1181 = vunpack.c.l.b16 %v212
  %v1182 = vunpack.c.h.b16 %v212
  %v1183 = vunpack.c.l.b16 %v213
  %v1184 = vunpack.c.h.b16 %v213
  %v1185 = vunpack.c.l.b16 %v214
  %v1186 = vunpack.c.h.b16 %v214
  %v1187 = vunpack.c.l.b16 %v215
  %v1188 = vunpack.c.h.b16 %v215
  %v1189 = vunpack.c.l.b16 %v216
  %v1190 = vunpack.c.h.b16 %v216
  %v1191 = vunpack.c.l.b16 %v217
  %v1192 = vunpack.c.h.b16 %v217
  %v1193 = vunpack.c.l.b16 %v218
  %v1194 = vunpack.c.h.b16 %v218
  %v1195 = vunpack.c.l.b16 %v219
  %v1196 = vunpack.c.h.b16 %v219
  %v1197 = vunpack.c.l.b16 %v220
  %v1198 = vunpack.c.h.b16 %v220
  %v1199 = vunpack.c.l.b16 %v221
  %v1200 = vunpack.c.h.b16 %v221
  %v1201 = vunpack.c.l.b16 %v222
  %v1202 = vunpack.c.h.b16 %v222
  %v1203 = vunpack.c.l.b16 %v223
  %v1204 = vunpack.c.h.b16 %v223
  %v1205 = vunpack.c.l.b16 %v224
  %v1206 = vunpack.c.h.b16 %v224
  %v1207 = vunpack.c.l.b16 %v225
  %v1208 = vunpack.c.h.b16 %v225
  %v1209 = vunpack.c.l.b16 %v226
  %v1210 = vunpack.c.h.b16 %v226
  %v1211 = vunpack.c.l.b16 %v227
  %v1212 = vunpack.c.h.b16 %v227
  %v1213 = vunpack.c.l.b16 %v228
  %v1214 = vunpack.c.h.b16 %v228
  %v1215 = vunpack.c.l.b16 %v229
  %v1216 = vunpack.c.h.b16 %v229
  %v1217 = vunpack.c.l.b16 %v230
  %v1218 = vunpack.c.h.b16 %v230
  %v1219 = vunpack.c.l.b16 %v231
  %v1220 = vunpack.c.h.b16 %v231
  %v1221 = vunpack.c.l.b16 %v232
  %v1222 = vunpack.c.h.b16 %v232
  %v1223 = vunpack.c.l.b16 %v233
  %v1224 = vunpack.c.h.b16 %v233
  %v1225 = vunpack.c.l.b16 %v234
  %v1226 = vunpack.c.h.b16 %v234
  %v1227 = vunpack.c.l.b16 %v235
  %v1228 = vunpack.c.h.b16 %v235
  %v1229 = vunpack.c.l.b16 %v236
  %v1230 = vunpack.c.h.b16 %v236
  %v1231 = vunpack.c.l.b16 %v237
  %v1232 = vunpack.c.h.b16 %v237
  %v1233 = vunpack.c.l.b16 %v238
  %v1234 = vunpack.c.h.b16 %v238
  %v1235 = vunpack.c.l.b16 %v239
  %v1236 = vunpack.c.h.b16 %v239
  %v1237 = vunpack.c.l.b16 %v240
  %v1238 = vunpack.c.h.b16 %v240
  %v1239 = vunpack.c.l.b16 %v241
  %v1240 = vunpack.c.h.b16 %v241
  %v1241 = vunpack.c.l.b16 %v242
  %v1242 = vunpack.c.h.b16 %v242
  %v1243 = vunpack.c.l.b16 %v243
  %v1244 = vunpack.c.h.b16 %v243
  %v1245 = vunpack.c.l.b16 %v244
  %v1246 = vunpack.c.h.b16 %v244
  %v1247 = vunpack.c.l.b16 %v245
  %v1248 = vunpack.c.h.b16 %v245
  %v1249 = vunpack.c.l.b16 %v246
  %v1250 = vunpack.c.h.b16 %v246
  %v1251 = vunpack.c.l.b16 %v247
  %v1252 = vunpack.c.h.b16 %v247
  %v1253 = vunpack.c.l.b16 %v248
  %v1254 = vunpack.c.h.b16 %v248
  %v1255 = vunpack.c.l.b16 %v249
  %v1256 = vunpack.c.h.b16 %v249
  %v1257 = vunpack.c.l.b16 %v250
  %v1258 = vunpack.c.h.b16 %v250
  %v1259 = vunpack.c.l.b16 %v251
  %v1260 = vunpack.c.h.b16 %v251
  %v1261 = vunpack.c.l.b16 %v252
  %v1262 = vunpack.c.h.b16 %v252
  %v1263 = vunpack.c.l.b16 %v253
  %v1264 = vunpack.c.h.b16 %v253
  %v1265 = vunpack.c.l.b16 %v254
  %v1266 = vunpack.c.h.b16 %v254
  %v1267 = vunpack.c.l.b16 %v255
  %v1268 = vunpack.c.h.b16 %v255
  %v1269 = vunpack.c.l.b16 %v256
  %v1270 = vunpack.c.h.b16 %v256
  %v1271 = vunpack.c.l.b16 %v257
  %v1272 = vunpack.c.h.b16 %v257
  %v1273 = vunpack.c.l.b16 %v258
  %v1274 = vunpack.c.h.b16 %v258
  %v1275 = vunpack.c.l.b16 %v259
  %v1276 = vunpack.c.h.b16 %v259
  %v1277 = vunpack.c.l.b16 %v260
  %v1278 = vunpack.c.h.b16 %v260
  %v1279 = vunpack.c.l.b16 %v261
  %v1280 = vunpack.c.h.b16 %v261
  %v1281 = vunpack.c.l.b16 %v262
  %v1282 = vunpack.c.h.b16 %v262
  %v1283 = vunpack.c.l.b16 %v263
  %v1284 = vunpack.c.h.b16 %v263
  %v1285 = vunpack.c.l.b16 %v264
  %v1286 = vunpack.c.h.b16 %v264
  %v1287 = vunpack.c.l.b16 %v265
  %v1288 = vunpack.c.h.b16 %v265
  %v1289 = vunpack.c.l.b16 %v266
  %v1290 = vunpack.c.h.b16 %v266
  %v1291 = vunpack.c.l.b16 %v267
  %v1292 = vunpack.c.h.b16 %v267
  %v1293 = vunpack.c.l.b16 %v268
  %v1294 = vunpack.c.h.b16 %v268
  %v1295 = vunpack.c.l.b16 %v269
  %v1296 = vunpack.c.h.b16 %v269
  %v1297 = vunpack.c.l.b16 %v270
  %v1298 = vunpack.c.h.b16 %v270
  %v1299 = vunpack.c.l.b16 %v271
  %v1300 = vunpack.c.h.b16 %v271
  %v1301 = vunpack.c.l.b16 %v272
  %v1302 = vunpack.c.h.b16 %v272
  %v1303 = vunpack.c.l.b16 %v273
  %v1304 = vunpack.c.h.b16 %v273
  %v1305 = vunpack.c.l.b16 %v274
  %v1306 = vunpack.c.h.b16 %v274
  %v1307 = vunpack.c.l.b16 %v275
  %v1308 = vunpack.c.h.b16 %v275
  %v1309 = vunpack.c.l.b16 %v276
  %v1310 = vunpack.c.h.b16 %v276
  %v1311 = vunpack.c.l.b16 %v277
  %v1312 = vunpack.c.h.b16 %v277
  %v1313 = vunpack.c.l.b16 %v278
  %v1314 = vunpack.c.h.b16 %v278
  %v1315 = vunpack.c.l.b16 %v279
  %v1316 = vunpack.c.h.b16 %v279
  %v1317 = vunpack.c.l.b16 %v280
  %v1318 = vunpack.c.h.b16 %v280
  %v1319 = vunpack.c.l.b16 %v281
  %v1320 = vunpack.c.h.b16 %v281
  %v1321 = vunpack.c.l.b16 %v282
  %v1322 = vunpack.c.h.b16 %v282
  %v1323 = vunpack.c.l.b16 %v283
  %v1324 = vunpack.c.h.b16 %v283
  %v1325 = vunpack.c.l.b16 %v284
  %v1326 = vunpack.c.h.b16 %v284
  %v1327 = vunpack.c.l.b16 %v285
  %v1328 = vunpack.c.h.b16 %v285
  %v1329 = vunpack.c.l.b16 %v286
  %v1330 = vunpack.c.h.b16 %v286
  %v1331 = vunpack.c.l.b16 %v287
  %v1332 = vunpack.c.h.b16 %v287
  %v1333 = vunpack.c.l.b16 %v288
  %v1334 = vunpack.c.h.b16 %v288
  %v1335 = vunpack.c.l.b16 %v289
  %v1336 = vunpack.c.h.b16 %v289
  %v1337 = vunpack.c.l.b16 %v290
  %v1338 = vunpack.c.h.b16 %v290
  %v1339 = vunpack.c.l.b16 %v291
  %v1340 = vunpack.c.h.b16 %v291
  %v1341 = vunpack.c.l.b16 %v292
  %v1342 = vunpack.c.h.b16 %v292
  %v1343 = vunpack.c.l.b16 %v293
  %v1344 = vunpack.c.h.b16 %v293
  %v1345 = vunpack.c.l.b16 %v294
  %v1346 = vunpack.c.h.b16 %v294
  %v1347 = vunpack.c.l.b16 %v295
  %v1348 = vunpack.c.h.b16 %v295
  %v1349 = vunpack.c.l.b16 %v296
  %v1350 = vunpack.c.h.b16 %v296
  %v1351 = vunpack.c.l.b16 %v297
  %v1352 = vunpack.c.h.b16 %v297
  %v1353 = vunpack.c.l.b16 %v298
  %v1354 = vunpack.c.h.b16 %v298
  %v1355 = vunpack.c.l.b16 %v299
  %v1356 = vunpack.c.h.b16 %v299
  %v1357 = vunpack.c.l.b16 %v300
  %v1358 = vunpack.c.h.b16 %v300
  %v1359 = vunpack.c.l.b16 %v301
  %v1360 = vunpack.c.h.b16 %v301
  %v1361 = vunpack.c.l.b16 %v302
  %v1362 = vunpack.c.h.b16 %v302
  %v1363 = vunpack.c.l.b16 %v303
  %v1364 = vunpack.c.h.b16 %v303
  %v1365 = vunpack.c.l.b16 %v304
  %v1366 = vunpack.c.h.b16 %v304
  %v1367 = vunpack.c.l.b16 %v305
  %v1368 = vunpack.c.h.b16 %v305
  %v1369 = vunpack.c.l.b16 %v306
  %v1370 = vunpack.c.h.b16 %v306
  %v1371 = vunpack.c.l.b16 %v307
  %v1372 = vunpack.c.h.b16 %v307
  %v1373 = vunpack.c.l.b16 %v308
  %v1374 = vunpack.c.h.b16 %v308
  %v1375 = vunpack.c.l.b16 %v309
  %v1376 = vunpack.c.h.b16 %v309
  %v1377 = vunpack.c.l.b16 %v310
  %v1378 = vunpack.c.h.b16 %v310
  %v1379 = vunpack.c.l.b16 %v311
  %v1380 = vunpack.c.h.b16 %v311
  %v1381 = vunpack.c.l.b16 %v312
  %v1382 = vunpack.c.h.b16 %v312
  %v1383 = vunpack.c.l.b16 %v313
  %v1384 = vunpack.c.h.b16 %v313
  %v1385 = vunpack.c.l.b16 %v314
  %v1386 = vunpack.c.h.b16 %v314
  %v1387 = vunpack.c.l.b16 %v315
  %v1388 = vunpack.c.h.b16 %v315
  %v1389 = vunpack.c.l.b16 %v316
  %v1390 = vunpack.c.h.b16 %v316
  %v1391 = vunpack.c.l.b16 %v317
  %v1392 = vunpack.c.h.b16 %v317
  %v1393 = vunpack.c.l.b16 %v318
  %v1394 = vunpack.c.h.b16 %v318
  %v1395 = vunpack.c.l.b16 %v319
  %v1396 = vunpack.c.h.b16 %v319
  %v1397 = vunpack.c.l.b16 %v320
  %v1398 = vunpack.c.h.b16 %v320
  %v1399 = vunpack.c.l.b16 %v321
  %v1400 = vunpack.c.h.b16 %v321
  %v1401 = vunpack.c.l.b16 %v322
  %v1402 = vunpack.c.h.b16 %v322
  %v1403 = vunpack.c.l.b16 %v323
  %v1404 = vunpack.c.h.b16 %v323
  %v1405 = vunpack.c.l.b16 %v324
  %v1406 = vunpack.c.h.b16 %v324
  %v1407 = vunpack.c.l.b16 %v325
  %v1408 = vunpack.c.h.b16 %v325
  %v1409 = vunpack.c.l.b16 %v326
  %v1410 = vunpack.c.h.b16 %v326
  %v1411 = vunpack.c.l.b16 %v327
  %v1412 = vunpack.c.h.b16 %v327
  %v1413 = vunpack.c.l.b16 %v328
  %v1414 = vunpack.c.h.b16 %v328
  %v1415 = vunpack.c.l.b16 %v329
  %v1416 = vunpack.c.h.b16 %v329
  %v1417 = vunpack.c.l.b16 %v330
  %v1418 = vunpack.c.h.b16 %v330
  %v1419 = vpack.c.b16 %v911, %v907
  %v1420 = vpack.c.b16 %v912, %v908
  %v1421 = vpack.c.b16 %v913, %v909
  %v1422 = vpack.c.b16 %v914, %v910
  %v1423 = vpack.c.b16 %v919, %v915
  %v1424 = vpack.c.b16 %v920, %v916
  %v1425 = vpack.c.b16 %v921, %v917
  %v1426 = vpack.c.b16 %v922, %v918
  %v1427 = vpack.c.b16 %v927, %v923
  %v1428 = vpack.c.b16 %v928, %v924
  %v1429 = vpack.c.b16 %v929, %v925
  %v1430 = vpack.c.b16 %v930, %v926
  %v1431 = vpack.c.b16 %v935, %v931
  %v1432 = vpack.c.b16 %v936, %v932
  %v1433 = vpack.c.b16 %v937, %v933
  %v1434 = vpack.c.b16 %v938, %v934
  %v1435 = vpack.c.b16 %v943, %v939
  %v1436 = vpack.c.b16 %v944, %v940
  %v1437 = vpack.c.b16 %v945, %v941
  %v1438 = vpack.c.b16 %v946, %v942
  %v1439 = vpack.c.b16 %v951, %v947
  %v1440 = vpack.c.b16 %v952, %v948
  %v1441 = vpack.c.b16 %v953, %v949
  %v1442 = vpack.c.b16 %v954, %v950
  %v1443 = vpack.c.b16 %v959, %v955
  %v1444 = vpack.c.b16 %v960, %v956
  %v1445 = vpack.c.b16 %v961, %v957
  %v1446 = vpack.c.b16 %v962, %v958
  %v1447 = vpack.c.b16 %v967, %v963
  %v1448 = vpack.c.b16 %v968, %v964
  %v1449 = vpack.c.b16 %v969, %v965
  %v1450 = vpack.c.b16 %v970, %v966
  %v1451 = vpack.c.b16 %v975, %v971
  %v1452 = vpack.c.b16 %v976, %v972
  %v1453 = vpack.c.b16 %v977, %v973
  %v1454 = vpack.c.b16 %v978, %v974
  %v1455 = vpack.c.b16 %v983, %v979
  %v1456 = vpack.c.b16 %v984, %v980
  %v1457 = vpack.c.b16 %v985, %v981
  %v1458 = vpack.c.b16 %v986, %v982
  %v1459 = vpack.c.b16 %v991, %v987
  %v1460 = vpack.c.b16 %v992, %v988
  %v1461 = vpack.c.b16 %v993, %v989
  %v1462 = vpack.c.b16 %v994, %v990
  %v1463 = vpack.c.b16 %v999, %v995
  %v1464 = vpack.c.b16 %v1000, %v996
  %v1465 = vpack.c.b16 %v1001, %v997
  %v1466 = vpack.c.b16 %v1002, %v998
  %v1467 = vpack.c.b16 %v1007, %v1003
  %v1468 = vpack.c.b16 %v1008, %v1004
  %v1469 = vpack.c.b16 %v1009, %v1005
  %v1470 = vpack.c.b16 %v1010, %v1006
  %v1471 = vpack.c.b16 %v1015, %v1011
  %v1472 = vpack.c.b16 %v1016, %v1012
  %v1473 = vpack.c.b16 %v1017, %v1013
  %v1474 = vpack.c.b16 %v1018, %v1014
  %v1475 = vpack.c.b16 %v1023, %v1019
  %v1476 = vpack.c.b16 %v1024, %v1020
  %v1477 = vpack.c.b16 %v1025, %v1021
  %v1478 = vpack.c.b16 %v1026, %v1022
  %v1479 = vpack.c.b16 %v1031, %v1027
  %v1480 = vpack.c.b16 %v1032, %v1028
  %v1481 = vpack.c.b16 %v1033, %v1029
  %v1482 = vpack.c.b16 %v1034, %v1030
  %v1483 = vpack.c.b16 %v1039, %v1035
  %v1484 = vpack.c.b16 %v1040, %v1036
  %v1485 = vpack.c.b16 %v1041, %v1037
  %v1486 = vpack.c.b16 %v1042, %v1038
  %v1487 = vpack.c.b16 %v1047, %v1043
  %v1488 = vpack.c.b16 %v1048, %v1044
  %v1489 = vpack.c.b16 %v1049, %v1045
  %v1490 = vpack.c.b16 %v1050, %v1046
  %v1491 = vpack.c.b16 %v1055, %v1051
  %v1492 = vpack.c.b16 %v1056, %v1052
  %v1493 = vpack.c.b16 %v1057, %v1053
  %v1494 = vpack.c.b16 %v1058, %v1054
  %v1495 = vpack.c.b16 %v1063, %v1059
  %v1496 = vpack.c.b16 %v1064, %v1060
  %v1497 = vpack.c.b16 %v1065, %v1061
  %v1498 = vpack.c.b16 %v1066, %v1062
  %v1499 = vpack.c.b16 %v1071, %v1067
  %v1500 = vpack.c.b16 %v1072, %v1068
  %v1501 = vpack.c.b16 %v1073, %v1069
  %v1502 = vpack.c.b16 %v1074, %v1070
  %v1503 = vpack.c.b16 %v1079, %v1075
  %v1504 = vpack.c.b16 %v1080, %v1076
  %v1505 = vpack.c.b16 %v1081, %v1077
  %v1506 = vpack.c.b16 %v1082, %v1078
  %v1507 = vpack.c.b16 %v1087, %v1083
  %v1508 = vpack.c.b16 %v1088, %v1084
  %v1509 = vpack.c.b16 %v1089, %v1085
  %v1510 = vpack.c.b16 %v1090, %v1086
  %v1511 = vpack.c.b16 %v1095, %v1091
  %v1512 = vpack.c.b16 %v1096, %v1092
  %v1513 = vpack.c.b16 %v1097, %v1093
  %v1514 = vpack.c.b16 %v1098, %v1094
  %v1515 = vpack.c.b16 %v1103, %v1099
  %v1516 = vpack.c.b16 %v1104, %v1100
  %v1517 = vpack.c.b16 %v1105, %v1101
  %v1518 = vpack.c.b16 %v1106, %v1102
  %v1519 = vpack.c.b16 %v1111, %v1107
  %v1520 = vpack.c.b16 %v1112, %v1108
  %v1521 = vpack.c.b16 %v1113, %v1109
  %v1522 = vpack.c.b16 %v1114, %v1110
  %v1523 = vpack.c.b16 %v1119, %v1115
  %v1524 = vpack.c.b16 %v1120, %v1116
  %v1525 = vpack.c.b16 %v1121, %v1117
  %v1526 = vpack.c.b16 %v1122, %v1118
  %v1527 = vpack.c.b16 %v1127, %v1123
  %v1528 = vpack.c.b16 %v1128, %v1124
  %v1529 = vpack.c.b16 %v1129, %v1125
  %v1530 = vpack.c.b16 %v1130, %v1126
  %v1531 = vpack.c.b16 %v1135, %v1131
  %v1532 = vpack.c.b16 %v1136, %v1132
  %v1533 = vpack.c.b16 %v1137, %v1133
  %v1534 = vpack.c.b16 %v1138, %v1134
  %v1535 = vpack.c.b16 %v1143, %v1139
  %v1536 = vpack.c.b16 %v1144, %v1140
  %v1537 = vpack.c.b16 %v1145, %v1141
  %v1538 = vpack.c.b16 %v1146, %v1142
  %v1539 = vpack.c.b16 %v1151, %v1147
  %v1540 = vpack.c.b16 %v1152, %v1148
  %v1541 = vpack.c.b16 %v1153, %v1149
  %v1542 = vpack.c.b16 %v1154, %v1150
  %v1543 = vpack.c.b16 %v1159, %v1155
  %v1544 = vpack.c.b16 %v1160, %v1156
  %v1545 = vpack.c.b16 %v1161, %v1157
  %v1546 = vpack.c.b16 %v1162, %v1158
  %v1547 = vpack.c.b16 %v1167, %v1163
  %v1548 = vpack.c.b16 %v1168, %v1164
  %v1549 = vpack.c.b16 %v1169, %v1165
  %v1550 = vpack.c.b16 %v1170, %v1166
  %v1551 = vpack.c.b16 %v1175, %v1171
  %v1552 = vpack.c.b16 %v1176, %v1172
  %v1553 = vpack.c.b16 %v1177, %v1173
  %v1554 = vpack.c.b16 %v1178, %v1174
  %v1555 = vpack.c.b16 %v1183, %v1179
  %v1556 = vpack.c.b16 %v1184, %v1180
  %v1557 = vpack.c.b16 %v1185, %v1181
  %v1558 = vpack.c.b16 %v1186, %v1182
  %v1559 = vpack.c.b16 %v1191, %v1187
  %v1560 = vpack.c.b16 %v1192, %v1188
  %v1561 = vpack.c.b16 %v1193, %v1189
  %v1562 = vpack.c.b16 %v1194, %v1190
  %v1563 = vpack.c.b16 %v1199, %v1195
  %v1564 = vpack.c.b16 %v1200, %v1196
  %v1565 = vpack.c.b16 %v1201, %v1197
  %v1566 = vpack.c.b16 %v1202, %v1198
  %v1567 = vpack.c.b16 %v1207, %v1203
  %v1568 = vpack.c.b16 %v1208, %v1204
  %v1569 = vpack.c.b16 %v1209, %v1205
  %v1570 = vpack.c.b16 %v1210, %v1206
  %v1571 = vpack.c.b16 %v1215, %v1211
  %v1572 = vpack.c.b16 %v1216, %v1212
  %v1573 = vpack.c.b16 %v1217, %v1213
  %v1574 = vpack.c.b16 %v1218, %v1214
  %v1575 = vpack.c.b16 %v1223, %v1219
  %v1576 = vpack.c.b16 %v1224, %v1220
  %v1577 = vpack.c.b16 %v1225, %v1221
  %v1578 = vpack.c.b16 %v1226, %v1222
  %v1579 = vpack.c.b16 %v1231, %v1227
  %v1580 = vpack.c.b16 %v1232, %v1228
  %v1581 = vpack.c.b16 %v1233, %v1229
  %v1582 = vpack.c.b16 %v1234, %v1230
  %v1583 = vpack.c.b16 %v1239, %v1235
  %v1584 = vpack.c.b16 %v1240, %v1236
  %v1585 = vpack.c.b16 %v1241, %v1237
  %v1586 = vpack.c.b16 %v1242, %v1238
  %v1587 = vpack.c.b16 %v1247, %v1243
  %v1588 = vpack.c.b16 %v1248, %v1244
  %v1589 = vpack.c.b16 %v1249, %v1245
  %v1590 = vpack.c.b16 %v1250, %v1246
  %v1591 = vpack.c.b16 %v1255, %v1251
  %v1592 = vpack.c.b16 %v1256, %v1252
  %v1593 = vpack.c.b16 %v1257, %v1253
  %v1594 = vpack.c.b16 %v1258, %v1254
  %v1595 = vpack.c.b16 %v1263, %v1259
  %v1596 = vpack.c.b16 %v1264, %v1260
  %v1597 = vpack.c.b16 %v1265, %v1261
  %v1598 = vpack.c.b16 %v1266, %v1262
  %v1599 = vpack.c.b16 %v1271, %v1267
  %v1600 = vpack.c.b16 %v1272, %v1268
  %v1601 = vpack.c.b16 %v1273, %v1269
  %v1602 = vpack.c.b16 %v1274, %v1270
  %v1603 = vpack.c.b16 %v1279, %v1275
  %v1604 = vpack.c.b16 %v1280, %v1276
  %v1605 = vpack.c.b16 %v1281, %v1277
  %v1606 = vpack.c.b16 %v1282, %v1278
  %v1607 = vpack.c.b16 %v1287, %v1283
  %v1608 = vpack.c.b16 %v1288, %v1284
  %v1609 = vpack.c.b16 %v1289, %v1285
  %v1610 = vpack.c.b16 %v1290, %v1286
  %v1611 = vpack.c.b16 %v1295, %v1291
  %v1612 = vpack.c.b16 %v1296, %v1292
  %v1613 = vpack.c.b16 %v1297, %v1293
  %v1614 = vpack.c.b16 %v1298, %v1294
  %v1615 = vpack.c.b16 %v1303, %v1299
  %v1616 = vpack.c.b16 %v1304, %v1300
  %v1617 = vpack.c.b16 %v1305, %v1301
  %v1618 = vpack.c.b16 %v1306, %v1302
  %v1619 = vpack.c.b16 %v1311, %v1307
  %v1620 = vpack.c.b16 %v1312, %v1308
  %v1621 = vpack.c.b16 %v1313, %v1309
  %v1622 = vpack.c.b16 %v1314, %v1310
  %v1623 = vpack.c.b16 %v1319, %v1315
  %v1624 = vpack.c.b16 %v1320, %v1316
  %v1625 = vpack.c.b16 %v1321, %v1317
  %v1626 = vpack.c.b16 %v1322, %v1318
  %v1627 = vpack.c.b16 %v1327, %v1323
  %v1628 = vpack.c.b16 %v1328, %v1324
  %v1629 = vpack.c.b16 %v1329, %v1325
  %v1630 = vpack.c.b16 %v1330, %v1326
  %v1631 = vpack.c.b16 %v1335, %v1331
  %v1632 = vpack.c.b16 %v1336, %v1332
  %v1633 = vpack.c.b16 %v1337, %v1333
  %v1634 = vpack.c.b16 %v1338, %v1334
  %v1635 = vpack.c.b16 %v1343, %v1339
  %v1636 = vpack.c.b16 %v1344, %v1340
  %v1637 = vpack.c.b16 %v1345, %v1341
  %v1638 = vpack.c.b16 %v1346, %v1342
  %v1639 = vpack.c.b16 %v1351, %v1347
  %v1640 = vpack.c.b16 %v1352, %v1348
  %v1641 = vpack.c.b16 %v1353, %v1349
  %v1642 = vpack.c.b16 %v1354, %v1350
  %v1643 = vpack.c.b16 %v1359, %v1355
  %v1644 = vpack.c.b16 %v1360, %v1356
  %v1645 = vpack.c.b16 %v1361, %v1357
  %v1646 = vpack.c.b16 %v1362, %v1358
  %v1647 = vpack.c.b16 %v1367, %v1363
  %v1648 = vpack.c.b16 %v1368, %v1364
  %v1649 = vpack.c.b16 %v1369, %v1365
  %v1650 = vpack.c.b16 %v1370, %v1366
  %v1651 = vpack.c.b16 %v1375, %v1371
  %v1652 = vpack.c.b16 %v1376, %v1372
  %v1653 = vpack.c.b16 %v1377, %v1373
  %v1654 = vpack.c.b16 %v1378, %v1374
  %v1655 = vpack.c.b16 %v1383, %v1379
  %v1656 = vpack.c.b16 %v1384, %v1380
  %v1657 = vpack.c.b16 %v1385, %v1381
  %v1658 = vpack.c.b16 %v1386, %v1382
  %v1659 = vpack.c.b16 %v1391, %v1387
  %v1660 = vpack.c.b16 %v1392, %v1388
  %v1661 = vpack.c.b16 %v1393, %v1389
  %v1662 = vpack.c.b16 %v1394, %v1390
  %v1663 = vpack.c.b16 %v1399, %v1395
  %v1664 = vpack.c.b16 %v1400, %v1396
  %v1665 = vpack.c.b16 %v1401, %v1397
  %v1666 = vpack.c.b16 %v1402, %v1398
  %v1667 = vpack.c.b16 %v1407, %v1403
  %v1668 = vpack.c.b16 %v1408, %v1404
  %v1669 = vpack.c.b16 %v1409, %v1405
  %v1670 = vpack.c.b16 %v1410, %v1406
  %v1671 = vpack.c.b16 %v1415, %v1411
  %v1672 = vpack.c.b16 %v1416, %v1412
  %v1673 = vpack.c.b16 %v1417, %v1413
  %v1674 = vpack.c.b16 %v1418, %v1414
  %1931 = vmatpush.bf16.msra.mxu0 %v1447
  %1932 = vmatpush.bf16.msra.mxu0 %v1443
  %1933 = vmatpush.bf16.msra.mxu0 %v1439
  %1934 = vmatpush.bf16.msra.mxu0 %v1435
  %1935 = vmatpush.bf16.msra.mxu0 %v1431
  %1936 = vmatpush.bf16.msra.mxu0 %v1427
  %1937 = vmatpush.bf16.msra.mxu0 %v1423
  %1938 = vmatpush.bf16.msra.mxu0 %v1419
  %1939 = vmatmul.bf16.gmra.mxu0 %v523
  %v1940 = vpop.f32.mrf.mxu0
  %v1941 = vadd.f32 0.0, %v1940
  %v1942 = vpop.f32.mrf.mxu0
  %v1943 = vadd.f32 0.0, %v1942
  %1944 = vmatmul.bf16.gmra.mxu0 %v531
  %v1945 = vpop.f32.mrf.mxu0
  %v1946 = vadd.f32 0.0, %v1945
  %v1947 = vpop.f32.mrf.mxu0
  %v1948 = vadd.f32 0.0, %v1947
  %1949 = vmatmul.bf16.gmra.mxu0 %v539
  %v1950 = vpop.f32.mrf.mxu0
  %v1951 = vadd.f32 0.0, %v1950
  %v1952 = vpop.f32.mrf.mxu0
  %v1953 = vadd.f32 0.0, %v1952
  %1954 = vmatmul.bf16.gmra.mxu0 %v547
  %v1955 = vpop.f32.mrf.mxu0
  %v1956 = vadd.f32 0.0, %v1955
  %v1957 = vpop.f32.mrf.mxu0
  %v1958 = vadd.f32 0.0, %v1957
  %1959 = vmatmul.bf16.gmra.mxu0 %v555
  %v1960 = vpop.f32.mrf.mxu0
  %v1961 = vadd.f32 0.0, %v1960
  %v1962 = vpop.f32.mrf.mxu0
  %v1963 = vadd.f32 0.0, %v1962
  %1964 = vmatmul.bf16.gmra.mxu0 %v563
  %v1965 = vpop.f32.mrf.mxu0
  %v1966 = vadd.f32 0.0, %v1965
  %v1967 = vpop.f32.mrf.mxu0
  %v1968 = vadd.f32 0.0, %v1967
  %1969 = vmatmul.bf16.gmra.mxu0 %v571
  %v1970 = vpop.f32.mrf.mxu0
  %v1971 = vadd.f32 0.0, %v1970
  %v1972 = vpop.f32.mrf.mxu0
  %v1973 = vadd.f32 0.0, %v1972
  %1974 = vmatmul.bf16.gmra.mxu0 %v579
  %v1975 = vpop.f32.mrf.mxu0
  %v1976 = vadd.f32 0.0, %v1975
  %v1977 = vpop.f32.mrf.mxu0
  %v1978 = vadd.f32 0.0, %v1977
  %1979 = vdwg.mxu0
  %1980 = vmatpush.bf16.msra.mxu0 %v1479
  %1981 = vmatpush.bf16.msra.mxu0 %v1475
  %1982 = vmatpush.bf16.msra.mxu0 %v1471
  %1983 = vmatpush.bf16.msra.mxu0 %v1467
  %1984 = vmatpush.bf16.msra.mxu0 %v1463
  %1985 = vmatpush.bf16.msra.mxu0 %v1459
  %1986 = vmatpush.bf16.msra.mxu0 %v1455
  %1987 = vmatpush.bf16.msra.mxu0 %v1451
  %1988 = vmatmul.bf16.gmra.mxu0 %v524
  %v1989 = vpop.f32.mrf.mxu0
  %v1990 = vadd.f32 %v1941, %v1989
  %v1991 = vpop.f32.mrf.mxu0
  %v1992 = vadd.f32 %v1943, %v1991
  %1993 = vmatmul.bf16.gmra.mxu0 %v532
  %v1994 = vpop.f32.mrf.mxu0
  %v1995 = vadd.f32 %v1946, %v1994
  %v1996 = vpop.f32.mrf.mxu0
  %v1997 = vadd.f32 %v1948, %v1996
  %1998 = vmatmul.bf16.gmra.mxu0 %v540
  %v1999 = vpop.f32.mrf.mxu0
  %v2000 = vadd.f32 %v1951, %v1999
  %v2001 = vpop.f32.mrf.mxu0
  %v2002 = vadd.f32 %v1953, %v2001
  %2003 = vmatmul.bf16.gmra.mxu0 %v548
  %v2004 = vpop.f32.mrf.mxu0
  %v2005 = vadd.f32 %v1956, %v2004
  %v2006 = vpop.f32.mrf.mxu0
  %v2007 = vadd.f32 %v1958, %v2006
  %2008 = vmatmul.bf16.gmra.mxu0 %v556
  %v2009 = vpop.f32.mrf.mxu0
  %v2010 = vadd.f32 %v1961, %v2009
  %v2011 = vpop.f32.mrf.mxu0
  %v2012 = vadd.f32 %v1963, %v2011
  %2013 = vmatmul.bf16.gmra.mxu0 %v564
  %v2014 = vpop.f32.mrf.mxu0
  %v2015 = vadd.f32 %v1966, %v2014
  %v2016 = vpop.f32.mrf.mxu0
  %v2017 = vadd.f32 %v1968, %v2016
  %2018 = vmatmul.bf16.gmra.mxu0 %v572
  %v2019 = vpop.f32.mrf.mxu0
  %v2020 = vadd.f32 %v1971, %v2019
  %v2021 = vpop.f32.mrf.mxu0
  %v2022 = vadd.f32 %v1973, %v2021
  %2023 = vmatmul.bf16.gmra.mxu0 %v580
  %v2024 = vpop.f32.mrf.mxu0
  %v2025 = vadd.f32 %v1976, %v2024
  %v2026 = vpop.f32.mrf.mxu0
  %v2027 = vadd.f32 %v1978, %v2026
  %2028 = vdwg.mxu0
  %2029 = vmatpush.bf16.msra.mxu0 %v1511
  %2030 = vmatpush.bf16.msra.mxu0 %v1507
  %2031 = vmatpush.bf16.msra.mxu0 %v1503
  %2032 = vmatpush.bf16.msra.mxu0 %v1499
  %2033 = vmatpush.bf16.msra.mxu0 %v1495
  %2034 = vmatpush.bf16.msra.mxu0 %v1491
  %2035 = vmatpush.bf16.msra.mxu0 %v1487
  %2036 = vmatpush.bf16.msra.mxu0 %v1483
  %2037 = vmatmul.bf16.gmra.mxu0 %v525
  %v2038 = vpop.f32.mrf.mxu0
  %v2039 = vadd.f32 %v1990, %v2038
  %v2040 = vpop.f32.mrf.mxu0
  %v2041 = vadd.f32 %v1992, %v2040
  %2042 = vmatmul.bf16.gmra.mxu0 %v533
  %v2043 = vpop.f32.mrf.mxu0
  %v2044 = vadd.f32 %v1995, %v2043
  %v2045 = vpop.f32.mrf.mxu0
  %v2046 = vadd.f32 %v1997, %v2045
  %2047 = vmatmul.bf16.gmra.mxu0 %v541
  %v2048 = vpop.f32.mrf.mxu0
  %v2049 = vadd.f32 %v2000, %v2048
  %v2050 = vpop.f32.mrf.mxu0
  %v2051 = vadd.f32 %v2002, %v2050
  %2052 = vmatmul.bf16.gmra.mxu0 %v549
  %v2053 = vpop.f32.mrf.mxu0
  %v2054 = vadd.f32 %v2005, %v2053
  %v2055 = vpop.f32.mrf.mxu0
  %v2056 = vadd.f32 %v2007, %v2055
  %2057 = vmatmul.bf16.gmra.mxu0 %v557
  %v2058 = vpop.f32.mrf.mxu0
  %v2059 = vadd.f32 %v2010, %v2058
  %v2060 = vpop.f32.mrf.mxu0
  %v2061 = vadd.f32 %v2012, %v2060
  %2062 = vmatmul.bf16.gmra.mxu0 %v565
  %v2063 = vpop.f32.mrf.mxu0
  %v2064 = vadd.f32 %v2015, %v2063
  %v2065 = vpop.f32.mrf.mxu0
  %v2066 = vadd.f32 %v2017, %v2065
  %2067 = vmatmul.bf16.gmra.mxu0 %v573
  %v2068 = vpop.f32.mrf.mxu0
  %v2069 = vadd.f32 %v2020, %v2068
  %v2070 = vpop.f32.mrf.mxu0
  %v2071 = vadd.f32 %v2022, %v2070
  %2072 = vmatmul.bf16.gmra.mxu0 %v581
  %v2073 = vpop.f32.mrf.mxu0
  %v2074 = vadd.f32 %v2025, %v2073
  %v2075 = vpop.f32.mrf.mxu0
  %v2076 = vadd.f32 %v2027, %v2075
  %2077 = vdwg.mxu0
  %2078 = vmatpush.bf16.msra.mxu0 %v1543
  %2079 = vmatpush.bf16.msra.mxu0 %v1539
  %2080 = vmatpush.bf16.msra.mxu0 %v1535
  %2081 = vmatpush.bf16.msra.mxu0 %v1531
  %2082 = vmatpush.bf16.msra.mxu0 %v1527
  %2083 = vmatpush.bf16.msra.mxu0 %v1523
  %2084 = vmatpush.bf16.msra.mxu0 %v1519
  %2085 = vmatpush.bf16.msra.mxu0 %v1515
  %2086 = vmatmul.bf16.gmra.mxu0 %v526
  %v2087 = vpop.f32.mrf.mxu0
  %v2088 = vadd.f32 %v2039, %v2087
  %v2089 = vpop.f32.mrf.mxu0
  %v2090 = vadd.f32 %v2041, %v2089
  %2091 = vmatmul.bf16.gmra.mxu0 %v534
  %v2092 = vpop.f32.mrf.mxu0
  %v2093 = vadd.f32 %v2044, %v2092
  %v2094 = vpop.f32.mrf.mxu0
  %v2095 = vadd.f32 %v2046, %v2094
  %2096 = vmatmul.bf16.gmra.mxu0 %v542
  %v2097 = vpop.f32.mrf.mxu0
  %v2098 = vadd.f32 %v2049, %v2097
  %v2099 = vpop.f32.mrf.mxu0
  %v2100 = vadd.f32 %v2051, %v2099
  %2101 = vmatmul.bf16.gmra.mxu0 %v550
  %v2102 = vpop.f32.mrf.mxu0
  %v2103 = vadd.f32 %v2054, %v2102
  %v2104 = vpop.f32.mrf.mxu0
  %v2105 = vadd.f32 %v2056, %v2104
  %2106 = vmatmul.bf16.gmra.mxu0 %v558
  %v2107 = vpop.f32.mrf.mxu0
  %v2108 = vadd.f32 %v2059, %v2107
  %v2109 = vpop.f32.mrf.mxu0
  %v2110 = vadd.f32 %v2061, %v2109
  %2111 = vmatmul.bf16.gmra.mxu0 %v566
  %v2112 = vpop.f32.mrf.mxu0
  %v2113 = vadd.f32 %v2064, %v2112
  %v2114 = vpop.f32.mrf.mxu0
  %v2115 = vadd.f32 %v2066, %v2114
  %2116 = vmatmul.bf16.gmra.mxu0 %v574
  %v2117 = vpop.f32.mrf.mxu0
  %v2118 = vadd.f32 %v2069, %v2117
  %v2119 = vpop.f32.mrf.mxu0
  %v2120 = vadd.f32 %v2071, %v2119
  %2121 = vmatmul.bf16.gmra.mxu0 %v582
  %v2122 = vpop.f32.mrf.mxu0
  %v2123 = vadd.f32 %v2074, %v2122
  %v2124 = vpop.f32.mrf.mxu0
  %v2125 = vadd.f32 %v2076, %v2124
  %2126 = vdwg.mxu0
  %2127 = vmatpush.bf16.msra.mxu0 %v1575
  %2128 = vmatpush.bf16.msra.mxu0 %v1571
  %2129 = vmatpush.bf16.msra.mxu0 %v1567
  %2130 = vmatpush.bf16.msra.mxu0 %v1563
  %2131 = vmatpush.bf16.msra.mxu0 %v1559
  %2132 = vmatpush.bf16.msra.mxu0 %v1555
  %2133 = vmatpush.bf16.msra.mxu0 %v1551
  %2134 = vmatpush.bf16.msra.mxu0 %v1547
  %2135 = vmatmul.bf16.gmra.mxu0 %v527
  %v2136 = vpop.f32.mrf.mxu0
  %v2137 = vadd.f32 %v2088, %v2136
  %v2138 = vpop.f32.mrf.mxu0
  %v2139 = vadd.f32 %v2090, %v2138
  %2140 = vmatmul.bf16.gmra.mxu0 %v535
  %v2141 = vpop.f32.mrf.mxu0
  %v2142 = vadd.f32 %v2093, %v2141
  %v2143 = vpop.f32.mrf.mxu0
  %v2144 = vadd.f32 %v2095, %v2143
  %2145 = vmatmul.bf16.gmra.mxu0 %v543
  %v2146 = vpop.f32.mrf.mxu0
  %v2147 = vadd.f32 %v2098, %v2146
  %v2148 = vpop.f32.mrf.mxu0
  %v2149 = vadd.f32 %v2100, %v2148
  %2150 = vmatmul.bf16.gmra.mxu0 %v551
  %v2151 = vpop.f32.mrf.mxu0
  %v2152 = vadd.f32 %v2103, %v2151
  %v2153 = vpop.f32.mrf.mxu0
  %v2154 = vadd.f32 %v2105, %v2153
  %2155 = vmatmul.bf16.gmra.mxu0 %v559
  %v2156 = vpop.f32.mrf.mxu0
  %v2157 = vadd.f32 %v2108, %v2156
  %v2158 = vpop.f32.mrf.mxu0
  %v2159 = vadd.f32 %v2110, %v2158
  %2160 = vmatmul.bf16.gmra.mxu0 %v567
  %v2161 = vpop.f32.mrf.mxu0
  %v2162 = vadd.f32 %v2113, %v2161
  %v2163 = vpop.f32.mrf.mxu0
  %v2164 = vadd.f32 %v2115, %v2163
  %2165 = vmatmul.bf16.gmra.mxu0 %v575
  %v2166 = vpop.f32.mrf.mxu0
  %v2167 = vadd.f32 %v2118, %v2166
  %v2168 = vpop.f32.mrf.mxu0
  %v2169 = vadd.f32 %v2120, %v2168
  %2170 = vmatmul.bf16.gmra.mxu0 %v583
  %v2171 = vpop.f32.mrf.mxu0
  %v2172 = vadd.f32 %v2123, %v2171
  %v2173 = vpop.f32.mrf.mxu0
  %v2174 = vadd.f32 %v2125, %v2173
  %2175 = vdwg.mxu0
  %2176 = vmatpush.bf16.msra.mxu0 %v1607
  %2177 = vmatpush.bf16.msra.mxu0 %v1603
  %2178 = vmatpush.bf16.msra.mxu0 %v1599
  %2179 = vmatpush.bf16.msra.mxu0 %v1595
  %2180 = vmatpush.bf16.msra.mxu0 %v1591
  %2181 = vmatpush.bf16.msra.mxu0 %v1587
  %2182 = vmatpush.bf16.msra.mxu0 %v1583
  %2183 = vmatpush.bf16.msra.mxu0 %v1579
  %2184 = vmatmul.bf16.gmra.mxu0 %v528
  %v2185 = vpop.f32.mrf.mxu0
  %v2186 = vadd.f32 %v2137, %v2185
  %v2187 = vpop.f32.mrf.mxu0
  %v2188 = vadd.f32 %v2139, %v2187
  %2189 = vmatmul.bf16.gmra.mxu0 %v536
  %v2190 = vpop.f32.mrf.mxu0
  %v2191 = vadd.f32 %v2142, %v2190
  %v2192 = vpop.f32.mrf.mxu0
  %v2193 = vadd.f32 %v2144, %v2192
  %2194 = vmatmul.bf16.gmra.mxu0 %v544
  %v2195 = vpop.f32.mrf.mxu0
  %v2196 = vadd.f32 %v2147, %v2195
  %v2197 = vpop.f32.mrf.mxu0
  %v2198 = vadd.f32 %v2149, %v2197
  %2199 = vmatmul.bf16.gmra.mxu0 %v552
  %v2200 = vpop.f32.mrf.mxu0
  %v2201 = vadd.f32 %v2152, %v2200
  %v2202 = vpop.f32.mrf.mxu0
  %v2203 = vadd.f32 %v2154, %v2202
  %2204 = vmatmul.bf16.gmra.mxu0 %v560
  %v2205 = vpop.f32.mrf.mxu0
  %v2206 = vadd.f32 %v2157, %v2205
  %v2207 = vpop.f32.mrf.mxu0
  %v2208 = vadd.f32 %v2159, %v2207
  %2209 = vmatmul.bf16.gmra.mxu0 %v568
  %v2210 = vpop.f32.mrf.mxu0
  %v2211 = vadd.f32 %v2162, %v2210
  %v2212 = vpop.f32.mrf.mxu0
  %v2213 = vadd.f32 %v2164, %v2212
  %2214 = vmatmul.bf16.gmra.mxu0 %v576
  %v2215 = vpop.f32.mrf.mxu0
  %v2216 = vadd.f32 %v2167, %v2215
  %v2217 = vpop.f32.mrf.mxu0
  %v2218 = vadd.f32 %v2169, %v2217
  %2219 = vmatmul.bf16.gmra.mxu0 %v584
  %v2220 = vpop.f32.mrf.mxu0
  %v2221 = vadd.f32 %v2172, %v2220
  %v2222 = vpop.f32.mrf.mxu0
  %v2223 = vadd.f32 %v2174, %v2222
  %2224 = vdwg.mxu0
  %2225 = vmatpush.bf16.msra.mxu0 %v1639
  %2226 = vmatpush.bf16.msra.mxu0 %v1635
  %2227 = vmatpush.bf16.msra.mxu0 %v1631
  %2228 = vmatpush.bf16.msra.mxu0 %v1627
  %2229 = vmatpush.bf16.msra.mxu0 %v1623
  %2230 = vmatpush.bf16.msra.mxu0 %v1619
  %2231 = vmatpush.bf16.msra.mxu0 %v1615
  %2232 = vmatpush.bf16.msra.mxu0 %v1611
  %2233 = vmatmul.bf16.gmra.mxu0 %v529
  %v2234 = vpop.f32.mrf.mxu0
  %v2235 = vadd.f32 %v2186, %v2234
  %v2236 = vpop.f32.mrf.mxu0
  %v2237 = vadd.f32 %v2188, %v2236
  %2238 = vmatmul.bf16.gmra.mxu0 %v537
  %v2239 = vpop.f32.mrf.mxu0
  %v2240 = vadd.f32 %v2191, %v2239
  %v2241 = vpop.f32.mrf.mxu0
  %v2242 = vadd.f32 %v2193, %v2241
  %2243 = vmatmul.bf16.gmra.mxu0 %v545
  %v2244 = vpop.f32.mrf.mxu0
  %v2245 = vadd.f32 %v2196, %v2244
  %v2246 = vpop.f32.mrf.mxu0
  %v2247 = vadd.f32 %v2198, %v2246
  %2248 = vmatmul.bf16.gmra.mxu0 %v553
  %v2249 = vpop.f32.mrf.mxu0
  %v2250 = vadd.f32 %v2201, %v2249
  %v2251 = vpop.f32.mrf.mxu0
  %v2252 = vadd.f32 %v2203, %v2251
  %2253 = vmatmul.bf16.gmra.mxu0 %v561
  %v2254 = vpop.f32.mrf.mxu0
  %v2255 = vadd.f32 %v2206, %v2254
  %v2256 = vpop.f32.mrf.mxu0
  %v2257 = vadd.f32 %v2208, %v2256
  %2258 = vmatmul.bf16.gmra.mxu0 %v569
  %v2259 = vpop.f32.mrf.mxu0
  %v2260 = vadd.f32 %v2211, %v2259
  %v2261 = vpop.f32.mrf.mxu0
  %v2262 = vadd.f32 %v2213, %v2261
  %2263 = vmatmul.bf16.gmra.mxu0 %v577
  %v2264 = vpop.f32.mrf.mxu0
  %v2265 = vadd.f32 %v2216, %v2264
  %v2266 = vpop.f32.mrf.mxu0
  %v2267 = vadd.f32 %v2218, %v2266
  %2268 = vmatmul.bf16.gmra.mxu0 %v585
  %v2269 = vpop.f32.mrf.mxu0
  %v2270 = vadd.f32 %v2221, %v2269
  %v2271 = vpop.f32.mrf.mxu0
  %v2272 = vadd.f32 %v2223, %v2271
  %2273 = vdwg.mxu0
  %2274 = vmatpush.bf16.msra.mxu0 %v1671
  %2275 = vmatpush.bf16.msra.mxu0 %v1667
  %2276 = vmatpush.bf16.msra.mxu0 %v1663
  %2277 = vmatpush.bf16.msra.mxu0 %v1659
  %2278 = vmatpush.bf16.msra.mxu0 %v1655
  %2279 = vmatpush.bf16.msra.mxu0 %v1651
  %2280 = vmatpush.bf16.msra.mxu0 %v1647
  %2281 = vmatpush.bf16.msra.mxu0 %v1643
  %2282 = vmatmul.bf16.gmra.mxu0 %v530
  %v2283 = vpop.f32.mrf.mxu0
  %v2284 = vadd.f32 %v2235, %v2283
  %v2285 = vpop.f32.mrf.mxu0
  %v2286 = vadd.f32 %v2237, %v2285
  %2287 = vmatmul.bf16.gmra.mxu0 %v538
  %v2288 = vpop.f32.mrf.mxu0
  %v2289 = vadd.f32 %v2240, %v2288
  %v2290 = vpop.f32.mrf.mxu0
  %v2291 = vadd.f32 %v2242, %v2290
  %2292 = vmatmul.bf16.gmra.mxu0 %v546
  %v2293 = vpop.f32.mrf.mxu0
  %v2294 = vadd.f32 %v2245, %v2293
  %v2295 = vpop.f32.mrf.mxu0
  %v2296 = vadd.f32 %v2247, %v2295
  %2297 = vmatmul.bf16.gmra.mxu0 %v554
  %v2298 = vpop.f32.mrf.mxu0
  %v2299 = vadd.f32 %v2250, %v2298
  %v2300 = vpop.f32.mrf.mxu0
  %v2301 = vadd.f32 %v2252, %v2300
  %2302 = vmatmul.bf16.gmra.mxu0 %v562
  %v2303 = vpop.f32.mrf.mxu0
  %v2304 = vadd.f32 %v2255, %v2303
  %v2305 = vpop.f32.mrf.mxu0
  %v2306 = vadd.f32 %v2257, %v2305
  %2307 = vmatmul.bf16.gmra.mxu0 %v570
  %v2308 = vpop.f32.mrf.mxu0
  %v2309 = vadd.f32 %v2260, %v2308
  %v2310 = vpop.f32.mrf.mxu0
  %v2311 = vadd.f32 %v2262, %v2310
  %2312 = vmatmul.bf16.gmra.mxu0 %v578
  %v2313 = vpop.f32.mrf.mxu0
  %v2314 = vadd.f32 %v2265, %v2313
  %v2315 = vpop.f32.mrf.mxu0
  %v2316 = vadd.f32 %v2267, %v2315
  %2317 = vmatmul.bf16.gmra.mxu0 %v586
  %v2318 = vpop.f32.mrf.mxu0
  %v2319 = vadd.f32 %v2270, %v2318
  %v2320 = vpop.f32.mrf.mxu0
  %v2321 = vadd.f32 %v2272, %v2320
  %2322 = vdwg.mxu0
  %2323 = vmatpush.bf16.msra.mxu0 %v1448
  %2324 = vmatpush.bf16.msra.mxu0 %v1444
  %2325 = vmatpush.bf16.msra.mxu0 %v1440
  %2326 = vmatpush.bf16.msra.mxu0 %v1436
  %2327 = vmatpush.bf16.msra.mxu0 %v1432
  %2328 = vmatpush.bf16.msra.mxu0 %v1428
  %2329 = vmatpush.bf16.msra.mxu0 %v1424
  %2330 = vmatpush.bf16.msra.mxu0 %v1420
  %2331 = vmatmul.bf16.gmra.mxu0 %v523
  %v2332 = vpop.f32.mrf.mxu0
  %v2333 = vadd.f32 0.0, %v2332
  %v2334 = vpop.f32.mrf.mxu0
  %v2335 = vadd.f32 0.0, %v2334
  %2336 = vmatmul.bf16.gmra.mxu0 %v531
  %v2337 = vpop.f32.mrf.mxu0
  %v2338 = vadd.f32 0.0, %v2337
  %v2339 = vpop.f32.mrf.mxu0
  %v2340 = vadd.f32 0.0, %v2339
  %2341 = vmatmul.bf16.gmra.mxu0 %v539
  %v2342 = vpop.f32.mrf.mxu0
  %v2343 = vadd.f32 0.0, %v2342
  %v2344 = vpop.f32.mrf.mxu0
  %v2345 = vadd.f32 0.0, %v2344
  %2346 = vmatmul.bf16.gmra.mxu0 %v547
  %v2347 = vpop.f32.mrf.mxu0
  %v2348 = vadd.f32 0.0, %v2347
  %v2349 = vpop.f32.mrf.mxu0
  %v2350 = vadd.f32 0.0, %v2349
  %2351 = vmatmul.bf16.gmra.mxu0 %v555
  %v2352 = vpop.f32.mrf.mxu0
  %v2353 = vadd.f32 0.0, %v2352
  %v2354 = vpop.f32.mrf.mxu0
  %v2355 = vadd.f32 0.0, %v2354
  %2356 = vmatmul.bf16.gmra.mxu0 %v563
  %v2357 = vpop.f32.mrf.mxu0
  %v2358 = vadd.f32 0.0, %v2357
  %v2359 = vpop.f32.mrf.mxu0
  %v2360 = vadd.f32 0.0, %v2359
  %2361 = vmatmul.bf16.gmra.mxu0 %v571
  %v2362 = vpop.f32.mrf.mxu0
  %v2363 = vadd.f32 0.0, %v2362
  %v2364 = vpop.f32.mrf.mxu0
  %v2365 = vadd.f32 0.0, %v2364
  %2366 = vmatmul.bf16.gmra.mxu0 %v579
  %v2367 = vpop.f32.mrf.mxu0
  %v2368 = vadd.f32 0.0, %v2367
  %v2369 = vpop.f32.mrf.mxu0
  %v2370 = vadd.f32 0.0, %v2369
  %2371 = vdwg.mxu0
  %2372 = vmatpush.bf16.msra.mxu0 %v1480
  %2373 = vmatpush.bf16.msra.mxu0 %v1476
  %2374 = vmatpush.bf16.msra.mxu0 %v1472
  %2375 = vmatpush.bf16.msra.mxu0 %v1468
  %2376 = vmatpush.bf16.msra.mxu0 %v1464
  %2377 = vmatpush.bf16.msra.mxu0 %v1460
  %2378 = vmatpush.bf16.msra.mxu0 %v1456
  %2379 = vmatpush.bf16.msra.mxu0 %v1452
  %2380 = vmatmul.bf16.gmra.mxu0 %v524
  %v2381 = vpop.f32.mrf.mxu0
  %v2382 = vadd.f32 %v2333, %v2381
  %v2383 = vpop.f32.mrf.mxu0
  %v2384 = vadd.f32 %v2335, %v2383
  %2385 = vmatmul.bf16.gmra.mxu0 %v532
  %v2386 = vpop.f32.mrf.mxu0
  %v2387 = vadd.f32 %v2338, %v2386
  %v2388 = vpop.f32.mrf.mxu0
  %v2389 = vadd.f32 %v2340, %v2388
  %2390 = vmatmul.bf16.gmra.mxu0 %v540
  %v2391 = vpop.f32.mrf.mxu0
  %v2392 = vadd.f32 %v2343, %v2391
  %v2393 = vpop.f32.mrf.mxu0
  %v2394 = vadd.f32 %v2345, %v2393
  %2395 = vmatmul.bf16.gmra.mxu0 %v548
  %v2396 = vpop.f32.mrf.mxu0
  %v2397 = vadd.f32 %v2348, %v2396
  %v2398 = vpop.f32.mrf.mxu0
  %v2399 = vadd.f32 %v2350, %v2398
  %2400 = vmatmul.bf16.gmra.mxu0 %v556
  %v2401 = vpop.f32.mrf.mxu0
  %v2402 = vadd.f32 %v2353, %v2401
  %v2403 = vpop.f32.mrf.mxu0
  %v2404 = vadd.f32 %v2355, %v2403
  %2405 = vmatmul.bf16.gmra.mxu0 %v564
  %v2406 = vpop.f32.mrf.mxu0
  %v2407 = vadd.f32 %v2358, %v2406
  %v2408 = vpop.f32.mrf.mxu0
  %v2409 = vadd.f32 %v2360, %v2408
  %2410 = vmatmul.bf16.gmra.mxu0 %v572
  %v2411 = vpop.f32.mrf.mxu0
  %v2412 = vadd.f32 %v2363, %v2411
  %v2413 = vpop.f32.mrf.mxu0
  %v2414 = vadd.f32 %v2365, %v2413
  %2415 = vmatmul.bf16.gmra.mxu0 %v580
  %v2416 = vpop.f32.mrf.mxu0
  %v2417 = vadd.f32 %v2368, %v2416
  %v2418 = vpop.f32.mrf.mxu0
  %v2419 = vadd.f32 %v2370, %v2418
  %2420 = vdwg.mxu0
  %2421 = vmatpush.bf16.msra.mxu0 %v1512
  %2422 = vmatpush.bf16.msra.mxu0 %v1508
  %2423 = vmatpush.bf16.msra.mxu0 %v1504
  %2424 = vmatpush.bf16.msra.mxu0 %v1500
  %2425 = vmatpush.bf16.msra.mxu0 %v1496
  %2426 = vmatpush.bf16.msra.mxu0 %v1492
  %2427 = vmatpush.bf16.msra.mxu0 %v1488
  %2428 = vmatpush.bf16.msra.mxu0 %v1484
  %2429 = vmatmul.bf16.gmra.mxu0 %v525
  %v2430 = vpop.f32.mrf.mxu0
  %v2431 = vadd.f32 %v2382, %v2430
  %v2432 = vpop.f32.mrf.mxu0
  %v2433 = vadd.f32 %v2384, %v2432
  %2434 = vmatmul.bf16.gmra.mxu0 %v533
  %v2435 = vpop.f32.mrf.mxu0
  %v2436 = vadd.f32 %v2387, %v2435
  %v2437 = vpop.f32.mrf.mxu0
  %v2438 = vadd.f32 %v2389, %v2437
  %2439 = vmatmul.bf16.gmra.mxu0 %v541
  %v2440 = vpop.f32.mrf.mxu0
  %v2441 = vadd.f32 %v2392, %v2440
  %v2442 = vpop.f32.mrf.mxu0
  %v2443 = vadd.f32 %v2394, %v2442
  %2444 = vmatmul.bf16.gmra.mxu0 %v549
  %v2445 = vpop.f32.mrf.mxu0
  %v2446 = vadd.f32 %v2397, %v2445
  %v2447 = vpop.f32.mrf.mxu0
  %v2448 = vadd.f32 %v2399, %v2447
  %2449 = vmatmul.bf16.gmra.mxu0 %v557
  %v2450 = vpop.f32.mrf.mxu0
  %v2451 = vadd.f32 %v2402, %v2450
  %v2452 = vpop.f32.mrf.mxu0
  %v2453 = vadd.f32 %v2404, %v2452
  %2454 = vmatmul.bf16.gmra.mxu0 %v565
  %v2455 = vpop.f32.mrf.mxu0
  %v2456 = vadd.f32 %v2407, %v2455
  %v2457 = vpop.f32.mrf.mxu0
  %v2458 = vadd.f32 %v2409, %v2457
  %2459 = vmatmul.bf16.gmra.mxu0 %v573
  %v2460 = vpop.f32.mrf.mxu0
  %v2461 = vadd.f32 %v2412, %v2460
  %v2462 = vpop.f32.mrf.mxu0
  %v2463 = vadd.f32 %v2414, %v2462
  %2464 = vmatmul.bf16.gmra.mxu0 %v581
  %v2465 = vpop.f32.mrf.mxu0
  %v2466 = vadd.f32 %v2417, %v2465
  %v2467 = vpop.f32.mrf.mxu0
  %v2468 = vadd.f32 %v2419, %v2467
  %2469 = vdwg.mxu0
  %2470 = vmatpush.bf16.msra.mxu0 %v1544
  %2471 = vmatpush.bf16.msra.mxu0 %v1540
  %2472 = vmatpush.bf16.msra.mxu0 %v1536
  %2473 = vmatpush.bf16.msra.mxu0 %v1532
  %2474 = vmatpush.bf16.msra.mxu0 %v1528
  %2475 = vmatpush.bf16.msra.mxu0 %v1524
  %2476 = vmatpush.bf16.msra.mxu0 %v1520
  %2477 = vmatpush.bf16.msra.mxu0 %v1516
  %2478 = vmatmul.bf16.gmra.mxu0 %v526
  %v2479 = vpop.f32.mrf.mxu0
  %v2480 = vadd.f32 %v2431, %v2479
  %v2481 = vpop.f32.mrf.mxu0
  %v2482 = vadd.f32 %v2433, %v2481
  %2483 = vmatmul.bf16.gmra.mxu0 %v534
  %v2484 = vpop.f32.mrf.mxu0
  %v2485 = vadd.f32 %v2436, %v2484
  %v2486 = vpop.f32.mrf.mxu0
  %v2487 = vadd.f32 %v2438, %v2486
  %2488 = vmatmul.bf16.gmra.mxu0 %v542
  %v2489 = vpop.f32.mrf.mxu0
  %v2490 = vadd.f32 %v2441, %v2489
  %v2491 = vpop.f32.mrf.mxu0
  %v2492 = vadd.f32 %v2443, %v2491
  %2493 = vmatmul.bf16.gmra.mxu0 %v550
  %v2494 = vpop.f32.mrf.mxu0
  %v2495 = vadd.f32 %v2446, %v2494
  %v2496 = vpop.f32.mrf.mxu0
  %v2497 = vadd.f32 %v2448, %v2496
  %2498 = vmatmul.bf16.gmra.mxu0 %v558
  %v2499 = vpop.f32.mrf.mxu0
  %v2500 = vadd.f32 %v2451, %v2499
  %v2501 = vpop.f32.mrf.mxu0
  %v2502 = vadd.f32 %v2453, %v2501
  %2503 = vmatmul.bf16.gmra.mxu0 %v566
  %v2504 = vpop.f32.mrf.mxu0
  %v2505 = vadd.f32 %v2456, %v2504
  %v2506 = vpop.f32.mrf.mxu0
  %v2507 = vadd.f32 %v2458, %v2506
  %2508 = vmatmul.bf16.gmra.mxu0 %v574
  %v2509 = vpop.f32.mrf.mxu0
  %v2510 = vadd.f32 %v2461, %v2509
  %v2511 = vpop.f32.mrf.mxu0
  %v2512 = vadd.f32 %v2463, %v2511
  %2513 = vmatmul.bf16.gmra.mxu0 %v582
  %v2514 = vpop.f32.mrf.mxu0
  %v2515 = vadd.f32 %v2466, %v2514
  %v2516 = vpop.f32.mrf.mxu0
  %v2517 = vadd.f32 %v2468, %v2516
  %2518 = vdwg.mxu0
  %2519 = vmatpush.bf16.msra.mxu0 %v1576
  %2520 = vmatpush.bf16.msra.mxu0 %v1572
  %2521 = vmatpush.bf16.msra.mxu0 %v1568
  %2522 = vmatpush.bf16.msra.mxu0 %v1564
  %2523 = vmatpush.bf16.msra.mxu0 %v1560
  %2524 = vmatpush.bf16.msra.mxu0 %v1556
  %2525 = vmatpush.bf16.msra.mxu0 %v1552
  %2526 = vmatpush.bf16.msra.mxu0 %v1548
  %2527 = vmatmul.bf16.gmra.mxu0 %v527
  %v2528 = vpop.f32.mrf.mxu0
  %v2529 = vadd.f32 %v2480, %v2528
  %v2530 = vpop.f32.mrf.mxu0
  %v2531 = vadd.f32 %v2482, %v2530
  %2532 = vmatmul.bf16.gmra.mxu0 %v535
  %v2533 = vpop.f32.mrf.mxu0
  %v2534 = vadd.f32 %v2485, %v2533
  %v2535 = vpop.f32.mrf.mxu0
  %v2536 = vadd.f32 %v2487, %v2535
  %2537 = vmatmul.bf16.gmra.mxu0 %v543
  %v2538 = vpop.f32.mrf.mxu0
  %v2539 = vadd.f32 %v2490, %v2538
  %v2540 = vpop.f32.mrf.mxu0
  %v2541 = vadd.f32 %v2492, %v2540
  %2542 = vmatmul.bf16.gmra.mxu0 %v551
  %v2543 = vpop.f32.mrf.mxu0
  %v2544 = vadd.f32 %v2495, %v2543
  %v2545 = vpop.f32.mrf.mxu0
  %v2546 = vadd.f32 %v2497, %v2545
  %2547 = vmatmul.bf16.gmra.mxu0 %v559
  %v2548 = vpop.f32.mrf.mxu0
  %v2549 = vadd.f32 %v2500, %v2548
  %v2550 = vpop.f32.mrf.mxu0
  %v2551 = vadd.f32 %v2502, %v2550
  %2552 = vmatmul.bf16.gmra.mxu0 %v567
  %v2553 = vpop.f32.mrf.mxu0
  %v2554 = vadd.f32 %v2505, %v2553
  %v2555 = vpop.f32.mrf.mxu0
  %v2556 = vadd.f32 %v2507, %v2555
  %2557 = vmatmul.bf16.gmra.mxu0 %v575
  %v2558 = vpop.f32.mrf.mxu0
  %v2559 = vadd.f32 %v2510, %v2558
  %v2560 = vpop.f32.mrf.mxu0
  %v2561 = vadd.f32 %v2512, %v2560
  %2562 = vmatmul.bf16.gmra.mxu0 %v583
  %v2563 = vpop.f32.mrf.mxu0
  %v2564 = vadd.f32 %v2515, %v2563
  %v2565 = vpop.f32.mrf.mxu0
  %v2566 = vadd.f32 %v2517, %v2565
  %2567 = vdwg.mxu0
  %2568 = vmatpush.bf16.msra.mxu0 %v1608
  %2569 = vmatpush.bf16.msra.mxu0 %v1604
  %2570 = vmatpush.bf16.msra.mxu0 %v1600
  %2571 = vmatpush.bf16.msra.mxu0 %v1596
  %2572 = vmatpush.bf16.msra.mxu0 %v1592
  %2573 = vmatpush.bf16.msra.mxu0 %v1588
  %2574 = vmatpush.bf16.msra.mxu0 %v1584
  %2575 = vmatpush.bf16.msra.mxu0 %v1580
  %2576 = vmatmul.bf16.gmra.mxu0 %v528
  %v2577 = vpop.f32.mrf.mxu0
  %v2578 = vadd.f32 %v2529, %v2577
  %v2579 = vpop.f32.mrf.mxu0
  %v2580 = vadd.f32 %v2531, %v2579
  %2581 = vmatmul.bf16.gmra.mxu0 %v536
  %v2582 = vpop.f32.mrf.mxu0
  %v2583 = vadd.f32 %v2534, %v2582
  %v2584 = vpop.f32.mrf.mxu0
  %v2585 = vadd.f32 %v2536, %v2584
  %2586 = vmatmul.bf16.gmra.mxu0 %v544
  %v2587 = vpop.f32.mrf.mxu0
  %v2588 = vadd.f32 %v2539, %v2587
  %v2589 = vpop.f32.mrf.mxu0
  %v2590 = vadd.f32 %v2541, %v2589
  %2591 = vmatmul.bf16.gmra.mxu0 %v552
  %v2592 = vpop.f32.mrf.mxu0
  %v2593 = vadd.f32 %v2544, %v2592
  %v2594 = vpop.f32.mrf.mxu0
  %v2595 = vadd.f32 %v2546, %v2594
  %2596 = vmatmul.bf16.gmra.mxu0 %v560
  %v2597 = vpop.f32.mrf.mxu0
  %v2598 = vadd.f32 %v2549, %v2597
  %v2599 = vpop.f32.mrf.mxu0
  %v2600 = vadd.f32 %v2551, %v2599
  %2601 = vmatmul.bf16.gmra.mxu0 %v568
  %v2602 = vpop.f32.mrf.mxu0
  %v2603 = vadd.f32 %v2554, %v2602
  %v2604 = vpop.f32.mrf.mxu0
  %v2605 = vadd.f32 %v2556, %v2604
  %2606 = vmatmul.bf16.gmra.mxu0 %v576
  %v2607 = vpop.f32.mrf.mxu0
  %v2608 = vadd.f32 %v2559, %v2607
  %v2609 = vpop.f32.mrf.mxu0
  %v2610 = vadd.f32 %v2561, %v2609
  %2611 = vmatmul.bf16.gmra.mxu0 %v584
  %v2612 = vpop.f32.mrf.mxu0
  %v2613 = vadd.f32 %v2564, %v2612
  %v2614 = vpop.f32.mrf.mxu0
  %v2615 = vadd.f32 %v2566, %v2614
  %2616 = vdwg.mxu0
  %2617 = vmatpush.bf16.msra.mxu0 %v1640
  %2618 = vmatpush.bf16.msra.mxu0 %v1636
  %2619 = vmatpush.bf16.msra.mxu0 %v1632
  %2620 = vmatpush.bf16.msra.mxu0 %v1628
  %2621 = vmatpush.bf16.msra.mxu0 %v1624
  %2622 = vmatpush.bf16.msra.mxu0 %v1620
  %2623 = vmatpush.bf16.msra.mxu0 %v1616
  %2624 = vmatpush.bf16.msra.mxu0 %v1612
  %2625 = vmatmul.bf16.gmra.mxu0 %v529
  %v2626 = vpop.f32.mrf.mxu0
  %v2627 = vadd.f32 %v2578, %v2626
  %v2628 = vpop.f32.mrf.mxu0
  %v2629 = vadd.f32 %v2580, %v2628
  %2630 = vmatmul.bf16.gmra.mxu0 %v537
  %v2631 = vpop.f32.mrf.mxu0
  %v2632 = vadd.f32 %v2583, %v2631
  %v2633 = vpop.f32.mrf.mxu0
  %v2634 = vadd.f32 %v2585, %v2633
  %2635 = vmatmul.bf16.gmra.mxu0 %v545
  %v2636 = vpop.f32.mrf.mxu0
  %v2637 = vadd.f32 %v2588, %v2636
  %v2638 = vpop.f32.mrf.mxu0
  %v2639 = vadd.f32 %v2590, %v2638
  %2640 = vmatmul.bf16.gmra.mxu0 %v553
  %v2641 = vpop.f32.mrf.mxu0
  %v2642 = vadd.f32 %v2593, %v2641
  %v2643 = vpop.f32.mrf.mxu0
  %v2644 = vadd.f32 %v2595, %v2643
  %2645 = vmatmul.bf16.gmra.mxu0 %v561
  %v2646 = vpop.f32.mrf.mxu0
  %v2647 = vadd.f32 %v2598, %v2646
  %v2648 = vpop.f32.mrf.mxu0
  %v2649 = vadd.f32 %v2600, %v2648
  %2650 = vmatmul.bf16.gmra.mxu0 %v569
  %v2651 = vpop.f32.mrf.mxu0
  %v2652 = vadd.f32 %v2603, %v2651
  %v2653 = vpop.f32.mrf.mxu0
  %v2654 = vadd.f32 %v2605, %v2653
  %2655 = vmatmul.bf16.gmra.mxu0 %v577
  %v2656 = vpop.f32.mrf.mxu0
  %v2657 = vadd.f32 %v2608, %v2656
  %v2658 = vpop.f32.mrf.mxu0
  %v2659 = vadd.f32 %v2610, %v2658
  %2660 = vmatmul.bf16.gmra.mxu0 %v585
  %v2661 = vpop.f32.mrf.mxu0
  %v2662 = vadd.f32 %v2613, %v2661
  %v2663 = vpop.f32.mrf.mxu0
  %v2664 = vadd.f32 %v2615, %v2663
  %2665 = vdwg.mxu0
  %2666 = vmatpush.bf16.msra.mxu0 %v1672
  %2667 = vmatpush.bf16.msra.mxu0 %v1668
  %2668 = vmatpush.bf16.msra.mxu0 %v1664
  %2669 = vmatpush.bf16.msra.mxu0 %v1660
  %2670 = vmatpush.bf16.msra.mxu0 %v1656
  %2671 = vmatpush.bf16.msra.mxu0 %v1652
  %2672 = vmatpush.bf16.msra.mxu0 %v1648
  %2673 = vmatpush.bf16.msra.mxu0 %v1644
  %2674 = vmatmul.bf16.gmra.mxu0 %v530
  %v2675 = vpop.f32.mrf.mxu0
  %v2676 = vadd.f32 %v2627, %v2675
  %v2677 = vpop.f32.mrf.mxu0
  %v2678 = vadd.f32 %v2629, %v2677
  %2679 = vmatmul.bf16.gmra.mxu0 %v538
  %v2680 = vpop.f32.mrf.mxu0
  %v2681 = vadd.f32 %v2632, %v2680
  %v2682 = vpop.f32.mrf.mxu0
  %v2683 = vadd.f32 %v2634, %v2682
  %2684 = vmatmul.bf16.gmra.mxu0 %v546
  %v2685 = vpop.f32.mrf.mxu0
  %v2686 = vadd.f32 %v2637, %v2685
  %v2687 = vpop.f32.mrf.mxu0
  %v2688 = vadd.f32 %v2639, %v2687
  %2689 = vmatmul.bf16.gmra.mxu0 %v554
  %v2690 = vpop.f32.mrf.mxu0
  %v2691 = vadd.f32 %v2642, %v2690
  %v2692 = vpop.f32.mrf.mxu0
  %v2693 = vadd.f32 %v2644, %v2692
  %2694 = vmatmul.bf16.gmra.mxu0 %v562
  %v2695 = vpop.f32.mrf.mxu0
  %v2696 = vadd.f32 %v2647, %v2695
  %v2697 = vpop.f32.mrf.mxu0
  %v2698 = vadd.f32 %v2649, %v2697
  %2699 = vmatmul.bf16.gmra.mxu0 %v570
  %v2700 = vpop.f32.mrf.mxu0
  %v2701 = vadd.f32 %v2652, %v2700
  %v2702 = vpop.f32.mrf.mxu0
  %v2703 = vadd.f32 %v2654, %v2702
  %2704 = vmatmul.bf16.gmra.mxu0 %v578
  %v2705 = vpop.f32.mrf.mxu0
  %v2706 = vadd.f32 %v2657, %v2705
  %v2707 = vpop.f32.mrf.mxu0
  %v2708 = vadd.f32 %v2659, %v2707
  %2709 = vmatmul.bf16.gmra.mxu0 %v586
  %v2710 = vpop.f32.mrf.mxu0
  %v2711 = vadd.f32 %v2662, %v2710
  %v2712 = vpop.f32.mrf.mxu0
  %v2713 = vadd.f32 %v2664, %v2712
  %2714 = vdwg.mxu0
  %2715 = vmatpush.bf16.msra.mxu0 %v1449
  %2716 = vmatpush.bf16.msra.mxu0 %v1445
  %2717 = vmatpush.bf16.msra.mxu0 %v1441
  %2718 = vmatpush.bf16.msra.mxu0 %v1437
  %2719 = vmatpush.bf16.msra.mxu0 %v1433
  %2720 = vmatpush.bf16.msra.mxu0 %v1429
  %2721 = vmatpush.bf16.msra.mxu0 %v1425
  %2722 = vmatpush.bf16.msra.mxu0 %v1421
  %2723 = vmatmul.bf16.gmra.mxu0 %v523
  %v2724 = vpop.f32.mrf.mxu0
  %v2725 = vadd.f32 0.0, %v2724
  %v2726 = vpop.f32.mrf.mxu0
  %v2727 = vadd.f32 0.0, %v2726
  %2728 = vmatmul.bf16.gmra.mxu0 %v531
  %v2729 = vpop.f32.mrf.mxu0
  %v2730 = vadd.f32 0.0, %v2729
  %v2731 = vpop.f32.mrf.mxu0
  %v2732 = vadd.f32 0.0, %v2731
  %2733 = vmatmul.bf16.gmra.mxu0 %v539
  %v2734 = vpop.f32.mrf.mxu0
  %v2735 = vadd.f32 0.0, %v2734
  %v2736 = vpop.f32.mrf.mxu0
  %v2737 = vadd.f32 0.0, %v2736
  %2738 = vmatmul.bf16.gmra.mxu0 %v547
  %v2739 = vpop.f32.mrf.mxu0
  %v2740 = vadd.f32 0.0, %v2739
  %v2741 = vpop.f32.mrf.mxu0
  %v2742 = vadd.f32 0.0, %v2741
  %2743 = vmatmul.bf16.gmra.mxu0 %v555
  %v2744 = vpop.f32.mrf.mxu0
  %v2745 = vadd.f32 0.0, %v2744
  %v2746 = vpop.f32.mrf.mxu0
  %v2747 = vadd.f32 0.0, %v2746
  %2748 = vmatmul.bf16.gmra.mxu0 %v563
  %v2749 = vpop.f32.mrf.mxu0
  %v2750 = vadd.f32 0.0, %v2749
  %v2751 = vpop.f32.mrf.mxu0
  %v2752 = vadd.f32 0.0, %v2751
  %2753 = vmatmul.bf16.gmra.mxu0 %v571
  %v2754 = vpop.f32.mrf.mxu0
  %v2755 = vadd.f32 0.0, %v2754
  %v2756 = vpop.f32.mrf.mxu0
  %v2757 = vadd.f32 0.0, %v2756
  %2758 = vmatmul.bf16.gmra.mxu0 %v579
  %v2759 = vpop.f32.mrf.mxu0
  %v2760 = vadd.f32 0.0, %v2759
  %v2761 = vpop.f32.mrf.mxu0
  %v2762 = vadd.f32 0.0, %v2761
  %2763 = vdwg.mxu0
  %2764 = vmatpush.bf16.msra.mxu0 %v1481
  %2765 = vmatpush.bf16.msra.mxu0 %v1477
  %2766 = vmatpush.bf16.msra.mxu0 %v1473
  %2767 = vmatpush.bf16.msra.mxu0 %v1469
  %2768 = vmatpush.bf16.msra.mxu0 %v1465
  %2769 = vmatpush.bf16.msra.mxu0 %v1461
  %2770 = vmatpush.bf16.msra.mxu0 %v1457
  %2771 = vmatpush.bf16.msra.mxu0 %v1453
  %2772 = vmatmul.bf16.gmra.mxu0 %v524
  %v2773 = vpop.f32.mrf.mxu0
  %v2774 = vadd.f32 %v2725, %v2773
  %v2775 = vpop.f32.mrf.mxu0
  %v2776 = vadd.f32 %v2727, %v2775
  %2777 = vmatmul.bf16.gmra.mxu0 %v532
  %v2778 = vpop.f32.mrf.mxu0
  %v2779 = vadd.f32 %v2730, %v2778
  %v2780 = vpop.f32.mrf.mxu0
  %v2781 = vadd.f32 %v2732, %v2780
  %2782 = vmatmul.bf16.gmra.mxu0 %v540
  %v2783 = vpop.f32.mrf.mxu0
  %v2784 = vadd.f32 %v2735, %v2783
  %v2785 = vpop.f32.mrf.mxu0
  %v2786 = vadd.f32 %v2737, %v2785
  %2787 = vmatmul.bf16.gmra.mxu0 %v548
  %v2788 = vpop.f32.mrf.mxu0
  %v2789 = vadd.f32 %v2740, %v2788
  %v2790 = vpop.f32.mrf.mxu0
  %v2791 = vadd.f32 %v2742, %v2790
  %2792 = vmatmul.bf16.gmra.mxu0 %v556
  %v2793 = vpop.f32.mrf.mxu0
  %v2794 = vadd.f32 %v2745, %v2793
  %v2795 = vpop.f32.mrf.mxu0
  %v2796 = vadd.f32 %v2747, %v2795
  %2797 = vmatmul.bf16.gmra.mxu0 %v564
  %v2798 = vpop.f32.mrf.mxu0
  %v2799 = vadd.f32 %v2750, %v2798
  %v2800 = vpop.f32.mrf.mxu0
  %v2801 = vadd.f32 %v2752, %v2800
  %2802 = vmatmul.bf16.gmra.mxu0 %v572
  %v2803 = vpop.f32.mrf.mxu0
  %v2804 = vadd.f32 %v2755, %v2803
  %v2805 = vpop.f32.mrf.mxu0
  %v2806 = vadd.f32 %v2757, %v2805
  %2807 = vmatmul.bf16.gmra.mxu0 %v580
  %v2808 = vpop.f32.mrf.mxu0
  %v2809 = vadd.f32 %v2760, %v2808
  %v2810 = vpop.f32.mrf.mxu0
  %v2811 = vadd.f32 %v2762, %v2810
  %2812 = vdwg.mxu0
  %2813 = vmatpush.bf16.msra.mxu0 %v1513
  %2814 = vmatpush.bf16.msra.mxu0 %v1509
  %2815 = vmatpush.bf16.msra.mxu0 %v1505
  %2816 = vmatpush.bf16.msra.mxu0 %v1501
  %2817 = vmatpush.bf16.msra.mxu0 %v1497
  %2818 = vmatpush.bf16.msra.mxu0 %v1493
  %2819 = vmatpush.bf16.msra.mxu0 %v1489
  %2820 = vmatpush.bf16.msra.mxu0 %v1485
  %2821 = vmatmul.bf16.gmra.mxu0 %v525
  %v2822 = vpop.f32.mrf.mxu0
  %v2823 = vadd.f32 %v2774, %v2822
  %v2824 = vpop.f32.mrf.mxu0
  %v2825 = vadd.f32 %v2776, %v2824
  %2826 = vmatmul.bf16.gmra.mxu0 %v533
  %v2827 = vpop.f32.mrf.mxu0
  %v2828 = vadd.f32 %v2779, %v2827
  %v2829 = vpop.f32.mrf.mxu0
  %v2830 = vadd.f32 %v2781, %v2829
  %2831 = vmatmul.bf16.gmra.mxu0 %v541
  %v2832 = vpop.f32.mrf.mxu0
  %v2833 = vadd.f32 %v2784, %v2832
  %v2834 = vpop.f32.mrf.mxu0
  %v2835 = vadd.f32 %v2786, %v2834
  %2836 = vmatmul.bf16.gmra.mxu0 %v549
  %v2837 = vpop.f32.mrf.mxu0
  %v2838 = vadd.f32 %v2789, %v2837
  %v2839 = vpop.f32.mrf.mxu0
  %v2840 = vadd.f32 %v2791, %v2839
  %2841 = vmatmul.bf16.gmra.mxu0 %v557
  %v2842 = vpop.f32.mrf.mxu0
  %v2843 = vadd.f32 %v2794, %v2842
  %v2844 = vpop.f32.mrf.mxu0
  %v2845 = vadd.f32 %v2796, %v2844
  %2846 = vmatmul.bf16.gmra.mxu0 %v565
  %v2847 = vpop.f32.mrf.mxu0
  %v2848 = vadd.f32 %v2799, %v2847
  %v2849 = vpop.f32.mrf.mxu0
  %v2850 = vadd.f32 %v2801, %v2849
  %2851 = vmatmul.bf16.gmra.mxu0 %v573
  %v2852 = vpop.f32.mrf.mxu0
  %v2853 = vadd.f32 %v2804, %v2852
  %v2854 = vpop.f32.mrf.mxu0
  %v2855 = vadd.f32 %v2806, %v2854
  %2856 = vmatmul.bf16.gmra.mxu0 %v581
  %v2857 = vpop.f32.mrf.mxu0
  %v2858 = vadd.f32 %v2809, %v2857
  %v2859 = vpop.f32.mrf.mxu0
  %v2860 = vadd.f32 %v2811, %v2859
  %2861 = vdwg.mxu0
  %2862 = vmatpush.bf16.msra.mxu0 %v1545
  %2863 = vmatpush.bf16.msra.mxu0 %v1541
  %2864 = vmatpush.bf16.msra.mxu0 %v1537
  %2865 = vmatpush.bf16.msra.mxu0 %v1533
  %2866 = vmatpush.bf16.msra.mxu0 %v1529
  %2867 = vmatpush.bf16.msra.mxu0 %v1525
  %2868 = vmatpush.bf16.msra.mxu0 %v1521
  %2869 = vmatpush.bf16.msra.mxu0 %v1517
  %2870 = vmatmul.bf16.gmra.mxu0 %v526
  %v2871 = vpop.f32.mrf.mxu0
  %v2872 = vadd.f32 %v2823, %v2871
  %v2873 = vpop.f32.mrf.mxu0
  %v2874 = vadd.f32 %v2825, %v2873
  %2875 = vmatmul.bf16.gmra.mxu0 %v534
  %v2876 = vpop.f32.mrf.mxu0
  %v2877 = vadd.f32 %v2828, %v2876
  %v2878 = vpop.f32.mrf.mxu0
  %v2879 = vadd.f32 %v2830, %v2878
  %2880 = vmatmul.bf16.gmra.mxu0 %v542
  %v2881 = vpop.f32.mrf.mxu0
  %v2882 = vadd.f32 %v2833, %v2881
  %v2883 = vpop.f32.mrf.mxu0
  %v2884 = vadd.f32 %v2835, %v2883
  %2885 = vmatmul.bf16.gmra.mxu0 %v550
  %v2886 = vpop.f32.mrf.mxu0
  %v2887 = vadd.f32 %v2838, %v2886
  %v2888 = vpop.f32.mrf.mxu0
  %v2889 = vadd.f32 %v2840, %v2888
  %2890 = vmatmul.bf16.gmra.mxu0 %v558
  %v2891 = vpop.f32.mrf.mxu0
  %v2892 = vadd.f32 %v2843, %v2891
  %v2893 = vpop.f32.mrf.mxu0
  %v2894 = vadd.f32 %v2845, %v2893
  %2895 = vmatmul.bf16.gmra.mxu0 %v566
  %v2896 = vpop.f32.mrf.mxu0
  %v2897 = vadd.f32 %v2848, %v2896
  %v2898 = vpop.f32.mrf.mxu0
  %v2899 = vadd.f32 %v2850, %v2898
  %2900 = vmatmul.bf16.gmra.mxu0 %v574
  %v2901 = vpop.f32.mrf.mxu0
  %v2902 = vadd.f32 %v2853, %v2901
  %v2903 = vpop.f32.mrf.mxu0
  %v2904 = vadd.f32 %v2855, %v2903
  %2905 = vmatmul.bf16.gmra.mxu0 %v582
  %v2906 = vpop.f32.mrf.mxu0
  %v2907 = vadd.f32 %v2858, %v2906
  %v2908 = vpop.f32.mrf.mxu0
  %v2909 = vadd.f32 %v2860, %v2908
  %2910 = vdwg.mxu0
  %2911 = vmatpush.bf16.msra.mxu0 %v1577
  %2912 = vmatpush.bf16.msra.mxu0 %v1573
  %2913 = vmatpush.bf16.msra.mxu0 %v1569
  %2914 = vmatpush.bf16.msra.mxu0 %v1565
  %2915 = vmatpush.bf16.msra.mxu0 %v1561
  %2916 = vmatpush.bf16.msra.mxu0 %v1557
  %2917 = vmatpush.bf16.msra.mxu0 %v1553
  %2918 = vmatpush.bf16.msra.mxu0 %v1549
  %2919 = vmatmul.bf16.gmra.mxu0 %v527
  %v2920 = vpop.f32.mrf.mxu0
  %v2921 = vadd.f32 %v2872, %v2920
  %v2922 = vpop.f32.mrf.mxu0
  %v2923 = vadd.f32 %v2874, %v2922
  %2924 = vmatmul.bf16.gmra.mxu0 %v535
  %v2925 = vpop.f32.mrf.mxu0
  %v2926 = vadd.f32 %v2877, %v2925
  %v2927 = vpop.f32.mrf.mxu0
  %v2928 = vadd.f32 %v2879, %v2927
  %2929 = vmatmul.bf16.gmra.mxu0 %v543
  %v2930 = vpop.f32.mrf.mxu0
  %v2931 = vadd.f32 %v2882, %v2930
  %v2932 = vpop.f32.mrf.mxu0
  %v2933 = vadd.f32 %v2884, %v2932
  %2934 = vmatmul.bf16.gmra.mxu0 %v551
  %v2935 = vpop.f32.mrf.mxu0
  %v2936 = vadd.f32 %v2887, %v2935
  %v2937 = vpop.f32.mrf.mxu0
  %v2938 = vadd.f32 %v2889, %v2937
  %2939 = vmatmul.bf16.gmra.mxu0 %v559
  %v2940 = vpop.f32.mrf.mxu0
  %v2941 = vadd.f32 %v2892, %v2940
  %v2942 = vpop.f32.mrf.mxu0
  %v2943 = vadd.f32 %v2894, %v2942
  %2944 = vmatmul.bf16.gmra.mxu0 %v567
  %v2945 = vpop.f32.mrf.mxu0
  %v2946 = vadd.f32 %v2897, %v2945
  %v2947 = vpop.f32.mrf.mxu0
  %v2948 = vadd.f32 %v2899, %v2947
  %2949 = vmatmul.bf16.gmra.mxu0 %v575
  %v2950 = vpop.f32.mrf.mxu0
  %v2951 = vadd.f32 %v2902, %v2950
  %v2952 = vpop.f32.mrf.mxu0
  %v2953 = vadd.f32 %v2904, %v2952
  %2954 = vmatmul.bf16.gmra.mxu0 %v583
  %v2955 = vpop.f32.mrf.mxu0
  %v2956 = vadd.f32 %v2907, %v2955
  %v2957 = vpop.f32.mrf.mxu0
  %v2958 = vadd.f32 %v2909, %v2957
  %2959 = vdwg.mxu0
  %2960 = vmatpush.bf16.msra.mxu0 %v1609
  %2961 = vmatpush.bf16.msra.mxu0 %v1605
  %2962 = vmatpush.bf16.msra.mxu0 %v1601
  %2963 = vmatpush.bf16.msra.mxu0 %v1597
  %2964 = vmatpush.bf16.msra.mxu0 %v1593
  %2965 = vmatpush.bf16.msra.mxu0 %v1589
  %2966 = vmatpush.bf16.msra.mxu0 %v1585
  %2967 = vmatpush.bf16.msra.mxu0 %v1581
  %2968 = vmatmul.bf16.gmra.mxu0 %v528
  %v2969 = vpop.f32.mrf.mxu0
  %v2970 = vadd.f32 %v2921, %v2969
  %v2971 = vpop.f32.mrf.mxu0
  %v2972 = vadd.f32 %v2923, %v2971
  %2973 = vmatmul.bf16.gmra.mxu0 %v536
  %v2974 = vpop.f32.mrf.mxu0
  %v2975 = vadd.f32 %v2926, %v2974
  %v2976 = vpop.f32.mrf.mxu0
  %v2977 = vadd.f32 %v2928, %v2976
  %2978 = vmatmul.bf16.gmra.mxu0 %v544
  %v2979 = vpop.f32.mrf.mxu0
  %v2980 = vadd.f32 %v2931, %v2979
  %v2981 = vpop.f32.mrf.mxu0
  %v2982 = vadd.f32 %v2933, %v2981
  %2983 = vmatmul.bf16.gmra.mxu0 %v552
  %v2984 = vpop.f32.mrf.mxu0
  %v2985 = vadd.f32 %v2936, %v2984
  %v2986 = vpop.f32.mrf.mxu0
  %v2987 = vadd.f32 %v2938, %v2986
  %2988 = vmatmul.bf16.gmra.mxu0 %v560
  %v2989 = vpop.f32.mrf.mxu0
  %v2990 = vadd.f32 %v2941, %v2989
  %v2991 = vpop.f32.mrf.mxu0
  %v2992 = vadd.f32 %v2943, %v2991
  %2993 = vmatmul.bf16.gmra.mxu0 %v568
  %v2994 = vpop.f32.mrf.mxu0
  %v2995 = vadd.f32 %v2946, %v2994
  %v2996 = vpop.f32.mrf.mxu0
  %v2997 = vadd.f32 %v2948, %v2996
  %2998 = vmatmul.bf16.gmra.mxu0 %v576
  %v2999 = vpop.f32.mrf.mxu0
  %v3000 = vadd.f32 %v2951, %v2999
  %v3001 = vpop.f32.mrf.mxu0
  %v3002 = vadd.f32 %v2953, %v3001
  %3003 = vmatmul.bf16.gmra.mxu0 %v584
  %v3004 = vpop.f32.mrf.mxu0
  %v3005 = vadd.f32 %v2956, %v3004
  %v3006 = vpop.f32.mrf.mxu0
  %v3007 = vadd.f32 %v2958, %v3006
  %3008 = vdwg.mxu0
  %3009 = vmatpush.bf16.msra.mxu0 %v1641
  %3010 = vmatpush.bf16.msra.mxu0 %v1637
  %3011 = vmatpush.bf16.msra.mxu0 %v1633
  %3012 = vmatpush.bf16.msra.mxu0 %v1629
  %3013 = vmatpush.bf16.msra.mxu0 %v1625
  %3014 = vmatpush.bf16.msra.mxu0 %v1621
  %3015 = vmatpush.bf16.msra.mxu0 %v1617
  %3016 = vmatpush.bf16.msra.mxu0 %v1613
  %3017 = vmatmul.bf16.gmra.mxu0 %v529
  %v3018 = vpop.f32.mrf.mxu0
  %v3019 = vadd.f32 %v2970, %v3018
  %v3020 = vpop.f32.mrf.mxu0
  %v3021 = vadd.f32 %v2972, %v3020
  %3022 = vmatmul.bf16.gmra.mxu0 %v537
  %v3023 = vpop.f32.mrf.mxu0
  %v3024 = vadd.f32 %v2975, %v3023
  %v3025 = vpop.f32.mrf.mxu0
  %v3026 = vadd.f32 %v2977, %v3025
  %3027 = vmatmul.bf16.gmra.mxu0 %v545
  %v3028 = vpop.f32.mrf.mxu0
  %v3029 = vadd.f32 %v2980, %v3028
  %v3030 = vpop.f32.mrf.mxu0
  %v3031 = vadd.f32 %v2982, %v3030
  %3032 = vmatmul.bf16.gmra.mxu0 %v553
  %v3033 = vpop.f32.mrf.mxu0
  %v3034 = vadd.f32 %v2985, %v3033
  %v3035 = vpop.f32.mrf.mxu0
  %v3036 = vadd.f32 %v2987, %v3035
  %3037 = vmatmul.bf16.gmra.mxu0 %v561
  %v3038 = vpop.f32.mrf.mxu0
  %v3039 = vadd.f32 %v2990, %v3038
  %v3040 = vpop.f32.mrf.mxu0
  %v3041 = vadd.f32 %v2992, %v3040
  %3042 = vmatmul.bf16.gmra.mxu0 %v569
  %v3043 = vpop.f32.mrf.mxu0
  %v3044 = vadd.f32 %v2995, %v3043
  %v3045 = vpop.f32.mrf.mxu0
  %v3046 = vadd.f32 %v2997, %v3045
  %3047 = vmatmul.bf16.gmra.mxu0 %v577
  %v3048 = vpop.f32.mrf.mxu0
  %v3049 = vadd.f32 %v3000, %v3048
  %v3050 = vpop.f32.mrf.mxu0
  %v3051 = vadd.f32 %v3002, %v3050
  %3052 = vmatmul.bf16.gmra.mxu0 %v585
  %v3053 = vpop.f32.mrf.mxu0
  %v3054 = vadd.f32 %v3005, %v3053
  %v3055 = vpop.f32.mrf.mxu0
  %v3056 = vadd.f32 %v3007, %v3055
  %3057 = vdwg.mxu0
  %3058 = vmatpush.bf16.msra.mxu0 %v1673
  %3059 = vmatpush.bf16.msra.mxu0 %v1669
  %3060 = vmatpush.bf16.msra.mxu0 %v1665
  %3061 = vmatpush.bf16.msra.mxu0 %v1661
  %3062 = vmatpush.bf16.msra.mxu0 %v1657
  %3063 = vmatpush.bf16.msra.mxu0 %v1653
  %3064 = vmatpush.bf16.msra.mxu0 %v1649
  %3065 = vmatpush.bf16.msra.mxu0 %v1645
  %3066 = vmatmul.bf16.gmra.mxu0 %v530
  %v3067 = vpop.f32.mrf.mxu0
  %v3068 = vadd.f32 %v3019, %v3067
  %v3069 = vpop.f32.mrf.mxu0
  %v3070 = vadd.f32 %v3021, %v3069
  %3071 = vmatmul.bf16.gmra.mxu0 %v538
  %v3072 = vpop.f32.mrf.mxu0
  %v3073 = vadd.f32 %v3024, %v3072
  %v3074 = vpop.f32.mrf.mxu0
  %v3075 = vadd.f32 %v3026, %v3074
  %3076 = vmatmul.bf16.gmra.mxu0 %v546
  %v3077 = vpop.f32.mrf.mxu0
  %v3078 = vadd.f32 %v3029, %v3077
  %v3079 = vpop.f32.mrf.mxu0
  %v3080 = vadd.f32 %v3031, %v3079
  %3081 = vmatmul.bf16.gmra.mxu0 %v554
  %v3082 = vpop.f32.mrf.mxu0
  %v3083 = vadd.f32 %v3034, %v3082
  %v3084 = vpop.f32.mrf.mxu0
  %v3085 = vadd.f32 %v3036, %v3084
  %3086 = vmatmul.bf16.gmra.mxu0 %v562
  %v3087 = vpop.f32.mrf.mxu0
  %v3088 = vadd.f32 %v3039, %v3087
  %v3089 = vpop.f32.mrf.mxu0
  %v3090 = vadd.f32 %v3041, %v3089
  %3091 = vmatmul.bf16.gmra.mxu0 %v570
  %v3092 = vpop.f32.mrf.mxu0
  %v3093 = vadd.f32 %v3044, %v3092
  %v3094 = vpop.f32.mrf.mxu0
  %v3095 = vadd.f32 %v3046, %v3094
  %3096 = vmatmul.bf16.gmra.mxu0 %v578
  %v3097 = vpop.f32.mrf.mxu0
  %v3098 = vadd.f32 %v3049, %v3097
  %v3099 = vpop.f32.mrf.mxu0
  %v3100 = vadd.f32 %v3051, %v3099
  %3101 = vmatmul.bf16.gmra.mxu0 %v586
  %v3102 = vpop.f32.mrf.mxu0
  %v3103 = vadd.f32 %v3054, %v3102
  %v3104 = vpop.f32.mrf.mxu0
  %v3105 = vadd.f32 %v3056, %v3104
  %3106 = vdwg.mxu0
  %3107 = vmatpush.bf16.msra.mxu0 %v1450
  %3108 = vmatpush.bf16.msra.mxu0 %v1446
  %3109 = vmatpush.bf16.msra.mxu0 %v1442
  %3110 = vmatpush.bf16.msra.mxu0 %v1438
  %3111 = vmatpush.bf16.msra.mxu0 %v1434
  %3112 = vmatpush.bf16.msra.mxu0 %v1430
  %3113 = vmatpush.bf16.msra.mxu0 %v1426
  %3114 = vmatpush.bf16.msra.mxu0 %v1422
  %3115 = vmatmul.bf16.gmra.mxu0 %v523
  %v3116 = vpop.f32.mrf.mxu0
  %v3117 = vadd.f32 0.0, %v3116
  %v3118 = vpop.f32.mrf.mxu0
  %v3119 = vadd.f32 0.0, %v3118
  %3120 = vmatmul.bf16.gmra.mxu0 %v531
  %v3121 = vpop.f32.mrf.mxu0
  %v3122 = vadd.f32 0.0, %v3121
  %v3123 = vpop.f32.mrf.mxu0
  %v3124 = vadd.f32 0.0, %v3123
  %3125 = vmatmul.bf16.gmra.mxu0 %v539
  %v3126 = vpop.f32.mrf.mxu0
  %v3127 = vadd.f32 0.0, %v3126
  %v3128 = vpop.f32.mrf.mxu0
  %v3129 = vadd.f32 0.0, %v3128
  %3130 = vmatmul.bf16.gmra.mxu0 %v547
  %v3131 = vpop.f32.mrf.mxu0
  %v3132 = vadd.f32 0.0, %v3131
  %v3133 = vpop.f32.mrf.mxu0
  %v3134 = vadd.f32 0.0, %v3133
  %3135 = vmatmul.bf16.gmra.mxu0 %v555
  %v3136 = vpop.f32.mrf.mxu0
  %v3137 = vadd.f32 0.0, %v3136
  %v3138 = vpop.f32.mrf.mxu0
  %v3139 = vadd.f32 0.0, %v3138
  %3140 = vmatmul.bf16.gmra.mxu0 %v563
  %v3141 = vpop.f32.mrf.mxu0
  %v3142 = vadd.f32 0.0, %v3141
  %v3143 = vpop.f32.mrf.mxu0
  %v3144 = vadd.f32 0.0, %v3143
  %3145 = vmatmul.bf16.gmra.mxu0 %v571
  %v3146 = vpop.f32.mrf.mxu0
  %v3147 = vadd.f32 0.0, %v3146
  %v3148 = vpop.f32.mrf.mxu0
  %v3149 = vadd.f32 0.0, %v3148
  %3150 = vmatmul.bf16.gmra.mxu0 %v579
  %v3151 = vpop.f32.mrf.mxu0
  %v3152 = vadd.f32 0.0, %v3151
  %v3153 = vpop.f32.mrf.mxu0
  %v3154 = vadd.f32 0.0, %v3153
  %3155 = vdwg.mxu0
  %3156 = vmatpush.bf16.msra.mxu0 %v1482
  %3157 = vmatpush.bf16.msra.mxu0 %v1478
  %3158 = vmatpush.bf16.msra.mxu0 %v1474
  %3159 = vmatpush.bf16.msra.mxu0 %v1470
  %3160 = vmatpush.bf16.msra.mxu0 %v1466
  %3161 = vmatpush.bf16.msra.mxu0 %v1462
  %3162 = vmatpush.bf16.msra.mxu0 %v1458
  %3163 = vmatpush.bf16.msra.mxu0 %v1454
  %3164 = vmatmul.bf16.gmra.mxu0 %v524
  %v3165 = vpop.f32.mrf.mxu0
  %v3166 = vadd.f32 %v3117, %v3165
  %v3167 = vpop.f32.mrf.mxu0
  %v3168 = vadd.f32 %v3119, %v3167
  %3169 = vmatmul.bf16.gmra.mxu0 %v532
  %v3170 = vpop.f32.mrf.mxu0
  %v3171 = vadd.f32 %v3122, %v3170
  %v3172 = vpop.f32.mrf.mxu0
  %v3173 = vadd.f32 %v3124, %v3172
  %3174 = vmatmul.bf16.gmra.mxu0 %v540
  %v3175 = vpop.f32.mrf.mxu0
  %v3176 = vadd.f32 %v3127, %v3175
  %v3177 = vpop.f32.mrf.mxu0
  %v3178 = vadd.f32 %v3129, %v3177
  %3179 = vmatmul.bf16.gmra.mxu0 %v548
  %v3180 = vpop.f32.mrf.mxu0
  %v3181 = vadd.f32 %v3132, %v3180
  %v3182 = vpop.f32.mrf.mxu0
  %v3183 = vadd.f32 %v3134, %v3182
  %3184 = vmatmul.bf16.gmra.mxu0 %v556
  %v3185 = vpop.f32.mrf.mxu0
  %v3186 = vadd.f32 %v3137, %v3185
  %v3187 = vpop.f32.mrf.mxu0
  %v3188 = vadd.f32 %v3139, %v3187
  %3189 = vmatmul.bf16.gmra.mxu0 %v564
  %v3190 = vpop.f32.mrf.mxu0
  %v3191 = vadd.f32 %v3142, %v3190
  %v3192 = vpop.f32.mrf.mxu0
  %v3193 = vadd.f32 %v3144, %v3192
  %3194 = vmatmul.bf16.gmra.mxu0 %v572
  %v3195 = vpop.f32.mrf.mxu0
  %v3196 = vadd.f32 %v3147, %v3195
  %v3197 = vpop.f32.mrf.mxu0
  %v3198 = vadd.f32 %v3149, %v3197
  %3199 = vmatmul.bf16.gmra.mxu0 %v580
  %v3200 = vpop.f32.mrf.mxu0
  %v3201 = vadd.f32 %v3152, %v3200
  %v3202 = vpop.f32.mrf.mxu0
  %v3203 = vadd.f32 %v3154, %v3202
  %3204 = vdwg.mxu0
  %3205 = vmatpush.bf16.msra.mxu0 %v1514
  %3206 = vmatpush.bf16.msra.mxu0 %v1510
  %3207 = vmatpush.bf16.msra.mxu0 %v1506
  %3208 = vmatpush.bf16.msra.mxu0 %v1502
  %3209 = vmatpush.bf16.msra.mxu0 %v1498
  %3210 = vmatpush.bf16.msra.mxu0 %v1494
  %3211 = vmatpush.bf16.msra.mxu0 %v1490
  %3212 = vmatpush.bf16.msra.mxu0 %v1486
  %3213 = vmatmul.bf16.gmra.mxu0 %v525
  %v3214 = vpop.f32.mrf.mxu0
  %v3215 = vadd.f32 %v3166, %v3214
  %v3216 = vpop.f32.mrf.mxu0
  %v3217 = vadd.f32 %v3168, %v3216
  %3218 = vmatmul.bf16.gmra.mxu0 %v533
  %v3219 = vpop.f32.mrf.mxu0
  %v3220 = vadd.f32 %v3171, %v3219
  %v3221 = vpop.f32.mrf.mxu0
  %v3222 = vadd.f32 %v3173, %v3221
  %3223 = vmatmul.bf16.gmra.mxu0 %v541
  %v3224 = vpop.f32.mrf.mxu0
  %v3225 = vadd.f32 %v3176, %v3224
  %v3226 = vpop.f32.mrf.mxu0
  %v3227 = vadd.f32 %v3178, %v3226
  %3228 = vmatmul.bf16.gmra.mxu0 %v549
  %v3229 = vpop.f32.mrf.mxu0
  %v3230 = vadd.f32 %v3181, %v3229
  %v3231 = vpop.f32.mrf.mxu0
  %v3232 = vadd.f32 %v3183, %v3231
  %3233 = vmatmul.bf16.gmra.mxu0 %v557
  %v3234 = vpop.f32.mrf.mxu0
  %v3235 = vadd.f32 %v3186, %v3234
  %v3236 = vpop.f32.mrf.mxu0
  %v3237 = vadd.f32 %v3188, %v3236
  %3238 = vmatmul.bf16.gmra.mxu0 %v565
  %v3239 = vpop.f32.mrf.mxu0
  %v3240 = vadd.f32 %v3191, %v3239
  %v3241 = vpop.f32.mrf.mxu0
  %v3242 = vadd.f32 %v3193, %v3241
  %3243 = vmatmul.bf16.gmra.mxu0 %v573
  %v3244 = vpop.f32.mrf.mxu0
  %v3245 = vadd.f32 %v3196, %v3244
  %v3246 = vpop.f32.mrf.mxu0
  %v3247 = vadd.f32 %v3198, %v3246
  %3248 = vmatmul.bf16.gmra.mxu0 %v581
  %v3249 = vpop.f32.mrf.mxu0
  %v3250 = vadd.f32 %v3201, %v3249
  %v3251 = vpop.f32.mrf.mxu0
  %v3252 = vadd.f32 %v3203, %v3251
  %3253 = vdwg.mxu0
  %3254 = vmatpush.bf16.msra.mxu0 %v1546
  %3255 = vmatpush.bf16.msra.mxu0 %v1542
  %3256 = vmatpush.bf16.msra.mxu0 %v1538
  %3257 = vmatpush.bf16.msra.mxu0 %v1534
  %3258 = vmatpush.bf16.msra.mxu0 %v1530
  %3259 = vmatpush.bf16.msra.mxu0 %v1526
  %3260 = vmatpush.bf16.msra.mxu0 %v1522
  %3261 = vmatpush.bf16.msra.mxu0 %v1518
  %3262 = vmatmul.bf16.gmra.mxu0 %v526
  %v3263 = vpop.f32.mrf.mxu0
  %v3264 = vadd.f32 %v3215, %v3263
  %v3265 = vpop.f32.mrf.mxu0
  %v3266 = vadd.f32 %v3217, %v3265
  %3267 = vmatmul.bf16.gmra.mxu0 %v534
  %v3268 = vpop.f32.mrf.mxu0
  %v3269 = vadd.f32 %v3220, %v3268
  %v3270 = vpop.f32.mrf.mxu0
  %v3271 = vadd.f32 %v3222, %v3270
  %3272 = vmatmul.bf16.gmra.mxu0 %v542
  %v3273 = vpop.f32.mrf.mxu0
  %v3274 = vadd.f32 %v3225, %v3273
  %v3275 = vpop.f32.mrf.mxu0
  %v3276 = vadd.f32 %v3227, %v3275
  %3277 = vmatmul.bf16.gmra.mxu0 %v550
  %v3278 = vpop.f32.mrf.mxu0
  %v3279 = vadd.f32 %v3230, %v3278
  %v3280 = vpop.f32.mrf.mxu0
  %v3281 = vadd.f32 %v3232, %v3280
  %3282 = vmatmul.bf16.gmra.mxu0 %v558
  %v3283 = vpop.f32.mrf.mxu0
  %v3284 = vadd.f32 %v3235, %v3283
  %v3285 = vpop.f32.mrf.mxu0
  %v3286 = vadd.f32 %v3237, %v3285
  %3287 = vmatmul.bf16.gmra.mxu0 %v566
  %v3288 = vpop.f32.mrf.mxu0
  %v3289 = vadd.f32 %v3240, %v3288
  %v3290 = vpop.f32.mrf.mxu0
  %v3291 = vadd.f32 %v3242, %v3290
  %3292 = vmatmul.bf16.gmra.mxu0 %v574
  %v3293 = vpop.f32.mrf.mxu0
  %v3294 = vadd.f32 %v3245, %v3293
  %v3295 = vpop.f32.mrf.mxu0
  %v3296 = vadd.f32 %v3247, %v3295
  %3297 = vmatmul.bf16.gmra.mxu0 %v582
  %v3298 = vpop.f32.mrf.mxu0
  %v3299 = vadd.f32 %v3250, %v3298
  %v3300 = vpop.f32.mrf.mxu0
  %v3301 = vadd.f32 %v3252, %v3300
  %3302 = vdwg.mxu0
  %3303 = vmatpush.bf16.msra.mxu0 %v1578
  %3304 = vmatpush.bf16.msra.mxu0 %v1574
  %3305 = vmatpush.bf16.msra.mxu0 %v1570
  %3306 = vmatpush.bf16.msra.mxu0 %v1566
  %3307 = vmatpush.bf16.msra.mxu0 %v1562
  %3308 = vmatpush.bf16.msra.mxu0 %v1558
  %3309 = vmatpush.bf16.msra.mxu0 %v1554
  %3310 = vmatpush.bf16.msra.mxu0 %v1550
  %3311 = vmatmul.bf16.gmra.mxu0 %v527
  %v3312 = vpop.f32.mrf.mxu0
  %v3313 = vadd.f32 %v3264, %v3312
  %v3314 = vpop.f32.mrf.mxu0
  %v3315 = vadd.f32 %v3266, %v3314
  %3316 = vmatmul.bf16.gmra.mxu0 %v535
  %v3317 = vpop.f32.mrf.mxu0
  %v3318 = vadd.f32 %v3269, %v3317
  %v3319 = vpop.f32.mrf.mxu0
  %v3320 = vadd.f32 %v3271, %v3319
  %3321 = vmatmul.bf16.gmra.mxu0 %v543
  %v3322 = vpop.f32.mrf.mxu0
  %v3323 = vadd.f32 %v3274, %v3322
  %v3324 = vpop.f32.mrf.mxu0
  %v3325 = vadd.f32 %v3276, %v3324
  %3326 = vmatmul.bf16.gmra.mxu0 %v551
  %v3327 = vpop.f32.mrf.mxu0
  %v3328 = vadd.f32 %v3279, %v3327
  %v3329 = vpop.f32.mrf.mxu0
  %v3330 = vadd.f32 %v3281, %v3329
  %3331 = vmatmul.bf16.gmra.mxu0 %v559
  %v3332 = vpop.f32.mrf.mxu0
  %v3333 = vadd.f32 %v3284, %v3332
  %v3334 = vpop.f32.mrf.mxu0
  %v3335 = vadd.f32 %v3286, %v3334
  %3336 = vmatmul.bf16.gmra.mxu0 %v567
  %v3337 = vpop.f32.mrf.mxu0
  %v3338 = vadd.f32 %v3289, %v3337
  %v3339 = vpop.f32.mrf.mxu0
  %v3340 = vadd.f32 %v3291, %v3339
  %3341 = vmatmul.bf16.gmra.mxu0 %v575
  %v3342 = vpop.f32.mrf.mxu0
  %v3343 = vadd.f32 %v3294, %v3342
  %v3344 = vpop.f32.mrf.mxu0
  %v3345 = vadd.f32 %v3296, %v3344
  %3346 = vmatmul.bf16.gmra.mxu0 %v583
  %v3347 = vpop.f32.mrf.mxu0
  %v3348 = vadd.f32 %v3299, %v3347
  %v3349 = vpop.f32.mrf.mxu0
  %v3350 = vadd.f32 %v3301, %v3349
  %3351 = vdwg.mxu0
  %3352 = vmatpush.bf16.msra.mxu0 %v1610
  %3353 = vmatpush.bf16.msra.mxu0 %v1606
  %3354 = vmatpush.bf16.msra.mxu0 %v1602
  %3355 = vmatpush.bf16.msra.mxu0 %v1598
  %3356 = vmatpush.bf16.msra.mxu0 %v1594
  %3357 = vmatpush.bf16.msra.mxu0 %v1590
  %3358 = vmatpush.bf16.msra.mxu0 %v1586
  %3359 = vmatpush.bf16.msra.mxu0 %v1582
  %3360 = vmatmul.bf16.gmra.mxu0 %v528
  %v3361 = vpop.f32.mrf.mxu0
  %v3362 = vadd.f32 %v3313, %v3361
  %v3363 = vpop.f32.mrf.mxu0
  %v3364 = vadd.f32 %v3315, %v3363
  %3365 = vmatmul.bf16.gmra.mxu0 %v536
  %v3366 = vpop.f32.mrf.mxu0
  %v3367 = vadd.f32 %v3318, %v3366
  %v3368 = vpop.f32.mrf.mxu0
  %v3369 = vadd.f32 %v3320, %v3368
  %3370 = vmatmul.bf16.gmra.mxu0 %v544
  %v3371 = vpop.f32.mrf.mxu0
  %v3372 = vadd.f32 %v3323, %v3371
  %v3373 = vpop.f32.mrf.mxu0
  %v3374 = vadd.f32 %v3325, %v3373
  %3375 = vmatmul.bf16.gmra.mxu0 %v552
  %v3376 = vpop.f32.mrf.mxu0
  %v3377 = vadd.f32 %v3328, %v3376
  %v3378 = vpop.f32.mrf.mxu0
  %v3379 = vadd.f32 %v3330, %v3378
  %3380 = vmatmul.bf16.gmra.mxu0 %v560
  %v3381 = vpop.f32.mrf.mxu0
  %v3382 = vadd.f32 %v3333, %v3381
  %v3383 = vpop.f32.mrf.mxu0
  %v3384 = vadd.f32 %v3335, %v3383
  %3385 = vmatmul.bf16.gmra.mxu0 %v568
  %v3386 = vpop.f32.mrf.mxu0
  %v3387 = vadd.f32 %v3338, %v3386
  %v3388 = vpop.f32.mrf.mxu0
  %v3389 = vadd.f32 %v3340, %v3388
  %3390 = vmatmul.bf16.gmra.mxu0 %v576
  %v3391 = vpop.f32.mrf.mxu0
  %v3392 = vadd.f32 %v3343, %v3391
  %v3393 = vpop.f32.mrf.mxu0
  %v3394 = vadd.f32 %v3345, %v3393
  %3395 = vmatmul.bf16.gmra.mxu0 %v584
  %v3396 = vpop.f32.mrf.mxu0
  %v3397 = vadd.f32 %v3348, %v3396
  %v3398 = vpop.f32.mrf.mxu0
  %v3399 = vadd.f32 %v3350, %v3398
  %3400 = vdwg.mxu0
  %3401 = vmatpush.bf16.msra.mxu0 %v1642
  %3402 = vmatpush.bf16.msra.mxu0 %v1638
  %3403 = vmatpush.bf16.msra.mxu0 %v1634
  %3404 = vmatpush.bf16.msra.mxu0 %v1630
  %3405 = vmatpush.bf16.msra.mxu0 %v1626
  %3406 = vmatpush.bf16.msra.mxu0 %v1622
  %3407 = vmatpush.bf16.msra.mxu0 %v1618
  %3408 = vmatpush.bf16.msra.mxu0 %v1614
  %3409 = vmatmul.bf16.gmra.mxu0 %v529
  %v3410 = vpop.f32.mrf.mxu0
  %v3411 = vadd.f32 %v3362, %v3410
  %v3412 = vpop.f32.mrf.mxu0
  %v3413 = vadd.f32 %v3364, %v3412
  %3414 = vmatmul.bf16.gmra.mxu0 %v537
  %v3415 = vpop.f32.mrf.mxu0
  %v3416 = vadd.f32 %v3367, %v3415
  %v3417 = vpop.f32.mrf.mxu0
  %v3418 = vadd.f32 %v3369, %v3417
  %3419 = vmatmul.bf16.gmra.mxu0 %v545
  %v3420 = vpop.f32.mrf.mxu0
  %v3421 = vadd.f32 %v3372, %v3420
  %v3422 = vpop.f32.mrf.mxu0
  %v3423 = vadd.f32 %v3374, %v3422
  %3424 = vmatmul.bf16.gmra.mxu0 %v553
  %v3425 = vpop.f32.mrf.mxu0
  %v3426 = vadd.f32 %v3377, %v3425
  %v3427 = vpop.f32.mrf.mxu0
  %v3428 = vadd.f32 %v3379, %v3427
  %3429 = vmatmul.bf16.gmra.mxu0 %v561
  %v3430 = vpop.f32.mrf.mxu0
  %v3431 = vadd.f32 %v3382, %v3430
  %v3432 = vpop.f32.mrf.mxu0
  %v3433 = vadd.f32 %v3384, %v3432
  %3434 = vmatmul.bf16.gmra.mxu0 %v569
  %v3435 = vpop.f32.mrf.mxu0
  %v3436 = vadd.f32 %v3387, %v3435
  %v3437 = vpop.f32.mrf.mxu0
  %v3438 = vadd.f32 %v3389, %v3437
  %3439 = vmatmul.bf16.gmra.mxu0 %v577
  %v3440 = vpop.f32.mrf.mxu0
  %v3441 = vadd.f32 %v3392, %v3440
  %v3442 = vpop.f32.mrf.mxu0
  %v3443 = vadd.f32 %v3394, %v3442
  %3444 = vmatmul.bf16.gmra.mxu0 %v585
  %v3445 = vpop.f32.mrf.mxu0
  %v3446 = vadd.f32 %v3397, %v3445
  %v3447 = vpop.f32.mrf.mxu0
  %v3448 = vadd.f32 %v3399, %v3447
  %3449 = vdwg.mxu0
  %3450 = vmatpush.bf16.msra.mxu0 %v1674
  %3451 = vmatpush.bf16.msra.mxu0 %v1670
  %3452 = vmatpush.bf16.msra.mxu0 %v1666
  %3453 = vmatpush.bf16.msra.mxu0 %v1662
  %3454 = vmatpush.bf16.msra.mxu0 %v1658
  %3455 = vmatpush.bf16.msra.mxu0 %v1654
  %3456 = vmatpush.bf16.msra.mxu0 %v1650
  %3457 = vmatpush.bf16.msra.mxu0 %v1646
  %3458 = vmatmul.bf16.gmra.mxu0 %v530
  %v3459 = vpop.f32.mrf.mxu0
  %v3460 = vadd.f32 %v3411, %v3459
  %v3461 = vpop.f32.mrf.mxu0
  %v3462 = vadd.f32 %v3413, %v3461
  %3463 = vmatmul.bf16.gmra.mxu0 %v538
  %v3464 = vpop.f32.mrf.mxu0
  %v3465 = vadd.f32 %v3416, %v3464
  %v3466 = vpop.f32.mrf.mxu0
  %v3467 = vadd.f32 %v3418, %v3466
  %3468 = vmatmul.bf16.gmra.mxu0 %v546
  %v3469 = vpop.f32.mrf.mxu0
  %v3470 = vadd.f32 %v3421, %v3469
  %v3471 = vpop.f32.mrf.mxu0
  %v3472 = vadd.f32 %v3423, %v3471
  %3473 = vmatmul.bf16.gmra.mxu0 %v554
  %v3474 = vpop.f32.mrf.mxu0
  %v3475 = vadd.f32 %v3426, %v3474
  %v3476 = vpop.f32.mrf.mxu0
  %v3477 = vadd.f32 %v3428, %v3476
  %3478 = vmatmul.bf16.gmra.mxu0 %v562
  %v3479 = vpop.f32.mrf.mxu0
  %v3480 = vadd.f32 %v3431, %v3479
  %v3481 = vpop.f32.mrf.mxu0
  %v3482 = vadd.f32 %v3433, %v3481
  %3483 = vmatmul.bf16.gmra.mxu0 %v570
  %v3484 = vpop.f32.mrf.mxu0
  %v3485 = vadd.f32 %v3436, %v3484
  %v3486 = vpop.f32.mrf.mxu0
  %v3487 = vadd.f32 %v3438, %v3486
  %3488 = vmatmul.bf16.gmra.mxu0 %v578
  %v3489 = vpop.f32.mrf.mxu0
  %v3490 = vadd.f32 %v3441, %v3489
  %v3491 = vpop.f32.mrf.mxu0
  %v3492 = vadd.f32 %v3443, %v3491
  %3493 = vmatmul.bf16.gmra.mxu0 %v586
  %v3494 = vpop.f32.mrf.mxu0
  %v3495 = vadd.f32 %v3446, %v3494
  %v3496 = vpop.f32.mrf.mxu0
  %v3497 = vadd.f32 %v3448, %v3496
  %3498 = vdwg.mxu0
  %v3499 = vmax.f32 %v2284, 0.0
  %v3500 = vmax.f32 %v2676, 0.0
  %v3501 = vmax.f32 %v3068, 0.0
  %v3502 = vmax.f32 %v3460, 0.0
  %v3503 = vmax.f32 %v2286, 0.0
  %v3504 = vmax.f32 %v2678, 0.0
  %v3505 = vmax.f32 %v3070, 0.0
  %v3506 = vmax.f32 %v3462, 0.0
  %v3507 = vmax.f32 %v2289, 0.0
  %v3508 = vmax.f32 %v2681, 0.0
  %v3509 = vmax.f32 %v3073, 0.0
  %v3510 = vmax.f32 %v3465, 0.0
  %v3511 = vmax.f32 %v2291, 0.0
  %v3512 = vmax.f32 %v2683, 0.0
  %v3513 = vmax.f32 %v3075, 0.0
  %v3514 = vmax.f32 %v3467, 0.0
  %v3515 = vmax.f32 %v2294, 0.0
  %v3516 = vmax.f32 %v2686, 0.0
  %v3517 = vmax.f32 %v3078, 0.0
  %v3518 = vmax.f32 %v3470, 0.0
  %v3519 = vmax.f32 %v2296, 0.0
  %v3520 = vmax.f32 %v2688, 0.0
  %v3521 = vmax.f32 %v3080, 0.0
  %v3522 = vmax.f32 %v3472, 0.0
  %v3523 = vmax.f32 %v2299, 0.0
  %v3524 = vmax.f32 %v2691, 0.0
  %v3525 = vmax.f32 %v3083, 0.0
  %v3526 = vmax.f32 %v3475, 0.0
  %v3527 = vmax.f32 %v2301, 0.0
  %v3528 = vmax.f32 %v2693, 0.0
  %v3529 = vmax.f32 %v3085, 0.0
  %v3530 = vmax.f32 %v3477, 0.0
  %v3531 = vmax.f32 %v2304, 0.0
  %v3532 = vmax.f32 %v2696, 0.0
  %v3533 = vmax.f32 %v3088, 0.0
  %v3534 = vmax.f32 %v3480, 0.0
  %v3535 = vmax.f32 %v2306, 0.0
  %v3536 = vmax.f32 %v2698, 0.0
  %v3537 = vmax.f32 %v3090, 0.0
  %v3538 = vmax.f32 %v3482, 0.0
  %v3539 = vmax.f32 %v2309, 0.0
  %v3540 = vmax.f32 %v2701, 0.0
  %v3541 = vmax.f32 %v3093, 0.0
  %v3542 = vmax.f32 %v3485, 0.0
  %v3543 = vmax.f32 %v2311, 0.0
  %v3544 = vmax.f32 %v2703, 0.0
  %v3545 = vmax.f32 %v3095, 0.0
  %v3546 = vmax.f32 %v3487, 0.0
  %v3547 = vmax.f32 %v2314, 0.0
  %v3548 = vmax.f32 %v2706, 0.0
  %v3549 = vmax.f32 %v3098, 0.0
  %v3550 = vmax.f32 %v3490, 0.0
  %v3551 = vmax.f32 %v2316, 0.0
  %v3552 = vmax.f32 %v2708, 0.0
  %v3553 = vmax.f32 %v3100, 0.0
  %v3554 = vmax.f32 %v3492, 0.0
  %v3555 = vmax.f32 %v2319, 0.0
  %v3556 = vmax.f32 %v2711, 0.0
  %v3557 = vmax.f32 %v3103, 0.0
  %v3558 = vmax.f32 %v3495, 0.0
  %v3559 = vmax.f32 %v2321, 0.0
  %v3560 = vmax.f32 %v2713, 0.0
  %v3561 = vmax.f32 %v3105, 0.0
  %v3562 = vmax.f32 %v3497, 0.0
  %v3563 = vmul.f32 %v3499, %v3499
  %v3564 = vmul.f32 %v3500, %v3500
  %v3565 = vmul.f32 %v3501, %v3501
  %v3566 = vmul.f32 %v3502, %v3502
  %v3567 = vmul.f32 %v3503, %v3503
  %v3568 = vmul.f32 %v3504, %v3504
  %v3569 = vmul.f32 %v3505, %v3505
  %v3570 = vmul.f32 %v3506, %v3506
  %v3571 = vmul.f32 %v3507, %v3507
  %v3572 = vmul.f32 %v3508, %v3508
  %v3573 = vmul.f32 %v3509, %v3509
  %v3574 = vmul.f32 %v3510, %v3510
  %v3575 = vmul.f32 %v3511, %v3511
  %v3576 = vmul.f32 %v3512, %v3512
  %v3577 = vmul.f32 %v3513, %v3513
  %v3578 = vmul.f32 %v3514, %v3514
  %v3579 = vmul.f32 %v3515, %v3515
  %v3580 = vmul.f32 %v3516, %v3516
  %v3581 = vmul.f32 %v3517, %v3517
  %v3582 = vmul.f32 %v3518, %v3518
  %v3583 = vmul.f32 %v3519, %v3519
  %v3584 = vmul.f32 %v3520, %v3520
  %v3585 = vmul.f32 %v3521, %v3521
  %v3586 = vmul.f32 %v3522, %v3522
  %v3587 = vmul.f32 %v3523, %v3523
  %v3588 = vmul.f32 %v3524, %v3524
  %v3589 = vmul.f32 %v3525, %v3525
  %v3590 = vmul.f32 %v3526, %v3526
  %v3591 = vmul.f32 %v3527, %v3527
  %v3592 = vmul.f32 %v3528, %v3528
  %v3593 = vmul.f32 %v3529, %v3529
  %v3594 = vmul.f32 %v3530, %v3530
  %v3595 = vmul.f32 %v3531, %v3531
  %v3596 = vmul.f32 %v3532, %v3532
  %v3597 = vmul.f32 %v3533, %v3533
  %v3598 = vmul.f32 %v3534, %v3534
  %v3599 = vmul.f32 %v3535, %v3535
  %v3600 = vmul.f32 %v3536, %v3536
  %v3601 = vmul.f32 %v3537, %v3537
  %v3602 = vmul.f32 %v3538, %v3538
  %v3603 = vmul.f32 %v3539, %v3539
  %v3604 = vmul.f32 %v3540, %v3540
  %v3605 = vmul.f32 %v3541, %v3541
  %v3606 = vmul.f32 %v3542, %v3542
  %v3607 = vmul.f32 %v3543, %v3543
  %v3608 = vmul.f32 %v3544, %v3544
  %v3609 = vmul.f32 %v3545, %v3545
  %v3610 = vmul.f32 %v3546, %v3546
  %v3611 = vmul.f32 %v3547, %v3547
  %v3612 = vmul.f32 %v3548, %v3548
  %v3613 = vmul.f32 %v3549, %v3549
  %v3614 = vmul.f32 %v3550, %v3550
  %v3615 = vmul.f32 %v3551, %v3551
  %v3616 = vmul.f32 %v3552, %v3552
  %v3617 = vmul.f32 %v3553, %v3553
  %v3618 = vmul.f32 %v3554, %v3554
  %v3619 = vmul.f32 %v3555, %v3555
  %v3620 = vmul.f32 %v3556, %v3556
  %v3621 = vmul.f32 %v3557, %v3557
  %v3622 = vmul.f32 %v3558, %v3558
  %v3623 = vmul.f32 %v3559, %v3559
  %v3624 = vmul.f32 %v3560, %v3560
  %v3625 = vmul.f32 %v3561, %v3561
  %v3626 = vmul.f32 %v3562, %v3562
  %v3627 = vadd.f32 %v3563, %v3564
  %v3628 = vadd.f32 %v3627, %v3565
  %v3629 = vadd.f32 %v3628, %v3566
  %3630 = vadd.xlane.f32.xlu0 %v3629
  %v3631 = vpop.xlane.xlu0 %3630
  %v3632 = vadd.f32 %v3567, %v3568
  %v3633 = vadd.f32 %v3632, %v3569
  %v3634 = vadd.f32 %v3633, %v3570
  %3635 = vadd.xlane.f32.xlu0 %v3634
  %v3636 = vpop.xlane.xlu0 %3635
  %v3637 = vadd.f32 %v3571, %v3572
  %v3638 = vadd.f32 %v3637, %v3573
  %v3639 = vadd.f32 %v3638, %v3574
  %3640 = vadd.xlane.f32.xlu0 %v3639
  %v3641 = vpop.xlane.xlu0 %3640
  %v3642 = vadd.f32 %v3575, %v3576
  %v3643 = vadd.f32 %v3642, %v3577
  %v3644 = vadd.f32 %v3643, %v3578
  %3645 = vadd.xlane.f32.xlu0 %v3644
  %v3646 = vpop.xlane.xlu0 %3645
  %v3647 = vadd.f32 %v3579, %v3580
  %v3648 = vadd.f32 %v3647, %v3581
  %v3649 = vadd.f32 %v3648, %v3582
  %3650 = vadd.xlane.f32.xlu0 %v3649
  %v3651 = vpop.xlane.xlu0 %3650
  %v3652 = vadd.f32 %v3583, %v3584
  %v3653 = vadd.f32 %v3652, %v3585
  %v3654 = vadd.f32 %v3653, %v3586
  %3655 = vadd.xlane.f32.xlu0 %v3654
  %v3656 = vpop.xlane.xlu0 %3655
  %v3657 = vadd.f32 %v3587, %v3588
  %v3658 = vadd.f32 %v3657, %v3589
  %v3659 = vadd.f32 %v3658, %v3590
  %3660 = vadd.xlane.f32.xlu0 %v3659
  %v3661 = vpop.xlane.xlu0 %3660
  %v3662 = vadd.f32 %v3591, %v3592
  %v3663 = vadd.f32 %v3662, %v3593
  %v3664 = vadd.f32 %v3663, %v3594
  %3665 = vadd.xlane.f32.xlu0 %v3664
  %v3666 = vpop.xlane.xlu0 %3665
  %v3667 = vadd.f32 %v3595, %v3596
  %v3668 = vadd.f32 %v3667, %v3597
  %v3669 = vadd.f32 %v3668, %v3598
  %3670 = vadd.xlane.f32.xlu0 %v3669
  %v3671 = vpop.xlane.xlu0 %3670
  %v3672 = vadd.f32 %v3599, %v3600
  %v3673 = vadd.f32 %v3672, %v3601
  %v3674 = vadd.f32 %v3673, %v3602
  %3675 = vadd.xlane.f32.xlu0 %v3674
  %v3676 = vpop.xlane.xlu0 %3675
  %v3677 = vadd.f32 %v3603, %v3604
  %v3678 = vadd.f32 %v3677, %v3605
  %v3679 = vadd.f32 %v3678, %v3606
  %3680 = vadd.xlane.f32.xlu0 %v3679
  %v3681 = vpop.xlane.xlu0 %3680
  %v3682 = vadd.f32 %v3607, %v3608
  %v3683 = vadd.f32 %v3682, %v3609
  %v3684 = vadd.f32 %v3683, %v3610
  %3685 = vadd.xlane.f32.xlu0 %v3684
  %v3686 = vpop.xlane.xlu0 %3685
  %v3687 = vadd.f32 %v3611, %v3612
  %v3688 = vadd.f32 %v3687, %v3613
  %v3689 = vadd.f32 %v3688, %v3614
  %3690 = vadd.xlane.f32.xlu0 %v3689
  %v3691 = vpop.xlane.xlu0 %3690
  %v3692 = vadd.f32 %v3615, %v3616
  %v3693 = vadd.f32 %v3692, %v3617
  %v3694 = vadd.f32 %v3693, %v3618
  %3695 = vadd.xlane.f32.xlu0 %v3694
  %v3696 = vpop.xlane.xlu0 %3695
  %v3697 = vadd.f32 %v3619, %v3620
  %v3698 = vadd.f32 %v3697, %v3621
  %v3699 = vadd.f32 %v3698, %v3622
  %3700 = vadd.xlane.f32.xlu0 %v3699
  %v3701 = vpop.xlane.xlu0 %3700
  %v3702 = vadd.f32 %v3623, %v3624
  %v3703 = vadd.f32 %v3702, %v3625
  %v3704 = vadd.f32 %v3703, %v3626
  %3705 = vadd.xlane.f32.xlu0 %v3704
  %v3706 = vpop.xlane.xlu0 %3705
  %v3707 = vmax.f32 %v3631, 1e-24
  %v3708 = vmax.f32 %v3636, 1e-24
  %v3709 = vmax.f32 %v3641, 1e-24
  %v3710 = vmax.f32 %v3646, 1e-24
  %v3711 = vmax.f32 %v3651, 1e-24
  %v3712 = vmax.f32 %v3656, 1e-24
  %v3713 = vmax.f32 %v3661, 1e-24
  %v3714 = vmax.f32 %v3666, 1e-24
  %v3715 = vmax.f32 %v3671, 1e-24
  %v3716 = vmax.f32 %v3676, 1e-24
  %v3717 = vmax.f32 %v3681, 1e-24
  %v3718 = vmax.f32 %v3686, 1e-24
  %v3719 = vmax.f32 %v3691, 1e-24
  %v3720 = vmax.f32 %v3696, 1e-24
  %v3721 = vmax.f32 %v3701, 1e-24
  %v3722 = vmax.f32 %v3706, 1e-24
  %v3723 = vrsqrt.pop %v3707
  %v3724 = vmul.f32 %v3723, %v3707
  %v3725 = vmul.f32 %v3724, %v3723
  %v3726 = vmul.f32 0.5, %v3725
  %v3727 = vsub.f32 1.5, %v3726
  %v3728 = vmul.f32 %v3723, %v3727
  %vm3729 = vweird.f32 %v3707
  %vm3730 = vweird.f32 %v3723
  %vm3731 = vmor %vm3729, %vm3730
  %v3732 = vsel %vm3731, %v3723, %v3728
  %v3733 = vrsqrt.pop %v3708
  %v3734 = vmul.f32 %v3733, %v3708
  %v3735 = vmul.f32 %v3734, %v3733
  %v3736 = vmul.f32 0.5, %v3735
  %v3737 = vsub.f32 1.5, %v3736
  %v3738 = vmul.f32 %v3733, %v3737
  %vm3739 = vweird.f32 %v3708
  %vm3740 = vweird.f32 %v3733
  %vm3741 = vmor %vm3739, %vm3740
  %v3742 = vsel %vm3741, %v3733, %v3738
  %v3743 = vrsqrt.pop %v3709
  %v3744 = vmul.f32 %v3743, %v3709
  %v3745 = vmul.f32 %v3744, %v3743
  %v3746 = vmul.f32 0.5, %v3745
  %v3747 = vsub.f32 1.5, %v3746
  %v3748 = vmul.f32 %v3743, %v3747
  %vm3749 = vweird.f32 %v3709
  %vm3750 = vweird.f32 %v3743
  %vm3751 = vmor %vm3749, %vm3750
  %v3752 = vsel %vm3751, %v3743, %v3748
  %v3753 = vrsqrt.pop %v3710
  %v3754 = vmul.f32 %v3753, %v3710
  %v3755 = vmul.f32 %v3754, %v3753
  %v3756 = vmul.f32 0.5, %v3755
  %v3757 = vsub.f32 1.5, %v3756
  %v3758 = vmul.f32 %v3753, %v3757
  %vm3759 = vweird.f32 %v3710
  %vm3760 = vweird.f32 %v3753
  %vm3761 = vmor %vm3759, %vm3760
  %v3762 = vsel %vm3761, %v3753, %v3758
  %v3763 = vrsqrt.pop %v3711
  %v3764 = vmul.f32 %v3763, %v3711
  %v3765 = vmul.f32 %v3764, %v3763
  %v3766 = vmul.f32 0.5, %v3765
  %v3767 = vsub.f32 1.5, %v3766
  %v3768 = vmul.f32 %v3763, %v3767
  %vm3769 = vweird.f32 %v3711
  %vm3770 = vweird.f32 %v3763
  %vm3771 = vmor %vm3769, %vm3770
  %v3772 = vsel %vm3771, %v3763, %v3768
  %v3773 = vrsqrt.pop %v3712
  %v3774 = vmul.f32 %v3773, %v3712
  %v3775 = vmul.f32 %v3774, %v3773
  %v3776 = vmul.f32 0.5, %v3775
  %v3777 = vsub.f32 1.5, %v3776
  %v3778 = vmul.f32 %v3773, %v3777
  %vm3779 = vweird.f32 %v3712
  %vm3780 = vweird.f32 %v3773
  %vm3781 = vmor %vm3779, %vm3780
  %v3782 = vsel %vm3781, %v3773, %v3778
  %v3783 = vrsqrt.pop %v3713
  %v3784 = vmul.f32 %v3783, %v3713
  %v3785 = vmul.f32 %v3784, %v3783
  %v3786 = vmul.f32 0.5, %v3785
  %v3787 = vsub.f32 1.5, %v3786
  %v3788 = vmul.f32 %v3783, %v3787
  %vm3789 = vweird.f32 %v3713
  %vm3790 = vweird.f32 %v3783
  %vm3791 = vmor %vm3789, %vm3790
  %v3792 = vsel %vm3791, %v3783, %v3788
  %v3793 = vrsqrt.pop %v3714
  %v3794 = vmul.f32 %v3793, %v3714
  %v3795 = vmul.f32 %v3794, %v3793
  %v3796 = vmul.f32 0.5, %v3795
  %v3797 = vsub.f32 1.5, %v3796
  %v3798 = vmul.f32 %v3793, %v3797
  %vm3799 = vweird.f32 %v3714
  %vm3800 = vweird.f32 %v3793
  %vm3801 = vmor %vm3799, %vm3800
  %v3802 = vsel %vm3801, %v3793, %v3798
  %v3803 = vrsqrt.pop %v3715
  %v3804 = vmul.f32 %v3803, %v3715
  %v3805 = vmul.f32 %v3804, %v3803
  %v3806 = vmul.f32 0.5, %v3805
  %v3807 = vsub.f32 1.5, %v3806
  %v3808 = vmul.f32 %v3803, %v3807
  %vm3809 = vweird.f32 %v3715
  %vm3810 = vweird.f32 %v3803
  %vm3811 = vmor %vm3809, %vm3810
  %v3812 = vsel %vm3811, %v3803, %v3808
  %v3813 = vrsqrt.pop %v3716
  %v3814 = vmul.f32 %v3813, %v3716
  %v3815 = vmul.f32 %v3814, %v3813
  %v3816 = vmul.f32 0.5, %v3815
  %v3817 = vsub.f32 1.5, %v3816
  %v3818 = vmul.f32 %v3813, %v3817
  %vm3819 = vweird.f32 %v3716
  %vm3820 = vweird.f32 %v3813
  %vm3821 = vmor %vm3819, %vm3820
  %v3822 = vsel %vm3821, %v3813, %v3818
  %v3823 = vrsqrt.pop %v3717
  %v3824 = vmul.f32 %v3823, %v3717
  %v3825 = vmul.f32 %v3824, %v3823
  %v3826 = vmul.f32 0.5, %v3825
  %v3827 = vsub.f32 1.5, %v3826
  %v3828 = vmul.f32 %v3823, %v3827
  %vm3829 = vweird.f32 %v3717
  %vm3830 = vweird.f32 %v3823
  %vm3831 = vmor %vm3829, %vm3830
  %v3832 = vsel %vm3831, %v3823, %v3828
  %v3833 = vrsqrt.pop %v3718
  %v3834 = vmul.f32 %v3833, %v3718
  %v3835 = vmul.f32 %v3834, %v3833
  %v3836 = vmul.f32 0.5, %v3835
  %v3837 = vsub.f32 1.5, %v3836
  %v3838 = vmul.f32 %v3833, %v3837
  %vm3839 = vweird.f32 %v3718
  %vm3840 = vweird.f32 %v3833
  %vm3841 = vmor %vm3839, %vm3840
  %v3842 = vsel %vm3841, %v3833, %v3838
  %v3843 = vrsqrt.pop %v3719
  %v3844 = vmul.f32 %v3843, %v3719
  %v3845 = vmul.f32 %v3844, %v3843
  %v3846 = vmul.f32 0.5, %v3845
  %v3847 = vsub.f32 1.5, %v3846
  %v3848 = vmul.f32 %v3843, %v3847
  %vm3849 = vweird.f32 %v3719
  %vm3850 = vweird.f32 %v3843
  %vm3851 = vmor %vm3849, %vm3850
  %v3852 = vsel %vm3851, %v3843, %v3848
  %v3853 = vrsqrt.pop %v3720
  %v3854 = vmul.f32 %v3853, %v3720
  %v3855 = vmul.f32 %v3854, %v3853
  %v3856 = vmul.f32 0.5, %v3855
  %v3857 = vsub.f32 1.5, %v3856
  %v3858 = vmul.f32 %v3853, %v3857
  %vm3859 = vweird.f32 %v3720
  %vm3860 = vweird.f32 %v3853
  %vm3861 = vmor %vm3859, %vm3860
  %v3862 = vsel %vm3861, %v3853, %v3858
  %v3863 = vrsqrt.pop %v3721
  %v3864 = vmul.f32 %v3863, %v3721
  %v3865 = vmul.f32 %v3864, %v3863
  %v3866 = vmul.f32 0.5, %v3865
  %v3867 = vsub.f32 1.5, %v3866
  %v3868 = vmul.f32 %v3863, %v3867
  %vm3869 = vweird.f32 %v3721
  %vm3870 = vweird.f32 %v3863
  %vm3871 = vmor %vm3869, %vm3870
  %v3872 = vsel %vm3871, %v3863, %v3868
  %v3873 = vrsqrt.pop %v3722
  %v3874 = vmul.f32 %v3873, %v3722
  %v3875 = vmul.f32 %v3874, %v3873
  %v3876 = vmul.f32 0.5, %v3875
  %v3877 = vsub.f32 1.5, %v3876
  %v3878 = vmul.f32 %v3873, %v3877
  %vm3879 = vweird.f32 %v3722
  %vm3880 = vweird.f32 %v3873
  %vm3881 = vmor %vm3879, %vm3880
  %v3882 = vsel %vm3881, %v3873, %v3878
  %v3883 = vmul.f32 %v3732, 22.627417
  %v3884 = vmul.f32 %v3742, 22.627417
  %v3885 = vmul.f32 %v3752, 22.627417
  %v3886 = vmul.f32 %v3762, 22.627417
  %v3887 = vmul.f32 %v3772, 22.627417
  %v3888 = vmul.f32 %v3782, 22.627417
  %v3889 = vmul.f32 %v3792, 22.627417
  %v3890 = vmul.f32 %v3802, 22.627417
  %v3891 = vmul.f32 %v3812, 22.627417
  %v3892 = vmul.f32 %v3822, 22.627417
  %v3893 = vmul.f32 %v3832, 22.627417
  %v3894 = vmul.f32 %v3842, 22.627417
  %v3895 = vmul.f32 %v3852, 22.627417
  %v3896 = vmul.f32 %v3862, 22.627417
  %v3897 = vmul.f32 %v3872, 22.627417
  %v3898 = vmul.f32 %v3882, 22.627417
  %v3899 = vmul.f32 %v3499, %v3883
  %v3900 = vmul.f32 %v3500, %v3883
  %v3901 = vmul.f32 %v3501, %v3883
  %v3902 = vmul.f32 %v3502, %v3883
  %v3903 = vmul.f32 %v3503, %v3884
  %v3904 = vmul.f32 %v3504, %v3884
  %v3905 = vmul.f32 %v3505, %v3884
  %v3906 = vmul.f32 %v3506, %v3884
  %v3907 = vmul.f32 %v3507, %v3885
  %v3908 = vmul.f32 %v3508, %v3885
  %v3909 = vmul.f32 %v3509, %v3885
  %v3910 = vmul.f32 %v3510, %v3885
  %v3911 = vmul.f32 %v3511, %v3886
  %v3912 = vmul.f32 %v3512, %v3886
  %v3913 = vmul.f32 %v3513, %v3886
  %v3914 = vmul.f32 %v3514, %v3886
  %v3915 = vmul.f32 %v3515, %v3887
  %v3916 = vmul.f32 %v3516, %v3887
  %v3917 = vmul.f32 %v3517, %v3887
  %v3918 = vmul.f32 %v3518, %v3887
  %v3919 = vmul.f32 %v3519, %v3888
  %v3920 = vmul.f32 %v3520, %v3888
  %v3921 = vmul.f32 %v3521, %v3888
  %v3922 = vmul.f32 %v3522, %v3888
  %v3923 = vmul.f32 %v3523, %v3889
  %v3924 = vmul.f32 %v3524, %v3889
  %v3925 = vmul.f32 %v3525, %v3889
  %v3926 = vmul.f32 %v3526, %v3889
  %v3927 = vmul.f32 %v3527, %v3890
  %v3928 = vmul.f32 %v3528, %v3890
  %v3929 = vmul.f32 %v3529, %v3890
  %v3930 = vmul.f32 %v3530, %v3890
  %v3931 = vmul.f32 %v3531, %v3891
  %v3932 = vmul.f32 %v3532, %v3891
  %v3933 = vmul.f32 %v3533, %v3891
  %v3934 = vmul.f32 %v3534, %v3891
  %v3935 = vmul.f32 %v3535, %v3892
  %v3936 = vmul.f32 %v3536, %v3892
  %v3937 = vmul.f32 %v3537, %v3892
  %v3938 = vmul.f32 %v3538, %v3892
  %v3939 = vmul.f32 %v3539, %v3893
  %v3940 = vmul.f32 %v3540, %v3893
  %v3941 = vmul.f32 %v3541, %v3893
  %v3942 = vmul.f32 %v3542, %v3893
  %v3943 = vmul.f32 %v3543, %v3894
  %v3944 = vmul.f32 %v3544, %v3894
  %v3945 = vmul.f32 %v3545, %v3894
  %v3946 = vmul.f32 %v3546, %v3894
  %v3947 = vmul.f32 %v3547, %v3895
  %v3948 = vmul.f32 %v3548, %v3895
  %v3949 = vmul.f32 %v3549, %v3895
  %v3950 = vmul.f32 %v3550, %v3895
  %v3951 = vmul.f32 %v3551, %v3896
  %v3952 = vmul.f32 %v3552, %v3896
  %v3953 = vmul.f32 %v3553, %v3896
  %v3954 = vmul.f32 %v3554, %v3896
  %v3955 = vmul.f32 %v3555, %v3897
  %v3956 = vmul.f32 %v3556, %v3897
  %v3957 = vmul.f32 %v3557, %v3897
  %v3958 = vmul.f32 %v3558, %v3897
  %v3959 = vmul.f32 %v3559, %v3898
  %v3960 = vmul.f32 %v3560, %v3898
  %v3961 = vmul.f32 %v3561, %v3898
  %v3962 = vmul.f32 %v3562, %v3898
  %v3963 = vpack.c.bf16 %v3900, %v3899
  %v3964 = vpack.c.bf16 %v3902, %v3901
  %v3965 = vpack.c.bf16 %v3904, %v3903
  %v3966 = vpack.c.bf16 %v3906, %v3905
  %v3967 = vpack.c.bf16 %v3908, %v3907
  %v3968 = vpack.c.bf16 %v3910, %v3909
  %v3969 = vpack.c.bf16 %v3912, %v3911
  %v3970 = vpack.c.bf16 %v3914, %v3913
  %v3971 = vpack.c.bf16 %v3916, %v3915
  %v3972 = vpack.c.bf16 %v3918, %v3917
  %v3973 = vpack.c.bf16 %v3920, %v3919
  %v3974 = vpack.c.bf16 %v3922, %v3921
  %v3975 = vpack.c.bf16 %v3924, %v3923
  %v3976 = vpack.c.bf16 %v3926, %v3925
  %v3977 = vpack.c.bf16 %v3928, %v3927
  %v3978 = vpack.c.bf16 %v3930, %v3929
  %v3979 = vpack.c.bf16 %v3932, %v3931
  %v3980 = vpack.c.bf16 %v3934, %v3933
  %v3981 = vpack.c.bf16 %v3936, %v3935
  %v3982 = vpack.c.bf16 %v3938, %v3937
  %v3983 = vpack.c.bf16 %v3940, %v3939
  %v3984 = vpack.c.bf16 %v3942, %v3941
  %v3985 = vpack.c.bf16 %v3944, %v3943
  %v3986 = vpack.c.bf16 %v3946, %v3945
  %v3987 = vpack.c.bf16 %v3948, %v3947
  %v3988 = vpack.c.bf16 %v3950, %v3949
  %v3989 = vpack.c.bf16 %v3952, %v3951
  %v3990 = vpack.c.bf16 %v3954, %v3953
  %v3991 = vpack.c.bf16 %v3956, %v3955
  %v3992 = vpack.c.bf16 %v3958, %v3957
  %v3993 = vpack.c.bf16 %v3960, %v3959
  %v3994 = vpack.c.bf16 %v3962, %v3961
  %3995 = vst [vmem:[%s2] sm:$0xff] %v3963
  %3996 = vst [vmem:[%s2 + $0x8] sm:$0xff] %v3964
  %3997 = vst [vmem:[%s2 + $0x10] sm:$0xff] %v3965
  %3998 = vst [vmem:[%s2 + $0x18] sm:$0xff] %v3966
  %3999 = vst [vmem:[%s2 + $0x20] sm:$0xff] %v3967
  %4000 = vst [vmem:[%s2 + $0x28] sm:$0xff] %v3968
  %4001 = vst [vmem:[%s2 + $0x30] sm:$0xff] %v3969
  %4002 = vst [vmem:[%s2 + $0x38] sm:$0xff] %v3970
  %4003 = vst [vmem:[%s2 + $0x40] sm:$0xff] %v3971
  %4004 = vst [vmem:[%s2 + $0x48] sm:$0xff] %v3972
  %4005 = vst [vmem:[%s2 + $0x50] sm:$0xff] %v3973
  %4006 = vst [vmem:[%s2 + $0x58] sm:$0xff] %v3974
  %4007 = vst [vmem:[%s2 + $0x60] sm:$0xff] %v3975
  %4008 = vst [vmem:[%s2 + $0x68] sm:$0xff] %v3976
  %4009 = vst [vmem:[%s2 + $0x70] sm:$0xff] %v3977
  %4010 = vst [vmem:[%s2 + $0x78] sm:$0xff] %v3978
  %4011 = vst [vmem:[%s2 + $0x80] sm:$0xff] %v3979
  %4012 = vst [vmem:[%s2 + $0x88] sm:$0xff] %v3980
  %4013 = vst [vmem:[%s2 + $0x90] sm:$0xff] %v3981
  %4014 = vst [vmem:[%s2 + $0x98] sm:$0xff] %v3982
  %4015 = vst [vmem:[%s2 + $0xa0] sm:$0xff] %v3983
  %4016 = vst [vmem:[%s2 + $0xa8] sm:$0xff] %v3984
  %4017 = vst [vmem:[%s2 + $0xb0] sm:$0xff] %v3985
  %4018 = vst [vmem:[%s2 + $0xb8] sm:$0xff] %v3986
  %4019 = vst [vmem:[%s2 + $0xc0] sm:$0xff] %v3987
  %4020 = vst [vmem:[%s2 + $0xc8] sm:$0xff] %v3988
  %4021 = vst [vmem:[%s2 + $0xd0] sm:$0xff] %v3989
  %4022 = vst [vmem:[%s2 + $0xd8] sm:$0xff] %v3990
  %4023 = vst [vmem:[%s2 + $0xe0] sm:$0xff] %v3991
  %4024 = vst [vmem:[%s2 + $0xe8] sm:$0xff] %v3992
  %4025 = vst [vmem:[%s2 + $0xf0] sm:$0xff] %v3993
  %4026 = vst [vmem:[%s2 + $0xf8] sm:$0xff] %v3994
  // Predicated region
  $region10: #{cycle_time_forward.4} parent=0 // pred_check
    _
  $region11: #{cycle_time_forward.4} parent=0 // pred_check_branch
    %4028 = sbr.rel (0) target = $region13
  $region12: #{cycle_time_forward.4} parent=0 // pred_region
    _
  $region13: #{cycle_time_forward.4} parent=0 // pred_fallthru
    _
  // Predicated region
  $region14: #{cycle_time_forward.4} parent=0 // pred_check
    _
  $region15: #{cycle_time_forward.4} parent=0 // pred_check_branch
    %4030 = sbr.rel (0) target = $region17
  $region16: #{cycle_time_forward.4} parent=0 // pred_region
    _
  $region17: #{cycle_time_forward.4} parent=0 // pred_fallthru
    _

</llo_original>
